<compile_context>
chip_gen: v7x
topology: tpu7x:2x2x1
jax: 0.10.0
libtpu: 0.0.40
codegen_flags: <defaults>
</compile_context>

<pallas_src>
import functools
import math

import jax
import jax.numpy as jnp
from jax.experimental import pallas as pl
from jax.experimental.pallas import tpu as pltpu

BN_EPS = 1e-5  # PyTorch BatchNorm3d default eps

_VMEM = pl.BlockSpec(memory_space=pltpu.MemorySpace.VMEM)  # whole-array block in VMEM


def _round_up(x, m):
    return ((x + m - 1) // m) * m


def _pick_tile(m, candidates=(512, 256, 128, 64, 32, 16, 8)):
    for t in candidates:
        if m % t == 0:
            return t
    return m


# ----------------------------- Pallas kernels -----------------------------

def _stem_kernel(x_ref, w_ref, s_ref, b_ref, o_ref):
    # x: (tm, Kpad) bf16 im2col cols, w: (Kpad, Cpad) bf16, s/b: (1, Cpad) folded BN (f32).
    acc = jnp.dot(x_ref[...], w_ref[...], preferred_element_type=jnp.float32)
    o_ref[...] = jnp.maximum(acc * s_ref[...] + b_ref[...], 0.0).astype(o_ref.dtype)


def _block_kernel(x_ref, dw_ref, dws_ref, dwb_ref, pw_ref, pws_ref, pwb_ref, o_ref,
                  *, sd, sh, Ho, W):
    # Fused depthwise-conv3d + BN + ReLU + pointwise matmul + BN + ReLU for ONE
    # (batch, output-depth) grid cell.  Taps are generated in-kernel from the halo-padded
    # activation window (no host im2col).  The H stride is applied exactly via per-output-row
    # static slices; the W axis is computed at stride-1 resolution (subsampled outside).
    #   x_ref : (1, Dp, Hp, Wp, C)   bf16  halo-padded activation for this batch element
    #   dw_ref: (27, 1, C)           f32   per-channel depthwise taps (kd*9 + kh*3 + kw)
    #   pw_ref: (C, Cout)            bf16  pointwise weight
    d0 = pl.program_id(1) * sd
    accs = [None] * Ho
    for kd in range(3):
        xplane = x_ref[0, d0 + kd]                                   # (Hp, Wp, C) bf16
        for kh in range(3):
            wtaps = [dw_ref[(kd * 3 + kh) * 3 + kw] for kw in range(3)]   # 3 x (1, C) f32
            for oh in range(Ho):
                xrow = xplane[oh * sh + kh].astype(jnp.float32)      # (Wp, C) f32 (VPU in f32)
                for kw in range(3):
                    t = xrow[kw:kw + W, :] * wtaps[kw]
                    accs[oh] = t if accs[oh] is None else accs[oh] + t
    dws = dws_ref[...]
    dwb = dwb_ref[...]
    pw = pw_ref[...]
    pws = pws_ref[...]
    pwb = pwb_ref[...]
    for oh in range(Ho):
        y = jnp.maximum(accs[oh] * dws + dwb, 0.0)                   # (W, C) f32
        z = jnp.dot(y.astype(jnp.bfloat16), pw,
                    preferred_element_type=jnp.float32)              # pointwise on the MXU
        z = jnp.maximum(z * pws + pwb, 0.0)
        o_ref[0, 0, oh] = z.astype(o_ref.dtype)                      # (W, Cout) bf16 store


def _make_tail_kernel(nblocks):
    # All remaining blocks have 1x1x1 spatial extent, so the 3x3x3 pad-1 depthwise reduces to
    # its center tap; the whole tail (blocks + avgpool(1) + dropout(eval) + linear + softmax)
    # stays resident in VMEM.
    def kernel(x_ref, dwc_ref, dws_ref, dwb_ref, pww_ref, pws_ref, pwb_ref,
               fcw_ref, fcb_ref, o_ref):
        x = x_ref[...].astype(jnp.float32)                           # (N, Cpad) f32
        for j in range(nblocks):
            y = jnp.maximum((x * dwc_ref[j]) * dws_ref[j] + dwb_ref[j], 0.0)
            z = jnp.dot(y.astype(jnp.bfloat16), pww_ref[j],
                        preferred_element_type=jnp.float32)
            x = jnp.maximum(z * pws_ref[j] + pwb_ref[j], 0.0)
        logits = jnp.dot(x.astype(jnp.bfloat16), fcw_ref[...],
                         preferred_element_type=jnp.float32) + fcb_ref[...]
        m = jnp.max(logits, axis=1, keepdims=True)
        e = jnp.exp(logits - m)
        s = jnp.sum(e, axis=1, keepdims=True)
        r = pl.reciprocal(s, approx=True)                            # EUP slot
        r = r * (2.0 - s * r)                                        # Newton refine (keeps
        r = r * (2.0 - s * r)                                        #  sum(probs)=1 to ~1e-7)
        o_ref[...] = e * r
    return kernel


def _head_kernel(x_ref, w_ref, b_ref, o_ref):
    # Fallback head (only used if spatial never collapses to 1x1x1).
    # TODO(synk): assumes the AvgPool3d kernel covers the full remaining spatial extent.
    x = jnp.mean(x_ref[...].astype(jnp.float32), axis=1)             # (N, Cpad)
    logits = jnp.dot(x.astype(jnp.bfloat16), w_ref[...],
                     preferred_element_type=jnp.float32) + b_ref[...]
    m = jnp.max(logits, axis=1, keepdims=True)
    e = jnp.exp(logits - m)
    s = jnp.sum(e, axis=1, keepdims=True)
    r = pl.reciprocal(s, approx=True)
    r = r * (2.0 - s * r)
    r = r * (2.0 - s * r)
    o_ref[...] = e * r


# ----------------------------- pallas_call wrappers -----------------------------

def stem_matmul_bn_relu(cols, w, scale, bias):
    m, kp = cols.shape
    cout = w.shape[1]
    tm = _pick_tile(m)
    return pl.pallas_call(
        _stem_kernel,
        out_shape=jax.ShapeDtypeStruct((m, cout), jnp.bfloat16),
        grid=(m // tm,),
        in_specs=[
            pl.BlockSpec((tm, kp), lambda i: (i, 0)),
            pl.BlockSpec((kp, cout), lambda i: (0, 0)),
            pl.BlockSpec((1, cout), lambda i: (0, 0)),
            pl.BlockSpec((1, cout), lambda i: (0, 0)),
        ],
        out_specs=pl.BlockSpec((tm, cout), lambda i: (i, 0)),
        compiler_params=pltpu.CompilerParams(
            dimension_semantics=("parallel",),
            vmem_limit_bytes=32 * 1024 * 1024),
    )(cols, w, scale, bias)


def fused_block(xp, dw_w, dw_s, dw_b, pw_w, pw_s, pw_b, stride):
    # xp: (N, D+2, H+2, W+2, Cin) bf16 halo-padded activation.
    n, dp, hp, wp, cin = xp.shape
    sd, sh, sw = stride
    d, h, w = dp - 2, hp - 2, wp - 2
    do = (d - 1) // sd + 1
    ho = (h - 1) // sh + 1
    cout = pw_w.shape[1]
    kernel = functools.partial(_block_kernel, sd=sd, sh=sh, Ho=ho, W=w)
    return pl.pallas_call(
        kernel,
        out_shape=jax.ShapeDtypeStruct((n, do, ho, w, cout), jnp.bfloat16),
        grid=(n, do),
        in_specs=[
            pl.BlockSpec((1, dp, hp, wp, cin), lambda b, j: (b, 0, 0, 0, 0)),
            pl.BlockSpec((27, 1, cin), lambda b, j: (0, 0, 0)),
            pl.BlockSpec((1, cin), lambda b, j: (0, 0)),
            pl.BlockSpec((1, cin), lambda b, j: (0, 0)),
            pl.BlockSpec((cin, cout), lambda b, j: (0, 0)),
            pl.BlockSpec((1, cout), lambda b, j: (0, 0)),
            pl.BlockSpec((1, cout), lambda b, j: (0, 0)),
        ],
        out_specs=pl.BlockSpec((1, 1, ho, w, cout), lambda b, j: (b, j, 0, 0, 0)),
        compiler_params=pltpu.CompilerParams(
            dimension_semantics=("parallel", "parallel"),   # megacore sharding on v7x
            vmem_limit_bytes=32 * 1024 * 1024),
    )(xp, dw_w, dw_s, dw_b, pw_w, pw_s, pw_b)


def fused_tail(x, dwc, dws, dwb, pww, pws, pwb, fc_w, fc_b):
    n, cpad = x.shape[0], fc_w.shape[1]
    return pl.pallas_call(
        _make_tail_kernel(dwc.shape[0]),
        out_shape=jax.ShapeDtypeStruct((n, cpad), jnp.float32),
        in_specs=[_VMEM] * 9,
        out_specs=_VMEM,
    )(x, dwc, dws, dwb, pww, pws, pwb, fc_w, fc_b)


def head(x3d, fc_w, fc_b):
    n, cpad = x3d.shape[0], fc_w.shape[1]
    return pl.pallas_call(
        _head_kernel,
        out_shape=jax.ShapeDtypeStruct((n, cpad), jnp.float32),
        in_specs=[_VMEM] * 3,
        out_specs=_VMEM,
    )(x3d, fc_w, fc_b)


# ----------------------------- glue (layout only) -----------------------------

def im2col_3d(x, stride, ksize=3, pad=1):
    """Stem only. x: (N, D, H, W, C) -> (27, N, Do, Ho, Wo, C) kernel-tap patches."""
    n, d, h, w, _ = x.shape
    sd, sh, sw = stride
    xp = jnp.pad(x, ((0, 0), (pad, pad), (pad, pad), (pad, pad), (0, 0)))
    do = (d + 2 * pad - ksize) // sd + 1
    ho = (h + 2 * pad - ksize) // sh + 1
    wo = (w + 2 * pad - ksize) // sw + 1
    taps = []
    for kd in range(ksize):
        for kh in range(ksize):
            for kw in range(ksize):
                taps.append(xp[:, kd:kd + sd * do:sd,
                               kh:kh + sh * ho:sh,
                               kw:kw + sw * wo:sw, :])
    return jnp.stack(taps, axis=0), (n, do, ho, wo)


# ----------------------------- parameters -----------------------------

def _fold_bn(key, c, cpad):
    # Inference-mode BatchNorm folded to per-channel scale/bias, zero-padded to cpad lanes.
    # TODO(synk): training-mode BN (batch statistics) not implemented.
    k1, k2, k3, k4 = jax.random.split(key, 4)
    gamma = 1.0 + 0.1 * jax.random.normal(k1, (c,), jnp.float32)
    beta = 0.1 * jax.random.normal(k2, (c,), jnp.float32)
    mean = 0.1 * jax.random.normal(k3, (c,), jnp.float32)
    var = 0.5 + jnp.abs(jax.random.normal(k4, (c,), jnp.float32))
    scale = gamma / jnp.sqrt(var + BN_EPS)
    bias = beta - mean * scale
    scale = jnp.pad(scale.reshape(1, c), ((0, 0), (0, cpad - c)))
    bias = jnp.pad(bias.reshape(1, c), ((0, 0), (0, cpad - c)))
    return scale, bias


def init_params(key, config_file, architecture_config):
    num_classes = config_file['train']['num_classes']
    width_mult = architecture_config['width_mult']
    input_channel = int(32 * width_mult)
    last_channel = int(1024 * width_mult)
    cfg = [[64, 1, (2, 2, 2)], [128, 2, (2, 2, 2)], [256, 2, (2, 2, 2)],
           [512, 6, (2, 2, 2)], [1024, 2, (1, 1, 1)]]

    kpad = _round_up(27 * 3, 128)  # stem im2col contracting dim 81 -> 128
    keys = iter(jax.random.split(key, 64))
    params = {'num_classes': num_classes}

    # stem: Conv3d(3, input_channel, 3, stride=(1,2,2), pad=1, bias=False) + BN + ReLU
    c0p = _round_up(input_channel, 128)
    w = jax.random.normal(next(keys), (27 * 3, input_channel), jnp.float32) / math.sqrt(81.0)
    w = jnp.pad(w, ((0, kpad - 27 * 3), (0, c0p - input_channel)))
    s, b = _fold_bn(next(keys), input_channel, c0p)
    params['stem'] = {'w': w.astype(jnp.bfloat16), 'scale': s, 'bias': b,
                      'stride': (1, 2, 2)}

    blocks = []
    in_c = input_channel
    for c, n, strd in cfg:
        out_c = int(c * width_mult)
        for i in range(n):
            stride = strd if i == 0 else (1, 1, 1)
            cin_p = _round_up(in_c, 128)    # per-layer lane padding
            cout_p = _round_up(out_c, 128)
            dw = jax.random.normal(next(keys), (27, in_c), jnp.float32) / math.sqrt(27.0)
            dw = jnp.pad(dw, ((0, 0), (0, cin_p - in_c))).reshape(27, 1, cin_p)
            dws, dwb = _fold_bn(next(keys), in_c, cin_p)
            pw = jax.random.normal(next(keys), (in_c, out_c), jnp.float32) / math.sqrt(in_c)
            pw = jnp.pad(pw, ((0, cin_p - in_c), (0, cout_p - out_c))).astype(jnp.bfloat16)
            pws, pwb = _fold_bn(next(keys), out_c, cout_p)
            blocks.append({'stride': stride, 'cin_pad': cin_p, 'cout_pad': cout_p,
                           'dw_w': dw, 'dw_scale': dws, 'dw_bias': dwb,
                           'pw_w': pw, 'pw_scale': pws, 'pw_bias': pwb})
            in_c = out_c
    params['blocks'] = blocks

    cls_p = _round_up(max(num_classes, 128), 128)
    lc_p = _round_up(last_channel, 128)
    fc_w = jax.random.normal(next(keys), (last_channel, num_classes),
                             jnp.float32) / math.sqrt(last_channel)
    params['fc_w'] = jnp.pad(fc_w, ((0, lc_p - last_channel),
                                    (0, cls_p - num_classes))).astype(jnp.bfloat16)
    fc_b = 0.1 * jax.random.normal(next(keys), (1, num_classes), jnp.float32)
    # padded class logits get -1e30 (additive only) -> exactly zero probability after softmax
    params['fc_b'] = jnp.concatenate(
        [fc_b, jnp.full((1, cls_p - num_classes), -1e30, jnp.float32)], axis=1)
    return params


# ----------------------------- forward -----------------------------

def mobilenet_forward(params, x_ncdhw):
    # QuantStub / DeQuantStub: identity (no quantized backend conversion).
    x = jnp.transpose(x_ncdhw, (0, 2, 3, 4, 1)).astype(jnp.float32)   # NCDHW -> NDHWC

    # stem conv_bn: host im2col (3-channel input) + tiled matmul + BN + ReLU on the MXU.
    p = params['stem']
    taps, (n, do, ho, wo) = im2col_3d(x, p['stride'])
    k, c = taps.shape[0], taps.shape[-1]
    cols = jnp.transpose(taps, (1, 2, 3, 4, 0, 5)).reshape(n * do * ho * wo, k * c)
    cols = jnp.pad(cols, ((0, 0), (0, p['w'].shape[0] - k * c))).astype(jnp.bfloat16)
    y = stem_matmul_bn_relu(cols, p['w'], p['scale'], p['bias'])
    x = y.reshape(n, do, ho, wo, p['w'].shape[1])                     # bf16 activations

    # Blocks with non-trivial spatial extent: one fused (dw+BN+ReLU+pw+BN+ReLU) kernel each,
    # gridded over (batch, out-depth); taps generated in-kernel from the halo-padded input.
    blocks = params['blocks']
    bi = 0
    while bi < len(blocks) and x.shape[1:4] != (1, 1, 1):
        bp = blocks[bi]
        sw = bp['stride'][2]
        xp = jnp.pad(x, ((0, 0), (1, 1), (1, 1), (1, 1), (0, 0)))     # halo pad only (bf16)
        out = fused_block(xp, bp['dw_w'], bp['dw_scale'], bp['dw_bias'],
                          bp['pw_w'], bp['pw_scale'], bp['pw_bias'], bp['stride'])
        if sw > 1:
            out = out[:, :, :, ::sw, :]                               # W-stride subsample (XLA)
        x = out
        bi += 1

    if bi < len(blocks):
        # Spatial extent is 1x1x1: remaining blocks + AvgPool3d (identity at 1x1x1) +
        # flatten + Dropout(eval: identity) + Linear + Softmax fused in one kernel.
        # TODO(synk): training-mode Dropout RNG masking not implemented (eval semantics).
        tail = blocks[bi:]
        tail_cpad = max([b['cin_pad'] for b in tail] + [b['cout_pad'] for b in tail]
                        + [params['fc_w'].shape[0]])

        def padc(a, axis):
            widths = [(0, 0)] * a.ndim
            widths[axis] = (0, tail_cpad - a.shape[axis])
            return jnp.pad(a, widths)

        dwc = jnp.stack([padc(b['dw_w'][13], 1) for b in tail])   # center tap (pad-1, 1x1x1)
        dws = jnp.stack([padc(b['dw_scale'], 1) for b in tail])
        dwb = jnp.stack([padc(b['dw_bias'], 1) for b in tail])
        pww = jnp.stack([padc(padc(b['pw_w'], 0), 1) for b in tail])
        pws = jnp.stack([padc(b['pw_scale'], 1) for b in tail])
        pwb = jnp.stack([padc(b['pw_bias'], 1) for b in tail])
        fc_w = padc(params['fc_w'], 0)
        xv = padc(x.reshape(x.shape[0], x.shape[-1]), 1)
        probs = fused_tail(xv, dwc, dws, dwb, pww, pws, pwb, fc_w, params['fc_b'])
    else:
        # Fallback: global average pool over the remaining positions + linear + softmax.
        n, d, h, w, _ = x.shape
        probs = head(x.reshape(n, d * h * w, x.shape[-1]), params['fc_w'], params['fc_b'])

    return probs[:, :params['num_classes']]


# ----------------------------- main -----------------------------

if __name__ == "__main__":
    config_file = {'train': {'num_classes': 5},
                   'data': {'n_frame': 8, 'frame_size': 16}}
    architecture_config = {'width_mult': 0.125, 'dropout_prob': 0.2,
                           'pool': {'kernel': 1, 'width': 1, 'height': 1}}

    key = jax.random.PRNGKey(0)
    pkey, xkey = jax.random.split(key)
    params = init_params(pkey, config_file, architecture_config)

    batch = 2
    x = jax.random.normal(
        xkey,
        (batch, 3, config_file['data']['n_frame'],
         config_file['data']['frame_size'], config_file['data']['frame_size']),
        jnp.float32)

    fwd = jax.jit(functools.partial(mobilenet_forward, params))
    out = fwd(x)
    jax.block_until_ready(out)

    assert out.shape == (batch, config_file['train']['num_classes'])
    assert bool(jnp.allclose(jnp.sum(out, axis=1), 1.0, atol=1e-5))
    print("KERNEL_OK")
</pallas_src>

<mosaic_0001>
module attributes {stable_mosaic.version = 11 : i64} {
  func.func @_stem_kernel(%arg0: i32, %arg1: memref<512x128xbf16, #tpu.memory_space<vmem>>, %arg2: memref<128x128xbf16, #tpu.memory_space<vmem>>, %arg3: memref<1x128xf32, #tpu.memory_space<vmem>>, %arg4: memref<1x128xf32, #tpu.memory_space<vmem>>, %arg5: memref<512x128xbf16, #tpu.memory_space<vmem>>) attributes {dimension_semantics = [#tpu.dimension_semantics<parallel>], iteration_bounds = array<i64: 2>, scalar_prefetch = 0 : i64, scratch_operands = 0 : i64, tpu.core_type = #tpu.core_type<tc>, window_params = [{transform_indices = @transform_0, window_bounds = array<i64: 512, 128>}, {pipeline_mode = #tpu.pipeline_mode<synchronous>, transform_indices = @transform_1, window_bounds = array<i64: 128, 128>}, {pipeline_mode = #tpu.pipeline_mode<synchronous>, transform_indices = @transform_2, window_bounds = array<i64: 1, 128>}, {pipeline_mode = #tpu.pipeline_mode<synchronous>, transform_indices = @transform_3, window_bounds = array<i64: 1, 128>}, {transform_indices = @transform_4, window_bounds = array<i64: 512, 128>}]} {
    %c0 = arith.constant 0 : index
    %c0_0 = arith.constant 0 : index
    %0 = vector.load %arg1[%c0, %c0_0] : memref<512x128xbf16, #tpu.memory_space<vmem>>, vector<512x128xbf16>
    %c0_1 = arith.constant 0 : index
    %c0_2 = arith.constant 0 : index
    %1 = vector.load %arg2[%c0_1, %c0_2] : memref<128x128xbf16, #tpu.memory_space<vmem>>, vector<128x128xbf16>
    %cst = arith.constant dense<0.000000e+00> : vector<512x128xf32>
    %2 = tpu.matmul %0, %1, %cst {dimension_numbers = #tpu.dot_dimension_numbers<[1], [0], [0], [1], [0, 0, 1, 1], [], []>} : vector<512x128xbf16>, vector<128x128xbf16>, vector<512x128xf32> -> vector<512x128xf32>
    %c0_3 = arith.constant 0 : index
    %c0_4 = arith.constant 0 : index
    %3 = vector.load %arg3[%c0_3, %c0_4] : memref<1x128xf32, #tpu.memory_space<vmem>>, vector<1x128xf32>
    %4 = vector.broadcast %3 : vector<1x128xf32> to vector<512x128xf32>
    %5 = arith.mulf %2, %4 : vector<512x128xf32>
    %c0_5 = arith.constant 0 : index
    %c0_6 = arith.constant 0 : index
    %6 = vector.load %arg4[%c0_5, %c0_6] : memref<1x128xf32, #tpu.memory_space<vmem>>, vector<1x128xf32>
    %7 = vector.broadcast %6 : vector<1x128xf32> to vector<512x128xf32>
    %8 = arith.addf %5, %7 : vector<512x128xf32>
    %cst_7 = arith.constant 0.000000e+00 : f32
    %9 = vector.broadcast %cst_7 : f32 to vector<512x128xf32>
    %10 = arith.maximumf %8, %9 : vector<512x128xf32>
    %11 = arith.truncf %10 : vector<512x128xf32> to vector<512x128xbf16>
    %c0_8 = arith.constant 0 : index
    %c0_9 = arith.constant 0 : index
    %12 = vector.load %arg5[%c0_8, %c0_9] : memref<512x128xbf16, #tpu.memory_space<vmem>>, vector<512x128xbf16>
    tpu.vector_store %arg5[%c0_8, %c0_9], %11 {strides = array<i32>} : memref<512x128xbf16, #tpu.memory_space<vmem>>, vector<512x128xbf16>,
    return
  }
  func.func @transform_0(%arg0: i32) -> (i32, i32) {
    %c0_i32 = arith.constant 0 : i32
    %c0_i32_0 = arith.constant 0 : i32
    return %arg0, %c0_i32 : i32, i32
  }
  func.func @transform_1(%arg0: i32) -> (i32, i32) {
    %c0_i32 = arith.constant 0 : i32
    %c0_i32_0 = arith.constant 0 : i32
    %c0_i32_1 = arith.constant 0 : i32
    return %c0_i32, %c0_i32_0 : i32, i32
  }
  func.func @transform_2(%arg0: i32) -> (i32, i32) {
    %c0_i32 = arith.constant 0 : i32
    %c0_i32_0 = arith.constant 0 : i32
    %c0_i32_1 = arith.constant 0 : i32
    return %c0_i32, %c0_i32_0 : i32, i32
  }
  func.func @transform_3(%arg0: i32) -> (i32, i32) {
    %c0_i32 = arith.constant 0 : i32
    %c0_i32_0 = arith.constant 0 : i32
    %c0_i32_1 = arith.constant 0 : i32
    return %c0_i32, %c0_i32_0 : i32, i32
  }
  func.func @transform_4(%arg0: i32) -> (i32, i32) {
    %c0_i32 = arith.constant 0 : i32
    %c0_i32_0 = arith.constant 0 : i32
    return %arg0, %c0_i32 : i32, i32
  }
}

module attributes {stable_mosaic.version = 11 : i64} {
  func.func @_block_kernel(%arg0: i32, %arg1: i32, %arg2: memref<1x10x10x10x128xbf16, #tpu.memory_space<vmem>>, %arg3: memref<27x1x128xf32, #tpu.memory_space<vmem>>, %arg4: memref<1x128xf32, #tpu.memory_space<vmem>>, %arg5: memref<1x128xf32, #tpu.memory_space<vmem>>, %arg6: memref<128x128xbf16, #tpu.memory_space<vmem>>, %arg7: memref<1x128xf32, #tpu.memory_space<vmem>>, %arg8: memref<1x128xf32, #tpu.memory_space<vmem>>, %arg9: memref<1x1x4x8x128xbf16, #tpu.memory_space<vmem>>) attributes {dimension_semantics = [#tpu.dimension_semantics<parallel>, #tpu.dimension_semantics<parallel>], iteration_bounds = array<i64: 2, 4>, scalar_prefetch = 0 : i64, scratch_operands = 0 : i64, tpu.core_type = #tpu.core_type<tc>, window_params = [{transform_indices = @transform_0, window_bounds = array<i64: 1, 10, 10, 10, 128>}, {pipeline_mode = #tpu.pipeline_mode<synchronous>, transform_indices = @transform_1, window_bounds = array<i64: 27, 1, 128>}, {pipeline_mode = #tpu.pipeline_mode<synchronous>, transform_indices = @transform_2, window_bounds = array<i64: 1, 128>}, {pipeline_mode = #tpu.pipeline_mode<synchronous>, transform_indices = @transform_3, window_bounds = array<i64: 1, 128>}, {pipeline_mode = #tpu.pipeline_mode<synchronous>, transform_indices = @transform_4, window_bounds = array<i64: 128, 128>}, {pipeline_mode = #tpu.pipeline_mode<synchronous>, transform_indices = @transform_5, window_bounds = array<i64: 1, 128>}, {pipeline_mode = #tpu.pipeline_mode<synchronous>, transform_indices = @transform_6, window_bounds = array<i64: 1, 128>}, {transform_indices = @transform_7, window_bounds = array<i64: 1, 1, 4, 8, 128>}]} {
    %c2_i32 = arith.constant 2 : i32
    %0 = arith.muli %arg1, %c2_i32 : i32
    %c0_i32 = arith.constant 0 : i32
    %1 = arith.addi %0, %c0_i32 : i32
    %c0 = arith.constant 0 : index
    %2 = arith.index_cast %1 : i32 to index
    %c0_0 = arith.constant 0 : index
    %c0_1 = arith.constant 0 : index
    %c0_2 = arith.constant 0 : index
    %3 = vector.load %arg2[%c0, %2, %c0_0, %c0_1, %c0_2] : memref<1x10x10x10x128xbf16, #tpu.memory_space<vmem>>, vector<1x1x10x10x128xbf16>
    %4 = vector.shape_cast %3 : vector<1x1x10x10x128xbf16> to vector<10x10x128xbf16>
    %c0_3 = arith.constant 0 : index
    %c0_4 = arith.constant 0 : index
    %c0_5 = arith.constant 0 : index
    %5 = vector.load %arg3[%c0_3, %c0_4, %c0_5] : memref<27x1x128xf32, #tpu.memory_space<vmem>>, vector<1x1x128xf32>
    %6 = vector.shape_cast %5 : vector<1x1x128xf32> to vector<1x128xf32>
    %c1 = arith.constant 1 : index
    %c0_6 = arith.constant 0 : index
    %c0_7 = arith.constant 0 : index
    %7 = vector.load %arg3[%c1, %c0_6, %c0_7] : memref<27x1x128xf32, #tpu.memory_space<vmem>>, vector<1x1x128xf32>
    %8 = vector.shape_cast %7 : vector<1x1x128xf32> to vector<1x128xf32>
    %c2 = arith.constant 2 : index
    %c0_8 = arith.constant 0 : index
    %c0_9 = arith.constant 0 : index
    %9 = vector.load %arg3[%c2, %c0_8, %c0_9] : memref<27x1x128xf32, #tpu.memory_space<vmem>>, vector<1x1x128xf32>
    %10 = vector.shape_cast %9 : vector<1x1x128xf32> to vector<1x128xf32>
    %11 = vector.extract_strided_slice %4 {offsets = [0, 0, 0], sizes = [1, 10, 128], strides = [1, 1, 1]} : vector<10x10x128xbf16> to vector<1x10x128xbf16>
    %12 = vector.shape_cast %11 : vector<1x10x128xbf16> to vector<10x128xbf16>
    %13 = arith.extf %12 : vector<10x128xbf16> to vector<10x128xf32>
    %14 = vector.extract_strided_slice %13 {offsets = [0, 0], sizes = [8, 128], strides = [1, 1]} : vector<10x128xf32> to vector<8x128xf32>
    %15 = vector.broadcast %6 : vector<1x128xf32> to vector<8x128xf32>
    %16 = arith.mulf %14, %15 : vector<8x128xf32>
    %17 = vector.extract_strided_slice %13 {offsets = [1, 0], sizes = [8, 128], strides = [1, 1]} : vector<10x128xf32> to vector<8x128xf32>
    %18 = vector.broadcast %8 : vector<1x128xf32> to vector<8x128xf32>
    %19 = arith.mulf %17, %18 : vector<8x128xf32>
    %20 = arith.addf %16, %19 : vector<8x128xf32>
    %21 = vector.extract_strided_slice %13 {offsets = [2, 0], sizes = [8, 128], strides = [1, 1]} : vector<10x128xf32> to vector<8x128xf32>
    %22 = vector.broadcast %10 : vector<1x128xf32> to vector<8x128xf32>
    %23 = arith.mulf %21, %22 : vector<8x128xf32>
    %24 = arith.addf %20, %23 : vector<8x128xf32>
    %25 = vector.extract_strided_slice %4 {offsets = [2, 0, 0], sizes = [1, 10, 128], strides = [1, 1, 1]} : vector<10x10x128xbf16> to vector<1x10x128xbf16>
    %26 = vector.shape_cast %25 : vector<1x10x128xbf16> to vector<10x128xbf16>
    %27 = arith.extf %26 : vector<10x128xbf16> to vector<10x128xf32>
    %28 = vector.extract_strided_slice %27 {offsets = [0, 0], sizes = [8, 128], strides = [1, 1]} : vector<10x128xf32> to vector<8x128xf32>
    %29 = vector.broadcast %6 : vector<1x128xf32> to vector<8x128xf32>
    %30 = arith.mulf %28, %29 : vector<8x128xf32>
    %31 = vector.extract_strided_slice %27 {offsets = [1, 0], sizes = [8, 128], strides = [1, 1]} : vector<10x128xf32> to vector<8x128xf32>
    %32 = vector.broadcast %8 : vector<1x128xf32> to vector<8x128xf32>
    %33 = arith.mulf %31, %32 : vector<8x128xf32>
    %34 = arith.addf %30, %33 : vector<8x128xf32>
    %35 = vector.extract_strided_slice %27 {offsets = [2, 0], sizes = [8, 128], strides = [1, 1]} : vector<10x128xf32> to vector<8x128xf32>
    %36 = vector.broadcast %10 : vector<1x128xf32> to vector<8x128xf32>
    %37 = arith.mulf %35, %36 : vector<8x128xf32>
    %38 = arith.addf %34, %37 : vector<8x128xf32>
    %39 = vector.extract_strided_slice %4 {offsets = [4, 0, 0], sizes = [1, 10, 128], strides = [1, 1, 1]} : vector<10x10x128xbf16> to vector<1x10x128xbf16>
    %40 = vector.shape_cast %39 : vector<1x10x128xbf16> to vector<10x128xbf16>
    %41 = arith.extf %40 : vector<10x128xbf16> to vector<10x128xf32>
    %42 = vector.extract_strided_slice %41 {offsets = [0, 0], sizes = [8, 128], strides = [1, 1]} : vector<10x128xf32> to vector<8x128xf32>
    %43 = vector.broadcast %6 : vector<1x128xf32> to vector<8x128xf32>
    %44 = arith.mulf %42, %43 : vector<8x128xf32>
    %45 = vector.extract_strided_slice %41 {offsets = [1, 0], sizes = [8, 128], strides = [1, 1]} : vector<10x128xf32> to vector<8x128xf32>
    %46 = vector.broadcast %8 : vector<1x128xf32> to vector<8x128xf32>
    %47 = arith.mulf %45, %46 : vector<8x128xf32>
    %48 = arith.addf %44, %47 : vector<8x128xf32>
    %49 = vector.extract_strided_slice %41 {offsets = [2, 0], sizes = [8, 128], strides = [1, 1]} : vector<10x128xf32> to vector<8x128xf32>
    %50 = vector.broadcast %10 : vector<1x128xf32> to vector<8x128xf32>
    %51 = arith.mulf %49, %50 : vector<8x128xf32>
    %52 = arith.addf %48, %51 : vector<8x128xf32>
    %53 = vector.extract_strided_slice %4 {offsets = [6, 0, 0], sizes = [1, 10, 128], strides = [1, 1, 1]} : vector<10x10x128xbf16> to vector<1x10x128xbf16>
    %54 = vector.shape_cast %53 : vector<1x10x128xbf16> to vector<10x128xbf16>
    %55 = arith.extf %54 : vector<10x128xbf16> to vector<10x128xf32>
    %56 = vector.extract_strided_slice %55 {offsets = [0, 0], sizes = [8, 128], strides = [1, 1]} : vector<10x128xf32> to vector<8x128xf32>
    %57 = vector.broadcast %6 : vector<1x128xf32> to vector<8x128xf32>
    %58 = arith.mulf %56, %57 : vector<8x128xf32>
    %59 = vector.extract_strided_slice %55 {offsets = [1, 0], sizes = [8, 128], strides = [1, 1]} : vector<10x128xf32> to vector<8x128xf32>
    %60 = vector.broadcast %8 : vector<1x128xf32> to vector<8x128xf32>
    %61 = arith.mulf %59, %60 : vector<8x128xf32>
    %62 = arith.addf %58, %61 : vector<8x128xf32>
    %63 = vector.extract_strided_slice %55 {offsets = [2, 0], sizes = [8, 128], strides = [1, 1]} : vector<10x128xf32> to vector<8x128xf32>
    %64 = vector.broadcast %10 : vector<1x128xf32> to vector<8x128xf32>
    %65 = arith.mulf %63, %64 : vector<8x128xf32>
    %66 = arith.addf %62, %65 : vector<8x128xf32>
    %c3 = arith.constant 3 : index
    %c0_10 = arith.constant 0 : index
    %c0_11 = arith.constant 0 : index
    %67 = vector.load %arg3[%c3, %c0_10, %c0_11] : memref<27x1x128xf32, #tpu.memory_space<vmem>>, vector<1x1x128xf32>
    %68 = vector.shape_cast %67 : vector<1x1x128xf32> to vector<1x128xf32>
    %c4 = arith.constant 4 : index
    %c0_12 = arith.constant 0 : index
    %c0_13 = arith.constant 0 : index
    %69 = vector.load %arg3[%c4, %c0_12, %c0_13] : memref<27x1x128xf32, #tpu.memory_space<vmem>>, vector<1x1x128xf32>
    %70 = vector.shape_cast %69 : vector<1x1x128xf32> to vector<1x128xf32>
    %c5 = arith.constant 5 : index
    %c0_14 = arith.constant 0 : index
    %c0_15 = arith.constant 0 : index
    %71 = vector.load %arg3[%c5, %c0_14, %c0_15] : memref<27x1x128xf32, #tpu.memory_space<vmem>>, vector<1x1x128xf32>
    %72 = vector.shape_cast %71 : vector<1x1x128xf32> to vector<1x128xf32>
    %73 = vector.extract_strided_slice %4 {offsets = [1, 0, 0], sizes = [1, 10, 128], strides = [1, 1, 1]} : vector<10x10x128xbf16> to vector<1x10x128xbf16>
    %74 = vector.shape_cast %73 : vector<1x10x128xbf16> to vector<10x128xbf16>
    %75 = arith.extf %74 : vector<10x128xbf16> to vector<10x128xf32>
    %76 = vector.extract_strided_slice %75 {offsets = [0, 0], sizes = [8, 128], strides = [1, 1]} : vector<10x128xf32> to vector<8x128xf32>
    %77 = vector.broadcast %68 : vector<1x128xf32> to vector<8x128xf32>
    %78 = arith.mulf %76, %77 : vector<8x128xf32>
    %79 = arith.addf %24, %78 : vector<8x128xf32>
    %80 = vector.extract_strided_slice %75 {offsets = [1, 0], sizes = [8, 128], strides = [1, 1]} : vector<10x128xf32> to vector<8x128xf32>
    %81 = vector.broadcast %70 : vector<1x128xf32> to vector<8x128xf32>
    %82 = arith.mulf %80, %81 : vector<8x128xf32>
    %83 = arith.addf %79, %82 : vector<8x128xf32>
    %84 = vector.extract_strided_slice %75 {offsets = [2, 0], sizes = [8, 128], strides = [1, 1]} : vector<10x128xf32> to vector<8x128xf32>
    %85 = vector.broadcast %72 : vector<1x128xf32> to vector<8x128xf32>
    %86 = arith.mulf %84, %85 : vector<8x128xf32>
    %87 = arith.addf %83, %86 : vector<8x128xf32>
    %88 = vector.extract_strided_slice %4 {offsets = [3, 0, 0], sizes = [1, 10, 128], strides = [1, 1, 1]} : vector<10x10x128xbf16> to vector<1x10x128xbf16>
    %89 = vector.shape_cast %88 : vector<1x10x128xbf16> to vector<10x128xbf16>
    %90 = arith.extf %89 : vector<10x128xbf16> to vector<10x128xf32>
    %91 = vector.extract_strided_slice %90 {offsets = [0, 0], sizes = [8, 128], strides = [1, 1]} : vector<10x128xf32> to vector<8x128xf32>
    %92 = vector.broadcast %68 : vector<1x128xf32> to vector<8x128xf32>
    %93 = arith.mulf %91, %92 : vector<8x128xf32>
    %94 = arith.addf %38, %93 : vector<8x128xf32>
    %95 = vector.extract_strided_slice %90 {offsets = [1, 0], sizes = [8, 128], strides = [1, 1]} : vector<10x128xf32> to vector<8x128xf32>
    %96 = vector.broadcast %70 : vector<1x128xf32> to vector<8x128xf32>
    %97 = arith.mulf %95, %96 : vector<8x128xf32>
    %98 = arith.addf %94, %97 : vector<8x128xf32>
    %99 = vector.extract_strided_slice %90 {offsets = [2, 0], sizes = [8, 128], strides = [1, 1]} : vector<10x128xf32> to vector<8x128xf32>
    %100 = vector.broadcast %72 : vector<1x128xf32> to vector<8x128xf32>
    %101 = arith.mulf %99, %100 : vector<8x128xf32>
    %102 = arith.addf %98, %101 : vector<8x128xf32>
    %103 = vector.extract_strided_slice %4 {offsets = [5, 0, 0], sizes = [1, 10, 128], strides = [1, 1, 1]} : vector<10x10x128xbf16> to vector<1x10x128xbf16>
    %104 = vector.shape_cast %103 : vector<1x10x128xbf16> to vector<10x128xbf16>
    %105 = arith.extf %104 : vector<10x128xbf16> to vector<10x128xf32>
    %106 = vector.extract_strided_slice %105 {offsets = [0, 0], sizes = [8, 128], strides = [1, 1]} : vector<10x128xf32> to vector<8x128xf32>
    %107 = vector.broadcast %68 : vector<1x128xf32> to vector<8x128xf32>
    %108 = arith.mulf %106, %107 : vector<8x128xf32>
    %109 = arith.addf %52, %108 : vector<8x128xf32>
    %110 = vector.extract_strided_slice %105 {offsets = [1, 0], sizes = [8, 128], strides = [1, 1]} : vector<10x128xf32> to vector<8x128xf32>
    %111 = vector.broadcast %70 : vector<1x128xf32> to vector<8x128xf32>
    %112 = arith.mulf %110, %111 : vector<8x128xf32>
    %113 = arith.addf %109, %112 : vector<8x128xf32>
    %114 = vector.extract_strided_slice %105 {offsets = [2, 0], sizes = [8, 128], strides = [1, 1]} : vector<10x128xf32> to vector<8x128xf32>
    %115 = vector.broadcast %72 : vector<1x128xf32> to vector<8x128xf32>
    %116 = arith.mulf %114, %115 : vector<8x128xf32>
    %117 = arith.addf %113, %116 : vector<8x128xf32>
    %118 = vector.extract_strided_slice %4 {offsets = [7, 0, 0], sizes = [1, 10, 128], strides = [1, 1, 1]} : vector<10x10x128xbf16> to vector<1x10x128xbf16>
    %119 = vector.shape_cast %118 : vector<1x10x128xbf16> to vector<10x128xbf16>
    %120 = arith.extf %119 : vector<10x128xbf16> to vector<10x128xf32>
    %121 = vector.extract_strided_slice %120 {offsets = [0, 0], sizes = [8, 128], strides = [1, 1]} : vector<10x128xf32> to vector<8x128xf32>
    %122 = vector.broadcast %68 : vector<1x128xf32> to vector<8x128xf32>
    %123 = arith.mulf %121, %122 : vector<8x128xf32>
    %124 = arith.addf %66, %123 : vector<8x128xf32>
    %125 = vector.extract_strided_slice %120 {offsets = [1, 0], sizes = [8, 128], strides = [1, 1]} : vector<10x128xf32> to vector<8x128xf32>
    %126 = vector.broadcast %70 : vector<1x128xf32> to vector<8x128xf32>
    %127 = arith.mulf %125, %126 : vector<8x128xf32>
    %128 = arith.addf %124, %127 : vector<8x128xf32>
    %129 = vector.extract_strided_slice %120 {offsets = [2, 0], sizes = [8, 128], strides = [1, 1]} : vector<10x128xf32> to vector<8x128xf32>
    %130 = vector.broadcast %72 : vector<1x128xf32> to vector<8x128xf32>
    %131 = arith.mulf %129, %130 : vector<8x128xf32>
    %132 = arith.addf %128, %131 : vector<8x128xf32>
    %c6 = arith.constant 6 : index
    %c0_16 = arith.constant 0 : index
    %c0_17 = arith.constant 0 : index
    %133 = vector.load %arg3[%c6, %c0_16, %c0_17] : memref<27x1x128xf32, #tpu.memory_space<vmem>>, vector<1x1x128xf32>
    %134 = vector.shape_cast %133 : vector<1x1x128xf32> to vector<1x128xf32>
    %c7 = arith.constant 7 : index
    %c0_18 = arith.constant 0 : index
    %c0_19 = arith.constant 0 : index
    %135 = vector.load %arg3[%c7, %c0_18, %c0_19] : memref<27x1x128xf32, #tpu.memory_space<vmem>>, vector<1x1x128xf32>
    %136 = vector.shape_cast %135 : vector<1x1x128xf32> to vector<1x128xf32>
    %c8 = arith.constant 8 : index
    %c0_20 = arith.constant 0 : index
    %c0_21 = arith.constant 0 : index
    %137 = vector.load %arg3[%c8, %c0_20, %c0_21] : memref<27x1x128xf32, #tpu.memory_space<vmem>>, vector<1x1x128xf32>
    %138 = vector.shape_cast %137 : vector<1x1x128xf32> to vector<1x128xf32>
    %139 = vector.extract_strided_slice %4 {offsets = [2, 0, 0], sizes = [1, 10, 128], strides = [1, 1, 1]} : vector<10x10x128xbf16> to vector<1x10x128xbf16>
    %140 = vector.shape_cast %139 : vector<1x10x128xbf16> to vector<10x128xbf16>
    %141 = arith.extf %140 : vector<10x128xbf16> to vector<10x128xf32>
    %142 = vector.extract_strided_slice %141 {offsets = [0, 0], sizes = [8, 128], strides = [1, 1]} : vector<10x128xf32> to vector<8x128xf32>
    %143 = vector.broadcast %134 : vector<1x128xf32> to vector<8x128xf32>
    %144 = arith.mulf %142, %143 : vector<8x128xf32>
    %145 = arith.addf %87, %144 : vector<8x128xf32>
    %146 = vector.extract_strided_slice %141 {offsets = [1, 0], sizes = [8, 128], strides = [1, 1]} : vector<10x128xf32> to vector<8x128xf32>
    %147 = vector.broadcast %136 : vector<1x128xf32> to vector<8x128xf32>
    %148 = arith.mulf %146, %147 : vector<8x128xf32>
    %149 = arith.addf %145, %148 : vector<8x128xf32>
    %150 = vector.extract_strided_slice %141 {offsets = [2, 0], sizes = [8, 128], strides = [1, 1]} : vector<10x128xf32> to vector<8x128xf32>
    %151 = vector.broadcast %138 : vector<1x128xf32> to vector<8x128xf32>
    %152 = arith.mulf %150, %151 : vector<8x128xf32>
    %153 = arith.addf %149, %152 : vector<8x128xf32>
    %154 = vector.extract_strided_slice %4 {offsets = [4, 0, 0], sizes = [1, 10, 128], strides = [1, 1, 1]} : vector<10x10x128xbf16> to vector<1x10x128xbf16>
    %155 = vector.shape_cast %154 : vector<1x10x128xbf16> to vector<10x128xbf16>
    %156 = arith.extf %155 : vector<10x128xbf16> to vector<10x128xf32>
    %157 = vector.extract_strided_slice %156 {offsets = [0, 0], sizes = [8, 128], strides = [1, 1]} : vector<10x128xf32> to vector<8x128xf32>
    %158 = vector.broadcast %134 : vector<1x128xf32> to vector<8x128xf32>
    %159 = arith.mulf %157, %158 : vector<8x128xf32>
    %160 = arith.addf %102, %159 : vector<8x128xf32>
    %161 = vector.extract_strided_slice %156 {offsets = [1, 0], sizes = [8, 128], strides = [1, 1]} : vector<10x128xf32> to vector<8x128xf32>
    %162 = vector.broadcast %136 : vector<1x128xf32> to vector<8x128xf32>
    %163 = arith.mulf %161, %162 : vector<8x128xf32>
    %164 = arith.addf %160, %163 : vector<8x128xf32>
    %165 = vector.extract_strided_slice %156 {offsets = [2, 0], sizes = [8, 128], strides = [1, 1]} : vector<10x128xf32> to vector<8x128xf32>
    %166 = vector.broadcast %138 : vector<1x128xf32> to vector<8x128xf32>
    %167 = arith.mulf %165, %166 : vector<8x128xf32>
    %168 = arith.addf %164, %167 : vector<8x128xf32>
    %169 = vector.extract_strided_slice %4 {offsets = [6, 0, 0], sizes = [1, 10, 128], strides = [1, 1, 1]} : vector<10x10x128xbf16> to vector<1x10x128xbf16>
    %170 = vector.shape_cast %169 : vector<1x10x128xbf16> to vector<10x128xbf16>
    %171 = arith.extf %170 : vector<10x128xbf16> to vector<10x128xf32>
    %172 = vector.extract_strided_slice %171 {offsets = [0, 0], sizes = [8, 128], strides = [1, 1]} : vector<10x128xf32> to vector<8x128xf32>
    %173 = vector.broadcast %134 : vector<1x128xf32> to vector<8x128xf32>
    %174 = arith.mulf %172, %173 : vector<8x128xf32>
    %175 = arith.addf %117, %174 : vector<8x128xf32>
    %176 = vector.extract_strided_slice %171 {offsets = [1, 0], sizes = [8, 128], strides = [1, 1]} : vector<10x128xf32> to vector<8x128xf32>
    %177 = vector.broadcast %136 : vector<1x128xf32> to vector<8x128xf32>
    %178 = arith.mulf %176, %177 : vector<8x128xf32>
    %179 = arith.addf %175, %178 : vector<8x128xf32>
    %180 = vector.extract_strided_slice %171 {offsets = [2, 0], sizes = [8, 128], strides = [1, 1]} : vector<10x128xf32> to vector<8x128xf32>
    %181 = vector.broadcast %138 : vector<1x128xf32> to vector<8x128xf32>
    %182 = arith.mulf %180, %181 : vector<8x128xf32>
    %183 = arith.addf %179, %182 : vector<8x128xf32>
    %184 = vector.extract_strided_slice %4 {offsets = [8, 0, 0], sizes = [1, 10, 128], strides = [1, 1, 1]} : vector<10x10x128xbf16> to vector<1x10x128xbf16>
    %185 = vector.shape_cast %184 : vector<1x10x128xbf16> to vector<10x128xbf16>
    %186 = arith.extf %185 : vector<10x128xbf16> to vector<10x128xf32>
    %187 = vector.extract_strided_slice %186 {offsets = [0, 0], sizes = [8, 128], strides = [1, 1]} : vector<10x128xf32> to vector<8x128xf32>
    %188 = vector.broadcast %134 : vector<1x128xf32> to vector<8x128xf32>
    %189 = arith.mulf %187, %188 : vector<8x128xf32>
    %190 = arith.addf %132, %189 : vector<8x128xf32>
    %191 = vector.extract_strided_slice %186 {offsets = [1, 0], sizes = [8, 128], strides = [1, 1]} : vector<10x128xf32> to vector<8x128xf32>
    %192 = vector.broadcast %136 : vector<1x128xf32> to vector<8x128xf32>
    %193 = arith.mulf %191, %192 : vector<8x128xf32>
    %194 = arith.addf %190, %193 : vector<8x128xf32>
    %195 = vector.extract_strided_slice %186 {offsets = [2, 0], sizes = [8, 128], strides = [1, 1]} : vector<10x128xf32> to vector<8x128xf32>
    %196 = vector.broadcast %138 : vector<1x128xf32> to vector<8x128xf32>
    %197 = arith.mulf %195, %196 : vector<8x128xf32>
    %198 = arith.addf %194, %197 : vector<8x128xf32>
    %c1_i32 = arith.constant 1 : i32
    %199 = arith.addi %0, %c1_i32 : i32
    %c0_22 = arith.constant 0 : index
    %200 = arith.index_cast %199 : i32 to index
    %c0_23 = arith.constant 0 : index
    %c0_24 = arith.constant 0 : index
    %c0_25 = arith.constant 0 : index
    %201 = vector.load %arg2[%c0_22, %200, %c0_23, %c0_24, %c0_25] : memref<1x10x10x10x128xbf16, #tpu.memory_space<vmem>>, vector<1x1x10x10x128xbf16>
    %202 = vector.shape_cast %201 : vector<1x1x10x10x128xbf16> to vector<10x10x128xbf16>
    %c9 = arith.constant 9 : index
    %c0_26 = arith.constant 0 : index
    %c0_27 = arith.constant 0 : index
    %203 = vector.load %arg3[%c9, %c0_26, %c0_27] : memref<27x1x128xf32, #tpu.memory_space<vmem>>, vector<1x1x128xf32>
    %204 = vector.shape_cast %203 : vector<1x1x128xf32> to vector<1x128xf32>
    %c10 = arith.constant 10 : index
    %c0_28 = arith.constant 0 : index
    %c0_29 = arith.constant 0 : index
    %205 = vector.load %arg3[%c10, %c0_28, %c0_29] : memref<27x1x128xf32, #tpu.memory_space<vmem>>, vector<1x1x128xf32>
    %206 = vector.shape_cast %205 : vector<1x1x128xf32> to vector<1x128xf32>
    %c11 = arith.constant 11 : index
    %c0_30 = arith.constant 0 : index
    %c0_31 = arith.constant 0 : index
    %207 = vector.load %arg3[%c11, %c0_30, %c0_31] : memref<27x1x128xf32, #tpu.memory_space<vmem>>, vector<1x1x128xf32>
    %208 = vector.shape_cast %207 : vector<1x1x128xf32> to vector<1x128xf32>
    %209 = vector.extract_strided_slice %202 {offsets = [0, 0, 0], sizes = [1, 10, 128], strides = [1, 1, 1]} : vector<10x10x128xbf16> to vector<1x10x128xbf16>
    %210 = vector.shape_cast %209 : vector<1x10x128xbf16> to vector<10x128xbf16>
    %211 = arith.extf %210 : vector<10x128xbf16> to vector<10x128xf32>
    %212 = vector.extract_strided_slice %211 {offsets = [0, 0], sizes = [8, 128], strides = [1, 1]} : vector<10x128xf32> to vector<8x128xf32>
    %213 = vector.broadcast %204 : vector<1x128xf32> to vector<8x128xf32>
    %214 = arith.mulf %212, %213 : vector<8x128xf32>
    %215 = arith.addf %153, %214 : vector<8x128xf32>
    %216 = vector.extract_strided_slice %211 {offsets = [1, 0], sizes = [8, 128], strides = [1, 1]} : vector<10x128xf32> to vector<8x128xf32>
    %217 = vector.broadcast %206 : vector<1x128xf32> to vector<8x128xf32>
    %218 = arith.mulf %216, %217 : vector<8x128xf32>
    %219 = arith.addf %215, %218 : vector<8x128xf32>
    %220 = vector.extract_strided_slice %211 {offsets = [2, 0], sizes = [8, 128], strides = [1, 1]} : vector<10x128xf32> to vector<8x128xf32>
    %221 = vector.broadcast %208 : vector<1x128xf32> to vector<8x128xf32>
    %222 = arith.mulf %220, %221 : vector<8x128xf32>
    %223 = arith.addf %219, %222 : vector<8x128xf32>
    %224 = vector.extract_strided_slice %202 {offsets = [2, 0, 0], sizes = [1, 10, 128], strides = [1, 1, 1]} : vector<10x10x128xbf16> to vector<1x10x128xbf16>
    %225 = vector.shape_cast %224 : vector<1x10x128xbf16> to vector<10x128xbf16>
    %226 = arith.extf %225 : vector<10x128xbf16> to vector<10x128xf32>
    %227 = vector.extract_strided_slice %226 {offsets = [0, 0], sizes = [8, 128], strides = [1, 1]} : vector<10x128xf32> to vector<8x128xf32>
    %228 = vector.broadcast %204 : vector<1x128xf32> to vector<8x128xf32>
    %229 = arith.mulf %227, %228 : vector<8x128xf32>
    %230 = arith.addf %168, %229 : vector<8x128xf32>
    %231 = vector.extract_strided_slice %226 {offsets = [1, 0], sizes = [8, 128], strides = [1, 1]} : vector<10x128xf32> to vector<8x128xf32>
    %232 = vector.broadcast %206 : vector<1x128xf32> to vector<8x128xf32>
    %233 = arith.mulf %231, %232 : vector<8x128xf32>
    %234 = arith.addf %230, %233 : vector<8x128xf32>
    %235 = vector.extract_strided_slice %226 {offsets = [2, 0], sizes = [8, 128], strides = [1, 1]} : vector<10x128xf32> to vector<8x128xf32>
    %236 = vector.broadcast %208 : vector<1x128xf32> to vector<8x128xf32>
    %237 = arith.mulf %235, %236 : vector<8x128xf32>
    %238 = arith.addf %234, %237 : vector<8x128xf32>
    %239 = vector.extract_strided_slice %202 {offsets = [4, 0, 0], sizes = [1, 10, 128], strides = [1, 1, 1]} : vector<10x10x128xbf16> to vector<1x10x128xbf16>
    %240 = vector.shape_cast %239 : vector<1x10x128xbf16> to vector<10x128xbf16>
    %241 = arith.extf %240 : vector<10x128xbf16> to vector<10x128xf32>
    %242 = vector.extract_strided_slice %241 {offsets = [0, 0], sizes = [8, 128], strides = [1, 1]} : vector<10x128xf32> to vector<8x128xf32>
    %243 = vector.broadcast %204 : vector<1x128xf32> to vector<8x128xf32>
    %244 = arith.mulf %242, %243 : vector<8x128xf32>
    %245 = arith.addf %183, %244 : vector<8x128xf32>
    %246 = vector.extract_strided_slice %241 {offsets = [1, 0], sizes = [8, 128], strides = [1, 1]} : vector<10x128xf32> to vector<8x128xf32>
    %247 = vector.broadcast %206 : vector<1x128xf32> to vector<8x128xf32>
    %248 = arith.mulf %246, %247 : vector<8x128xf32>
    %249 = arith.addf %245, %248 : vector<8x128xf32>
    %250 = vector.extract_strided_slice %241 {offsets = [2, 0], sizes = [8, 128], strides = [1, 1]} : vector<10x128xf32> to vector<8x128xf32>
    %251 = vector.broadcast %208 : vector<1x128xf32> to vector<8x128xf32>
    %252 = arith.mulf %250, %251 : vector<8x128xf32>
    %253 = arith.addf %249, %252 : vector<8x128xf32>
    %254 = vector.extract_strided_slice %202 {offsets = [6, 0, 0], sizes = [1, 10, 128], strides = [1, 1, 1]} : vector<10x10x128xbf16> to vector<1x10x128xbf16>
    %255 = vector.shape_cast %254 : vector<1x10x128xbf16> to vector<10x128xbf16>
    %256 = arith.extf %255 : vector<10x128xbf16> to vector<10x128xf32>
    %257 = vector.extract_strided_slice %256 {offsets = [0, 0], sizes = [8, 128], strides = [1, 1]} : vector<10x128xf32> to vector<8x128xf32>
    %258 = vector.broadcast %204 : vector<1x128xf32> to vector<8x128xf32>
    %259 = arith.mulf %257, %258 : vector<8x128xf32>
    %260 = arith.addf %198, %259 : vector<8x128xf32>
    %261 = vector.extract_strided_slice %256 {offsets = [1, 0], sizes = [8, 128], strides = [1, 1]} : vector<10x128xf32> to vector<8x128xf32>
    %262 = vector.broadcast %206 : vector<1x128xf32> to vector<8x128xf32>
    %263 = arith.mulf %261, %262 : vector<8x128xf32>
    %264 = arith.addf %260, %263 : vector<8x128xf32>
    %265 = vector.extract_strided_slice %256 {offsets = [2, 0], sizes = [8, 128], strides = [1, 1]} : vector<10x128xf32> to vector<8x128xf32>
    %266 = vector.broadcast %208 : vector<1x128xf32> to vector<8x128xf32>
    %267 = arith.mulf %265, %266 : vector<8x128xf32>
    %268 = arith.addf %264, %267 : vector<8x128xf32>
    %c12 = arith.constant 12 : index
    %c0_32 = arith.constant 0 : index
    %c0_33 = arith.constant 0 : index
    %269 = vector.load %arg3[%c12, %c0_32, %c0_33] : memref<27x1x128xf32, #tpu.memory_space<vmem>>, vector<1x1x128xf32>
    %270 = vector.shape_cast %269 : vector<1x1x128xf32> to vector<1x128xf32>
    %c13 = arith.constant 13 : index
    %c0_34 = arith.constant 0 : index
    %c0_35 = arith.constant 0 : index
    %271 = vector.load %arg3[%c13, %c0_34, %c0_35] : memref<27x1x128xf32, #tpu.memory_space<vmem>>, vector<1x1x128xf32>
    %272 = vector.shape_cast %271 : vector<1x1x128xf32> to vector<1x128xf32>
    %c14 = arith.constant 14 : index
    %c0_36 = arith.constant 0 : index
    %c0_37 = arith.constant 0 : index
    %273 = vector.load %arg3[%c14, %c0_36, %c0_37] : memref<27x1x128xf32, #tpu.memory_space<vmem>>, vector<1x1x128xf32>
    %274 = vector.shape_cast %273 : vector<1x1x128xf32> to vector<1x128xf32>
    %275 = vector.extract_strided_slice %202 {offsets = [1, 0, 0], sizes = [1, 10, 128], strides = [1, 1, 1]} : vector<10x10x128xbf16> to vector<1x10x128xbf16>
    %276 = vector.shape_cast %275 : vector<1x10x128xbf16> to vector<10x128xbf16>
    %277 = arith.extf %276 : vector<10x128xbf16> to vector<10x128xf32>
    %278 = vector.extract_strided_slice %277 {offsets = [0, 0], sizes = [8, 128], strides = [1, 1]} : vector<10x128xf32> to vector<8x128xf32>
    %279 = vector.broadcast %270 : vector<1x128xf32> to vector<8x128xf32>
    %280 = arith.mulf %278, %279 : vector<8x128xf32>
    %281 = arith.addf %223, %280 : vector<8x128xf32>
    %282 = vector.extract_strided_slice %277 {offsets = [1, 0], sizes = [8, 128], strides = [1, 1]} : vector<10x128xf32> to vector<8x128xf32>
    %283 = vector.broadcast %272 : vector<1x128xf32> to vector<8x128xf32>
    %284 = arith.mulf %282, %283 : vector<8x128xf32>
    %285 = arith.addf %281, %284 : vector<8x128xf32>
    %286 = vector.extract_strided_slice %277 {offsets = [2, 0], sizes = [8, 128], strides = [1, 1]} : vector<10x128xf32> to vector<8x128xf32>
    %287 = vector.broadcast %274 : vector<1x128xf32> to vector<8x128xf32>
    %288 = arith.mulf %286, %287 : vector<8x128xf32>
    %289 = arith.addf %285, %288 : vector<8x128xf32>
    %290 = vector.extract_strided_slice %202 {offsets = [3, 0, 0], sizes = [1, 10, 128], strides = [1, 1, 1]} : vector<10x10x128xbf16> to vector<1x10x128xbf16>
    %291 = vector.shape_cast %290 : vector<1x10x128xbf16> to vector<10x128xbf16>
    %292 = arith.extf %291 : vector<10x128xbf16> to vector<10x128xf32>
    %293 = vector.extract_strided_slice %292 {offsets = [0, 0], sizes = [8, 128], strides = [1, 1]} : vector<10x128xf32> to vector<8x128xf32>
    %294 = vector.broadcast %270 : vector<1x128xf32> to vector<8x128xf32>
    %295 = arith.mulf %293, %294 : vector<8x128xf32>
    %296 = arith.addf %238, %295 : vector<8x128xf32>
    %297 = vector.extract_strided_slice %292 {offsets = [1, 0], sizes = [8, 128], strides = [1, 1]} : vector<10x128xf32> to vector<8x128xf32>
    %298 = vector.broadcast %272 : vector<1x128xf32> to vector<8x128xf32>
    %299 = arith.mulf %297, %298 : vector<8x128xf32>
    %300 = arith.addf %296, %299 : vector<8x128xf32>
    %301 = vector.extract_strided_slice %292 {offsets = [2, 0], sizes = [8, 128], strides = [1, 1]} : vector<10x128xf32> to vector<8x128xf32>
    %302 = vector.broadcast %274 : vector<1x128xf32> to vector<8x128xf32>
    %303 = arith.mulf %301, %302 : vector<8x128xf32>
    %304 = arith.addf %300, %303 : vector<8x128xf32>
    %305 = vector.extract_strided_slice %202 {offsets = [5, 0, 0], sizes = [1, 10, 128], strides = [1, 1, 1]} : vector<10x10x128xbf16> to vector<1x10x128xbf16>
    %306 = vector.shape_cast %305 : vector<1x10x128xbf16> to vector<10x128xbf16>
    %307 = arith.extf %306 : vector<10x128xbf16> to vector<10x128xf32>
    %308 = vector.extract_strided_slice %307 {offsets = [0, 0], sizes = [8, 128], strides = [1, 1]} : vector<10x128xf32> to vector<8x128xf32>
    %309 = vector.broadcast %270 : vector<1x128xf32> to vector<8x128xf32>
    %310 = arith.mulf %308, %309 : vector<8x128xf32>
    %311 = arith.addf %253, %310 : vector<8x128xf32>
    %312 = vector.extract_strided_slice %307 {offsets = [1, 0], sizes = [8, 128], strides = [1, 1]} : vector<10x128xf32> to vector<8x128xf32>
    %313 = vector.broadcast %272 : vector<1x128xf32> to vector<8x128xf32>
    %314 = arith.mulf %312, %313 : vector<8x128xf32>
    %315 = arith.addf %311, %314 : vector<8x128xf32>
    %316 = vector.extract_strided_slice %307 {offsets = [2, 0], sizes = [8, 128], strides = [1, 1]} : vector<10x128xf32> to vector<8x128xf32>
    %317 = vector.broadcast %274 : vector<1x128xf32> to vector<8x128xf32>
    %318 = arith.mulf %316, %317 : vector<8x128xf32>
    %319 = arith.addf %315, %318 : vector<8x128xf32>
    %320 = vector.extract_strided_slice %202 {offsets = [7, 0, 0], sizes = [1, 10, 128], strides = [1, 1, 1]} : vector<10x10x128xbf16> to vector<1x10x128xbf16>
    %321 = vector.shape_cast %320 : vector<1x10x128xbf16> to vector<10x128xbf16>
    %322 = arith.extf %321 : vector<10x128xbf16> to vector<10x128xf32>
    %323 = vector.extract_strided_slice %322 {offsets = [0, 0], sizes = [8, 128], strides = [1, 1]} : vector<10x128xf32> to vector<8x128xf32>
    %324 = vector.broadcast %270 : vector<1x128xf32> to vector<8x128xf32>
    %325 = arith.mulf %323, %324 : vector<8x128xf32>
    %326 = arith.addf %268, %325 : vector<8x128xf32>
    %327 = vector.extract_strided_slice %322 {offsets = [1, 0], sizes = [8, 128], strides = [1, 1]} : vector<10x128xf32> to vector<8x128xf32>
    %328 = vector.broadcast %272 : vector<1x128xf32> to vector<8x128xf32>
    %329 = arith.mulf %327, %328 : vector<8x128xf32>
    %330 = arith.addf %326, %329 : vector<8x128xf32>
    %331 = vector.extract_strided_slice %322 {offsets = [2, 0], sizes = [8, 128], strides = [1, 1]} : vector<10x128xf32> to vector<8x128xf32>
    %332 = vector.broadcast %274 : vector<1x128xf32> to vector<8x128xf32>
    %333 = arith.mulf %331, %332 : vector<8x128xf32>
    %334 = arith.addf %330, %333 : vector<8x128xf32>
    %c15 = arith.constant 15 : index
    %c0_38 = arith.constant 0 : index
    %c0_39 = arith.constant 0 : index
    %335 = vector.load %arg3[%c15, %c0_38, %c0_39] : memref<27x1x128xf32, #tpu.memory_space<vmem>>, vector<1x1x128xf32>
    %336 = vector.shape_cast %335 : vector<1x1x128xf32> to vector<1x128xf32>
    %c16 = arith.constant 16 : index
    %c0_40 = arith.constant 0 : index
    %c0_41 = arith.constant 0 : index
    %337 = vector.load %arg3[%c16, %c0_40, %c0_41] : memref<27x1x128xf32, #tpu.memory_space<vmem>>, vector<1x1x128xf32>
    %338 = vector.shape_cast %337 : vector<1x1x128xf32> to vector<1x128xf32>
    %c17 = arith.constant 17 : index
    %c0_42 = arith.constant 0 : index
    %c0_43 = arith.constant 0 : index
    %339 = vector.load %arg3[%c17, %c0_42, %c0_43] : memref<27x1x128xf32, #tpu.memory_space<vmem>>, vector<1x1x128xf32>
    %340 = vector.shape_cast %339 : vector<1x1x128xf32> to vector<1x128xf32>
    %341 = vector.extract_strided_slice %202 {offsets = [2, 0, 0], sizes = [1, 10, 128], strides = [1, 1, 1]} : vector<10x10x128xbf16> to vector<1x10x128xbf16>
    %342 = vector.shape_cast %341 : vector<1x10x128xbf16> to vector<10x128xbf16>
    %343 = arith.extf %342 : vector<10x128xbf16> to vector<10x128xf32>
    %344 = vector.extract_strided_slice %343 {offsets = [0, 0], sizes = [8, 128], strides = [1, 1]} : vector<10x128xf32> to vector<8x128xf32>
    %345 = vector.broadcast %336 : vector<1x128xf32> to vector<8x128xf32>
    %346 = arith.mulf %344, %345 : vector<8x128xf32>
    %347 = arith.addf %289, %346 : vector<8x128xf32>
    %348 = vector.extract_strided_slice %343 {offsets = [1, 0], sizes = [8, 128], strides = [1, 1]} : vector<10x128xf32> to vector<8x128xf32>
    %349 = vector.broadcast %338 : vector<1x128xf32> to vector<8x128xf32>
    %350 = arith.mulf %348, %349 : vector<8x128xf32>
    %351 = arith.addf %347, %350 : vector<8x128xf32>
    %352 = vector.extract_strided_slice %343 {offsets = [2, 0], sizes = [8, 128], strides = [1, 1]} : vector<10x128xf32> to vector<8x128xf32>
    %353 = vector.broadcast %340 : vector<1x128xf32> to vector<8x128xf32>
    %354 = arith.mulf %352, %353 : vector<8x128xf32>
    %355 = arith.addf %351, %354 : vector<8x128xf32>
    %356 = vector.extract_strided_slice %202 {offsets = [4, 0, 0], sizes = [1, 10, 128], strides = [1, 1, 1]} : vector<10x10x128xbf16> to vector<1x10x128xbf16>
    %357 = vector.shape_cast %356 : vector<1x10x128xbf16> to vector<10x128xbf16>
    %358 = arith.extf %357 : vector<10x128xbf16> to vector<10x128xf32>
    %359 = vector.extract_strided_slice %358 {offsets = [0, 0], sizes = [8, 128], strides = [1, 1]} : vector<10x128xf32> to vector<8x128xf32>
    %360 = vector.broadcast %336 : vector<1x128xf32> to vector<8x128xf32>
    %361 = arith.mulf %359, %360 : vector<8x128xf32>
    %362 = arith.addf %304, %361 : vector<8x128xf32>
    %363 = vector.extract_strided_slice %358 {offsets = [1, 0], sizes = [8, 128], strides = [1, 1]} : vector<10x128xf32> to vector<8x128xf32>
    %364 = vector.broadcast %338 : vector<1x128xf32> to vector<8x128xf32>
    %365 = arith.mulf %363, %364 : vector<8x128xf32>
    %366 = arith.addf %362, %365 : vector<8x128xf32>
    %367 = vector.extract_strided_slice %358 {offsets = [2, 0], sizes = [8, 128], strides = [1, 1]} : vector<10x128xf32> to vector<8x128xf32>
    %368 = vector.broadcast %340 : vector<1x128xf32> to vector<8x128xf32>
    %369 = arith.mulf %367, %368 : vector<8x128xf32>
    %370 = arith.addf %366, %369 : vector<8x128xf32>
    %371 = vector.extract_strided_slice %202 {offsets = [6, 0, 0], sizes = [1, 10, 128], strides = [1, 1, 1]} : vector<10x10x128xbf16> to vector<1x10x128xbf16>
    %372 = vector.shape_cast %371 : vector<1x10x128xbf16> to vector<10x128xbf16>
    %373 = arith.extf %372 : vector<10x128xbf16> to vector<10x128xf32>
    %374 = vector.extract_strided_slice %373 {offsets = [0, 0], sizes = [8, 128], strides = [1, 1]} : vector<10x128xf32> to vector<8x128xf32>
    %375 = vector.broadcast %336 : vector<1x128xf32> to vector<8x128xf32>
    %376 = arith.mulf %374, %375 : vector<8x128xf32>
    %377 = arith.addf %319, %376 : vector<8x128xf32>
    %378 = vector.extract_strided_slice %373 {offsets = [1, 0], sizes = [8, 128], strides = [1, 1]} : vector<10x128xf32> to vector<8x128xf32>
    %379 = vector.broadcast %338 : vector<1x128xf32> to vector<8x128xf32>
    %380 = arith.mulf %378, %379 : vector<8x128xf32>
    %381 = arith.addf %377, %380 : vector<8x128xf32>
    %382 = vector.extract_strided_slice %373 {offsets = [2, 0], sizes = [8, 128], strides = [1, 1]} : vector<10x128xf32> to vector<8x128xf32>
    %383 = vector.broadcast %340 : vector<1x128xf32> to vector<8x128xf32>
    %384 = arith.mulf %382, %383 : vector<8x128xf32>
    %385 = arith.addf %381, %384 : vector<8x128xf32>
    %386 = vector.extract_strided_slice %202 {offsets = [8, 0, 0], sizes = [1, 10, 128], strides = [1, 1, 1]} : vector<10x10x128xbf16> to vector<1x10x128xbf16>
    %387 = vector.shape_cast %386 : vector<1x10x128xbf16> to vector<10x128xbf16>
    %388 = arith.extf %387 : vector<10x128xbf16> to vector<10x128xf32>
    %389 = vector.extract_strided_slice %388 {offsets = [0, 0], sizes = [8, 128], strides = [1, 1]} : vector<10x128xf32> to vector<8x128xf32>
    %390 = vector.broadcast %336 : vector<1x128xf32> to vector<8x128xf32>
    %391 = arith.mulf %389, %390 : vector<8x128xf32>
    %392 = arith.addf %334, %391 : vector<8x128xf32>
    %393 = vector.extract_strided_slice %388 {offsets = [1, 0], sizes = [8, 128], strides = [1, 1]} : vector<10x128xf32> to vector<8x128xf32>
    %394 = vector.broadcast %338 : vector<1x128xf32> to vector<8x128xf32>
    %395 = arith.mulf %393, %394 : vector<8x128xf32>
    %396 = arith.addf %392, %395 : vector<8x128xf32>
    %397 = vector.extract_strided_slice %388 {offsets = [2, 0], sizes = [8, 128], strides = [1, 1]} : vector<10x128xf32> to vector<8x128xf32>
    %398 = vector.broadcast %340 : vector<1x128xf32> to vector<8x128xf32>
    %399 = arith.mulf %397, %398 : vector<8x128xf32>
    %400 = arith.addf %396, %399 : vector<8x128xf32>
    %c2_i32_44 = arith.constant 2 : i32
    %401 = arith.addi %0, %c2_i32_44 : i32
    %c0_45 = arith.constant 0 : index
    %402 = arith.index_cast %401 : i32 to index
    %c0_46 = arith.constant 0 : index
    %c0_47 = arith.constant 0 : index
    %c0_48 = arith.constant 0 : index
    %403 = vector.load %arg2[%c0_45, %402, %c0_46, %c0_47, %c0_48] : memref<1x10x10x10x128xbf16, #tpu.memory_space<vmem>>, vector<1x1x10x10x128xbf16>
    %404 = vector.shape_cast %403 : vector<1x1x10x10x128xbf16> to vector<10x10x128xbf16>
    %c18 = arith.constant 18 : index
    %c0_49 = arith.constant 0 : index
    %c0_50 = arith.constant 0 : index
    %405 = vector.load %arg3[%c18, %c0_49, %c0_50] : memref<27x1x128xf32, #tpu.memory_space<vmem>>, vector<1x1x128xf32>
    %406 = vector.shape_cast %405 : vector<1x1x128xf32> to vector<1x128xf32>
    %c19 = arith.constant 19 : index
    %c0_51 = arith.constant 0 : index
    %c0_52 = arith.constant 0 : index
    %407 = vector.load %arg3[%c19, %c0_51, %c0_52] : memref<27x1x128xf32, #tpu.memory_space<vmem>>, vector<1x1x128xf32>
    %408 = vector.shape_cast %407 : vector<1x1x128xf32> to vector<1x128xf32>
    %c20 = arith.constant 20 : index
    %c0_53 = arith.constant 0 : index
    %c0_54 = arith.constant 0 : index
    %409 = vector.load %arg3[%c20, %c0_53, %c0_54] : memref<27x1x128xf32, #tpu.memory_space<vmem>>, vector<1x1x128xf32>
    %410 = vector.shape_cast %409 : vector<1x1x128xf32> to vector<1x128xf32>
    %411 = vector.extract_strided_slice %404 {offsets = [0, 0, 0], sizes = [1, 10, 128], strides = [1, 1, 1]} : vector<10x10x128xbf16> to vector<1x10x128xbf16>
    %412 = vector.shape_cast %411 : vector<1x10x128xbf16> to vector<10x128xbf16>
    %413 = arith.extf %412 : vector<10x128xbf16> to vector<10x128xf32>
    %414 = vector.extract_strided_slice %413 {offsets = [0, 0], sizes = [8, 128], strides = [1, 1]} : vector<10x128xf32> to vector<8x128xf32>
    %415 = vector.broadcast %406 : vector<1x128xf32> to vector<8x128xf32>
    %416 = arith.mulf %414, %415 : vector<8x128xf32>
    %417 = arith.addf %355, %416 : vector<8x128xf32>
    %418 = vector.extract_strided_slice %413 {offsets = [1, 0], sizes = [8, 128], strides = [1, 1]} : vector<10x128xf32> to vector<8x128xf32>
    %419 = vector.broadcast %408 : vector<1x128xf32> to vector<8x128xf32>
    %420 = arith.mulf %418, %419 : vector<8x128xf32>
    %421 = arith.addf %417, %420 : vector<8x128xf32>
    %422 = vector.extract_strided_slice %413 {offsets = [2, 0], sizes = [8, 128], strides = [1, 1]} : vector<10x128xf32> to vector<8x128xf32>
    %423 = vector.broadcast %410 : vector<1x128xf32> to vector<8x128xf32>
    %424 = arith.mulf %422, %423 : vector<8x128xf32>
    %425 = arith.addf %421, %424 : vector<8x128xf32>
    %426 = vector.extract_strided_slice %404 {offsets = [2, 0, 0], sizes = [1, 10, 128], strides = [1, 1, 1]} : vector<10x10x128xbf16> to vector<1x10x128xbf16>
    %427 = vector.shape_cast %426 : vector<1x10x128xbf16> to vector<10x128xbf16>
    %428 = arith.extf %427 : vector<10x128xbf16> to vector<10x128xf32>
    %429 = vector.extract_strided_slice %428 {offsets = [0, 0], sizes = [8, 128], strides = [1, 1]} : vector<10x128xf32> to vector<8x128xf32>
    %430 = vector.broadcast %406 : vector<1x128xf32> to vector<8x128xf32>
    %431 = arith.mulf %429, %430 : vector<8x128xf32>
    %432 = arith.addf %370, %431 : vector<8x128xf32>
    %433 = vector.extract_strided_slice %428 {offsets = [1, 0], sizes = [8, 128], strides = [1, 1]} : vector<10x128xf32> to vector<8x128xf32>
    %434 = vector.broadcast %408 : vector<1x128xf32> to vector<8x128xf32>
    %435 = arith.mulf %433, %434 : vector<8x128xf32>
    %436 = arith.addf %432, %435 : vector<8x128xf32>
    %437 = vector.extract_strided_slice %428 {offsets = [2, 0], sizes = [8, 128], strides = [1, 1]} : vector<10x128xf32> to vector<8x128xf32>
    %438 = vector.broadcast %410 : vector<1x128xf32> to vector<8x128xf32>
    %439 = arith.mulf %437, %438 : vector<8x128xf32>
    %440 = arith.addf %436, %439 : vector<8x128xf32>
    %441 = vector.extract_strided_slice %404 {offsets = [4, 0, 0], sizes = [1, 10, 128], strides = [1, 1, 1]} : vector<10x10x128xbf16> to vector<1x10x128xbf16>
    %442 = vector.shape_cast %441 : vector<1x10x128xbf16> to vector<10x128xbf16>
    %443 = arith.extf %442 : vector<10x128xbf16> to vector<10x128xf32>
    %444 = vector.extract_strided_slice %443 {offsets = [0, 0], sizes = [8, 128], strides = [1, 1]} : vector<10x128xf32> to vector<8x128xf32>
    %445 = vector.broadcast %406 : vector<1x128xf32> to vector<8x128xf32>
    %446 = arith.mulf %444, %445 : vector<8x128xf32>
    %447 = arith.addf %385, %446 : vector<8x128xf32>
    %448 = vector.extract_strided_slice %443 {offsets = [1, 0], sizes = [8, 128], strides = [1, 1]} : vector<10x128xf32> to vector<8x128xf32>
    %449 = vector.broadcast %408 : vector<1x128xf32> to vector<8x128xf32>
    %450 = arith.mulf %448, %449 : vector<8x128xf32>
    %451 = arith.addf %447, %450 : vector<8x128xf32>
    %452 = vector.extract_strided_slice %443 {offsets = [2, 0], sizes = [8, 128], strides = [1, 1]} : vector<10x128xf32> to vector<8x128xf32>
    %453 = vector.broadcast %410 : vector<1x128xf32> to vector<8x128xf32>
    %454 = arith.mulf %452, %453 : vector<8x128xf32>
    %455 = arith.addf %451, %454 : vector<8x128xf32>
    %456 = vector.extract_strided_slice %404 {offsets = [6, 0, 0], sizes = [1, 10, 128], strides = [1, 1, 1]} : vector<10x10x128xbf16> to vector<1x10x128xbf16>
    %457 = vector.shape_cast %456 : vector<1x10x128xbf16> to vector<10x128xbf16>
    %458 = arith.extf %457 : vector<10x128xbf16> to vector<10x128xf32>
    %459 = vector.extract_strided_slice %458 {offsets = [0, 0], sizes = [8, 128], strides = [1, 1]} : vector<10x128xf32> to vector<8x128xf32>
    %460 = vector.broadcast %406 : vector<1x128xf32> to vector<8x128xf32>
    %461 = arith.mulf %459, %460 : vector<8x128xf32>
    %462 = arith.addf %400, %461 : vector<8x128xf32>
    %463 = vector.extract_strided_slice %458 {offsets = [1, 0], sizes = [8, 128], strides = [1, 1]} : vector<10x128xf32> to vector<8x128xf32>
    %464 = vector.broadcast %408 : vector<1x128xf32> to vector<8x128xf32>
    %465 = arith.mulf %463, %464 : vector<8x128xf32>
    %466 = arith.addf %462, %465 : vector<8x128xf32>
    %467 = vector.extract_strided_slice %458 {offsets = [2, 0], sizes = [8, 128], strides = [1, 1]} : vector<10x128xf32> to vector<8x128xf32>
    %468 = vector.broadcast %410 : vector<1x128xf32> to vector<8x128xf32>
    %469 = arith.mulf %467, %468 : vector<8x128xf32>
    %470 = arith.addf %466, %469 : vector<8x128xf32>
    %c21 = arith.constant 21 : index
    %c0_55 = arith.constant 0 : index
    %c0_56 = arith.constant 0 : index
    %471 = vector.load %arg3[%c21, %c0_55, %c0_56] : memref<27x1x128xf32, #tpu.memory_space<vmem>>, vector<1x1x128xf32>
    %472 = vector.shape_cast %471 : vector<1x1x128xf32> to vector<1x128xf32>
    %c22 = arith.constant 22 : index
    %c0_57 = arith.constant 0 : index
    %c0_58 = arith.constant 0 : index
    %473 = vector.load %arg3[%c22, %c0_57, %c0_58] : memref<27x1x128xf32, #tpu.memory_space<vmem>>, vector<1x1x128xf32>
    %474 = vector.shape_cast %473 : vector<1x1x128xf32> to vector<1x128xf32>
    %c23 = arith.constant 23 : index
    %c0_59 = arith.constant 0 : index
    %c0_60 = arith.constant 0 : index
    %475 = vector.load %arg3[%c23, %c0_59, %c0_60] : memref<27x1x128xf32, #tpu.memory_space<vmem>>, vector<1x1x128xf32>
    %476 = vector.shape_cast %475 : vector<1x1x128xf32> to vector<1x128xf32>
    %477 = vector.extract_strided_slice %404 {offsets = [1, 0, 0], sizes = [1, 10, 128], strides = [1, 1, 1]} : vector<10x10x128xbf16> to vector<1x10x128xbf16>
    %478 = vector.shape_cast %477 : vector<1x10x128xbf16> to vector<10x128xbf16>
    %479 = arith.extf %478 : vector<10x128xbf16> to vector<10x128xf32>
    %480 = vector.extract_strided_slice %479 {offsets = [0, 0], sizes = [8, 128], strides = [1, 1]} : vector<10x128xf32> to vector<8x128xf32>
    %481 = vector.broadcast %472 : vector<1x128xf32> to vector<8x128xf32>
    %482 = arith.mulf %480, %481 : vector<8x128xf32>
    %483 = arith.addf %425, %482 : vector<8x128xf32>
    %484 = vector.extract_strided_slice %479 {offsets = [1, 0], sizes = [8, 128], strides = [1, 1]} : vector<10x128xf32> to vector<8x128xf32>
    %485 = vector.broadcast %474 : vector<1x128xf32> to vector<8x128xf32>
    %486 = arith.mulf %484, %485 : vector<8x128xf32>
    %487 = arith.addf %483, %486 : vector<8x128xf32>
    %488 = vector.extract_strided_slice %479 {offsets = [2, 0], sizes = [8, 128], strides = [1, 1]} : vector<10x128xf32> to vector<8x128xf32>
    %489 = vector.broadcast %476 : vector<1x128xf32> to vector<8x128xf32>
    %490 = arith.mulf %488, %489 : vector<8x128xf32>
    %491 = arith.addf %487, %490 : vector<8x128xf32>
    %492 = vector.extract_strided_slice %404 {offsets = [3, 0, 0], sizes = [1, 10, 128], strides = [1, 1, 1]} : vector<10x10x128xbf16> to vector<1x10x128xbf16>
    %493 = vector.shape_cast %492 : vector<1x10x128xbf16> to vector<10x128xbf16>
    %494 = arith.extf %493 : vector<10x128xbf16> to vector<10x128xf32>
    %495 = vector.extract_strided_slice %494 {offsets = [0, 0], sizes = [8, 128], strides = [1, 1]} : vector<10x128xf32> to vector<8x128xf32>
    %496 = vector.broadcast %472 : vector<1x128xf32> to vector<8x128xf32>
    %497 = arith.mulf %495, %496 : vector<8x128xf32>
    %498 = arith.addf %440, %497 : vector<8x128xf32>
    %499 = vector.extract_strided_slice %494 {offsets = [1, 0], sizes = [8, 128], strides = [1, 1]} : vector<10x128xf32> to vector<8x128xf32>
    %500 = vector.broadcast %474 : vector<1x128xf32> to vector<8x128xf32>
    %501 = arith.mulf %499, %500 : vector<8x128xf32>
    %502 = arith.addf %498, %501 : vector<8x128xf32>
    %503 = vector.extract_strided_slice %494 {offsets = [2, 0], sizes = [8, 128], strides = [1, 1]} : vector<10x128xf32> to vector<8x128xf32>
    %504 = vector.broadcast %476 : vector<1x128xf32> to vector<8x128xf32>
    %505 = arith.mulf %503, %504 : vector<8x128xf32>
    %506 = arith.addf %502, %505 : vector<8x128xf32>
    %507 = vector.extract_strided_slice %404 {offsets = [5, 0, 0], sizes = [1, 10, 128], strides = [1, 1, 1]} : vector<10x10x128xbf16> to vector<1x10x128xbf16>
    %508 = vector.shape_cast %507 : vector<1x10x128xbf16> to vector<10x128xbf16>
    %509 = arith.extf %508 : vector<10x128xbf16> to vector<10x128xf32>
    %510 = vector.extract_strided_slice %509 {offsets = [0, 0], sizes = [8, 128], strides = [1, 1]} : vector<10x128xf32> to vector<8x128xf32>
    %511 = vector.broadcast %472 : vector<1x128xf32> to vector<8x128xf32>
    %512 = arith.mulf %510, %511 : vector<8x128xf32>
    %513 = arith.addf %455, %512 : vector<8x128xf32>
    %514 = vector.extract_strided_slice %509 {offsets = [1, 0], sizes = [8, 128], strides = [1, 1]} : vector<10x128xf32> to vector<8x128xf32>
    %515 = vector.broadcast %474 : vector<1x128xf32> to vector<8x128xf32>
    %516 = arith.mulf %514, %515 : vector<8x128xf32>
    %517 = arith.addf %513, %516 : vector<8x128xf32>
    %518 = vector.extract_strided_slice %509 {offsets = [2, 0], sizes = [8, 128], strides = [1, 1]} : vector<10x128xf32> to vector<8x128xf32>
    %519 = vector.broadcast %476 : vector<1x128xf32> to vector<8x128xf32>
    %520 = arith.mulf %518, %519 : vector<8x128xf32>
    %521 = arith.addf %517, %520 : vector<8x128xf32>
    %522 = vector.extract_strided_slice %404 {offsets = [7, 0, 0], sizes = [1, 10, 128], strides = [1, 1, 1]} : vector<10x10x128xbf16> to vector<1x10x128xbf16>
    %523 = vector.shape_cast %522 : vector<1x10x128xbf16> to vector<10x128xbf16>
    %524 = arith.extf %523 : vector<10x128xbf16> to vector<10x128xf32>
    %525 = vector.extract_strided_slice %524 {offsets = [0, 0], sizes = [8, 128], strides = [1, 1]} : vector<10x128xf32> to vector<8x128xf32>
    %526 = vector.broadcast %472 : vector<1x128xf32> to vector<8x128xf32>
    %527 = arith.mulf %525, %526 : vector<8x128xf32>
    %528 = arith.addf %470, %527 : vector<8x128xf32>
    %529 = vector.extract_strided_slice %524 {offsets = [1, 0], sizes = [8, 128], strides = [1, 1]} : vector<10x128xf32> to vector<8x128xf32>
    %530 = vector.broadcast %474 : vector<1x128xf32> to vector<8x128xf32>
    %531 = arith.mulf %529, %530 : vector<8x128xf32>
    %532 = arith.addf %528, %531 : vector<8x128xf32>
    %533 = vector.extract_strided_slice %524 {offsets = [2, 0], sizes = [8, 128], strides = [1, 1]} : vector<10x128xf32> to vector<8x128xf32>
    %534 = vector.broadcast %476 : vector<1x128xf32> to vector<8x128xf32>
    %535 = arith.mulf %533, %534 : vector<8x128xf32>
    %536 = arith.addf %532, %535 : vector<8x128xf32>
    %c24 = arith.constant 24 : index
    %c0_61 = arith.constant 0 : index
    %c0_62 = arith.constant 0 : index
    %537 = vector.load %arg3[%c24, %c0_61, %c0_62] : memref<27x1x128xf32, #tpu.memory_space<vmem>>, vector<1x1x128xf32>
    %538 = vector.shape_cast %537 : vector<1x1x128xf32> to vector<1x128xf32>
    %c25 = arith.constant 25 : index
    %c0_63 = arith.constant 0 : index
    %c0_64 = arith.constant 0 : index
    %539 = vector.load %arg3[%c25, %c0_63, %c0_64] : memref<27x1x128xf32, #tpu.memory_space<vmem>>, vector<1x1x128xf32>
    %540 = vector.shape_cast %539 : vector<1x1x128xf32> to vector<1x128xf32>
    %c26 = arith.constant 26 : index
    %c0_65 = arith.constant 0 : index
    %c0_66 = arith.constant 0 : index
    %541 = vector.load %arg3[%c26, %c0_65, %c0_66] : memref<27x1x128xf32, #tpu.memory_space<vmem>>, vector<1x1x128xf32>
    %542 = vector.shape_cast %541 : vector<1x1x128xf32> to vector<1x128xf32>
    %543 = vector.extract_strided_slice %404 {offsets = [2, 0, 0], sizes = [1, 10, 128], strides = [1, 1, 1]} : vector<10x10x128xbf16> to vector<1x10x128xbf16>
    %544 = vector.shape_cast %543 : vector<1x10x128xbf16> to vector<10x128xbf16>
    %545 = arith.extf %544 : vector<10x128xbf16> to vector<10x128xf32>
    %546 = vector.extract_strided_slice %545 {offsets = [0, 0], sizes = [8, 128], strides = [1, 1]} : vector<10x128xf32> to vector<8x128xf32>
    %547 = vector.broadcast %538 : vector<1x128xf32> to vector<8x128xf32>
    %548 = arith.mulf %546, %547 : vector<8x128xf32>
    %549 = arith.addf %491, %548 : vector<8x128xf32>
    %550 = vector.extract_strided_slice %545 {offsets = [1, 0], sizes = [8, 128], strides = [1, 1]} : vector<10x128xf32> to vector<8x128xf32>
    %551 = vector.broadcast %540 : vector<1x128xf32> to vector<8x128xf32>
    %552 = arith.mulf %550, %551 : vector<8x128xf32>
    %553 = arith.addf %549, %552 : vector<8x128xf32>
    %554 = vector.extract_strided_slice %545 {offsets = [2, 0], sizes = [8, 128], strides = [1, 1]} : vector<10x128xf32> to vector<8x128xf32>
    %555 = vector.broadcast %542 : vector<1x128xf32> to vector<8x128xf32>
    %556 = arith.mulf %554, %555 : vector<8x128xf32>
    %557 = arith.addf %553, %556 : vector<8x128xf32>
    %558 = vector.extract_strided_slice %404 {offsets = [4, 0, 0], sizes = [1, 10, 128], strides = [1, 1, 1]} : vector<10x10x128xbf16> to vector<1x10x128xbf16>
    %559 = vector.shape_cast %558 : vector<1x10x128xbf16> to vector<10x128xbf16>
    %560 = arith.extf %559 : vector<10x128xbf16> to vector<10x128xf32>
    %561 = vector.extract_strided_slice %560 {offsets = [0, 0], sizes = [8, 128], strides = [1, 1]} : vector<10x128xf32> to vector<8x128xf32>
    %562 = vector.broadcast %538 : vector<1x128xf32> to vector<8x128xf32>
    %563 = arith.mulf %561, %562 : vector<8x128xf32>
    %564 = arith.addf %506, %563 : vector<8x128xf32>
    %565 = vector.extract_strided_slice %560 {offsets = [1, 0], sizes = [8, 128], strides = [1, 1]} : vector<10x128xf32> to vector<8x128xf32>
    %566 = vector.broadcast %540 : vector<1x128xf32> to vector<8x128xf32>
    %567 = arith.mulf %565, %566 : vector<8x128xf32>
    %568 = arith.addf %564, %567 : vector<8x128xf32>
    %569 = vector.extract_strided_slice %560 {offsets = [2, 0], sizes = [8, 128], strides = [1, 1]} : vector<10x128xf32> to vector<8x128xf32>
    %570 = vector.broadcast %542 : vector<1x128xf32> to vector<8x128xf32>
    %571 = arith.mulf %569, %570 : vector<8x128xf32>
    %572 = arith.addf %568, %571 : vector<8x128xf32>
    %573 = vector.extract_strided_slice %404 {offsets = [6, 0, 0], sizes = [1, 10, 128], strides = [1, 1, 1]} : vector<10x10x128xbf16> to vector<1x10x128xbf16>
    %574 = vector.shape_cast %573 : vector<1x10x128xbf16> to vector<10x128xbf16>
    %575 = arith.extf %574 : vector<10x128xbf16> to vector<10x128xf32>
    %576 = vector.extract_strided_slice %575 {offsets = [0, 0], sizes = [8, 128], strides = [1, 1]} : vector<10x128xf32> to vector<8x128xf32>
    %577 = vector.broadcast %538 : vector<1x128xf32> to vector<8x128xf32>
    %578 = arith.mulf %576, %577 : vector<8x128xf32>
    %579 = arith.addf %521, %578 : vector<8x128xf32>
    %580 = vector.extract_strided_slice %575 {offsets = [1, 0], sizes = [8, 128], strides = [1, 1]} : vector<10x128xf32> to vector<8x128xf32>
    %581 = vector.broadcast %540 : vector<1x128xf32> to vector<8x128xf32>
    %582 = arith.mulf %580, %581 : vector<8x128xf32>
    %583 = arith.addf %579, %582 : vector<8x128xf32>
    %584 = vector.extract_strided_slice %575 {offsets = [2, 0], sizes = [8, 128], strides = [1, 1]} : vector<10x128xf32> to vector<8x128xf32>
    %585 = vector.broadcast %542 : vector<1x128xf32> to vector<8x128xf32>
    %586 = arith.mulf %584, %585 : vector<8x128xf32>
    %587 = arith.addf %583, %586 : vector<8x128xf32>
    %588 = vector.extract_strided_slice %404 {offsets = [8, 0, 0], sizes = [1, 10, 128], strides = [1, 1, 1]} : vector<10x10x128xbf16> to vector<1x10x128xbf16>
    %589 = vector.shape_cast %588 : vector<1x10x128xbf16> to vector<10x128xbf16>
    %590 = arith.extf %589 : vector<10x128xbf16> to vector<10x128xf32>
    %591 = vector.extract_strided_slice %590 {offsets = [0, 0], sizes = [8, 128], strides = [1, 1]} : vector<10x128xf32> to vector<8x128xf32>
    %592 = vector.broadcast %538 : vector<1x128xf32> to vector<8x128xf32>
    %593 = arith.mulf %591, %592 : vector<8x128xf32>
    %594 = arith.addf %536, %593 : vector<8x128xf32>
    %595 = vector.extract_strided_slice %590 {offsets = [1, 0], sizes = [8, 128], strides = [1, 1]} : vector<10x128xf32> to vector<8x128xf32>
    %596 = vector.broadcast %540 : vector<1x128xf32> to vector<8x128xf32>
    %597 = arith.mulf %595, %596 : vector<8x128xf32>
    %598 = arith.addf %594, %597 : vector<8x128xf32>
    %599 = vector.extract_strided_slice %590 {offsets = [2, 0], sizes = [8, 128], strides = [1, 1]} : vector<10x128xf32> to vector<8x128xf32>
    %600 = vector.broadcast %542 : vector<1x128xf32> to vector<8x128xf32>
    %601 = arith.mulf %599, %600 : vector<8x128xf32>
    %602 = arith.addf %598, %601 : vector<8x128xf32>
    %c0_67 = arith.constant 0 : index
    %c0_68 = arith.constant 0 : index
    %603 = vector.load %arg4[%c0_67, %c0_68] : memref<1x128xf32, #tpu.memory_space<vmem>>, vector<1x128xf32>
    %c0_69 = arith.constant 0 : index
    %c0_70 = arith.constant 0 : index
    %604 = vector.load %arg5[%c0_69, %c0_70] : memref<1x128xf32, #tpu.memory_space<vmem>>, vector<1x128xf32>
    %c0_71 = arith.constant 0 : index
    %c0_72 = arith.constant 0 : index
    %605 = vector.load %arg6[%c0_71, %c0_72] : memref<128x128xbf16, #tpu.memory_space<vmem>>, vector<128x128xbf16>
    %c0_73 = arith.constant 0 : index
    %c0_74 = arith.constant 0 : index
    %606 = vector.load %arg7[%c0_73, %c0_74] : memref<1x128xf32, #tpu.memory_space<vmem>>, vector<1x128xf32>
    %c0_75 = arith.constant 0 : index
    %c0_76 = arith.constant 0 : index
    %607 = vector.load %arg8[%c0_75, %c0_76] : memref<1x128xf32, #tpu.memory_space<vmem>>, vector<1x128xf32>
    %608 = vector.broadcast %603 : vector<1x128xf32> to vector<8x128xf32>
    %609 = arith.mulf %557, %608 : vector<8x128xf32>
    %610 = vector.broadcast %604 : vector<1x128xf32> to vector<8x128xf32>
    %611 = arith.addf %609, %610 : vector<8x128xf32>
    %cst = arith.constant 0.000000e+00 : f32
    %612 = vector.broadcast %cst : f32 to vector<8x128xf32>
    %613 = arith.maximumf %611, %612 : vector<8x128xf32>
    %614 = arith.truncf %613 : vector<8x128xf32> to vector<8x128xbf16>
    %cst_77 = arith.constant dense<0.000000e+00> : vector<8x128xf32>
    %615 = tpu.matmul %614, %605, %cst_77 {dimension_numbers = #tpu.dot_dimension_numbers<[1], [0], [0], [1], [0, 0, 1, 1], [], []>} : vector<8x128xbf16>, vector<128x128xbf16>, vector<8x128xf32> -> vector<8x128xf32>
    %616 = vector.broadcast %606 : vector<1x128xf32> to vector<8x128xf32>
    %617 = arith.mulf %615, %616 : vector<8x128xf32>
    %618 = vector.broadcast %607 : vector<1x128xf32> to vector<8x128xf32>
    %619 = arith.addf %617, %618 : vector<8x128xf32>
    %cst_78 = arith.constant 0.000000e+00 : f32
    %620 = vector.broadcast %cst_78 : f32 to vector<8x128xf32>
    %621 = arith.maximumf %619, %620 : vector<8x128xf32>
    %622 = arith.truncf %621 : vector<8x128xf32> to vector<8x128xbf16>
    %c0_79 = arith.constant 0 : index
    %c0_80 = arith.constant 0 : index
    %c0_81 = arith.constant 0 : index
    %c0_82 = arith.constant 0 : index
    %c0_83 = arith.constant 0 : index
    %623 = vector.load %arg9[%c0_79, %c0_80, %c0_81, %c0_82, %c0_83] : memref<1x1x4x8x128xbf16, #tpu.memory_space<vmem>>, vector<1x1x1x8x128xbf16>
    %624 = vector.shape_cast %623 : vector<1x1x1x8x128xbf16> to vector<8x128xbf16>
    %625 = vector.shape_cast %622 : vector<8x128xbf16> to vector<1x1x1x8x128xbf16>
    tpu.vector_store %arg9[%c0_79, %c0_80, %c0_81, %c0_82, %c0_83], %625 {strides = array<i32>} : memref<1x1x4x8x128xbf16, #tpu.memory_space<vmem>>, vector<1x1x1x8x128xbf16>,
    %626 = vector.broadcast %603 : vector<1x128xf32> to vector<8x128xf32>
    %627 = arith.mulf %572, %626 : vector<8x128xf32>
    %628 = vector.broadcast %604 : vector<1x128xf32> to vector<8x128xf32>
    %629 = arith.addf %627, %628 : vector<8x128xf32>
    %cst_84 = arith.constant 0.000000e+00 : f32
    %630 = vector.broadcast %cst_84 : f32 to vector<8x128xf32>
    %631 = arith.maximumf %629, %630 : vector<8x128xf32>
    %632 = arith.truncf %631 : vector<8x128xf32> to vector<8x128xbf16>
    %cst_85 = arith.constant dense<0.000000e+00> : vector<8x128xf32>
    %633 = tpu.matmul %632, %605, %cst_85 {dimension_numbers = #tpu.dot_dimension_numbers<[1], [0], [0], [1], [0, 0, 1, 1], [], []>} : vector<8x128xbf16>, vector<128x128xbf16>, vector<8x128xf32> -> vector<8x128xf32>
    %634 = vector.broadcast %606 : vector<1x128xf32> to vector<8x128xf32>
    %635 = arith.mulf %633, %634 : vector<8x128xf32>
    %636 = vector.broadcast %607 : vector<1x128xf32> to vector<8x128xf32>
    %637 = arith.addf %635, %636 : vector<8x128xf32>
    %cst_86 = arith.constant 0.000000e+00 : f32
    %638 = vector.broadcast %cst_86 : f32 to vector<8x128xf32>
    %639 = arith.maximumf %637, %638 : vector<8x128xf32>
    %640 = arith.truncf %639 : vector<8x128xf32> to vector<8x128xbf16>
    %c0_87 = arith.constant 0 : index
    %c0_88 = arith.constant 0 : index
    %c1_89 = arith.constant 1 : index
    %c0_90 = arith.constant 0 : index
    %c0_91 = arith.constant 0 : index
    %641 = vector.load %arg9[%c0_87, %c0_88, %c1_89, %c0_90, %c0_91] : memref<1x1x4x8x128xbf16, #tpu.memory_space<vmem>>, vector<1x1x1x8x128xbf16>
    %642 = vector.shape_cast %641 : vector<1x1x1x8x128xbf16> to vector<8x128xbf16>
    %643 = vector.shape_cast %640 : vector<8x128xbf16> to vector<1x1x1x8x128xbf16>
    tpu.vector_store %arg9[%c0_87, %c0_88, %c1_89, %c0_90, %c0_91], %643 {strides = array<i32>} : memref<1x1x4x8x128xbf16, #tpu.memory_space<vmem>>, vector<1x1x1x8x128xbf16>,
    %644 = vector.broadcast %603 : vector<1x128xf32> to vector<8x128xf32>
    %645 = arith.mulf %587, %644 : vector<8x128xf32>
    %646 = vector.broadcast %604 : vector<1x128xf32> to vector<8x128xf32>
    %647 = arith.addf %645, %646 : vector<8x128xf32>
    %cst_92 = arith.constant 0.000000e+00 : f32
    %648 = vector.broadcast %cst_92 : f32 to vector<8x128xf32>
    %649 = arith.maximumf %647, %648 : vector<8x128xf32>
    %650 = arith.truncf %649 : vector<8x128xf32> to vector<8x128xbf16>
    %cst_93 = arith.constant dense<0.000000e+00> : vector<8x128xf32>
    %651 = tpu.matmul %650, %605, %cst_93 {dimension_numbers = #tpu.dot_dimension_numbers<[1], [0], [0], [1], [0, 0, 1, 1], [], []>} : vector<8x128xbf16>, vector<128x128xbf16>, vector<8x128xf32> -> vector<8x128xf32>
    %652 = vector.broadcast %606 : vector<1x128xf32> to vector<8x128xf32>
    %653 = arith.mulf %651, %652 : vector<8x128xf32>
    %654 = vector.broadcast %607 : vector<1x128xf32> to vector<8x128xf32>
    %655 = arith.addf %653, %654 : vector<8x128xf32>
    %cst_94 = arith.constant 0.000000e+00 : f32
    %656 = vector.broadcast %cst_94 : f32 to vector<8x128xf32>
    %657 = arith.maximumf %655, %656 : vector<8x128xf32>
    %658 = arith.truncf %657 : vector<8x128xf32> to vector<8x128xbf16>
    %c0_95 = arith.constant 0 : index
    %c0_96 = arith.constant 0 : index
    %c2_97 = arith.constant 2 : index
    %c0_98 = arith.constant 0 : index
    %c0_99 = arith.constant 0 : index
    %659 = vector.load %arg9[%c0_95, %c0_96, %c2_97, %c0_98, %c0_99] : memref<1x1x4x8x128xbf16, #tpu.memory_space<vmem>>, vector<1x1x1x8x128xbf16>
    %660 = vector.shape_cast %659 : vector<1x1x1x8x128xbf16> to vector<8x128xbf16>
    %661 = vector.shape_cast %658 : vector<8x128xbf16> to vector<1x1x1x8x128xbf16>
    tpu.vector_store %arg9[%c0_95, %c0_96, %c2_97, %c0_98, %c0_99], %661 {strides = array<i32>} : memref<1x1x4x8x128xbf16, #tpu.memory_space<vmem>>, vector<1x1x1x8x128xbf16>,
    %662 = vector.broadcast %603 : vector<1x128xf32> to vector<8x128xf32>
    %663 = arith.mulf %602, %662 : vector<8x128xf32>
    %664 = vector.broadcast %604 : vector<1x128xf32> to vector<8x128xf32>
    %665 = arith.addf %663, %664 : vector<8x128xf32>
    %cst_100 = arith.constant 0.000000e+00 : f32
    %666 = vector.broadcast %cst_100 : f32 to vector<8x128xf32>
    %667 = arith.maximumf %665, %666 : vector<8x128xf32>
    %668 = arith.truncf %667 : vector<8x128xf32> to vector<8x128xbf16>
    %cst_101 = arith.constant dense<0.000000e+00> : vector<8x128xf32>
    %669 = tpu.matmul %668, %605, %cst_101 {dimension_numbers = #tpu.dot_dimension_numbers<[1], [0], [0], [1], [0, 0, 1, 1], [], []>} : vector<8x128xbf16>, vector<128x128xbf16>, vector<8x128xf32> -> vector<8x128xf32>
    %670 = vector.broadcast %606 : vector<1x128xf32> to vector<8x128xf32>
    %671 = arith.mulf %669, %670 : vector<8x128xf32>
    %672 = vector.broadcast %607 : vector<1x128xf32> to vector<8x128xf32>
    %673 = arith.addf %671, %672 : vector<8x128xf32>
    %cst_102 = arith.constant 0.000000e+00 : f32
    %674 = vector.broadcast %cst_102 : f32 to vector<8x128xf32>
    %675 = arith.maximumf %673, %674 : vector<8x128xf32>
    %676 = arith.truncf %675 : vector<8x128xf32> to vector<8x128xbf16>
    %c0_103 = arith.constant 0 : index
    %c0_104 = arith.constant 0 : index
    %c3_105 = arith.constant 3 : index
    %c0_106 = arith.constant 0 : index
    %c0_107 = arith.constant 0 : index
    %677 = vector.load %arg9[%c0_103, %c0_104, %c3_105, %c0_106, %c0_107] : memref<1x1x4x8x128xbf16, #tpu.memory_space<vmem>>, vector<1x1x1x8x128xbf16>
    %678 = vector.shape_cast %677 : vector<1x1x1x8x128xbf16> to vector<8x128xbf16>
    %679 = vector.shape_cast %676 : vector<8x128xbf16> to vector<1x1x1x8x128xbf16>
    tpu.vector_store %arg9[%c0_103, %c0_104, %c3_105, %c0_106, %c0_107], %679 {strides = array<i32>} : memref<1x1x4x8x128xbf16, #tpu.memory_space<vmem>>, vector<1x1x1x8x128xbf16>,
    return
  }
  func.func @transform_0(%arg0: i32, %arg1: i32) -> (i32, i32, i32, i32, i32) {
    %c0_i32 = arith.constant 0 : i32
    %c0_i32_0 = arith.constant 0 : i32
    %c0_i32_1 = arith.constant 0 : i32
    %c0_i32_2 = arith.constant 0 : i32
    %c0_i32_3 = arith.constant 0 : i32
    return %arg0, %c0_i32, %c0_i32_0, %c0_i32_1, %c0_i32_2 : i32, i32, i32, i32, i32
  }
  func.func @transform_1(%arg0: i32, %arg1: i32) -> (i32, i32, i32) {
    %c0_i32 = arith.constant 0 : i32
    %c0_i32_0 = arith.constant 0 : i32
    %c0_i32_1 = arith.constant 0 : i32
    %c0_i32_2 = arith.constant 0 : i32
    return %c0_i32, %c0_i32_0, %c0_i32_1 : i32, i32, i32
  }
  func.func @transform_2(%arg0: i32, %arg1: i32) -> (i32, i32) {
    %c0_i32 = arith.constant 0 : i32
    %c0_i32_0 = arith.constant 0 : i32
    %c0_i32_1 = arith.constant 0 : i32
    return %c0_i32, %c0_i32_0 : i32, i32
  }
  func.func @transform_3(%arg0: i32, %arg1: i32) -> (i32, i32) {
    %c0_i32 = arith.constant 0 : i32
    %c0_i32_0 = arith.constant 0 : i32
    %c0_i32_1 = arith.constant 0 : i32
    return %c0_i32, %c0_i32_0 : i32, i32
  }
  func.func @transform_4(%arg0: i32, %arg1: i32) -> (i32, i32) {
    %c0_i32 = arith.constant 0 : i32
    %c0_i32_0 = arith.constant 0 : i32
    %c0_i32_1 = arith.constant 0 : i32
    return %c0_i32, %c0_i32_0 : i32, i32
  }
  func.func @transform_5(%arg0: i32, %arg1: i32) -> (i32, i32) {
    %c0_i32 = arith.constant 0 : i32
    %c0_i32_0 = arith.constant 0 : i32
    %c0_i32_1 = arith.constant 0 : i32
    return %c0_i32, %c0_i32_0 : i32, i32
  }
  func.func @transform_6(%arg0: i32, %arg1: i32) -> (i32, i32) {
    %c0_i32 = arith.constant 0 : i32
    %c0_i32_0 = arith.constant 0 : i32
    %c0_i32_1 = arith.constant 0 : i32
    return %c0_i32, %c0_i32_0 : i32, i32
  }
  func.func @transform_7(%arg0: i32, %arg1: i32) -> (i32, i32, i32, i32, i32) {
    %c0_i32 = arith.constant 0 : i32
    %c0_i32_0 = arith.constant 0 : i32
    %c0_i32_1 = arith.constant 0 : i32
    %c0_i32_2 = arith.constant 0 : i32
    return %arg0, %arg1, %c0_i32, %c0_i32_0, %c0_i32_1 : i32, i32, i32, i32, i32
  }
}

module attributes {stable_mosaic.version = 11 : i64} {
  func.func @_block_kernel(%arg0: i32, %arg1: i32, %arg2: memref<1x6x6x6x128xbf16, #tpu.memory_space<vmem>>, %arg3: memref<27x1x128xf32, #tpu.memory_space<vmem>>, %arg4: memref<1x128xf32, #tpu.memory_space<vmem>>, %arg5: memref<1x128xf32, #tpu.memory_space<vmem>>, %arg6: memref<128x128xbf16, #tpu.memory_space<vmem>>, %arg7: memref<1x128xf32, #tpu.memory_space<vmem>>, %arg8: memref<1x128xf32, #tpu.memory_space<vmem>>, %arg9: memref<1x1x2x4x128xbf16, #tpu.memory_space<vmem>>) attributes {dimension_semantics = [#tpu.dimension_semantics<parallel>, #tpu.dimension_semantics<parallel>], iteration_bounds = array<i64: 2, 2>, scalar_prefetch = 0 : i64, scratch_operands = 0 : i64, tpu.core_type = #tpu.core_type<tc>, window_params = [{transform_indices = @transform_0, window_bounds = array<i64: 1, 6, 6, 6, 128>}, {pipeline_mode = #tpu.pipeline_mode<synchronous>, transform_indices = @transform_1, window_bounds = array<i64: 27, 1, 128>}, {pipeline_mode = #tpu.pipeline_mode<synchronous>, transform_indices = @transform_2, window_bounds = array<i64: 1, 128>}, {pipeline_mode = #tpu.pipeline_mode<synchronous>, transform_indices = @transform_3, window_bounds = array<i64: 1, 128>}, {pipeline_mode = #tpu.pipeline_mode<synchronous>, transform_indices = @transform_4, window_bounds = array<i64: 128, 128>}, {pipeline_mode = #tpu.pipeline_mode<synchronous>, transform_indices = @transform_5, window_bounds = array<i64: 1, 128>}, {pipeline_mode = #tpu.pipeline_mode<synchronous>, transform_indices = @transform_6, window_bounds = array<i64: 1, 128>}, {transform_indices = @transform_7, window_bounds = array<i64: 1, 1, 2, 4, 128>}]} {
    %c2_i32 = arith.constant 2 : i32
    %0 = arith.muli %arg1, %c2_i32 : i32
    %c0_i32 = arith.constant 0 : i32
    %1 = arith.addi %0, %c0_i32 : i32
    %c0 = arith.constant 0 : index
    %2 = arith.index_cast %1 : i32 to index
    %c0_0 = arith.constant 0 : index
    %c0_1 = arith.constant 0 : index
    %c0_2 = arith.constant 0 : index
    %3 = vector.load %arg2[%c0, %2, %c0_0, %c0_1, %c0_2] : memref<1x6x6x6x128xbf16, #tpu.memory_space<vmem>>, vector<1x1x6x6x128xbf16>
    %4 = vector.shape_cast %3 : vector<1x1x6x6x128xbf16> to vector<6x6x128xbf16>
    %c0_3 = arith.constant 0 : index
    %c0_4 = arith.constant 0 : index
    %c0_5 = arith.constant 0 : index
    %5 = vector.load %arg3[%c0_3, %c0_4, %c0_5] : memref<27x1x128xf32, #tpu.memory_space<vmem>>, vector<1x1x128xf32>
    %6 = vector.shape_cast %5 : vector<1x1x128xf32> to vector<1x128xf32>
    %c1 = arith.constant 1 : index
    %c0_6 = arith.constant 0 : index
    %c0_7 = arith.constant 0 : index
    %7 = vector.load %arg3[%c1, %c0_6, %c0_7] : memref<27x1x128xf32, #tpu.memory_space<vmem>>, vector<1x1x128xf32>
    %8 = vector.shape_cast %7 : vector<1x1x128xf32> to vector<1x128xf32>
    %c2 = arith.constant 2 : index
    %c0_8 = arith.constant 0 : index
    %c0_9 = arith.constant 0 : index
    %9 = vector.load %arg3[%c2, %c0_8, %c0_9] : memref<27x1x128xf32, #tpu.memory_space<vmem>>, vector<1x1x128xf32>
    %10 = vector.shape_cast %9 : vector<1x1x128xf32> to vector<1x128xf32>
    %11 = vector.extract_strided_slice %4 {offsets = [0, 0, 0], sizes = [1, 6, 128], strides = [1, 1, 1]} : vector<6x6x128xbf16> to vector<1x6x128xbf16>
    %12 = vector.shape_cast %11 : vector<1x6x128xbf16> to vector<6x128xbf16>
    %13 = arith.extf %12 : vector<6x128xbf16> to vector<6x128xf32>
    %14 = vector.extract_strided_slice %13 {offsets = [0, 0], sizes = [4, 128], strides = [1, 1]} : vector<6x128xf32> to vector<4x128xf32>
    %15 = vector.broadcast %6 : vector<1x128xf32> to vector<4x128xf32>
    %16 = arith.mulf %14, %15 : vector<4x128xf32>
    %17 = vector.extract_strided_slice %13 {offsets = [1, 0], sizes = [4, 128], strides = [1, 1]} : vector<6x128xf32> to vector<4x128xf32>
    %18 = vector.broadcast %8 : vector<1x128xf32> to vector<4x128xf32>
    %19 = arith.mulf %17, %18 : vector<4x128xf32>
    %20 = arith.addf %16, %19 : vector<4x128xf32>
    %21 = vector.extract_strided_slice %13 {offsets = [2, 0], sizes = [4, 128], strides = [1, 1]} : vector<6x128xf32> to vector<4x128xf32>
    %22 = vector.broadcast %10 : vector<1x128xf32> to vector<4x128xf32>
    %23 = arith.mulf %21, %22 : vector<4x128xf32>
    %24 = arith.addf %20, %23 : vector<4x128xf32>
    %25 = vector.extract_strided_slice %4 {offsets = [2, 0, 0], sizes = [1, 6, 128], strides = [1, 1, 1]} : vector<6x6x128xbf16> to vector<1x6x128xbf16>
    %26 = vector.shape_cast %25 : vector<1x6x128xbf16> to vector<6x128xbf16>
    %27 = arith.extf %26 : vector<6x128xbf16> to vector<6x128xf32>
    %28 = vector.extract_strided_slice %27 {offsets = [0, 0], sizes = [4, 128], strides = [1, 1]} : vector<6x128xf32> to vector<4x128xf32>
    %29 = vector.broadcast %6 : vector<1x128xf32> to vector<4x128xf32>
    %30 = arith.mulf %28, %29 : vector<4x128xf32>
    %31 = vector.extract_strided_slice %27 {offsets = [1, 0], sizes = [4, 128], strides = [1, 1]} : vector<6x128xf32> to vector<4x128xf32>
    %32 = vector.broadcast %8 : vector<1x128xf32> to vector<4x128xf32>
    %33 = arith.mulf %31, %32 : vector<4x128xf32>
    %34 = arith.addf %30, %33 : vector<4x128xf32>
    %35 = vector.extract_strided_slice %27 {offsets = [2, 0], sizes = [4, 128], strides = [1, 1]} : vector<6x128xf32> to vector<4x128xf32>
    %36 = vector.broadcast %10 : vector<1x128xf32> to vector<4x128xf32>
    %37 = arith.mulf %35, %36 : vector<4x128xf32>
    %38 = arith.addf %34, %37 : vector<4x128xf32>
    %c3 = arith.constant 3 : index
    %c0_10 = arith.constant 0 : index
    %c0_11 = arith.constant 0 : index
    %39 = vector.load %arg3[%c3, %c0_10, %c0_11] : memref<27x1x128xf32, #tpu.memory_space<vmem>>, vector<1x1x128xf32>
    %40 = vector.shape_cast %39 : vector<1x1x128xf32> to vector<1x128xf32>
    %c4 = arith.constant 4 : index
    %c0_12 = arith.constant 0 : index
    %c0_13 = arith.constant 0 : index
    %41 = vector.load %arg3[%c4, %c0_12, %c0_13] : memref<27x1x128xf32, #tpu.memory_space<vmem>>, vector<1x1x128xf32>
    %42 = vector.shape_cast %41 : vector<1x1x128xf32> to vector<1x128xf32>
    %c5 = arith.constant 5 : index
    %c0_14 = arith.constant 0 : index
    %c0_15 = arith.constant 0 : index
    %43 = vector.load %arg3[%c5, %c0_14, %c0_15] : memref<27x1x128xf32, #tpu.memory_space<vmem>>, vector<1x1x128xf32>
    %44 = vector.shape_cast %43 : vector<1x1x128xf32> to vector<1x128xf32>
    %45 = vector.extract_strided_slice %4 {offsets = [1, 0, 0], sizes = [1, 6, 128], strides = [1, 1, 1]} : vector<6x6x128xbf16> to vector<1x6x128xbf16>
    %46 = vector.shape_cast %45 : vector<1x6x128xbf16> to vector<6x128xbf16>
    %47 = arith.extf %46 : vector<6x128xbf16> to vector<6x128xf32>
    %48 = vector.extract_strided_slice %47 {offsets = [0, 0], sizes = [4, 128], strides = [1, 1]} : vector<6x128xf32> to vector<4x128xf32>
    %49 = vector.broadcast %40 : vector<1x128xf32> to vector<4x128xf32>
    %50 = arith.mulf %48, %49 : vector<4x128xf32>
    %51 = arith.addf %24, %50 : vector<4x128xf32>
    %52 = vector.extract_strided_slice %47 {offsets = [1, 0], sizes = [4, 128], strides = [1, 1]} : vector<6x128xf32> to vector<4x128xf32>
    %53 = vector.broadcast %42 : vector<1x128xf32> to vector<4x128xf32>
    %54 = arith.mulf %52, %53 : vector<4x128xf32>
    %55 = arith.addf %51, %54 : vector<4x128xf32>
    %56 = vector.extract_strided_slice %47 {offsets = [2, 0], sizes = [4, 128], strides = [1, 1]} : vector<6x128xf32> to vector<4x128xf32>
    %57 = vector.broadcast %44 : vector<1x128xf32> to vector<4x128xf32>
    %58 = arith.mulf %56, %57 : vector<4x128xf32>
    %59 = arith.addf %55, %58 : vector<4x128xf32>
    %60 = vector.extract_strided_slice %4 {offsets = [3, 0, 0], sizes = [1, 6, 128], strides = [1, 1, 1]} : vector<6x6x128xbf16> to vector<1x6x128xbf16>
    %61 = vector.shape_cast %60 : vector<1x6x128xbf16> to vector<6x128xbf16>
    %62 = arith.extf %61 : vector<6x128xbf16> to vector<6x128xf32>
    %63 = vector.extract_strided_slice %62 {offsets = [0, 0], sizes = [4, 128], strides = [1, 1]} : vector<6x128xf32> to vector<4x128xf32>
    %64 = vector.broadcast %40 : vector<1x128xf32> to vector<4x128xf32>
    %65 = arith.mulf %63, %64 : vector<4x128xf32>
    %66 = arith.addf %38, %65 : vector<4x128xf32>
    %67 = vector.extract_strided_slice %62 {offsets = [1, 0], sizes = [4, 128], strides = [1, 1]} : vector<6x128xf32> to vector<4x128xf32>
    %68 = vector.broadcast %42 : vector<1x128xf32> to vector<4x128xf32>
    %69 = arith.mulf %67, %68 : vector<4x128xf32>
    %70 = arith.addf %66, %69 : vector<4x128xf32>
    %71 = vector.extract_strided_slice %62 {offsets = [2, 0], sizes = [4, 128], strides = [1, 1]} : vector<6x128xf32> to vector<4x128xf32>
    %72 = vector.broadcast %44 : vector<1x128xf32> to vector<4x128xf32>
    %73 = arith.mulf %71, %72 : vector<4x128xf32>
    %74 = arith.addf %70, %73 : vector<4x128xf32>
    %c6 = arith.constant 6 : index
    %c0_16 = arith.constant 0 : index
    %c0_17 = arith.constant 0 : index
    %75 = vector.load %arg3[%c6, %c0_16, %c0_17] : memref<27x1x128xf32, #tpu.memory_space<vmem>>, vector<1x1x128xf32>
    %76 = vector.shape_cast %75 : vector<1x1x128xf32> to vector<1x128xf32>
    %c7 = arith.constant 7 : index
    %c0_18 = arith.constant 0 : index
    %c0_19 = arith.constant 0 : index
    %77 = vector.load %arg3[%c7, %c0_18, %c0_19] : memref<27x1x128xf32, #tpu.memory_space<vmem>>, vector<1x1x128xf32>
    %78 = vector.shape_cast %77 : vector<1x1x128xf32> to vector<1x128xf32>
    %c8 = arith.constant 8 : index
    %c0_20 = arith.constant 0 : index
    %c0_21 = arith.constant 0 : index
    %79 = vector.load %arg3[%c8, %c0_20, %c0_21] : memref<27x1x128xf32, #tpu.memory_space<vmem>>, vector<1x1x128xf32>
    %80 = vector.shape_cast %79 : vector<1x1x128xf32> to vector<1x128xf32>
    %81 = vector.extract_strided_slice %4 {offsets = [2, 0, 0], sizes = [1, 6, 128], strides = [1, 1, 1]} : vector<6x6x128xbf16> to vector<1x6x128xbf16>
    %82 = vector.shape_cast %81 : vector<1x6x128xbf16> to vector<6x128xbf16>
    %83 = arith.extf %82 : vector<6x128xbf16> to vector<6x128xf32>
    %84 = vector.extract_strided_slice %83 {offsets = [0, 0], sizes = [4, 128], strides = [1, 1]} : vector<6x128xf32> to vector<4x128xf32>
    %85 = vector.broadcast %76 : vector<1x128xf32> to vector<4x128xf32>
    %86 = arith.mulf %84, %85 : vector<4x128xf32>
    %87 = arith.addf %59, %86 : vector<4x128xf32>
    %88 = vector.extract_strided_slice %83 {offsets = [1, 0], sizes = [4, 128], strides = [1, 1]} : vector<6x128xf32> to vector<4x128xf32>
    %89 = vector.broadcast %78 : vector<1x128xf32> to vector<4x128xf32>
    %90 = arith.mulf %88, %89 : vector<4x128xf32>
    %91 = arith.addf %87, %90 : vector<4x128xf32>
    %92 = vector.extract_strided_slice %83 {offsets = [2, 0], sizes = [4, 128], strides = [1, 1]} : vector<6x128xf32> to vector<4x128xf32>
    %93 = vector.broadcast %80 : vector<1x128xf32> to vector<4x128xf32>
    %94 = arith.mulf %92, %93 : vector<4x128xf32>
    %95 = arith.addf %91, %94 : vector<4x128xf32>
    %96 = vector.extract_strided_slice %4 {offsets = [4, 0, 0], sizes = [1, 6, 128], strides = [1, 1, 1]} : vector<6x6x128xbf16> to vector<1x6x128xbf16>
    %97 = vector.shape_cast %96 : vector<1x6x128xbf16> to vector<6x128xbf16>
    %98 = arith.extf %97 : vector<6x128xbf16> to vector<6x128xf32>
    %99 = vector.extract_strided_slice %98 {offsets = [0, 0], sizes = [4, 128], strides = [1, 1]} : vector<6x128xf32> to vector<4x128xf32>
    %100 = vector.broadcast %76 : vector<1x128xf32> to vector<4x128xf32>
    %101 = arith.mulf %99, %100 : vector<4x128xf32>
    %102 = arith.addf %74, %101 : vector<4x128xf32>
    %103 = vector.extract_strided_slice %98 {offsets = [1, 0], sizes = [4, 128], strides = [1, 1]} : vector<6x128xf32> to vector<4x128xf32>
    %104 = vector.broadcast %78 : vector<1x128xf32> to vector<4x128xf32>
    %105 = arith.mulf %103, %104 : vector<4x128xf32>
    %106 = arith.addf %102, %105 : vector<4x128xf32>
    %107 = vector.extract_strided_slice %98 {offsets = [2, 0], sizes = [4, 128], strides = [1, 1]} : vector<6x128xf32> to vector<4x128xf32>
    %108 = vector.broadcast %80 : vector<1x128xf32> to vector<4x128xf32>
    %109 = arith.mulf %107, %108 : vector<4x128xf32>
    %110 = arith.addf %106, %109 : vector<4x128xf32>
    %c1_i32 = arith.constant 1 : i32
    %111 = arith.addi %0, %c1_i32 : i32
    %c0_22 = arith.constant 0 : index
    %112 = arith.index_cast %111 : i32 to index
    %c0_23 = arith.constant 0 : index
    %c0_24 = arith.constant 0 : index
    %c0_25 = arith.constant 0 : index
    %113 = vector.load %arg2[%c0_22, %112, %c0_23, %c0_24, %c0_25] : memref<1x6x6x6x128xbf16, #tpu.memory_space<vmem>>, vector<1x1x6x6x128xbf16>
    %114 = vector.shape_cast %113 : vector<1x1x6x6x128xbf16> to vector<6x6x128xbf16>
    %c9 = arith.constant 9 : index
    %c0_26 = arith.constant 0 : index
    %c0_27 = arith.constant 0 : index
    %115 = vector.load %arg3[%c9, %c0_26, %c0_27] : memref<27x1x128xf32, #tpu.memory_space<vmem>>, vector<1x1x128xf32>
    %116 = vector.shape_cast %115 : vector<1x1x128xf32> to vector<1x128xf32>
    %c10 = arith.constant 10 : index
    %c0_28 = arith.constant 0 : index
    %c0_29 = arith.constant 0 : index
    %117 = vector.load %arg3[%c10, %c0_28, %c0_29] : memref<27x1x128xf32, #tpu.memory_space<vmem>>, vector<1x1x128xf32>
    %118 = vector.shape_cast %117 : vector<1x1x128xf32> to vector<1x128xf32>
    %c11 = arith.constant 11 : index
    %c0_30 = arith.constant 0 : index
    %c0_31 = arith.constant 0 : index
    %119 = vector.load %arg3[%c11, %c0_30, %c0_31] : memref<27x1x128xf32, #tpu.memory_space<vmem>>, vector<1x1x128xf32>
    %120 = vector.shape_cast %119 : vector<1x1x128xf32> to vector<1x128xf32>
    %121 = vector.extract_strided_slice %114 {offsets = [0, 0, 0], sizes = [1, 6, 128], strides = [1, 1, 1]} : vector<6x6x128xbf16> to vector<1x6x128xbf16>
    %122 = vector.shape_cast %121 : vector<1x6x128xbf16> to vector<6x128xbf16>
    %123 = arith.extf %122 : vector<6x128xbf16> to vector<6x128xf32>
    %124 = vector.extract_strided_slice %123 {offsets = [0, 0], sizes = [4, 128], strides = [1, 1]} : vector<6x128xf32> to vector<4x128xf32>
    %125 = vector.broadcast %116 : vector<1x128xf32> to vector<4x128xf32>
    %126 = arith.mulf %124, %125 : vector<4x128xf32>
    %127 = arith.addf %95, %126 : vector<4x128xf32>
    %128 = vector.extract_strided_slice %123 {offsets = [1, 0], sizes = [4, 128], strides = [1, 1]} : vector<6x128xf32> to vector<4x128xf32>
    %129 = vector.broadcast %118 : vector<1x128xf32> to vector<4x128xf32>
    %130 = arith.mulf %128, %129 : vector<4x128xf32>
    %131 = arith.addf %127, %130 : vector<4x128xf32>
    %132 = vector.extract_strided_slice %123 {offsets = [2, 0], sizes = [4, 128], strides = [1, 1]} : vector<6x128xf32> to vector<4x128xf32>
    %133 = vector.broadcast %120 : vector<1x128xf32> to vector<4x128xf32>
    %134 = arith.mulf %132, %133 : vector<4x128xf32>
    %135 = arith.addf %131, %134 : vector<4x128xf32>
    %136 = vector.extract_strided_slice %114 {offsets = [2, 0, 0], sizes = [1, 6, 128], strides = [1, 1, 1]} : vector<6x6x128xbf16> to vector<1x6x128xbf16>
    %137 = vector.shape_cast %136 : vector<1x6x128xbf16> to vector<6x128xbf16>
    %138 = arith.extf %137 : vector<6x128xbf16> to vector<6x128xf32>
    %139 = vector.extract_strided_slice %138 {offsets = [0, 0], sizes = [4, 128], strides = [1, 1]} : vector<6x128xf32> to vector<4x128xf32>
    %140 = vector.broadcast %116 : vector<1x128xf32> to vector<4x128xf32>
    %141 = arith.mulf %139, %140 : vector<4x128xf32>
    %142 = arith.addf %110, %141 : vector<4x128xf32>
    %143 = vector.extract_strided_slice %138 {offsets = [1, 0], sizes = [4, 128], strides = [1, 1]} : vector<6x128xf32> to vector<4x128xf32>
    %144 = vector.broadcast %118 : vector<1x128xf32> to vector<4x128xf32>
    %145 = arith.mulf %143, %144 : vector<4x128xf32>
    %146 = arith.addf %142, %145 : vector<4x128xf32>
    %147 = vector.extract_strided_slice %138 {offsets = [2, 0], sizes = [4, 128], strides = [1, 1]} : vector<6x128xf32> to vector<4x128xf32>
    %148 = vector.broadcast %120 : vector<1x128xf32> to vector<4x128xf32>
    %149 = arith.mulf %147, %148 : vector<4x128xf32>
    %150 = arith.addf %146, %149 : vector<4x128xf32>
    %c12 = arith.constant 12 : index
    %c0_32 = arith.constant 0 : index
    %c0_33 = arith.constant 0 : index
    %151 = vector.load %arg3[%c12, %c0_32, %c0_33] : memref<27x1x128xf32, #tpu.memory_space<vmem>>, vector<1x1x128xf32>
    %152 = vector.shape_cast %151 : vector<1x1x128xf32> to vector<1x128xf32>
    %c13 = arith.constant 13 : index
    %c0_34 = arith.constant 0 : index
    %c0_35 = arith.constant 0 : index
    %153 = vector.load %arg3[%c13, %c0_34, %c0_35] : memref<27x1x128xf32, #tpu.memory_space<vmem>>, vector<1x1x128xf32>
    %154 = vector.shape_cast %153 : vector<1x1x128xf32> to vector<1x128xf32>
    %c14 = arith.constant 14 : index
    %c0_36 = arith.constant 0 : index
    %c0_37 = arith.constant 0 : index
    %155 = vector.load %arg3[%c14, %c0_36, %c0_37] : memref<27x1x128xf32, #tpu.memory_space<vmem>>, vector<1x1x128xf32>
    %156 = vector.shape_cast %155 : vector<1x1x128xf32> to vector<1x128xf32>
    %157 = vector.extract_strided_slice %114 {offsets = [1, 0, 0], sizes = [1, 6, 128], strides = [1, 1, 1]} : vector<6x6x128xbf16> to vector<1x6x128xbf16>
    %158 = vector.shape_cast %157 : vector<1x6x128xbf16> to vector<6x128xbf16>
    %159 = arith.extf %158 : vector<6x128xbf16> to vector<6x128xf32>
    %160 = vector.extract_strided_slice %159 {offsets = [0, 0], sizes = [4, 128], strides = [1, 1]} : vector<6x128xf32> to vector<4x128xf32>
    %161 = vector.broadcast %152 : vector<1x128xf32> to vector<4x128xf32>
    %162 = arith.mulf %160, %161 : vector<4x128xf32>
    %163 = arith.addf %135, %162 : vector<4x128xf32>
    %164 = vector.extract_strided_slice %159 {offsets = [1, 0], sizes = [4, 128], strides = [1, 1]} : vector<6x128xf32> to vector<4x128xf32>
    %165 = vector.broadcast %154 : vector<1x128xf32> to vector<4x128xf32>
    %166 = arith.mulf %164, %165 : vector<4x128xf32>
    %167 = arith.addf %163, %166 : vector<4x128xf32>
    %168 = vector.extract_strided_slice %159 {offsets = [2, 0], sizes = [4, 128], strides = [1, 1]} : vector<6x128xf32> to vector<4x128xf32>
    %169 = vector.broadcast %156 : vector<1x128xf32> to vector<4x128xf32>
    %170 = arith.mulf %168, %169 : vector<4x128xf32>
    %171 = arith.addf %167, %170 : vector<4x128xf32>
    %172 = vector.extract_strided_slice %114 {offsets = [3, 0, 0], sizes = [1, 6, 128], strides = [1, 1, 1]} : vector<6x6x128xbf16> to vector<1x6x128xbf16>
    %173 = vector.shape_cast %172 : vector<1x6x128xbf16> to vector<6x128xbf16>
    %174 = arith.extf %173 : vector<6x128xbf16> to vector<6x128xf32>
    %175 = vector.extract_strided_slice %174 {offsets = [0, 0], sizes = [4, 128], strides = [1, 1]} : vector<6x128xf32> to vector<4x128xf32>
    %176 = vector.broadcast %152 : vector<1x128xf32> to vector<4x128xf32>
    %177 = arith.mulf %175, %176 : vector<4x128xf32>
    %178 = arith.addf %150, %177 : vector<4x128xf32>
    %179 = vector.extract_strided_slice %174 {offsets = [1, 0], sizes = [4, 128], strides = [1, 1]} : vector<6x128xf32> to vector<4x128xf32>
    %180 = vector.broadcast %154 : vector<1x128xf32> to vector<4x128xf32>
    %181 = arith.mulf %179, %180 : vector<4x128xf32>
    %182 = arith.addf %178, %181 : vector<4x128xf32>
    %183 = vector.extract_strided_slice %174 {offsets = [2, 0], sizes = [4, 128], strides = [1, 1]} : vector<6x128xf32> to vector<4x128xf32>
    %184 = vector.broadcast %156 : vector<1x128xf32> to vector<4x128xf32>
    %185 = arith.mulf %183, %184 : vector<4x128xf32>
    %186 = arith.addf %182, %185 : vector<4x128xf32>
    %c15 = arith.constant 15 : index
    %c0_38 = arith.constant 0 : index
    %c0_39 = arith.constant 0 : index
    %187 = vector.load %arg3[%c15, %c0_38, %c0_39] : memref<27x1x128xf32, #tpu.memory_space<vmem>>, vector<1x1x128xf32>
    %188 = vector.shape_cast %187 : vector<1x1x128xf32> to vector<1x128xf32>
    %c16 = arith.constant 16 : index
    %c0_40 = arith.constant 0 : index
    %c0_41 = arith.constant 0 : index
    %189 = vector.load %arg3[%c16, %c0_40, %c0_41] : memref<27x1x128xf32, #tpu.memory_space<vmem>>, vector<1x1x128xf32>
    %190 = vector.shape_cast %189 : vector<1x1x128xf32> to vector<1x128xf32>
    %c17 = arith.constant 17 : index
    %c0_42 = arith.constant 0 : index
    %c0_43 = arith.constant 0 : index
    %191 = vector.load %arg3[%c17, %c0_42, %c0_43] : memref<27x1x128xf32, #tpu.memory_space<vmem>>, vector<1x1x128xf32>
    %192 = vector.shape_cast %191 : vector<1x1x128xf32> to vector<1x128xf32>
    %193 = vector.extract_strided_slice %114 {offsets = [2, 0, 0], sizes = [1, 6, 128], strides = [1, 1, 1]} : vector<6x6x128xbf16> to vector<1x6x128xbf16>
    %194 = vector.shape_cast %193 : vector<1x6x128xbf16> to vector<6x128xbf16>
    %195 = arith.extf %194 : vector<6x128xbf16> to vector<6x128xf32>
    %196 = vector.extract_strided_slice %195 {offsets = [0, 0], sizes = [4, 128], strides = [1, 1]} : vector<6x128xf32> to vector<4x128xf32>
    %197 = vector.broadcast %188 : vector<1x128xf32> to vector<4x128xf32>
    %198 = arith.mulf %196, %197 : vector<4x128xf32>
    %199 = arith.addf %171, %198 : vector<4x128xf32>
    %200 = vector.extract_strided_slice %195 {offsets = [1, 0], sizes = [4, 128], strides = [1, 1]} : vector<6x128xf32> to vector<4x128xf32>
    %201 = vector.broadcast %190 : vector<1x128xf32> to vector<4x128xf32>
    %202 = arith.mulf %200, %201 : vector<4x128xf32>
    %203 = arith.addf %199, %202 : vector<4x128xf32>
    %204 = vector.extract_strided_slice %195 {offsets = [2, 0], sizes = [4, 128], strides = [1, 1]} : vector<6x128xf32> to vector<4x128xf32>
    %205 = vector.broadcast %192 : vector<1x128xf32> to vector<4x128xf32>
    %206 = arith.mulf %204, %205 : vector<4x128xf32>
    %207 = arith.addf %203, %206 : vector<4x128xf32>
    %208 = vector.extract_strided_slice %114 {offsets = [4, 0, 0], sizes = [1, 6, 128], strides = [1, 1, 1]} : vector<6x6x128xbf16> to vector<1x6x128xbf16>
    %209 = vector.shape_cast %208 : vector<1x6x128xbf16> to vector<6x128xbf16>
    %210 = arith.extf %209 : vector<6x128xbf16> to vector<6x128xf32>
    %211 = vector.extract_strided_slice %210 {offsets = [0, 0], sizes = [4, 128], strides = [1, 1]} : vector<6x128xf32> to vector<4x128xf32>
    %212 = vector.broadcast %188 : vector<1x128xf32> to vector<4x128xf32>
    %213 = arith.mulf %211, %212 : vector<4x128xf32>
    %214 = arith.addf %186, %213 : vector<4x128xf32>
    %215 = vector.extract_strided_slice %210 {offsets = [1, 0], sizes = [4, 128], strides = [1, 1]} : vector<6x128xf32> to vector<4x128xf32>
    %216 = vector.broadcast %190 : vector<1x128xf32> to vector<4x128xf32>
    %217 = arith.mulf %215, %216 : vector<4x128xf32>
    %218 = arith.addf %214, %217 : vector<4x128xf32>
    %219 = vector.extract_strided_slice %210 {offsets = [2, 0], sizes = [4, 128], strides = [1, 1]} : vector<6x128xf32> to vector<4x128xf32>
    %220 = vector.broadcast %192 : vector<1x128xf32> to vector<4x128xf32>
    %221 = arith.mulf %219, %220 : vector<4x128xf32>
    %222 = arith.addf %218, %221 : vector<4x128xf32>
    %c2_i32_44 = arith.constant 2 : i32
    %223 = arith.addi %0, %c2_i32_44 : i32
    %c0_45 = arith.constant 0 : index
    %224 = arith.index_cast %223 : i32 to index
    %c0_46 = arith.constant 0 : index
    %c0_47 = arith.constant 0 : index
    %c0_48 = arith.constant 0 : index
    %225 = vector.load %arg2[%c0_45, %224, %c0_46, %c0_47, %c0_48] : memref<1x6x6x6x128xbf16, #tpu.memory_space<vmem>>, vector<1x1x6x6x128xbf16>
    %226 = vector.shape_cast %225 : vector<1x1x6x6x128xbf16> to vector<6x6x128xbf16>
    %c18 = arith.constant 18 : index
    %c0_49 = arith.constant 0 : index
    %c0_50 = arith.constant 0 : index
    %227 = vector.load %arg3[%c18, %c0_49, %c0_50] : memref<27x1x128xf32, #tpu.memory_space<vmem>>, vector<1x1x128xf32>
    %228 = vector.shape_cast %227 : vector<1x1x128xf32> to vector<1x128xf32>
    %c19 = arith.constant 19 : index
    %c0_51 = arith.constant 0 : index
    %c0_52 = arith.constant 0 : index
    %229 = vector.load %arg3[%c19, %c0_51, %c0_52] : memref<27x1x128xf32, #tpu.memory_space<vmem>>, vector<1x1x128xf32>
    %230 = vector.shape_cast %229 : vector<1x1x128xf32> to vector<1x128xf32>
    %c20 = arith.constant 20 : index
    %c0_53 = arith.constant 0 : index
    %c0_54 = arith.constant 0 : index
    %231 = vector.load %arg3[%c20, %c0_53, %c0_54] : memref<27x1x128xf32, #tpu.memory_space<vmem>>, vector<1x1x128xf32>
    %232 = vector.shape_cast %231 : vector<1x1x128xf32> to vector<1x128xf32>
    %233 = vector.extract_strided_slice %226 {offsets = [0, 0, 0], sizes = [1, 6, 128], strides = [1, 1, 1]} : vector<6x6x128xbf16> to vector<1x6x128xbf16>
    %234 = vector.shape_cast %233 : vector<1x6x128xbf16> to vector<6x128xbf16>
    %235 = arith.extf %234 : vector<6x128xbf16> to vector<6x128xf32>
    %236 = vector.extract_strided_slice %235 {offsets = [0, 0], sizes = [4, 128], strides = [1, 1]} : vector<6x128xf32> to vector<4x128xf32>
    %237 = vector.broadcast %228 : vector<1x128xf32> to vector<4x128xf32>
    %238 = arith.mulf %236, %237 : vector<4x128xf32>
    %239 = arith.addf %207, %238 : vector<4x128xf32>
    %240 = vector.extract_strided_slice %235 {offsets = [1, 0], sizes = [4, 128], strides = [1, 1]} : vector<6x128xf32> to vector<4x128xf32>
    %241 = vector.broadcast %230 : vector<1x128xf32> to vector<4x128xf32>
    %242 = arith.mulf %240, %241 : vector<4x128xf32>
    %243 = arith.addf %239, %242 : vector<4x128xf32>
    %244 = vector.extract_strided_slice %235 {offsets = [2, 0], sizes = [4, 128], strides = [1, 1]} : vector<6x128xf32> to vector<4x128xf32>
    %245 = vector.broadcast %232 : vector<1x128xf32> to vector<4x128xf32>
    %246 = arith.mulf %244, %245 : vector<4x128xf32>
    %247 = arith.addf %243, %246 : vector<4x128xf32>
    %248 = vector.extract_strided_slice %226 {offsets = [2, 0, 0], sizes = [1, 6, 128], strides = [1, 1, 1]} : vector<6x6x128xbf16> to vector<1x6x128xbf16>
    %249 = vector.shape_cast %248 : vector<1x6x128xbf16> to vector<6x128xbf16>
    %250 = arith.extf %249 : vector<6x128xbf16> to vector<6x128xf32>
    %251 = vector.extract_strided_slice %250 {offsets = [0, 0], sizes = [4, 128], strides = [1, 1]} : vector<6x128xf32> to vector<4x128xf32>
    %252 = vector.broadcast %228 : vector<1x128xf32> to vector<4x128xf32>
    %253 = arith.mulf %251, %252 : vector<4x128xf32>
    %254 = arith.addf %222, %253 : vector<4x128xf32>
    %255 = vector.extract_strided_slice %250 {offsets = [1, 0], sizes = [4, 128], strides = [1, 1]} : vector<6x128xf32> to vector<4x128xf32>
    %256 = vector.broadcast %230 : vector<1x128xf32> to vector<4x128xf32>
    %257 = arith.mulf %255, %256 : vector<4x128xf32>
    %258 = arith.addf %254, %257 : vector<4x128xf32>
    %259 = vector.extract_strided_slice %250 {offsets = [2, 0], sizes = [4, 128], strides = [1, 1]} : vector<6x128xf32> to vector<4x128xf32>
    %260 = vector.broadcast %232 : vector<1x128xf32> to vector<4x128xf32>
    %261 = arith.mulf %259, %260 : vector<4x128xf32>
    %262 = arith.addf %258, %261 : vector<4x128xf32>
    %c21 = arith.constant 21 : index
    %c0_55 = arith.constant 0 : index
    %c0_56 = arith.constant 0 : index
    %263 = vector.load %arg3[%c21, %c0_55, %c0_56] : memref<27x1x128xf32, #tpu.memory_space<vmem>>, vector<1x1x128xf32>
    %264 = vector.shape_cast %263 : vector<1x1x128xf32> to vector<1x128xf32>
    %c22 = arith.constant 22 : index
    %c0_57 = arith.constant 0 : index
    %c0_58 = arith.constant 0 : index
    %265 = vector.load %arg3[%c22, %c0_57, %c0_58] : memref<27x1x128xf32, #tpu.memory_space<vmem>>, vector<1x1x128xf32>
    %266 = vector.shape_cast %265 : vector<1x1x128xf32> to vector<1x128xf32>
    %c23 = arith.constant 23 : index
    %c0_59 = arith.constant 0 : index
    %c0_60 = arith.constant 0 : index
    %267 = vector.load %arg3[%c23, %c0_59, %c0_60] : memref<27x1x128xf32, #tpu.memory_space<vmem>>, vector<1x1x128xf32>
    %268 = vector.shape_cast %267 : vector<1x1x128xf32> to vector<1x128xf32>
    %269 = vector.extract_strided_slice %226 {offsets = [1, 0, 0], sizes = [1, 6, 128], strides = [1, 1, 1]} : vector<6x6x128xbf16> to vector<1x6x128xbf16>
    %270 = vector.shape_cast %269 : vector<1x6x128xbf16> to vector<6x128xbf16>
    %271 = arith.extf %270 : vector<6x128xbf16> to vector<6x128xf32>
    %272 = vector.extract_strided_slice %271 {offsets = [0, 0], sizes = [4, 128], strides = [1, 1]} : vector<6x128xf32> to vector<4x128xf32>
    %273 = vector.broadcast %264 : vector<1x128xf32> to vector<4x128xf32>
    %274 = arith.mulf %272, %273 : vector<4x128xf32>
    %275 = arith.addf %247, %274 : vector<4x128xf32>
    %276 = vector.extract_strided_slice %271 {offsets = [1, 0], sizes = [4, 128], strides = [1, 1]} : vector<6x128xf32> to vector<4x128xf32>
    %277 = vector.broadcast %266 : vector<1x128xf32> to vector<4x128xf32>
    %278 = arith.mulf %276, %277 : vector<4x128xf32>
    %279 = arith.addf %275, %278 : vector<4x128xf32>
    %280 = vector.extract_strided_slice %271 {offsets = [2, 0], sizes = [4, 128], strides = [1, 1]} : vector<6x128xf32> to vector<4x128xf32>
    %281 = vector.broadcast %268 : vector<1x128xf32> to vector<4x128xf32>
    %282 = arith.mulf %280, %281 : vector<4x128xf32>
    %283 = arith.addf %279, %282 : vector<4x128xf32>
    %284 = vector.extract_strided_slice %226 {offsets = [3, 0, 0], sizes = [1, 6, 128], strides = [1, 1, 1]} : vector<6x6x128xbf16> to vector<1x6x128xbf16>
    %285 = vector.shape_cast %284 : vector<1x6x128xbf16> to vector<6x128xbf16>
    %286 = arith.extf %285 : vector<6x128xbf16> to vector<6x128xf32>
    %287 = vector.extract_strided_slice %286 {offsets = [0, 0], sizes = [4, 128], strides = [1, 1]} : vector<6x128xf32> to vector<4x128xf32>
    %288 = vector.broadcast %264 : vector<1x128xf32> to vector<4x128xf32>
    %289 = arith.mulf %287, %288 : vector<4x128xf32>
    %290 = arith.addf %262, %289 : vector<4x128xf32>
    %291 = vector.extract_strided_slice %286 {offsets = [1, 0], sizes = [4, 128], strides = [1, 1]} : vector<6x128xf32> to vector<4x128xf32>
    %292 = vector.broadcast %266 : vector<1x128xf32> to vector<4x128xf32>
    %293 = arith.mulf %291, %292 : vector<4x128xf32>
    %294 = arith.addf %290, %293 : vector<4x128xf32>
    %295 = vector.extract_strided_slice %286 {offsets = [2, 0], sizes = [4, 128], strides = [1, 1]} : vector<6x128xf32> to vector<4x128xf32>
    %296 = vector.broadcast %268 : vector<1x128xf32> to vector<4x128xf32>
    %297 = arith.mulf %295, %296 : vector<4x128xf32>
    %298 = arith.addf %294, %297 : vector<4x128xf32>
    %c24 = arith.constant 24 : index
    %c0_61 = arith.constant 0 : index
    %c0_62 = arith.constant 0 : index
    %299 = vector.load %arg3[%c24, %c0_61, %c0_62] : memref<27x1x128xf32, #tpu.memory_space<vmem>>, vector<1x1x128xf32>
    %300 = vector.shape_cast %299 : vector<1x1x128xf32> to vector<1x128xf32>
    %c25 = arith.constant 25 : index
    %c0_63 = arith.constant 0 : index
    %c0_64 = arith.constant 0 : index
    %301 = vector.load %arg3[%c25, %c0_63, %c0_64] : memref<27x1x128xf32, #tpu.memory_space<vmem>>, vector<1x1x128xf32>
    %302 = vector.shape_cast %301 : vector<1x1x128xf32> to vector<1x128xf32>
    %c26 = arith.constant 26 : index
    %c0_65 = arith.constant 0 : index
    %c0_66 = arith.constant 0 : index
    %303 = vector.load %arg3[%c26, %c0_65, %c0_66] : memref<27x1x128xf32, #tpu.memory_space<vmem>>, vector<1x1x128xf32>
    %304 = vector.shape_cast %303 : vector<1x1x128xf32> to vector<1x128xf32>
    %305 = vector.extract_strided_slice %226 {offsets = [2, 0, 0], sizes = [1, 6, 128], strides = [1, 1, 1]} : vector<6x6x128xbf16> to vector<1x6x128xbf16>
    %306 = vector.shape_cast %305 : vector<1x6x128xbf16> to vector<6x128xbf16>
    %307 = arith.extf %306 : vector<6x128xbf16> to vector<6x128xf32>
    %308 = vector.extract_strided_slice %307 {offsets = [0, 0], sizes = [4, 128], strides = [1, 1]} : vector<6x128xf32> to vector<4x128xf32>
    %309 = vector.broadcast %300 : vector<1x128xf32> to vector<4x128xf32>
    %310 = arith.mulf %308, %309 : vector<4x128xf32>
    %311 = arith.addf %283, %310 : vector<4x128xf32>
    %312 = vector.extract_strided_slice %307 {offsets = [1, 0], sizes = [4, 128], strides = [1, 1]} : vector<6x128xf32> to vector<4x128xf32>
    %313 = vector.broadcast %302 : vector<1x128xf32> to vector<4x128xf32>
    %314 = arith.mulf %312, %313 : vector<4x128xf32>
    %315 = arith.addf %311, %314 : vector<4x128xf32>
    %316 = vector.extract_strided_slice %307 {offsets = [2, 0], sizes = [4, 128], strides = [1, 1]} : vector<6x128xf32> to vector<4x128xf32>
    %317 = vector.broadcast %304 : vector<1x128xf32> to vector<4x128xf32>
    %318 = arith.mulf %316, %317 : vector<4x128xf32>
    %319 = arith.addf %315, %318 : vector<4x128xf32>
    %320 = vector.extract_strided_slice %226 {offsets = [4, 0, 0], sizes = [1, 6, 128], strides = [1, 1, 1]} : vector<6x6x128xbf16> to vector<1x6x128xbf16>
    %321 = vector.shape_cast %320 : vector<1x6x128xbf16> to vector<6x128xbf16>
    %322 = arith.extf %321 : vector<6x128xbf16> to vector<6x128xf32>
    %323 = vector.extract_strided_slice %322 {offsets = [0, 0], sizes = [4, 128], strides = [1, 1]} : vector<6x128xf32> to vector<4x128xf32>
    %324 = vector.broadcast %300 : vector<1x128xf32> to vector<4x128xf32>
    %325 = arith.mulf %323, %324 : vector<4x128xf32>
    %326 = arith.addf %298, %325 : vector<4x128xf32>
    %327 = vector.extract_strided_slice %322 {offsets = [1, 0], sizes = [4, 128], strides = [1, 1]} : vector<6x128xf32> to vector<4x128xf32>
    %328 = vector.broadcast %302 : vector<1x128xf32> to vector<4x128xf32>
    %329 = arith.mulf %327, %328 : vector<4x128xf32>
    %330 = arith.addf %326, %329 : vector<4x128xf32>
    %331 = vector.extract_strided_slice %322 {offsets = [2, 0], sizes = [4, 128], strides = [1, 1]} : vector<6x128xf32> to vector<4x128xf32>
    %332 = vector.broadcast %304 : vector<1x128xf32> to vector<4x128xf32>
    %333 = arith.mulf %331, %332 : vector<4x128xf32>
    %334 = arith.addf %330, %333 : vector<4x128xf32>
    %c0_67 = arith.constant 0 : index
    %c0_68 = arith.constant 0 : index
    %335 = vector.load %arg4[%c0_67, %c0_68] : memref<1x128xf32, #tpu.memory_space<vmem>>, vector<1x128xf32>
    %c0_69 = arith.constant 0 : index
    %c0_70 = arith.constant 0 : index
    %336 = vector.load %arg5[%c0_69, %c0_70] : memref<1x128xf32, #tpu.memory_space<vmem>>, vector<1x128xf32>
    %c0_71 = arith.constant 0 : index
    %c0_72 = arith.constant 0 : index
    %337 = vector.load %arg6[%c0_71, %c0_72] : memref<128x128xbf16, #tpu.memory_space<vmem>>, vector<128x128xbf16>
    %c0_73 = arith.constant 0 : index
    %c0_74 = arith.constant 0 : index
    %338 = vector.load %arg7[%c0_73, %c0_74] : memref<1x128xf32, #tpu.memory_space<vmem>>, vector<1x128xf32>
    %c0_75 = arith.constant 0 : index
    %c0_76 = arith.constant 0 : index
    %339 = vector.load %arg8[%c0_75, %c0_76] : memref<1x128xf32, #tpu.memory_space<vmem>>, vector<1x128xf32>
    %340 = vector.broadcast %335 : vector<1x128xf32> to vector<4x128xf32>
    %341 = arith.mulf %319, %340 : vector<4x128xf32>
    %342 = vector.broadcast %336 : vector<1x128xf32> to vector<4x128xf32>
    %343 = arith.addf %341, %342 : vector<4x128xf32>
    %cst = arith.constant 0.000000e+00 : f32
    %344 = vector.broadcast %cst : f32 to vector<4x128xf32>
    %345 = arith.maximumf %343, %344 : vector<4x128xf32>
    %346 = arith.truncf %345 : vector<4x128xf32> to vector<4x128xbf16>
    %cst_77 = arith.constant dense<0.000000e+00> : vector<4x128xf32>
    %347 = tpu.matmul %346, %337, %cst_77 {dimension_numbers = #tpu.dot_dimension_numbers<[1], [0], [0], [1], [0, 0, 1, 1], [], []>} : vector<4x128xbf16>, vector<128x128xbf16>, vector<4x128xf32> -> vector<4x128xf32>
    %348 = vector.broadcast %338 : vector<1x128xf32> to vector<4x128xf32>
    %349 = arith.mulf %347, %348 : vector<4x128xf32>
    %350 = vector.broadcast %339 : vector<1x128xf32> to vector<4x128xf32>
    %351 = arith.addf %349, %350 : vector<4x128xf32>
    %cst_78 = arith.constant 0.000000e+00 : f32
    %352 = vector.broadcast %cst_78 : f32 to vector<4x128xf32>
    %353 = arith.maximumf %351, %352 : vector<4x128xf32>
    %354 = arith.truncf %353 : vector<4x128xf32> to vector<4x128xbf16>
    %c0_79 = arith.constant 0 : index
    %c0_80 = arith.constant 0 : index
    %c0_81 = arith.constant 0 : index
    %c0_82 = arith.constant 0 : index
    %c0_83 = arith.constant 0 : index
    %355 = vector.load %arg9[%c0_79, %c0_80, %c0_81, %c0_82, %c0_83] : memref<1x1x2x4x128xbf16, #tpu.memory_space<vmem>>, vector<1x1x1x4x128xbf16>
    %356 = vector.shape_cast %355 : vector<1x1x1x4x128xbf16> to vector<4x128xbf16>
    %357 = vector.shape_cast %354 : vector<4x128xbf16> to vector<1x1x1x4x128xbf16>
    tpu.vector_store %arg9[%c0_79, %c0_80, %c0_81, %c0_82, %c0_83], %357 {strides = array<i32>} : memref<1x1x2x4x128xbf16, #tpu.memory_space<vmem>>, vector<1x1x1x4x128xbf16>,
    %358 = vector.broadcast %335 : vector<1x128xf32> to vector<4x128xf32>
    %359 = arith.mulf %334, %358 : vector<4x128xf32>
    %360 = vector.broadcast %336 : vector<1x128xf32> to vector<4x128xf32>
    %361 = arith.addf %359, %360 : vector<4x128xf32>
    %cst_84 = arith.constant 0.000000e+00 : f32
    %362 = vector.broadcast %cst_84 : f32 to vector<4x128xf32>
    %363 = arith.maximumf %361, %362 : vector<4x128xf32>
    %364 = arith.truncf %363 : vector<4x128xf32> to vector<4x128xbf16>
    %cst_85 = arith.constant dense<0.000000e+00> : vector<4x128xf32>
    %365 = tpu.matmul %364, %337, %cst_85 {dimension_numbers = #tpu.dot_dimension_numbers<[1], [0], [0], [1], [0, 0, 1, 1], [], []>} : vector<4x128xbf16>, vector<128x128xbf16>, vector<4x128xf32> -> vector<4x128xf32>
    %366 = vector.broadcast %338 : vector<1x128xf32> to vector<4x128xf32>
    %367 = arith.mulf %365, %366 : vector<4x128xf32>
    %368 = vector.broadcast %339 : vector<1x128xf32> to vector<4x128xf32>
    %369 = arith.addf %367, %368 : vector<4x128xf32>
    %cst_86 = arith.constant 0.000000e+00 : f32
    %370 = vector.broadcast %cst_86 : f32 to vector<4x128xf32>
    %371 = arith.maximumf %369, %370 : vector<4x128xf32>
    %372 = arith.truncf %371 : vector<4x128xf32> to vector<4x128xbf16>
    %c0_87 = arith.constant 0 : index
    %c0_88 = arith.constant 0 : index
    %c1_89 = arith.constant 1 : index
    %c0_90 = arith.constant 0 : index
    %c0_91 = arith.constant 0 : index
    %373 = vector.load %arg9[%c0_87, %c0_88, %c1_89, %c0_90, %c0_91] : memref<1x1x2x4x128xbf16, #tpu.memory_space<vmem>>, vector<1x1x1x4x128xbf16>
    %374 = vector.shape_cast %373 : vector<1x1x1x4x128xbf16> to vector<4x128xbf16>
    %375 = vector.shape_cast %372 : vector<4x128xbf16> to vector<1x1x1x4x128xbf16>
    tpu.vector_store %arg9[%c0_87, %c0_88, %c1_89, %c0_90, %c0_91], %375 {strides = array<i32>} : memref<1x1x2x4x128xbf16, #tpu.memory_space<vmem>>, vector<1x1x1x4x128xbf16>,
    return
  }
  func.func @transform_0(%arg0: i32, %arg1: i32) -> (i32, i32, i32, i32, i32) {
    %c0_i32 = arith.constant 0 : i32
    %c0_i32_0 = arith.constant 0 : i32
    %c0_i32_1 = arith.constant 0 : i32
    %c0_i32_2 = arith.constant 0 : i32
    %c0_i32_3 = arith.constant 0 : i32
    return %arg0, %c0_i32, %c0_i32_0, %c0_i32_1, %c0_i32_2 : i32, i32, i32, i32, i32
  }
  func.func @transform_1(%arg0: i32, %arg1: i32) -> (i32, i32, i32) {
    %c0_i32 = arith.constant 0 : i32
    %c0_i32_0 = arith.constant 0 : i32
    %c0_i32_1 = arith.constant 0 : i32
    %c0_i32_2 = arith.constant 0 : i32
    return %c0_i32, %c0_i32_0, %c0_i32_1 : i32, i32, i32
  }
  func.func @transform_2(%arg0: i32, %arg1: i32) -> (i32, i32) {
    %c0_i32 = arith.constant 0 : i32
    %c0_i32_0 = arith.constant 0 : i32
    %c0_i32_1 = arith.constant 0 : i32
    return %c0_i32, %c0_i32_0 : i32, i32
  }
  func.func @transform_3(%arg0: i32, %arg1: i32) -> (i32, i32) {
    %c0_i32 = arith.constant 0 : i32
    %c0_i32_0 = arith.constant 0 : i32
    %c0_i32_1 = arith.constant 0 : i32
    return %c0_i32, %c0_i32_0 : i32, i32
  }
  func.func @transform_4(%arg0: i32, %arg1: i32) -> (i32, i32) {
    %c0_i32 = arith.constant 0 : i32
    %c0_i32_0 = arith.constant 0 : i32
    %c0_i32_1 = arith.constant 0 : i32
    return %c0_i32, %c0_i32_0 : i32, i32
  }
  func.func @transform_5(%arg0: i32, %arg1: i32) -> (i32, i32) {
    %c0_i32 = arith.constant 0 : i32
    %c0_i32_0 = arith.constant 0 : i32
    %c0_i32_1 = arith.constant 0 : i32
    return %c0_i32, %c0_i32_0 : i32, i32
  }
  func.func @transform_6(%arg0: i32, %arg1: i32) -> (i32, i32) {
    %c0_i32 = arith.constant 0 : i32
    %c0_i32_0 = arith.constant 0 : i32
    %c0_i32_1 = arith.constant 0 : i32
    return %c0_i32, %c0_i32_0 : i32, i32
  }
  func.func @transform_7(%arg0: i32, %arg1: i32) -> (i32, i32, i32, i32, i32) {
    %c0_i32 = arith.constant 0 : i32
    %c0_i32_0 = arith.constant 0 : i32
    %c0_i32_1 = arith.constant 0 : i32
    %c0_i32_2 = arith.constant 0 : i32
    return %arg0, %arg1, %c0_i32, %c0_i32_0, %c0_i32_1 : i32, i32, i32, i32, i32
  }
}

module attributes {stable_mosaic.version = 11 : i64} {
  func.func @_block_kernel(%arg0: i32, %arg1: i32, %arg2: memref<1x4x4x4x128xbf16, #tpu.memory_space<vmem>>, %arg3: memref<27x1x128xf32, #tpu.memory_space<vmem>>, %arg4: memref<1x128xf32, #tpu.memory_space<vmem>>, %arg5: memref<1x128xf32, #tpu.memory_space<vmem>>, %arg6: memref<128x128xbf16, #tpu.memory_space<vmem>>, %arg7: memref<1x128xf32, #tpu.memory_space<vmem>>, %arg8: memref<1x128xf32, #tpu.memory_space<vmem>>, %arg9: memref<1x1x2x2x128xbf16, #tpu.memory_space<vmem>>) attributes {dimension_semantics = [#tpu.dimension_semantics<parallel>, #tpu.dimension_semantics<parallel>], iteration_bounds = array<i64: 2, 2>, scalar_prefetch = 0 : i64, scratch_operands = 0 : i64, tpu.core_type = #tpu.core_type<tc>, window_params = [{transform_indices = @transform_0, window_bounds = array<i64: 1, 4, 4, 4, 128>}, {pipeline_mode = #tpu.pipeline_mode<synchronous>, transform_indices = @transform_1, window_bounds = array<i64: 27, 1, 128>}, {pipeline_mode = #tpu.pipeline_mode<synchronous>, transform_indices = @transform_2, window_bounds = array<i64: 1, 128>}, {pipeline_mode = #tpu.pipeline_mode<synchronous>, transform_indices = @transform_3, window_bounds = array<i64: 1, 128>}, {pipeline_mode = #tpu.pipeline_mode<synchronous>, transform_indices = @transform_4, window_bounds = array<i64: 128, 128>}, {pipeline_mode = #tpu.pipeline_mode<synchronous>, transform_indices = @transform_5, window_bounds = array<i64: 1, 128>}, {pipeline_mode = #tpu.pipeline_mode<synchronous>, transform_indices = @transform_6, window_bounds = array<i64: 1, 128>}, {transform_indices = @transform_7, window_bounds = array<i64: 1, 1, 2, 2, 128>}]} {
    %c1_i32 = arith.constant 1 : i32
    %0 = arith.muli %arg1, %c1_i32 : i32
    %c0_i32 = arith.constant 0 : i32
    %1 = arith.addi %0, %c0_i32 : i32
    %c0 = arith.constant 0 : index
    %2 = arith.index_cast %1 : i32 to index
    %c0_0 = arith.constant 0 : index
    %c0_1 = arith.constant 0 : index
    %c0_2 = arith.constant 0 : index
    %3 = vector.load %arg2[%c0, %2, %c0_0, %c0_1, %c0_2] : memref<1x4x4x4x128xbf16, #tpu.memory_space<vmem>>, vector<1x1x4x4x128xbf16>
    %4 = vector.shape_cast %3 : vector<1x1x4x4x128xbf16> to vector<4x4x128xbf16>
    %c0_3 = arith.constant 0 : index
    %c0_4 = arith.constant 0 : index
    %c0_5 = arith.constant 0 : index
    %5 = vector.load %arg3[%c0_3, %c0_4, %c0_5] : memref<27x1x128xf32, #tpu.memory_space<vmem>>, vector<1x1x128xf32>
    %6 = vector.shape_cast %5 : vector<1x1x128xf32> to vector<1x128xf32>
    %c1 = arith.constant 1 : index
    %c0_6 = arith.constant 0 : index
    %c0_7 = arith.constant 0 : index
    %7 = vector.load %arg3[%c1, %c0_6, %c0_7] : memref<27x1x128xf32, #tpu.memory_space<vmem>>, vector<1x1x128xf32>
    %8 = vector.shape_cast %7 : vector<1x1x128xf32> to vector<1x128xf32>
    %c2 = arith.constant 2 : index
    %c0_8 = arith.constant 0 : index
    %c0_9 = arith.constant 0 : index
    %9 = vector.load %arg3[%c2, %c0_8, %c0_9] : memref<27x1x128xf32, #tpu.memory_space<vmem>>, vector<1x1x128xf32>
    %10 = vector.shape_cast %9 : vector<1x1x128xf32> to vector<1x128xf32>
    %11 = vector.extract_strided_slice %4 {offsets = [0, 0, 0], sizes = [1, 4, 128], strides = [1, 1, 1]} : vector<4x4x128xbf16> to vector<1x4x128xbf16>
    %12 = vector.shape_cast %11 : vector<1x4x128xbf16> to vector<4x128xbf16>
    %13 = arith.extf %12 : vector<4x128xbf16> to vector<4x128xf32>
    %14 = vector.extract_strided_slice %13 {offsets = [0, 0], sizes = [2, 128], strides = [1, 1]} : vector<4x128xf32> to vector<2x128xf32>
    %15 = vector.broadcast %6 : vector<1x128xf32> to vector<2x128xf32>
    %16 = arith.mulf %14, %15 : vector<2x128xf32>
    %17 = vector.extract_strided_slice %13 {offsets = [1, 0], sizes = [2, 128], strides = [1, 1]} : vector<4x128xf32> to vector<2x128xf32>
    %18 = vector.broadcast %8 : vector<1x128xf32> to vector<2x128xf32>
    %19 = arith.mulf %17, %18 : vector<2x128xf32>
    %20 = arith.addf %16, %19 : vector<2x128xf32>
    %21 = vector.extract_strided_slice %13 {offsets = [2, 0], sizes = [2, 128], strides = [1, 1]} : vector<4x128xf32> to vector<2x128xf32>
    %22 = vector.broadcast %10 : vector<1x128xf32> to vector<2x128xf32>
    %23 = arith.mulf %21, %22 : vector<2x128xf32>
    %24 = arith.addf %20, %23 : vector<2x128xf32>
    %25 = vector.extract_strided_slice %4 {offsets = [1, 0, 0], sizes = [1, 4, 128], strides = [1, 1, 1]} : vector<4x4x128xbf16> to vector<1x4x128xbf16>
    %26 = vector.shape_cast %25 : vector<1x4x128xbf16> to vector<4x128xbf16>
    %27 = arith.extf %26 : vector<4x128xbf16> to vector<4x128xf32>
    %28 = vector.extract_strided_slice %27 {offsets = [0, 0], sizes = [2, 128], strides = [1, 1]} : vector<4x128xf32> to vector<2x128xf32>
    %29 = vector.broadcast %6 : vector<1x128xf32> to vector<2x128xf32>
    %30 = arith.mulf %28, %29 : vector<2x128xf32>
    %31 = vector.extract_strided_slice %27 {offsets = [1, 0], sizes = [2, 128], strides = [1, 1]} : vector<4x128xf32> to vector<2x128xf32>
    %32 = vector.broadcast %8 : vector<1x128xf32> to vector<2x128xf32>
    %33 = arith.mulf %31, %32 : vector<2x128xf32>
    %34 = arith.addf %30, %33 : vector<2x128xf32>
    %35 = vector.extract_strided_slice %27 {offsets = [2, 0], sizes = [2, 128], strides = [1, 1]} : vector<4x128xf32> to vector<2x128xf32>
    %36 = vector.broadcast %10 : vector<1x128xf32> to vector<2x128xf32>
    %37 = arith.mulf %35, %36 : vector<2x128xf32>
    %38 = arith.addf %34, %37 : vector<2x128xf32>
    %c3 = arith.constant 3 : index
    %c0_10 = arith.constant 0 : index
    %c0_11 = arith.constant 0 : index
    %39 = vector.load %arg3[%c3, %c0_10, %c0_11] : memref<27x1x128xf32, #tpu.memory_space<vmem>>, vector<1x1x128xf32>
    %40 = vector.shape_cast %39 : vector<1x1x128xf32> to vector<1x128xf32>
    %c4 = arith.constant 4 : index
    %c0_12 = arith.constant 0 : index
    %c0_13 = arith.constant 0 : index
    %41 = vector.load %arg3[%c4, %c0_12, %c0_13] : memref<27x1x128xf32, #tpu.memory_space<vmem>>, vector<1x1x128xf32>
    %42 = vector.shape_cast %41 : vector<1x1x128xf32> to vector<1x128xf32>
    %c5 = arith.constant 5 : index
    %c0_14 = arith.constant 0 : index
    %c0_15 = arith.constant 0 : index
    %43 = vector.load %arg3[%c5, %c0_14, %c0_15] : memref<27x1x128xf32, #tpu.memory_space<vmem>>, vector<1x1x128xf32>
    %44 = vector.shape_cast %43 : vector<1x1x128xf32> to vector<1x128xf32>
    %45 = vector.extract_strided_slice %4 {offsets = [1, 0, 0], sizes = [1, 4, 128], strides = [1, 1, 1]} : vector<4x4x128xbf16> to vector<1x4x128xbf16>
    %46 = vector.shape_cast %45 : vector<1x4x128xbf16> to vector<4x128xbf16>
    %47 = arith.extf %46 : vector<4x128xbf16> to vector<4x128xf32>
    %48 = vector.extract_strided_slice %47 {offsets = [0, 0], sizes = [2, 128], strides = [1, 1]} : vector<4x128xf32> to vector<2x128xf32>
    %49 = vector.broadcast %40 : vector<1x128xf32> to vector<2x128xf32>
    %50 = arith.mulf %48, %49 : vector<2x128xf32>
    %51 = arith.addf %24, %50 : vector<2x128xf32>
    %52 = vector.extract_strided_slice %47 {offsets = [1, 0], sizes = [2, 128], strides = [1, 1]} : vector<4x128xf32> to vector<2x128xf32>
    %53 = vector.broadcast %42 : vector<1x128xf32> to vector<2x128xf32>
    %54 = arith.mulf %52, %53 : vector<2x128xf32>
    %55 = arith.addf %51, %54 : vector<2x128xf32>
    %56 = vector.extract_strided_slice %47 {offsets = [2, 0], sizes = [2, 128], strides = [1, 1]} : vector<4x128xf32> to vector<2x128xf32>
    %57 = vector.broadcast %44 : vector<1x128xf32> to vector<2x128xf32>
    %58 = arith.mulf %56, %57 : vector<2x128xf32>
    %59 = arith.addf %55, %58 : vector<2x128xf32>
    %60 = vector.extract_strided_slice %4 {offsets = [2, 0, 0], sizes = [1, 4, 128], strides = [1, 1, 1]} : vector<4x4x128xbf16> to vector<1x4x128xbf16>
    %61 = vector.shape_cast %60 : vector<1x4x128xbf16> to vector<4x128xbf16>
    %62 = arith.extf %61 : vector<4x128xbf16> to vector<4x128xf32>
    %63 = vector.extract_strided_slice %62 {offsets = [0, 0], sizes = [2, 128], strides = [1, 1]} : vector<4x128xf32> to vector<2x128xf32>
    %64 = vector.broadcast %40 : vector<1x128xf32> to vector<2x128xf32>
    %65 = arith.mulf %63, %64 : vector<2x128xf32>
    %66 = arith.addf %38, %65 : vector<2x128xf32>
    %67 = vector.extract_strided_slice %62 {offsets = [1, 0], sizes = [2, 128], strides = [1, 1]} : vector<4x128xf32> to vector<2x128xf32>
    %68 = vector.broadcast %42 : vector<1x128xf32> to vector<2x128xf32>
    %69 = arith.mulf %67, %68 : vector<2x128xf32>
    %70 = arith.addf %66, %69 : vector<2x128xf32>
    %71 = vector.extract_strided_slice %62 {offsets = [2, 0], sizes = [2, 128], strides = [1, 1]} : vector<4x128xf32> to vector<2x128xf32>
    %72 = vector.broadcast %44 : vector<1x128xf32> to vector<2x128xf32>
    %73 = arith.mulf %71, %72 : vector<2x128xf32>
    %74 = arith.addf %70, %73 : vector<2x128xf32>
    %c6 = arith.constant 6 : index
    %c0_16 = arith.constant 0 : index
    %c0_17 = arith.constant 0 : index
    %75 = vector.load %arg3[%c6, %c0_16, %c0_17] : memref<27x1x128xf32, #tpu.memory_space<vmem>>, vector<1x1x128xf32>
    %76 = vector.shape_cast %75 : vector<1x1x128xf32> to vector<1x128xf32>
    %c7 = arith.constant 7 : index
    %c0_18 = arith.constant 0 : index
    %c0_19 = arith.constant 0 : index
    %77 = vector.load %arg3[%c7, %c0_18, %c0_19] : memref<27x1x128xf32, #tpu.memory_space<vmem>>, vector<1x1x128xf32>
    %78 = vector.shape_cast %77 : vector<1x1x128xf32> to vector<1x128xf32>
    %c8 = arith.constant 8 : index
    %c0_20 = arith.constant 0 : index
    %c0_21 = arith.constant 0 : index
    %79 = vector.load %arg3[%c8, %c0_20, %c0_21] : memref<27x1x128xf32, #tpu.memory_space<vmem>>, vector<1x1x128xf32>
    %80 = vector.shape_cast %79 : vector<1x1x128xf32> to vector<1x128xf32>
    %81 = vector.extract_strided_slice %4 {offsets = [2, 0, 0], sizes = [1, 4, 128], strides = [1, 1, 1]} : vector<4x4x128xbf16> to vector<1x4x128xbf16>
    %82 = vector.shape_cast %81 : vector<1x4x128xbf16> to vector<4x128xbf16>
    %83 = arith.extf %82 : vector<4x128xbf16> to vector<4x128xf32>
    %84 = vector.extract_strided_slice %83 {offsets = [0, 0], sizes = [2, 128], strides = [1, 1]} : vector<4x128xf32> to vector<2x128xf32>
    %85 = vector.broadcast %76 : vector<1x128xf32> to vector<2x128xf32>
    %86 = arith.mulf %84, %85 : vector<2x128xf32>
    %87 = arith.addf %59, %86 : vector<2x128xf32>
    %88 = vector.extract_strided_slice %83 {offsets = [1, 0], sizes = [2, 128], strides = [1, 1]} : vector<4x128xf32> to vector<2x128xf32>
    %89 = vector.broadcast %78 : vector<1x128xf32> to vector<2x128xf32>
    %90 = arith.mulf %88, %89 : vector<2x128xf32>
    %91 = arith.addf %87, %90 : vector<2x128xf32>
    %92 = vector.extract_strided_slice %83 {offsets = [2, 0], sizes = [2, 128], strides = [1, 1]} : vector<4x128xf32> to vector<2x128xf32>
    %93 = vector.broadcast %80 : vector<1x128xf32> to vector<2x128xf32>
    %94 = arith.mulf %92, %93 : vector<2x128xf32>
    %95 = arith.addf %91, %94 : vector<2x128xf32>
    %96 = vector.extract_strided_slice %4 {offsets = [3, 0, 0], sizes = [1, 4, 128], strides = [1, 1, 1]} : vector<4x4x128xbf16> to vector<1x4x128xbf16>
    %97 = vector.shape_cast %96 : vector<1x4x128xbf16> to vector<4x128xbf16>
    %98 = arith.extf %97 : vector<4x128xbf16> to vector<4x128xf32>
    %99 = vector.extract_strided_slice %98 {offsets = [0, 0], sizes = [2, 128], strides = [1, 1]} : vector<4x128xf32> to vector<2x128xf32>
    %100 = vector.broadcast %76 : vector<1x128xf32> to vector<2x128xf32>
    %101 = arith.mulf %99, %100 : vector<2x128xf32>
    %102 = arith.addf %74, %101 : vector<2x128xf32>
    %103 = vector.extract_strided_slice %98 {offsets = [1, 0], sizes = [2, 128], strides = [1, 1]} : vector<4x128xf32> to vector<2x128xf32>
    %104 = vector.broadcast %78 : vector<1x128xf32> to vector<2x128xf32>
    %105 = arith.mulf %103, %104 : vector<2x128xf32>
    %106 = arith.addf %102, %105 : vector<2x128xf32>
    %107 = vector.extract_strided_slice %98 {offsets = [2, 0], sizes = [2, 128], strides = [1, 1]} : vector<4x128xf32> to vector<2x128xf32>
    %108 = vector.broadcast %80 : vector<1x128xf32> to vector<2x128xf32>
    %109 = arith.mulf %107, %108 : vector<2x128xf32>
    %110 = arith.addf %106, %109 : vector<2x128xf32>
    %c1_i32_22 = arith.constant 1 : i32
    %111 = arith.addi %0, %c1_i32_22 : i32
    %c0_23 = arith.constant 0 : index
    %112 = arith.index_cast %111 : i32 to index
    %c0_24 = arith.constant 0 : index
    %c0_25 = arith.constant 0 : index
    %c0_26 = arith.constant 0 : index
    %113 = vector.load %arg2[%c0_23, %112, %c0_24, %c0_25, %c0_26] : memref<1x4x4x4x128xbf16, #tpu.memory_space<vmem>>, vector<1x1x4x4x128xbf16>
    %114 = vector.shape_cast %113 : vector<1x1x4x4x128xbf16> to vector<4x4x128xbf16>
    %c9 = arith.constant 9 : index
    %c0_27 = arith.constant 0 : index
    %c0_28 = arith.constant 0 : index
    %115 = vector.load %arg3[%c9, %c0_27, %c0_28] : memref<27x1x128xf32, #tpu.memory_space<vmem>>, vector<1x1x128xf32>
    %116 = vector.shape_cast %115 : vector<1x1x128xf32> to vector<1x128xf32>
    %c10 = arith.constant 10 : index
    %c0_29 = arith.constant 0 : index
    %c0_30 = arith.constant 0 : index
    %117 = vector.load %arg3[%c10, %c0_29, %c0_30] : memref<27x1x128xf32, #tpu.memory_space<vmem>>, vector<1x1x128xf32>
    %118 = vector.shape_cast %117 : vector<1x1x128xf32> to vector<1x128xf32>
    %c11 = arith.constant 11 : index
    %c0_31 = arith.constant 0 : index
    %c0_32 = arith.constant 0 : index
    %119 = vector.load %arg3[%c11, %c0_31, %c0_32] : memref<27x1x128xf32, #tpu.memory_space<vmem>>, vector<1x1x128xf32>
    %120 = vector.shape_cast %119 : vector<1x1x128xf32> to vector<1x128xf32>
    %121 = vector.extract_strided_slice %114 {offsets = [0, 0, 0], sizes = [1, 4, 128], strides = [1, 1, 1]} : vector<4x4x128xbf16> to vector<1x4x128xbf16>
    %122 = vector.shape_cast %121 : vector<1x4x128xbf16> to vector<4x128xbf16>
    %123 = arith.extf %122 : vector<4x128xbf16> to vector<4x128xf32>
    %124 = vector.extract_strided_slice %123 {offsets = [0, 0], sizes = [2, 128], strides = [1, 1]} : vector<4x128xf32> to vector<2x128xf32>
    %125 = vector.broadcast %116 : vector<1x128xf32> to vector<2x128xf32>
    %126 = arith.mulf %124, %125 : vector<2x128xf32>
    %127 = arith.addf %95, %126 : vector<2x128xf32>
    %128 = vector.extract_strided_slice %123 {offsets = [1, 0], sizes = [2, 128], strides = [1, 1]} : vector<4x128xf32> to vector<2x128xf32>
    %129 = vector.broadcast %118 : vector<1x128xf32> to vector<2x128xf32>
    %130 = arith.mulf %128, %129 : vector<2x128xf32>
    %131 = arith.addf %127, %130 : vector<2x128xf32>
    %132 = vector.extract_strided_slice %123 {offsets = [2, 0], sizes = [2, 128], strides = [1, 1]} : vector<4x128xf32> to vector<2x128xf32>
    %133 = vector.broadcast %120 : vector<1x128xf32> to vector<2x128xf32>
    %134 = arith.mulf %132, %133 : vector<2x128xf32>
    %135 = arith.addf %131, %134 : vector<2x128xf32>
    %136 = vector.extract_strided_slice %114 {offsets = [1, 0, 0], sizes = [1, 4, 128], strides = [1, 1, 1]} : vector<4x4x128xbf16> to vector<1x4x128xbf16>
    %137 = vector.shape_cast %136 : vector<1x4x128xbf16> to vector<4x128xbf16>
    %138 = arith.extf %137 : vector<4x128xbf16> to vector<4x128xf32>
    %139 = vector.extract_strided_slice %138 {offsets = [0, 0], sizes = [2, 128], strides = [1, 1]} : vector<4x128xf32> to vector<2x128xf32>
    %140 = vector.broadcast %116 : vector<1x128xf32> to vector<2x128xf32>
    %141 = arith.mulf %139, %140 : vector<2x128xf32>
    %142 = arith.addf %110, %141 : vector<2x128xf32>
    %143 = vector.extract_strided_slice %138 {offsets = [1, 0], sizes = [2, 128], strides = [1, 1]} : vector<4x128xf32> to vector<2x128xf32>
    %144 = vector.broadcast %118 : vector<1x128xf32> to vector<2x128xf32>
    %145 = arith.mulf %143, %144 : vector<2x128xf32>
    %146 = arith.addf %142, %145 : vector<2x128xf32>
    %147 = vector.extract_strided_slice %138 {offsets = [2, 0], sizes = [2, 128], strides = [1, 1]} : vector<4x128xf32> to vector<2x128xf32>
    %148 = vector.broadcast %120 : vector<1x128xf32> to vector<2x128xf32>
    %149 = arith.mulf %147, %148 : vector<2x128xf32>
    %150 = arith.addf %146, %149 : vector<2x128xf32>
    %c12 = arith.constant 12 : index
    %c0_33 = arith.constant 0 : index
    %c0_34 = arith.constant 0 : index
    %151 = vector.load %arg3[%c12, %c0_33, %c0_34] : memref<27x1x128xf32, #tpu.memory_space<vmem>>, vector<1x1x128xf32>
    %152 = vector.shape_cast %151 : vector<1x1x128xf32> to vector<1x128xf32>
    %c13 = arith.constant 13 : index
    %c0_35 = arith.constant 0 : index
    %c0_36 = arith.constant 0 : index
    %153 = vector.load %arg3[%c13, %c0_35, %c0_36] : memref<27x1x128xf32, #tpu.memory_space<vmem>>, vector<1x1x128xf32>
    %154 = vector.shape_cast %153 : vector<1x1x128xf32> to vector<1x128xf32>
    %c14 = arith.constant 14 : index
    %c0_37 = arith.constant 0 : index
    %c0_38 = arith.constant 0 : index
    %155 = vector.load %arg3[%c14, %c0_37, %c0_38] : memref<27x1x128xf32, #tpu.memory_space<vmem>>, vector<1x1x128xf32>
    %156 = vector.shape_cast %155 : vector<1x1x128xf32> to vector<1x128xf32>
    %157 = vector.extract_strided_slice %114 {offsets = [1, 0, 0], sizes = [1, 4, 128], strides = [1, 1, 1]} : vector<4x4x128xbf16> to vector<1x4x128xbf16>
    %158 = vector.shape_cast %157 : vector<1x4x128xbf16> to vector<4x128xbf16>
    %159 = arith.extf %158 : vector<4x128xbf16> to vector<4x128xf32>
    %160 = vector.extract_strided_slice %159 {offsets = [0, 0], sizes = [2, 128], strides = [1, 1]} : vector<4x128xf32> to vector<2x128xf32>
    %161 = vector.broadcast %152 : vector<1x128xf32> to vector<2x128xf32>
    %162 = arith.mulf %160, %161 : vector<2x128xf32>
    %163 = arith.addf %135, %162 : vector<2x128xf32>
    %164 = vector.extract_strided_slice %159 {offsets = [1, 0], sizes = [2, 128], strides = [1, 1]} : vector<4x128xf32> to vector<2x128xf32>
    %165 = vector.broadcast %154 : vector<1x128xf32> to vector<2x128xf32>
    %166 = arith.mulf %164, %165 : vector<2x128xf32>
    %167 = arith.addf %163, %166 : vector<2x128xf32>
    %168 = vector.extract_strided_slice %159 {offsets = [2, 0], sizes = [2, 128], strides = [1, 1]} : vector<4x128xf32> to vector<2x128xf32>
    %169 = vector.broadcast %156 : vector<1x128xf32> to vector<2x128xf32>
    %170 = arith.mulf %168, %169 : vector<2x128xf32>
    %171 = arith.addf %167, %170 : vector<2x128xf32>
    %172 = vector.extract_strided_slice %114 {offsets = [2, 0, 0], sizes = [1, 4, 128], strides = [1, 1, 1]} : vector<4x4x128xbf16> to vector<1x4x128xbf16>
    %173 = vector.shape_cast %172 : vector<1x4x128xbf16> to vector<4x128xbf16>
    %174 = arith.extf %173 : vector<4x128xbf16> to vector<4x128xf32>
    %175 = vector.extract_strided_slice %174 {offsets = [0, 0], sizes = [2, 128], strides = [1, 1]} : vector<4x128xf32> to vector<2x128xf32>
    %176 = vector.broadcast %152 : vector<1x128xf32> to vector<2x128xf32>
    %177 = arith.mulf %175, %176 : vector<2x128xf32>
    %178 = arith.addf %150, %177 : vector<2x128xf32>
    %179 = vector.extract_strided_slice %174 {offsets = [1, 0], sizes = [2, 128], strides = [1, 1]} : vector<4x128xf32> to vector<2x128xf32>
    %180 = vector.broadcast %154 : vector<1x128xf32> to vector<2x128xf32>
    %181 = arith.mulf %179, %180 : vector<2x128xf32>
    %182 = arith.addf %178, %181 : vector<2x128xf32>
    %183 = vector.extract_strided_slice %174 {offsets = [2, 0], sizes = [2, 128], strides = [1, 1]} : vector<4x128xf32> to vector<2x128xf32>
    %184 = vector.broadcast %156 : vector<1x128xf32> to vector<2x128xf32>
    %185 = arith.mulf %183, %184 : vector<2x128xf32>
    %186 = arith.addf %182, %185 : vector<2x128xf32>
    %c15 = arith.constant 15 : index
    %c0_39 = arith.constant 0 : index
    %c0_40 = arith.constant 0 : index
    %187 = vector.load %arg3[%c15, %c0_39, %c0_40] : memref<27x1x128xf32, #tpu.memory_space<vmem>>, vector<1x1x128xf32>
    %188 = vector.shape_cast %187 : vector<1x1x128xf32> to vector<1x128xf32>
    %c16 = arith.constant 16 : index
    %c0_41 = arith.constant 0 : index
    %c0_42 = arith.constant 0 : index
    %189 = vector.load %arg3[%c16, %c0_41, %c0_42] : memref<27x1x128xf32, #tpu.memory_space<vmem>>, vector<1x1x128xf32>
    %190 = vector.shape_cast %189 : vector<1x1x128xf32> to vector<1x128xf32>
    %c17 = arith.constant 17 : index
    %c0_43 = arith.constant 0 : index
    %c0_44 = arith.constant 0 : index
    %191 = vector.load %arg3[%c17, %c0_43, %c0_44] : memref<27x1x128xf32, #tpu.memory_space<vmem>>, vector<1x1x128xf32>
    %192 = vector.shape_cast %191 : vector<1x1x128xf32> to vector<1x128xf32>
    %193 = vector.extract_strided_slice %114 {offsets = [2, 0, 0], sizes = [1, 4, 128], strides = [1, 1, 1]} : vector<4x4x128xbf16> to vector<1x4x128xbf16>
    %194 = vector.shape_cast %193 : vector<1x4x128xbf16> to vector<4x128xbf16>
    %195 = arith.extf %194 : vector<4x128xbf16> to vector<4x128xf32>
    %196 = vector.extract_strided_slice %195 {offsets = [0, 0], sizes = [2, 128], strides = [1, 1]} : vector<4x128xf32> to vector<2x128xf32>
    %197 = vector.broadcast %188 : vector<1x128xf32> to vector<2x128xf32>
    %198 = arith.mulf %196, %197 : vector<2x128xf32>
    %199 = arith.addf %171, %198 : vector<2x128xf32>
    %200 = vector.extract_strided_slice %195 {offsets = [1, 0], sizes = [2, 128], strides = [1, 1]} : vector<4x128xf32> to vector<2x128xf32>
    %201 = vector.broadcast %190 : vector<1x128xf32> to vector<2x128xf32>
    %202 = arith.mulf %200, %201 : vector<2x128xf32>
    %203 = arith.addf %199, %202 : vector<2x128xf32>
    %204 = vector.extract_strided_slice %195 {offsets = [2, 0], sizes = [2, 128], strides = [1, 1]} : vector<4x128xf32> to vector<2x128xf32>
    %205 = vector.broadcast %192 : vector<1x128xf32> to vector<2x128xf32>
    %206 = arith.mulf %204, %205 : vector<2x128xf32>
    %207 = arith.addf %203, %206 : vector<2x128xf32>
    %208 = vector.extract_strided_slice %114 {offsets = [3, 0, 0], sizes = [1, 4, 128], strides = [1, 1, 1]} : vector<4x4x128xbf16> to vector<1x4x128xbf16>
    %209 = vector.shape_cast %208 : vector<1x4x128xbf16> to vector<4x128xbf16>
    %210 = arith.extf %209 : vector<4x128xbf16> to vector<4x128xf32>
    %211 = vector.extract_strided_slice %210 {offsets = [0, 0], sizes = [2, 128], strides = [1, 1]} : vector<4x128xf32> to vector<2x128xf32>
    %212 = vector.broadcast %188 : vector<1x128xf32> to vector<2x128xf32>
    %213 = arith.mulf %211, %212 : vector<2x128xf32>
    %214 = arith.addf %186, %213 : vector<2x128xf32>
    %215 = vector.extract_strided_slice %210 {offsets = [1, 0], sizes = [2, 128], strides = [1, 1]} : vector<4x128xf32> to vector<2x128xf32>
    %216 = vector.broadcast %190 : vector<1x128xf32> to vector<2x128xf32>
    %217 = arith.mulf %215, %216 : vector<2x128xf32>
    %218 = arith.addf %214, %217 : vector<2x128xf32>
    %219 = vector.extract_strided_slice %210 {offsets = [2, 0], sizes = [2, 128], strides = [1, 1]} : vector<4x128xf32> to vector<2x128xf32>
    %220 = vector.broadcast %192 : vector<1x128xf32> to vector<2x128xf32>
    %221 = arith.mulf %219, %220 : vector<2x128xf32>
    %222 = arith.addf %218, %221 : vector<2x128xf32>
    %c2_i32 = arith.constant 2 : i32
    %223 = arith.addi %0, %c2_i32 : i32
    %c0_45 = arith.constant 0 : index
    %224 = arith.index_cast %223 : i32 to index
    %c0_46 = arith.constant 0 : index
    %c0_47 = arith.constant 0 : index
    %c0_48 = arith.constant 0 : index
    %225 = vector.load %arg2[%c0_45, %224, %c0_46, %c0_47, %c0_48] : memref<1x4x4x4x128xbf16, #tpu.memory_space<vmem>>, vector<1x1x4x4x128xbf16>
    %226 = vector.shape_cast %225 : vector<1x1x4x4x128xbf16> to vector<4x4x128xbf16>
    %c18 = arith.constant 18 : index
    %c0_49 = arith.constant 0 : index
    %c0_50 = arith.constant 0 : index
    %227 = vector.load %arg3[%c18, %c0_49, %c0_50] : memref<27x1x128xf32, #tpu.memory_space<vmem>>, vector<1x1x128xf32>
    %228 = vector.shape_cast %227 : vector<1x1x128xf32> to vector<1x128xf32>
    %c19 = arith.constant 19 : index
    %c0_51 = arith.constant 0 : index
    %c0_52 = arith.constant 0 : index
    %229 = vector.load %arg3[%c19, %c0_51, %c0_52] : memref<27x1x128xf32, #tpu.memory_space<vmem>>, vector<1x1x128xf32>
    %230 = vector.shape_cast %229 : vector<1x1x128xf32> to vector<1x128xf32>
    %c20 = arith.constant 20 : index
    %c0_53 = arith.constant 0 : index
    %c0_54 = arith.constant 0 : index
    %231 = vector.load %arg3[%c20, %c0_53, %c0_54] : memref<27x1x128xf32, #tpu.memory_space<vmem>>, vector<1x1x128xf32>
    %232 = vector.shape_cast %231 : vector<1x1x128xf32> to vector<1x128xf32>
    %233 = vector.extract_strided_slice %226 {offsets = [0, 0, 0], sizes = [1, 4, 128], strides = [1, 1, 1]} : vector<4x4x128xbf16> to vector<1x4x128xbf16>
    %234 = vector.shape_cast %233 : vector<1x4x128xbf16> to vector<4x128xbf16>
    %235 = arith.extf %234 : vector<4x128xbf16> to vector<4x128xf32>
    %236 = vector.extract_strided_slice %235 {offsets = [0, 0], sizes = [2, 128], strides = [1, 1]} : vector<4x128xf32> to vector<2x128xf32>
    %237 = vector.broadcast %228 : vector<1x128xf32> to vector<2x128xf32>
    %238 = arith.mulf %236, %237 : vector<2x128xf32>
    %239 = arith.addf %207, %238 : vector<2x128xf32>
    %240 = vector.extract_strided_slice %235 {offsets = [1, 0], sizes = [2, 128], strides = [1, 1]} : vector<4x128xf32> to vector<2x128xf32>
    %241 = vector.broadcast %230 : vector<1x128xf32> to vector<2x128xf32>
    %242 = arith.mulf %240, %241 : vector<2x128xf32>
    %243 = arith.addf %239, %242 : vector<2x128xf32>
    %244 = vector.extract_strided_slice %235 {offsets = [2, 0], sizes = [2, 128], strides = [1, 1]} : vector<4x128xf32> to vector<2x128xf32>
    %245 = vector.broadcast %232 : vector<1x128xf32> to vector<2x128xf32>
    %246 = arith.mulf %244, %245 : vector<2x128xf32>
    %247 = arith.addf %243, %246 : vector<2x128xf32>
    %248 = vector.extract_strided_slice %226 {offsets = [1, 0, 0], sizes = [1, 4, 128], strides = [1, 1, 1]} : vector<4x4x128xbf16> to vector<1x4x128xbf16>
    %249 = vector.shape_cast %248 : vector<1x4x128xbf16> to vector<4x128xbf16>
    %250 = arith.extf %249 : vector<4x128xbf16> to vector<4x128xf32>
    %251 = vector.extract_strided_slice %250 {offsets = [0, 0], sizes = [2, 128], strides = [1, 1]} : vector<4x128xf32> to vector<2x128xf32>
    %252 = vector.broadcast %228 : vector<1x128xf32> to vector<2x128xf32>
    %253 = arith.mulf %251, %252 : vector<2x128xf32>
    %254 = arith.addf %222, %253 : vector<2x128xf32>
    %255 = vector.extract_strided_slice %250 {offsets = [1, 0], sizes = [2, 128], strides = [1, 1]} : vector<4x128xf32> to vector<2x128xf32>
    %256 = vector.broadcast %230 : vector<1x128xf32> to vector<2x128xf32>
    %257 = arith.mulf %255, %256 : vector<2x128xf32>
    %258 = arith.addf %254, %257 : vector<2x128xf32>
    %259 = vector.extract_strided_slice %250 {offsets = [2, 0], sizes = [2, 128], strides = [1, 1]} : vector<4x128xf32> to vector<2x128xf32>
    %260 = vector.broadcast %232 : vector<1x128xf32> to vector<2x128xf32>
    %261 = arith.mulf %259, %260 : vector<2x128xf32>
    %262 = arith.addf %258, %261 : vector<2x128xf32>
    %c21 = arith.constant 21 : index
    %c0_55 = arith.constant 0 : index
    %c0_56 = arith.constant 0 : index
    %263 = vector.load %arg3[%c21, %c0_55, %c0_56] : memref<27x1x128xf32, #tpu.memory_space<vmem>>, vector<1x1x128xf32>
    %264 = vector.shape_cast %263 : vector<1x1x128xf32> to vector<1x128xf32>
    %c22 = arith.constant 22 : index
    %c0_57 = arith.constant 0 : index
    %c0_58 = arith.constant 0 : index
    %265 = vector.load %arg3[%c22, %c0_57, %c0_58] : memref<27x1x128xf32, #tpu.memory_space<vmem>>, vector<1x1x128xf32>
    %266 = vector.shape_cast %265 : vector<1x1x128xf32> to vector<1x128xf32>
    %c23 = arith.constant 23 : index
    %c0_59 = arith.constant 0 : index
    %c0_60 = arith.constant 0 : index
    %267 = vector.load %arg3[%c23, %c0_59, %c0_60] : memref<27x1x128xf32, #tpu.memory_space<vmem>>, vector<1x1x128xf32>
    %268 = vector.shape_cast %267 : vector<1x1x128xf32> to vector<1x128xf32>
    %269 = vector.extract_strided_slice %226 {offsets = [1, 0, 0], sizes = [1, 4, 128], strides = [1, 1, 1]} : vector<4x4x128xbf16> to vector<1x4x128xbf16>
    %270 = vector.shape_cast %269 : vector<1x4x128xbf16> to vector<4x128xbf16>
    %271 = arith.extf %270 : vector<4x128xbf16> to vector<4x128xf32>
    %272 = vector.extract_strided_slice %271 {offsets = [0, 0], sizes = [2, 128], strides = [1, 1]} : vector<4x128xf32> to vector<2x128xf32>
    %273 = vector.broadcast %264 : vector<1x128xf32> to vector<2x128xf32>
    %274 = arith.mulf %272, %273 : vector<2x128xf32>
    %275 = arith.addf %247, %274 : vector<2x128xf32>
    %276 = vector.extract_strided_slice %271 {offsets = [1, 0], sizes = [2, 128], strides = [1, 1]} : vector<4x128xf32> to vector<2x128xf32>
    %277 = vector.broadcast %266 : vector<1x128xf32> to vector<2x128xf32>
    %278 = arith.mulf %276, %277 : vector<2x128xf32>
    %279 = arith.addf %275, %278 : vector<2x128xf32>
    %280 = vector.extract_strided_slice %271 {offsets = [2, 0], sizes = [2, 128], strides = [1, 1]} : vector<4x128xf32> to vector<2x128xf32>
    %281 = vector.broadcast %268 : vector<1x128xf32> to vector<2x128xf32>
    %282 = arith.mulf %280, %281 : vector<2x128xf32>
    %283 = arith.addf %279, %282 : vector<2x128xf32>
    %284 = vector.extract_strided_slice %226 {offsets = [2, 0, 0], sizes = [1, 4, 128], strides = [1, 1, 1]} : vector<4x4x128xbf16> to vector<1x4x128xbf16>
    %285 = vector.shape_cast %284 : vector<1x4x128xbf16> to vector<4x128xbf16>
    %286 = arith.extf %285 : vector<4x128xbf16> to vector<4x128xf32>
    %287 = vector.extract_strided_slice %286 {offsets = [0, 0], sizes = [2, 128], strides = [1, 1]} : vector<4x128xf32> to vector<2x128xf32>
    %288 = vector.broadcast %264 : vector<1x128xf32> to vector<2x128xf32>
    %289 = arith.mulf %287, %288 : vector<2x128xf32>
    %290 = arith.addf %262, %289 : vector<2x128xf32>
    %291 = vector.extract_strided_slice %286 {offsets = [1, 0], sizes = [2, 128], strides = [1, 1]} : vector<4x128xf32> to vector<2x128xf32>
    %292 = vector.broadcast %266 : vector<1x128xf32> to vector<2x128xf32>
    %293 = arith.mulf %291, %292 : vector<2x128xf32>
    %294 = arith.addf %290, %293 : vector<2x128xf32>
    %295 = vector.extract_strided_slice %286 {offsets = [2, 0], sizes = [2, 128], strides = [1, 1]} : vector<4x128xf32> to vector<2x128xf32>
    %296 = vector.broadcast %268 : vector<1x128xf32> to vector<2x128xf32>
    %297 = arith.mulf %295, %296 : vector<2x128xf32>
    %298 = arith.addf %294, %297 : vector<2x128xf32>
    %c24 = arith.constant 24 : index
    %c0_61 = arith.constant 0 : index
    %c0_62 = arith.constant 0 : index
    %299 = vector.load %arg3[%c24, %c0_61, %c0_62] : memref<27x1x128xf32, #tpu.memory_space<vmem>>, vector<1x1x128xf32>
    %300 = vector.shape_cast %299 : vector<1x1x128xf32> to vector<1x128xf32>
    %c25 = arith.constant 25 : index
    %c0_63 = arith.constant 0 : index
    %c0_64 = arith.constant 0 : index
    %301 = vector.load %arg3[%c25, %c0_63, %c0_64] : memref<27x1x128xf32, #tpu.memory_space<vmem>>, vector<1x1x128xf32>
    %302 = vector.shape_cast %301 : vector<1x1x128xf32> to vector<1x128xf32>
    %c26 = arith.constant 26 : index
    %c0_65 = arith.constant 0 : index
    %c0_66 = arith.constant 0 : index
    %303 = vector.load %arg3[%c26, %c0_65, %c0_66] : memref<27x1x128xf32, #tpu.memory_space<vmem>>, vector<1x1x128xf32>
    %304 = vector.shape_cast %303 : vector<1x1x128xf32> to vector<1x128xf32>
    %305 = vector.extract_strided_slice %226 {offsets = [2, 0, 0], sizes = [1, 4, 128], strides = [1, 1, 1]} : vector<4x4x128xbf16> to vector<1x4x128xbf16>
    %306 = vector.shape_cast %305 : vector<1x4x128xbf16> to vector<4x128xbf16>
    %307 = arith.extf %306 : vector<4x128xbf16> to vector<4x128xf32>
    %308 = vector.extract_strided_slice %307 {offsets = [0, 0], sizes = [2, 128], strides = [1, 1]} : vector<4x128xf32> to vector<2x128xf32>
    %309 = vector.broadcast %300 : vector<1x128xf32> to vector<2x128xf32>
    %310 = arith.mulf %308, %309 : vector<2x128xf32>
    %311 = arith.addf %283, %310 : vector<2x128xf32>
    %312 = vector.extract_strided_slice %307 {offsets = [1, 0], sizes = [2, 128], strides = [1, 1]} : vector<4x128xf32> to vector<2x128xf32>
    %313 = vector.broadcast %302 : vector<1x128xf32> to vector<2x128xf32>
    %314 = arith.mulf %312, %313 : vector<2x128xf32>
    %315 = arith.addf %311, %314 : vector<2x128xf32>
    %316 = vector.extract_strided_slice %307 {offsets = [2, 0], sizes = [2, 128], strides = [1, 1]} : vector<4x128xf32> to vector<2x128xf32>
    %317 = vector.broadcast %304 : vector<1x128xf32> to vector<2x128xf32>
    %318 = arith.mulf %316, %317 : vector<2x128xf32>
    %319 = arith.addf %315, %318 : vector<2x128xf32>
    %320 = vector.extract_strided_slice %226 {offsets = [3, 0, 0], sizes = [1, 4, 128], strides = [1, 1, 1]} : vector<4x4x128xbf16> to vector<1x4x128xbf16>
    %321 = vector.shape_cast %320 : vector<1x4x128xbf16> to vector<4x128xbf16>
    %322 = arith.extf %321 : vector<4x128xbf16> to vector<4x128xf32>
    %323 = vector.extract_strided_slice %322 {offsets = [0, 0], sizes = [2, 128], strides = [1, 1]} : vector<4x128xf32> to vector<2x128xf32>
    %324 = vector.broadcast %300 : vector<1x128xf32> to vector<2x128xf32>
    %325 = arith.mulf %323, %324 : vector<2x128xf32>
    %326 = arith.addf %298, %325 : vector<2x128xf32>
    %327 = vector.extract_strided_slice %322 {offsets = [1, 0], sizes = [2, 128], strides = [1, 1]} : vector<4x128xf32> to vector<2x128xf32>
    %328 = vector.broadcast %302 : vector<1x128xf32> to vector<2x128xf32>
    %329 = arith.mulf %327, %328 : vector<2x128xf32>
    %330 = arith.addf %326, %329 : vector<2x128xf32>
    %331 = vector.extract_strided_slice %322 {offsets = [2, 0], sizes = [2, 128], strides = [1, 1]} : vector<4x128xf32> to vector<2x128xf32>
    %332 = vector.broadcast %304 : vector<1x128xf32> to vector<2x128xf32>
    %333 = arith.mulf %331, %332 : vector<2x128xf32>
    %334 = arith.addf %330, %333 : vector<2x128xf32>
    %c0_67 = arith.constant 0 : index
    %c0_68 = arith.constant 0 : index
    %335 = vector.load %arg4[%c0_67, %c0_68] : memref<1x128xf32, #tpu.memory_space<vmem>>, vector<1x128xf32>
    %c0_69 = arith.constant 0 : index
    %c0_70 = arith.constant 0 : index
    %336 = vector.load %arg5[%c0_69, %c0_70] : memref<1x128xf32, #tpu.memory_space<vmem>>, vector<1x128xf32>
    %c0_71 = arith.constant 0 : index
    %c0_72 = arith.constant 0 : index
    %337 = vector.load %arg6[%c0_71, %c0_72] : memref<128x128xbf16, #tpu.memory_space<vmem>>, vector<128x128xbf16>
    %c0_73 = arith.constant 0 : index
    %c0_74 = arith.constant 0 : index
    %338 = vector.load %arg7[%c0_73, %c0_74] : memref<1x128xf32, #tpu.memory_space<vmem>>, vector<1x128xf32>
    %c0_75 = arith.constant 0 : index
    %c0_76 = arith.constant 0 : index
    %339 = vector.load %arg8[%c0_75, %c0_76] : memref<1x128xf32, #tpu.memory_space<vmem>>, vector<1x128xf32>
    %340 = vector.broadcast %335 : vector<1x128xf32> to vector<2x128xf32>
    %341 = arith.mulf %319, %340 : vector<2x128xf32>
    %342 = vector.broadcast %336 : vector<1x128xf32> to vector<2x128xf32>
    %343 = arith.addf %341, %342 : vector<2x128xf32>
    %cst = arith.constant 0.000000e+00 : f32
    %344 = vector.broadcast %cst : f32 to vector<2x128xf32>
    %345 = arith.maximumf %343, %344 : vector<2x128xf32>
    %346 = arith.truncf %345 : vector<2x128xf32> to vector<2x128xbf16>
    %cst_77 = arith.constant dense<0.000000e+00> : vector<2x128xf32>
    %347 = tpu.matmul %346, %337, %cst_77 {dimension_numbers = #tpu.dot_dimension_numbers<[1], [0], [0], [1], [0, 0, 1, 1], [], []>} : vector<2x128xbf16>, vector<128x128xbf16>, vector<2x128xf32> -> vector<2x128xf32>
    %348 = vector.broadcast %338 : vector<1x128xf32> to vector<2x128xf32>
    %349 = arith.mulf %347, %348 : vector<2x128xf32>
    %350 = vector.broadcast %339 : vector<1x128xf32> to vector<2x128xf32>
    %351 = arith.addf %349, %350 : vector<2x128xf32>
    %cst_78 = arith.constant 0.000000e+00 : f32
    %352 = vector.broadcast %cst_78 : f32 to vector<2x128xf32>
    %353 = arith.maximumf %351, %352 : vector<2x128xf32>
    %354 = arith.truncf %353 : vector<2x128xf32> to vector<2x128xbf16>
    %c0_79 = arith.constant 0 : index
    %c0_80 = arith.constant 0 : index
    %c0_81 = arith.constant 0 : index
    %c0_82 = arith.constant 0 : index
    %c0_83 = arith.constant 0 : index
    %355 = vector.load %arg9[%c0_79, %c0_80, %c0_81, %c0_82, %c0_83] : memref<1x1x2x2x128xbf16, #tpu.memory_space<vmem>>, vector<1x1x1x2x128xbf16>
    %356 = vector.shape_cast %355 : vector<1x1x1x2x128xbf16> to vector<2x128xbf16>
    %357 = vector.shape_cast %354 : vector<2x128xbf16> to vector<1x1x1x2x128xbf16>
    tpu.vector_store %arg9[%c0_79, %c0_80, %c0_81, %c0_82, %c0_83], %357 {strides = array<i32>} : memref<1x1x2x2x128xbf16, #tpu.memory_space<vmem>>, vector<1x1x1x2x128xbf16>,
    %358 = vector.broadcast %335 : vector<1x128xf32> to vector<2x128xf32>
    %359 = arith.mulf %334, %358 : vector<2x128xf32>
    %360 = vector.broadcast %336 : vector<1x128xf32> to vector<2x128xf32>
    %361 = arith.addf %359, %360 : vector<2x128xf32>
    %cst_84 = arith.constant 0.000000e+00 : f32
    %362 = vector.broadcast %cst_84 : f32 to vector<2x128xf32>
    %363 = arith.maximumf %361, %362 : vector<2x128xf32>
    %364 = arith.truncf %363 : vector<2x128xf32> to vector<2x128xbf16>
    %cst_85 = arith.constant dense<0.000000e+00> : vector<2x128xf32>
    %365 = tpu.matmul %364, %337, %cst_85 {dimension_numbers = #tpu.dot_dimension_numbers<[1], [0], [0], [1], [0, 0, 1, 1], [], []>} : vector<2x128xbf16>, vector<128x128xbf16>, vector<2x128xf32> -> vector<2x128xf32>
    %366 = vector.broadcast %338 : vector<1x128xf32> to vector<2x128xf32>
    %367 = arith.mulf %365, %366 : vector<2x128xf32>
    %368 = vector.broadcast %339 : vector<1x128xf32> to vector<2x128xf32>
    %369 = arith.addf %367, %368 : vector<2x128xf32>
    %cst_86 = arith.constant 0.000000e+00 : f32
    %370 = vector.broadcast %cst_86 : f32 to vector<2x128xf32>
    %371 = arith.maximumf %369, %370 : vector<2x128xf32>
    %372 = arith.truncf %371 : vector<2x128xf32> to vector<2x128xbf16>
    %c0_87 = arith.constant 0 : index
    %c0_88 = arith.constant 0 : index
    %c1_89 = arith.constant 1 : index
    %c0_90 = arith.constant 0 : index
    %c0_91 = arith.constant 0 : index
    %373 = vector.load %arg9[%c0_87, %c0_88, %c1_89, %c0_90, %c0_91] : memref<1x1x2x2x128xbf16, #tpu.memory_space<vmem>>, vector<1x1x1x2x128xbf16>
    %374 = vector.shape_cast %373 : vector<1x1x1x2x128xbf16> to vector<2x128xbf16>
    %375 = vector.shape_cast %372 : vector<2x128xbf16> to vector<1x1x1x2x128xbf16>
    tpu.vector_store %arg9[%c0_87, %c0_88, %c1_89, %c0_90, %c0_91], %375 {strides = array<i32>} : memref<1x1x2x2x128xbf16, #tpu.memory_space<vmem>>, vector<1x1x1x2x128xbf16>,
    return
  }
  func.func @transform_0(%arg0: i32, %arg1: i32) -> (i32, i32, i32, i32, i32) {
    %c0_i32 = arith.constant 0 : i32
    %c0_i32_0 = arith.constant 0 : i32
    %c0_i32_1 = arith.constant 0 : i32
    %c0_i32_2 = arith.constant 0 : i32
    %c0_i32_3 = arith.constant 0 : i32
    return %arg0, %c0_i32, %c0_i32_0, %c0_i32_1, %c0_i32_2 : i32, i32, i32, i32, i32
  }
  func.func @transform_1(%arg0: i32, %arg1: i32) -> (i32, i32, i32) {
    %c0_i32 = arith.constant 0 : i32
    %c0_i32_0 = arith.constant 0 : i32
    %c0_i32_1 = arith.constant 0 : i32
    %c0_i32_2 = arith.constant 0 : i32
    return %c0_i32, %c0_i32_0, %c0_i32_1 : i32, i32, i32
  }
  func.func @transform_2(%arg0: i32, %arg1: i32) -> (i32, i32) {
    %c0_i32 = arith.constant 0 : i32
    %c0_i32_0 = arith.constant 0 : i32
    %c0_i32_1 = arith.constant 0 : i32
    return %c0_i32, %c0_i32_0 : i32, i32
  }
  func.func @transform_3(%arg0: i32, %arg1: i32) -> (i32, i32) {
    %c0_i32 = arith.constant 0 : i32
    %c0_i32_0 = arith.constant 0 : i32
    %c0_i32_1 = arith.constant 0 : i32
    return %c0_i32, %c0_i32_0 : i32, i32
  }
  func.func @transform_4(%arg0: i32, %arg1: i32) -> (i32, i32) {
    %c0_i32 = arith.constant 0 : i32
    %c0_i32_0 = arith.constant 0 : i32
    %c0_i32_1 = arith.constant 0 : i32
    return %c0_i32, %c0_i32_0 : i32, i32
  }
  func.func @transform_5(%arg0: i32, %arg1: i32) -> (i32, i32) {
    %c0_i32 = arith.constant 0 : i32
    %c0_i32_0 = arith.constant 0 : i32
    %c0_i32_1 = arith.constant 0 : i32
    return %c0_i32, %c0_i32_0 : i32, i32
  }
  func.func @transform_6(%arg0: i32, %arg1: i32) -> (i32, i32) {
    %c0_i32 = arith.constant 0 : i32
    %c0_i32_0 = arith.constant 0 : i32
    %c0_i32_1 = arith.constant 0 : i32
    return %c0_i32, %c0_i32_0 : i32, i32
  }
  func.func @transform_7(%arg0: i32, %arg1: i32) -> (i32, i32, i32, i32, i32) {
    %c0_i32 = arith.constant 0 : i32
    %c0_i32_0 = arith.constant 0 : i32
    %c0_i32_1 = arith.constant 0 : i32
    %c0_i32_2 = arith.constant 0 : i32
    return %arg0, %arg1, %c0_i32, %c0_i32_0, %c0_i32_1 : i32, i32, i32, i32, i32
  }
}

module attributes {stable_mosaic.version = 11 : i64} {
  func.func @_block_kernel(%arg0: i32, %arg1: i32, %arg2: memref<1x4x4x4x128xbf16, #tpu.memory_space<vmem>>, %arg3: memref<27x1x128xf32, #tpu.memory_space<vmem>>, %arg4: memref<1x128xf32, #tpu.memory_space<vmem>>, %arg5: memref<1x128xf32, #tpu.memory_space<vmem>>, %arg6: memref<128x128xbf16, #tpu.memory_space<vmem>>, %arg7: memref<1x128xf32, #tpu.memory_space<vmem>>, %arg8: memref<1x128xf32, #tpu.memory_space<vmem>>, %arg9: memref<1x1x1x2x128xbf16, #tpu.memory_space<vmem>>) attributes {dimension_semantics = [#tpu.dimension_semantics<parallel>, #tpu.dimension_semantics<parallel>], iteration_bounds = array<i64: 2, 1>, scalar_prefetch = 0 : i64, scratch_operands = 0 : i64, tpu.core_type = #tpu.core_type<tc>, window_params = [{transform_indices = @transform_0, window_bounds = array<i64: 1, 4, 4, 4, 128>}, {pipeline_mode = #tpu.pipeline_mode<synchronous>, transform_indices = @transform_1, window_bounds = array<i64: 27, 1, 128>}, {pipeline_mode = #tpu.pipeline_mode<synchronous>, transform_indices = @transform_2, window_bounds = array<i64: 1, 128>}, {pipeline_mode = #tpu.pipeline_mode<synchronous>, transform_indices = @transform_3, window_bounds = array<i64: 1, 128>}, {pipeline_mode = #tpu.pipeline_mode<synchronous>, transform_indices = @transform_4, window_bounds = array<i64: 128, 128>}, {pipeline_mode = #tpu.pipeline_mode<synchronous>, transform_indices = @transform_5, window_bounds = array<i64: 1, 128>}, {pipeline_mode = #tpu.pipeline_mode<synchronous>, transform_indices = @transform_6, window_bounds = array<i64: 1, 128>}, {transform_indices = @transform_7, window_bounds = array<i64: 1, 1, 1, 2, 128>}]} {
    %c2_i32 = arith.constant 2 : i32
    %0 = arith.muli %arg1, %c2_i32 : i32
    %c0_i32 = arith.constant 0 : i32
    %1 = arith.addi %0, %c0_i32 : i32
    %c0 = arith.constant 0 : index
    %2 = arith.index_cast %1 : i32 to index
    %c0_0 = arith.constant 0 : index
    %c0_1 = arith.constant 0 : index
    %c0_2 = arith.constant 0 : index
    %3 = vector.load %arg2[%c0, %2, %c0_0, %c0_1, %c0_2] : memref<1x4x4x4x128xbf16, #tpu.memory_space<vmem>>, vector<1x1x4x4x128xbf16>
    %4 = vector.shape_cast %3 : vector<1x1x4x4x128xbf16> to vector<4x4x128xbf16>
    %c0_3 = arith.constant 0 : index
    %c0_4 = arith.constant 0 : index
    %c0_5 = arith.constant 0 : index
    %5 = vector.load %arg3[%c0_3, %c0_4, %c0_5] : memref<27x1x128xf32, #tpu.memory_space<vmem>>, vector<1x1x128xf32>
    %6 = vector.shape_cast %5 : vector<1x1x128xf32> to vector<1x128xf32>
    %c1 = arith.constant 1 : index
    %c0_6 = arith.constant 0 : index
    %c0_7 = arith.constant 0 : index
    %7 = vector.load %arg3[%c1, %c0_6, %c0_7] : memref<27x1x128xf32, #tpu.memory_space<vmem>>, vector<1x1x128xf32>
    %8 = vector.shape_cast %7 : vector<1x1x128xf32> to vector<1x128xf32>
    %c2 = arith.constant 2 : index
    %c0_8 = arith.constant 0 : index
    %c0_9 = arith.constant 0 : index
    %9 = vector.load %arg3[%c2, %c0_8, %c0_9] : memref<27x1x128xf32, #tpu.memory_space<vmem>>, vector<1x1x128xf32>
    %10 = vector.shape_cast %9 : vector<1x1x128xf32> to vector<1x128xf32>
    %11 = vector.extract_strided_slice %4 {offsets = [0, 0, 0], sizes = [1, 4, 128], strides = [1, 1, 1]} : vector<4x4x128xbf16> to vector<1x4x128xbf16>
    %12 = vector.shape_cast %11 : vector<1x4x128xbf16> to vector<4x128xbf16>
    %13 = arith.extf %12 : vector<4x128xbf16> to vector<4x128xf32>
    %14 = vector.extract_strided_slice %13 {offsets = [0, 0], sizes = [2, 128], strides = [1, 1]} : vector<4x128xf32> to vector<2x128xf32>
    %15 = vector.broadcast %6 : vector<1x128xf32> to vector<2x128xf32>
    %16 = arith.mulf %14, %15 : vector<2x128xf32>
    %17 = vector.extract_strided_slice %13 {offsets = [1, 0], sizes = [2, 128], strides = [1, 1]} : vector<4x128xf32> to vector<2x128xf32>
    %18 = vector.broadcast %8 : vector<1x128xf32> to vector<2x128xf32>
    %19 = arith.mulf %17, %18 : vector<2x128xf32>
    %20 = arith.addf %16, %19 : vector<2x128xf32>
    %21 = vector.extract_strided_slice %13 {offsets = [2, 0], sizes = [2, 128], strides = [1, 1]} : vector<4x128xf32> to vector<2x128xf32>
    %22 = vector.broadcast %10 : vector<1x128xf32> to vector<2x128xf32>
    %23 = arith.mulf %21, %22 : vector<2x128xf32>
    %24 = arith.addf %20, %23 : vector<2x128xf32>
    %c3 = arith.constant 3 : index
    %c0_10 = arith.constant 0 : index
    %c0_11 = arith.constant 0 : index
    %25 = vector.load %arg3[%c3, %c0_10, %c0_11] : memref<27x1x128xf32, #tpu.memory_space<vmem>>, vector<1x1x128xf32>
    %26 = vector.shape_cast %25 : vector<1x1x128xf32> to vector<1x128xf32>
    %c4 = arith.constant 4 : index
    %c0_12 = arith.constant 0 : index
    %c0_13 = arith.constant 0 : index
    %27 = vector.load %arg3[%c4, %c0_12, %c0_13] : memref<27x1x128xf32, #tpu.memory_space<vmem>>, vector<1x1x128xf32>
    %28 = vector.shape_cast %27 : vector<1x1x128xf32> to vector<1x128xf32>
    %c5 = arith.constant 5 : index
    %c0_14 = arith.constant 0 : index
    %c0_15 = arith.constant 0 : index
    %29 = vector.load %arg3[%c5, %c0_14, %c0_15] : memref<27x1x128xf32, #tpu.memory_space<vmem>>, vector<1x1x128xf32>
    %30 = vector.shape_cast %29 : vector<1x1x128xf32> to vector<1x128xf32>
    %31 = vector.extract_strided_slice %4 {offsets = [1, 0, 0], sizes = [1, 4, 128], strides = [1, 1, 1]} : vector<4x4x128xbf16> to vector<1x4x128xbf16>
    %32 = vector.shape_cast %31 : vector<1x4x128xbf16> to vector<4x128xbf16>
    %33 = arith.extf %32 : vector<4x128xbf16> to vector<4x128xf32>
    %34 = vector.extract_strided_slice %33 {offsets = [0, 0], sizes = [2, 128], strides = [1, 1]} : vector<4x128xf32> to vector<2x128xf32>
    %35 = vector.broadcast %26 : vector<1x128xf32> to vector<2x128xf32>
    %36 = arith.mulf %34, %35 : vector<2x128xf32>
    %37 = arith.addf %24, %36 : vector<2x128xf32>
    %38 = vector.extract_strided_slice %33 {offsets = [1, 0], sizes = [2, 128], strides = [1, 1]} : vector<4x128xf32> to vector<2x128xf32>
    %39 = vector.broadcast %28 : vector<1x128xf32> to vector<2x128xf32>
    %40 = arith.mulf %38, %39 : vector<2x128xf32>
    %41 = arith.addf %37, %40 : vector<2x128xf32>
    %42 = vector.extract_strided_slice %33 {offsets = [2, 0], sizes = [2, 128], strides = [1, 1]} : vector<4x128xf32> to vector<2x128xf32>
    %43 = vector.broadcast %30 : vector<1x128xf32> to vector<2x128xf32>
    %44 = arith.mulf %42, %43 : vector<2x128xf32>
    %45 = arith.addf %41, %44 : vector<2x128xf32>
    %c6 = arith.constant 6 : index
    %c0_16 = arith.constant 0 : index
    %c0_17 = arith.constant 0 : index
    %46 = vector.load %arg3[%c6, %c0_16, %c0_17] : memref<27x1x128xf32, #tpu.memory_space<vmem>>, vector<1x1x128xf32>
    %47 = vector.shape_cast %46 : vector<1x1x128xf32> to vector<1x128xf32>
    %c7 = arith.constant 7 : index
    %c0_18 = arith.constant 0 : index
    %c0_19 = arith.constant 0 : index
    %48 = vector.load %arg3[%c7, %c0_18, %c0_19] : memref<27x1x128xf32, #tpu.memory_space<vmem>>, vector<1x1x128xf32>
    %49 = vector.shape_cast %48 : vector<1x1x128xf32> to vector<1x128xf32>
    %c8 = arith.constant 8 : index
    %c0_20 = arith.constant 0 : index
    %c0_21 = arith.constant 0 : index
    %50 = vector.load %arg3[%c8, %c0_20, %c0_21] : memref<27x1x128xf32, #tpu.memory_space<vmem>>, vector<1x1x128xf32>
    %51 = vector.shape_cast %50 : vector<1x1x128xf32> to vector<1x128xf32>
    %52 = vector.extract_strided_slice %4 {offsets = [2, 0, 0], sizes = [1, 4, 128], strides = [1, 1, 1]} : vector<4x4x128xbf16> to vector<1x4x128xbf16>
    %53 = vector.shape_cast %52 : vector<1x4x128xbf16> to vector<4x128xbf16>
    %54 = arith.extf %53 : vector<4x128xbf16> to vector<4x128xf32>
    %55 = vector.extract_strided_slice %54 {offsets = [0, 0], sizes = [2, 128], strides = [1, 1]} : vector<4x128xf32> to vector<2x128xf32>
    %56 = vector.broadcast %47 : vector<1x128xf32> to vector<2x128xf32>
    %57 = arith.mulf %55, %56 : vector<2x128xf32>
    %58 = arith.addf %45, %57 : vector<2x128xf32>
    %59 = vector.extract_strided_slice %54 {offsets = [1, 0], sizes = [2, 128], strides = [1, 1]} : vector<4x128xf32> to vector<2x128xf32>
    %60 = vector.broadcast %49 : vector<1x128xf32> to vector<2x128xf32>
    %61 = arith.mulf %59, %60 : vector<2x128xf32>
    %62 = arith.addf %58, %61 : vector<2x128xf32>
    %63 = vector.extract_strided_slice %54 {offsets = [2, 0], sizes = [2, 128], strides = [1, 1]} : vector<4x128xf32> to vector<2x128xf32>
    %64 = vector.broadcast %51 : vector<1x128xf32> to vector<2x128xf32>
    %65 = arith.mulf %63, %64 : vector<2x128xf32>
    %66 = arith.addf %62, %65 : vector<2x128xf32>
    %c1_i32 = arith.constant 1 : i32
    %67 = arith.addi %0, %c1_i32 : i32
    %c0_22 = arith.constant 0 : index
    %68 = arith.index_cast %67 : i32 to index
    %c0_23 = arith.constant 0 : index
    %c0_24 = arith.constant 0 : index
    %c0_25 = arith.constant 0 : index
    %69 = vector.load %arg2[%c0_22, %68, %c0_23, %c0_24, %c0_25] : memref<1x4x4x4x128xbf16, #tpu.memory_space<vmem>>, vector<1x1x4x4x128xbf16>
    %70 = vector.shape_cast %69 : vector<1x1x4x4x128xbf16> to vector<4x4x128xbf16>
    %c9 = arith.constant 9 : index
    %c0_26 = arith.constant 0 : index
    %c0_27 = arith.constant 0 : index
    %71 = vector.load %arg3[%c9, %c0_26, %c0_27] : memref<27x1x128xf32, #tpu.memory_space<vmem>>, vector<1x1x128xf32>
    %72 = vector.shape_cast %71 : vector<1x1x128xf32> to vector<1x128xf32>
    %c10 = arith.constant 10 : index
    %c0_28 = arith.constant 0 : index
    %c0_29 = arith.constant 0 : index
    %73 = vector.load %arg3[%c10, %c0_28, %c0_29] : memref<27x1x128xf32, #tpu.memory_space<vmem>>, vector<1x1x128xf32>
    %74 = vector.shape_cast %73 : vector<1x1x128xf32> to vector<1x128xf32>
    %c11 = arith.constant 11 : index
    %c0_30 = arith.constant 0 : index
    %c0_31 = arith.constant 0 : index
    %75 = vector.load %arg3[%c11, %c0_30, %c0_31] : memref<27x1x128xf32, #tpu.memory_space<vmem>>, vector<1x1x128xf32>
    %76 = vector.shape_cast %75 : vector<1x1x128xf32> to vector<1x128xf32>
    %77 = vector.extract_strided_slice %70 {offsets = [0, 0, 0], sizes = [1, 4, 128], strides = [1, 1, 1]} : vector<4x4x128xbf16> to vector<1x4x128xbf16>
    %78 = vector.shape_cast %77 : vector<1x4x128xbf16> to vector<4x128xbf16>
    %79 = arith.extf %78 : vector<4x128xbf16> to vector<4x128xf32>
    %80 = vector.extract_strided_slice %79 {offsets = [0, 0], sizes = [2, 128], strides = [1, 1]} : vector<4x128xf32> to vector<2x128xf32>
    %81 = vector.broadcast %72 : vector<1x128xf32> to vector<2x128xf32>
    %82 = arith.mulf %80, %81 : vector<2x128xf32>
    %83 = arith.addf %66, %82 : vector<2x128xf32>
    %84 = vector.extract_strided_slice %79 {offsets = [1, 0], sizes = [2, 128], strides = [1, 1]} : vector<4x128xf32> to vector<2x128xf32>
    %85 = vector.broadcast %74 : vector<1x128xf32> to vector<2x128xf32>
    %86 = arith.mulf %84, %85 : vector<2x128xf32>
    %87 = arith.addf %83, %86 : vector<2x128xf32>
    %88 = vector.extract_strided_slice %79 {offsets = [2, 0], sizes = [2, 128], strides = [1, 1]} : vector<4x128xf32> to vector<2x128xf32>
    %89 = vector.broadcast %76 : vector<1x128xf32> to vector<2x128xf32>
    %90 = arith.mulf %88, %89 : vector<2x128xf32>
    %91 = arith.addf %87, %90 : vector<2x128xf32>
    %c12 = arith.constant 12 : index
    %c0_32 = arith.constant 0 : index
    %c0_33 = arith.constant 0 : index
    %92 = vector.load %arg3[%c12, %c0_32, %c0_33] : memref<27x1x128xf32, #tpu.memory_space<vmem>>, vector<1x1x128xf32>
    %93 = vector.shape_cast %92 : vector<1x1x128xf32> to vector<1x128xf32>
    %c13 = arith.constant 13 : index
    %c0_34 = arith.constant 0 : index
    %c0_35 = arith.constant 0 : index
    %94 = vector.load %arg3[%c13, %c0_34, %c0_35] : memref<27x1x128xf32, #tpu.memory_space<vmem>>, vector<1x1x128xf32>
    %95 = vector.shape_cast %94 : vector<1x1x128xf32> to vector<1x128xf32>
    %c14 = arith.constant 14 : index
    %c0_36 = arith.constant 0 : index
    %c0_37 = arith.constant 0 : index
    %96 = vector.load %arg3[%c14, %c0_36, %c0_37] : memref<27x1x128xf32, #tpu.memory_space<vmem>>, vector<1x1x128xf32>
    %97 = vector.shape_cast %96 : vector<1x1x128xf32> to vector<1x128xf32>
    %98 = vector.extract_strided_slice %70 {offsets = [1, 0, 0], sizes = [1, 4, 128], strides = [1, 1, 1]} : vector<4x4x128xbf16> to vector<1x4x128xbf16>
    %99 = vector.shape_cast %98 : vector<1x4x128xbf16> to vector<4x128xbf16>
    %100 = arith.extf %99 : vector<4x128xbf16> to vector<4x128xf32>
    %101 = vector.extract_strided_slice %100 {offsets = [0, 0], sizes = [2, 128], strides = [1, 1]} : vector<4x128xf32> to vector<2x128xf32>
    %102 = vector.broadcast %93 : vector<1x128xf32> to vector<2x128xf32>
    %103 = arith.mulf %101, %102 : vector<2x128xf32>
    %104 = arith.addf %91, %103 : vector<2x128xf32>
    %105 = vector.extract_strided_slice %100 {offsets = [1, 0], sizes = [2, 128], strides = [1, 1]} : vector<4x128xf32> to vector<2x128xf32>
    %106 = vector.broadcast %95 : vector<1x128xf32> to vector<2x128xf32>
    %107 = arith.mulf %105, %106 : vector<2x128xf32>
    %108 = arith.addf %104, %107 : vector<2x128xf32>
    %109 = vector.extract_strided_slice %100 {offsets = [2, 0], sizes = [2, 128], strides = [1, 1]} : vector<4x128xf32> to vector<2x128xf32>
    %110 = vector.broadcast %97 : vector<1x128xf32> to vector<2x128xf32>
    %111 = arith.mulf %109, %110 : vector<2x128xf32>
    %112 = arith.addf %108, %111 : vector<2x128xf32>
    %c15 = arith.constant 15 : index
    %c0_38 = arith.constant 0 : index
    %c0_39 = arith.constant 0 : index
    %113 = vector.load %arg3[%c15, %c0_38, %c0_39] : memref<27x1x128xf32, #tpu.memory_space<vmem>>, vector<1x1x128xf32>
    %114 = vector.shape_cast %113 : vector<1x1x128xf32> to vector<1x128xf32>
    %c16 = arith.constant 16 : index
    %c0_40 = arith.constant 0 : index
    %c0_41 = arith.constant 0 : index
    %115 = vector.load %arg3[%c16, %c0_40, %c0_41] : memref<27x1x128xf32, #tpu.memory_space<vmem>>, vector<1x1x128xf32>
    %116 = vector.shape_cast %115 : vector<1x1x128xf32> to vector<1x128xf32>
    %c17 = arith.constant 17 : index
    %c0_42 = arith.constant 0 : index
    %c0_43 = arith.constant 0 : index
    %117 = vector.load %arg3[%c17, %c0_42, %c0_43] : memref<27x1x128xf32, #tpu.memory_space<vmem>>, vector<1x1x128xf32>
    %118 = vector.shape_cast %117 : vector<1x1x128xf32> to vector<1x128xf32>
    %119 = vector.extract_strided_slice %70 {offsets = [2, 0, 0], sizes = [1, 4, 128], strides = [1, 1, 1]} : vector<4x4x128xbf16> to vector<1x4x128xbf16>
    %120 = vector.shape_cast %119 : vector<1x4x128xbf16> to vector<4x128xbf16>
    %121 = arith.extf %120 : vector<4x128xbf16> to vector<4x128xf32>
    %122 = vector.extract_strided_slice %121 {offsets = [0, 0], sizes = [2, 128], strides = [1, 1]} : vector<4x128xf32> to vector<2x128xf32>
    %123 = vector.broadcast %114 : vector<1x128xf32> to vector<2x128xf32>
    %124 = arith.mulf %122, %123 : vector<2x128xf32>
    %125 = arith.addf %112, %124 : vector<2x128xf32>
    %126 = vector.extract_strided_slice %121 {offsets = [1, 0], sizes = [2, 128], strides = [1, 1]} : vector<4x128xf32> to vector<2x128xf32>
    %127 = vector.broadcast %116 : vector<1x128xf32> to vector<2x128xf32>
    %128 = arith.mulf %126, %127 : vector<2x128xf32>
    %129 = arith.addf %125, %128 : vector<2x128xf32>
    %130 = vector.extract_strided_slice %121 {offsets = [2, 0], sizes = [2, 128], strides = [1, 1]} : vector<4x128xf32> to vector<2x128xf32>
    %131 = vector.broadcast %118 : vector<1x128xf32> to vector<2x128xf32>
    %132 = arith.mulf %130, %131 : vector<2x128xf32>
    %133 = arith.addf %129, %132 : vector<2x128xf32>
    %c2_i32_44 = arith.constant 2 : i32
    %134 = arith.addi %0, %c2_i32_44 : i32
    %c0_45 = arith.constant 0 : index
    %135 = arith.index_cast %134 : i32 to index
    %c0_46 = arith.constant 0 : index
    %c0_47 = arith.constant 0 : index
    %c0_48 = arith.constant 0 : index
    %136 = vector.load %arg2[%c0_45, %135, %c0_46, %c0_47, %c0_48] : memref<1x4x4x4x128xbf16, #tpu.memory_space<vmem>>, vector<1x1x4x4x128xbf16>
    %137 = vector.shape_cast %136 : vector<1x1x4x4x128xbf16> to vector<4x4x128xbf16>
    %c18 = arith.constant 18 : index
    %c0_49 = arith.constant 0 : index
    %c0_50 = arith.constant 0 : index
    %138 = vector.load %arg3[%c18, %c0_49, %c0_50] : memref<27x1x128xf32, #tpu.memory_space<vmem>>, vector<1x1x128xf32>
    %139 = vector.shape_cast %138 : vector<1x1x128xf32> to vector<1x128xf32>
    %c19 = arith.constant 19 : index
    %c0_51 = arith.constant 0 : index
    %c0_52 = arith.constant 0 : index
    %140 = vector.load %arg3[%c19, %c0_51, %c0_52] : memref<27x1x128xf32, #tpu.memory_space<vmem>>, vector<1x1x128xf32>
    %141 = vector.shape_cast %140 : vector<1x1x128xf32> to vector<1x128xf32>
    %c20 = arith.constant 20 : index
    %c0_53 = arith.constant 0 : index
    %c0_54 = arith.constant 0 : index
    %142 = vector.load %arg3[%c20, %c0_53, %c0_54] : memref<27x1x128xf32, #tpu.memory_space<vmem>>, vector<1x1x128xf32>
    %143 = vector.shape_cast %142 : vector<1x1x128xf32> to vector<1x128xf32>
    %144 = vector.extract_strided_slice %137 {offsets = [0, 0, 0], sizes = [1, 4, 128], strides = [1, 1, 1]} : vector<4x4x128xbf16> to vector<1x4x128xbf16>
    %145 = vector.shape_cast %144 : vector<1x4x128xbf16> to vector<4x128xbf16>
    %146 = arith.extf %145 : vector<4x128xbf16> to vector<4x128xf32>
    %147 = vector.extract_strided_slice %146 {offsets = [0, 0], sizes = [2, 128], strides = [1, 1]} : vector<4x128xf32> to vector<2x128xf32>
    %148 = vector.broadcast %139 : vector<1x128xf32> to vector<2x128xf32>
    %149 = arith.mulf %147, %148 : vector<2x128xf32>
    %150 = arith.addf %133, %149 : vector<2x128xf32>
    %151 = vector.extract_strided_slice %146 {offsets = [1, 0], sizes = [2, 128], strides = [1, 1]} : vector<4x128xf32> to vector<2x128xf32>
    %152 = vector.broadcast %141 : vector<1x128xf32> to vector<2x128xf32>
    %153 = arith.mulf %151, %152 : vector<2x128xf32>
    %154 = arith.addf %150, %153 : vector<2x128xf32>
    %155 = vector.extract_strided_slice %146 {offsets = [2, 0], sizes = [2, 128], strides = [1, 1]} : vector<4x128xf32> to vector<2x128xf32>
    %156 = vector.broadcast %143 : vector<1x128xf32> to vector<2x128xf32>
    %157 = arith.mulf %155, %156 : vector<2x128xf32>
    %158 = arith.addf %154, %157 : vector<2x128xf32>
    %c21 = arith.constant 21 : index
    %c0_55 = arith.constant 0 : index
    %c0_56 = arith.constant 0 : index
    %159 = vector.load %arg3[%c21, %c0_55, %c0_56] : memref<27x1x128xf32, #tpu.memory_space<vmem>>, vector<1x1x128xf32>
    %160 = vector.shape_cast %159 : vector<1x1x128xf32> to vector<1x128xf32>
    %c22 = arith.constant 22 : index
    %c0_57 = arith.constant 0 : index
    %c0_58 = arith.constant 0 : index
    %161 = vector.load %arg3[%c22, %c0_57, %c0_58] : memref<27x1x128xf32, #tpu.memory_space<vmem>>, vector<1x1x128xf32>
    %162 = vector.shape_cast %161 : vector<1x1x128xf32> to vector<1x128xf32>
    %c23 = arith.constant 23 : index
    %c0_59 = arith.constant 0 : index
    %c0_60 = arith.constant 0 : index
    %163 = vector.load %arg3[%c23, %c0_59, %c0_60] : memref<27x1x128xf32, #tpu.memory_space<vmem>>, vector<1x1x128xf32>
    %164 = vector.shape_cast %163 : vector<1x1x128xf32> to vector<1x128xf32>
    %165 = vector.extract_strided_slice %137 {offsets = [1, 0, 0], sizes = [1, 4, 128], strides = [1, 1, 1]} : vector<4x4x128xbf16> to vector<1x4x128xbf16>
    %166 = vector.shape_cast %165 : vector<1x4x128xbf16> to vector<4x128xbf16>
    %167 = arith.extf %166 : vector<4x128xbf16> to vector<4x128xf32>
    %168 = vector.extract_strided_slice %167 {offsets = [0, 0], sizes = [2, 128], strides = [1, 1]} : vector<4x128xf32> to vector<2x128xf32>
    %169 = vector.broadcast %160 : vector<1x128xf32> to vector<2x128xf32>
    %170 = arith.mulf %168, %169 : vector<2x128xf32>
    %171 = arith.addf %158, %170 : vector<2x128xf32>
    %172 = vector.extract_strided_slice %167 {offsets = [1, 0], sizes = [2, 128], strides = [1, 1]} : vector<4x128xf32> to vector<2x128xf32>
    %173 = vector.broadcast %162 : vector<1x128xf32> to vector<2x128xf32>
    %174 = arith.mulf %172, %173 : vector<2x128xf32>
    %175 = arith.addf %171, %174 : vector<2x128xf32>
    %176 = vector.extract_strided_slice %167 {offsets = [2, 0], sizes = [2, 128], strides = [1, 1]} : vector<4x128xf32> to vector<2x128xf32>
    %177 = vector.broadcast %164 : vector<1x128xf32> to vector<2x128xf32>
    %178 = arith.mulf %176, %177 : vector<2x128xf32>
    %179 = arith.addf %175, %178 : vector<2x128xf32>
    %c24 = arith.constant 24 : index
    %c0_61 = arith.constant 0 : index
    %c0_62 = arith.constant 0 : index
    %180 = vector.load %arg3[%c24, %c0_61, %c0_62] : memref<27x1x128xf32, #tpu.memory_space<vmem>>, vector<1x1x128xf32>
    %181 = vector.shape_cast %180 : vector<1x1x128xf32> to vector<1x128xf32>
    %c25 = arith.constant 25 : index
    %c0_63 = arith.constant 0 : index
    %c0_64 = arith.constant 0 : index
    %182 = vector.load %arg3[%c25, %c0_63, %c0_64] : memref<27x1x128xf32, #tpu.memory_space<vmem>>, vector<1x1x128xf32>
    %183 = vector.shape_cast %182 : vector<1x1x128xf32> to vector<1x128xf32>
    %c26 = arith.constant 26 : index
    %c0_65 = arith.constant 0 : index
    %c0_66 = arith.constant 0 : index
    %184 = vector.load %arg3[%c26, %c0_65, %c0_66] : memref<27x1x128xf32, #tpu.memory_space<vmem>>, vector<1x1x128xf32>
    %185 = vector.shape_cast %184 : vector<1x1x128xf32> to vector<1x128xf32>
    %186 = vector.extract_strided_slice %137 {offsets = [2, 0, 0], sizes = [1, 4, 128], strides = [1, 1, 1]} : vector<4x4x128xbf16> to vector<1x4x128xbf16>
    %187 = vector.shape_cast %186 : vector<1x4x128xbf16> to vector<4x128xbf16>
    %188 = arith.extf %187 : vector<4x128xbf16> to vector<4x128xf32>
    %189 = vector.extract_strided_slice %188 {offsets = [0, 0], sizes = [2, 128], strides = [1, 1]} : vector<4x128xf32> to vector<2x128xf32>
    %190 = vector.broadcast %181 : vector<1x128xf32> to vector<2x128xf32>
    %191 = arith.mulf %189, %190 : vector<2x128xf32>
    %192 = arith.addf %179, %191 : vector<2x128xf32>
    %193 = vector.extract_strided_slice %188 {offsets = [1, 0], sizes = [2, 128], strides = [1, 1]} : vector<4x128xf32> to vector<2x128xf32>
    %194 = vector.broadcast %183 : vector<1x128xf32> to vector<2x128xf32>
    %195 = arith.mulf %193, %194 : vector<2x128xf32>
    %196 = arith.addf %192, %195 : vector<2x128xf32>
    %197 = vector.extract_strided_slice %188 {offsets = [2, 0], sizes = [2, 128], strides = [1, 1]} : vector<4x128xf32> to vector<2x128xf32>
    %198 = vector.broadcast %185 : vector<1x128xf32> to vector<2x128xf32>
    %199 = arith.mulf %197, %198 : vector<2x128xf32>
    %200 = arith.addf %196, %199 : vector<2x128xf32>
    %c0_67 = arith.constant 0 : index
    %c0_68 = arith.constant 0 : index
    %201 = vector.load %arg4[%c0_67, %c0_68] : memref<1x128xf32, #tpu.memory_space<vmem>>, vector<1x128xf32>
    %c0_69 = arith.constant 0 : index
    %c0_70 = arith.constant 0 : index
    %202 = vector.load %arg5[%c0_69, %c0_70] : memref<1x128xf32, #tpu.memory_space<vmem>>, vector<1x128xf32>
    %c0_71 = arith.constant 0 : index
    %c0_72 = arith.constant 0 : index
    %203 = vector.load %arg6[%c0_71, %c0_72] : memref<128x128xbf16, #tpu.memory_space<vmem>>, vector<128x128xbf16>
    %c0_73 = arith.constant 0 : index
    %c0_74 = arith.constant 0 : index
    %204 = vector.load %arg7[%c0_73, %c0_74] : memref<1x128xf32, #tpu.memory_space<vmem>>, vector<1x128xf32>
    %c0_75 = arith.constant 0 : index
    %c0_76 = arith.constant 0 : index
    %205 = vector.load %arg8[%c0_75, %c0_76] : memref<1x128xf32, #tpu.memory_space<vmem>>, vector<1x128xf32>
    %206 = vector.broadcast %201 : vector<1x128xf32> to vector<2x128xf32>
    %207 = arith.mulf %200, %206 : vector<2x128xf32>
    %208 = vector.broadcast %202 : vector<1x128xf32> to vector<2x128xf32>
    %209 = arith.addf %207, %208 : vector<2x128xf32>
    %cst = arith.constant 0.000000e+00 : f32
    %210 = vector.broadcast %cst : f32 to vector<2x128xf32>
    %211 = arith.maximumf %209, %210 : vector<2x128xf32>
    %212 = arith.truncf %211 : vector<2x128xf32> to vector<2x128xbf16>
    %cst_77 = arith.constant dense<0.000000e+00> : vector<2x128xf32>
    %213 = tpu.matmul %212, %203, %cst_77 {dimension_numbers = #tpu.dot_dimension_numbers<[1], [0], [0], [1], [0, 0, 1, 1], [], []>} : vector<2x128xbf16>, vector<128x128xbf16>, vector<2x128xf32> -> vector<2x128xf32>
    %214 = vector.broadcast %204 : vector<1x128xf32> to vector<2x128xf32>
    %215 = arith.mulf %213, %214 : vector<2x128xf32>
    %216 = vector.broadcast %205 : vector<1x128xf32> to vector<2x128xf32>
    %217 = arith.addf %215, %216 : vector<2x128xf32>
    %cst_78 = arith.constant 0.000000e+00 : f32
    %218 = vector.broadcast %cst_78 : f32 to vector<2x128xf32>
    %219 = arith.maximumf %217, %218 : vector<2x128xf32>
    %220 = arith.truncf %219 : vector<2x128xf32> to vector<2x128xbf16>
    %c0_79 = arith.constant 0 : index
    %c0_80 = arith.constant 0 : index
    %c0_81 = arith.constant 0 : index
    %c0_82 = arith.constant 0 : index
    %c0_83 = arith.constant 0 : index
    %221 = vector.load %arg9[%c0_79, %c0_80, %c0_81, %c0_82, %c0_83] : memref<1x1x1x2x128xbf16, #tpu.memory_space<vmem>>, vector<1x1x1x2x128xbf16>
    %222 = vector.shape_cast %221 : vector<1x1x1x2x128xbf16> to vector<2x128xbf16>
    %223 = vector.shape_cast %220 : vector<2x128xbf16> to vector<1x1x1x2x128xbf16>
    tpu.vector_store %arg9[%c0_79, %c0_80, %c0_81, %c0_82, %c0_83], %223 {strides = array<i32>} : memref<1x1x1x2x128xbf16, #tpu.memory_space<vmem>>, vector<1x1x1x2x128xbf16>,
    return
  }
  func.func @transform_0(%arg0: i32, %arg1: i32) -> (i32, i32, i32, i32, i32) {
    %c0_i32 = arith.constant 0 : i32
    %c0_i32_0 = arith.constant 0 : i32
    %c0_i32_1 = arith.constant 0 : i32
    %c0_i32_2 = arith.constant 0 : i32
    %c0_i32_3 = arith.constant 0 : i32
    return %arg0, %c0_i32, %c0_i32_0, %c0_i32_1, %c0_i32_2 : i32, i32, i32, i32, i32
  }
  func.func @transform_1(%arg0: i32, %arg1: i32) -> (i32, i32, i32) {
    %c0_i32 = arith.constant 0 : i32
    %c0_i32_0 = arith.constant 0 : i32
    %c0_i32_1 = arith.constant 0 : i32
    %c0_i32_2 = arith.constant 0 : i32
    return %c0_i32, %c0_i32_0, %c0_i32_1 : i32, i32, i32
  }
  func.func @transform_2(%arg0: i32, %arg1: i32) -> (i32, i32) {
    %c0_i32 = arith.constant 0 : i32
    %c0_i32_0 = arith.constant 0 : i32
    %c0_i32_1 = arith.constant 0 : i32
    return %c0_i32, %c0_i32_0 : i32, i32
  }
  func.func @transform_3(%arg0: i32, %arg1: i32) -> (i32, i32) {
    %c0_i32 = arith.constant 0 : i32
    %c0_i32_0 = arith.constant 0 : i32
    %c0_i32_1 = arith.constant 0 : i32
    return %c0_i32, %c0_i32_0 : i32, i32
  }
  func.func @transform_4(%arg0: i32, %arg1: i32) -> (i32, i32) {
    %c0_i32 = arith.constant 0 : i32
    %c0_i32_0 = arith.constant 0 : i32
    %c0_i32_1 = arith.constant 0 : i32
    return %c0_i32, %c0_i32_0 : i32, i32
  }
  func.func @transform_5(%arg0: i32, %arg1: i32) -> (i32, i32) {
    %c0_i32 = arith.constant 0 : i32
    %c0_i32_0 = arith.constant 0 : i32
    %c0_i32_1 = arith.constant 0 : i32
    return %c0_i32, %c0_i32_0 : i32, i32
  }
  func.func @transform_6(%arg0: i32, %arg1: i32) -> (i32, i32) {
    %c0_i32 = arith.constant 0 : i32
    %c0_i32_0 = arith.constant 0 : i32
    %c0_i32_1 = arith.constant 0 : i32
    return %c0_i32, %c0_i32_0 : i32, i32
  }
  func.func @transform_7(%arg0: i32, %arg1: i32) -> (i32, i32, i32, i32, i32) {
    %c0_i32 = arith.constant 0 : i32
    %c0_i32_0 = arith.constant 0 : i32
    %c0_i32_1 = arith.constant 0 : i32
    %c0_i32_2 = arith.constant 0 : i32
    return %arg0, %arg1, %c0_i32, %c0_i32_0, %c0_i32_1 : i32, i32, i32, i32, i32
  }
}

module attributes {stable_mosaic.version = 11 : i64} {
  func.func @kernel(%arg0: memref<2x128xbf16, #tpu.memory_space<vmem>>, %arg1: memref<9x1x128xf32, #tpu.memory_space<vmem>>, %arg2: memref<9x1x128xf32, #tpu.memory_space<vmem>>, %arg3: memref<9x1x128xf32, #tpu.memory_space<vmem>>, %arg4: memref<9x128x128xbf16, #tpu.memory_space<vmem>>, %arg5: memref<9x1x128xf32, #tpu.memory_space<vmem>>, %arg6: memref<9x1x128xf32, #tpu.memory_space<vmem>>, %arg7: memref<128x128xbf16, #tpu.memory_space<vmem>>, %arg8: memref<1x128xf32, #tpu.memory_space<vmem>>, %arg9: memref<2x128xf32, #tpu.memory_space<vmem>>) attributes {dimension_semantics = [], scalar_prefetch = 0 : i64, scratch_operands = 0 : i64, tpu.core_type = #tpu.core_type<tc>} {
    %c0 = arith.constant 0 : index
    %c0_0 = arith.constant 0 : index
    %0 = vector.load %arg0[%c0, %c0_0] : memref<2x128xbf16, #tpu.memory_space<vmem>>, vector<2x128xbf16>
    %1 = arith.extf %0 : vector<2x128xbf16> to vector<2x128xf32>
    %c0_1 = arith.constant 0 : index
    %c0_2 = arith.constant 0 : index
    %c0_3 = arith.constant 0 : index
    %2 = vector.load %arg1[%c0_1, %c0_2, %c0_3] : memref<9x1x128xf32, #tpu.memory_space<vmem>>, vector<1x1x128xf32>
    %3 = vector.shape_cast %2 : vector<1x1x128xf32> to vector<1x128xf32>
    %4 = vector.broadcast %3 : vector<1x128xf32> to vector<2x128xf32>
    %5 = arith.mulf %1, %4 : vector<2x128xf32>
    %c0_4 = arith.constant 0 : index
    %c0_5 = arith.constant 0 : index
    %c0_6 = arith.constant 0 : index
    %6 = vector.load %arg2[%c0_4, %c0_5, %c0_6] : memref<9x1x128xf32, #tpu.memory_space<vmem>>, vector<1x1x128xf32>
    %7 = vector.shape_cast %6 : vector<1x1x128xf32> to vector<1x128xf32>
    %8 = vector.broadcast %7 : vector<1x128xf32> to vector<2x128xf32>
    %9 = arith.mulf %5, %8 : vector<2x128xf32>
    %c0_7 = arith.constant 0 : index
    %c0_8 = arith.constant 0 : index
    %c0_9 = arith.constant 0 : index
    %10 = vector.load %arg3[%c0_7, %c0_8, %c0_9] : memref<9x1x128xf32, #tpu.memory_space<vmem>>, vector<1x1x128xf32>
    %11 = vector.shape_cast %10 : vector<1x1x128xf32> to vector<1x128xf32>
    %12 = vector.broadcast %11 : vector<1x128xf32> to vector<2x128xf32>
    %13 = arith.addf %9, %12 : vector<2x128xf32>
    %cst = arith.constant 0.000000e+00 : f32
    %14 = vector.broadcast %cst : f32 to vector<2x128xf32>
    %15 = arith.maximumf %13, %14 : vector<2x128xf32>
    %16 = arith.truncf %15 : vector<2x128xf32> to vector<2x128xbf16>
    %c0_10 = arith.constant 0 : index
    %c0_11 = arith.constant 0 : index
    %c0_12 = arith.constant 0 : index
    %17 = vector.load %arg4[%c0_10, %c0_11, %c0_12] : memref<9x128x128xbf16, #tpu.memory_space<vmem>>, vector<1x128x128xbf16>
    %18 = vector.shape_cast %17 : vector<1x128x128xbf16> to vector<128x128xbf16>
    %cst_13 = arith.constant dense<0.000000e+00> : vector<2x128xf32>
    %19 = tpu.matmul %16, %18, %cst_13 {dimension_numbers = #tpu.dot_dimension_numbers<[1], [0], [0], [1], [0, 0, 1, 1], [], []>} : vector<2x128xbf16>, vector<128x128xbf16>, vector<2x128xf32> -> vector<2x128xf32>
    %c0_14 = arith.constant 0 : index
    %c0_15 = arith.constant 0 : index
    %c0_16 = arith.constant 0 : index
    %20 = vector.load %arg5[%c0_14, %c0_15, %c0_16] : memref<9x1x128xf32, #tpu.memory_space<vmem>>, vector<1x1x128xf32>
    %21 = vector.shape_cast %20 : vector<1x1x128xf32> to vector<1x128xf32>
    %22 = vector.broadcast %21 : vector<1x128xf32> to vector<2x128xf32>
    %23 = arith.mulf %19, %22 : vector<2x128xf32>
    %c0_17 = arith.constant 0 : index
    %c0_18 = arith.constant 0 : index
    %c0_19 = arith.constant 0 : index
    %24 = vector.load %arg6[%c0_17, %c0_18, %c0_19] : memref<9x1x128xf32, #tpu.memory_space<vmem>>, vector<1x1x128xf32>
    %25 = vector.shape_cast %24 : vector<1x1x128xf32> to vector<1x128xf32>
    %26 = vector.broadcast %25 : vector<1x128xf32> to vector<2x128xf32>
    %27 = arith.addf %23, %26 : vector<2x128xf32>
    %cst_20 = arith.constant 0.000000e+00 : f32
    %28 = vector.broadcast %cst_20 : f32 to vector<2x128xf32>
    %29 = arith.maximumf %27, %28 : vector<2x128xf32>
    %c1 = arith.constant 1 : index
    %c0_21 = arith.constant 0 : index
    %c0_22 = arith.constant 0 : index
    %30 = vector.load %arg1[%c1, %c0_21, %c0_22] : memref<9x1x128xf32, #tpu.memory_space<vmem>>, vector<1x1x128xf32>
    %31 = vector.shape_cast %30 : vector<1x1x128xf32> to vector<1x128xf32>
    %32 = vector.broadcast %31 : vector<1x128xf32> to vector<2x128xf32>
    %33 = arith.mulf %29, %32 : vector<2x128xf32>
    %c1_23 = arith.constant 1 : index
    %c0_24 = arith.constant 0 : index
    %c0_25 = arith.constant 0 : index
    %34 = vector.load %arg2[%c1_23, %c0_24, %c0_25] : memref<9x1x128xf32, #tpu.memory_space<vmem>>, vector<1x1x128xf32>
    %35 = vector.shape_cast %34 : vector<1x1x128xf32> to vector<1x128xf32>
    %36 = vector.broadcast %35 : vector<1x128xf32> to vector<2x128xf32>
    %37 = arith.mulf %33, %36 : vector<2x128xf32>
    %c1_26 = arith.constant 1 : index
    %c0_27 = arith.constant 0 : index
    %c0_28 = arith.constant 0 : index
    %38 = vector.load %arg3[%c1_26, %c0_27, %c0_28] : memref<9x1x128xf32, #tpu.memory_space<vmem>>, vector<1x1x128xf32>
    %39 = vector.shape_cast %38 : vector<1x1x128xf32> to vector<1x128xf32>
    %40 = vector.broadcast %39 : vector<1x128xf32> to vector<2x128xf32>
    %41 = arith.addf %37, %40 : vector<2x128xf32>
    %cst_29 = arith.constant 0.000000e+00 : f32
    %42 = vector.broadcast %cst_29 : f32 to vector<2x128xf32>
    %43 = arith.maximumf %41, %42 : vector<2x128xf32>
    %44 = arith.truncf %43 : vector<2x128xf32> to vector<2x128xbf16>
    %c1_30 = arith.constant 1 : index
    %c0_31 = arith.constant 0 : index
    %c0_32 = arith.constant 0 : index
    %45 = vector.load %arg4[%c1_30, %c0_31, %c0_32] : memref<9x128x128xbf16, #tpu.memory_space<vmem>>, vector<1x128x128xbf16>
    %46 = vector.shape_cast %45 : vector<1x128x128xbf16> to vector<128x128xbf16>
    %cst_33 = arith.constant dense<0.000000e+00> : vector<2x128xf32>
    %47 = tpu.matmul %44, %46, %cst_33 {dimension_numbers = #tpu.dot_dimension_numbers<[1], [0], [0], [1], [0, 0, 1, 1], [], []>} : vector<2x128xbf16>, vector<128x128xbf16>, vector<2x128xf32> -> vector<2x128xf32>
    %c1_34 = arith.constant 1 : index
    %c0_35 = arith.constant 0 : index
    %c0_36 = arith.constant 0 : index
    %48 = vector.load %arg5[%c1_34, %c0_35, %c0_36] : memref<9x1x128xf32, #tpu.memory_space<vmem>>, vector<1x1x128xf32>
    %49 = vector.shape_cast %48 : vector<1x1x128xf32> to vector<1x128xf32>
    %50 = vector.broadcast %49 : vector<1x128xf32> to vector<2x128xf32>
    %51 = arith.mulf %47, %50 : vector<2x128xf32>
    %c1_37 = arith.constant 1 : index
    %c0_38 = arith.constant 0 : index
    %c0_39 = arith.constant 0 : index
    %52 = vector.load %arg6[%c1_37, %c0_38, %c0_39] : memref<9x1x128xf32, #tpu.memory_space<vmem>>, vector<1x1x128xf32>
    %53 = vector.shape_cast %52 : vector<1x1x128xf32> to vector<1x128xf32>
    %54 = vector.broadcast %53 : vector<1x128xf32> to vector<2x128xf32>
    %55 = arith.addf %51, %54 : vector<2x128xf32>
    %cst_40 = arith.constant 0.000000e+00 : f32
    %56 = vector.broadcast %cst_40 : f32 to vector<2x128xf32>
    %57 = arith.maximumf %55, %56 : vector<2x128xf32>
    %c2 = arith.constant 2 : index
    %c0_41 = arith.constant 0 : index
    %c0_42 = arith.constant 0 : index
    %58 = vector.load %arg1[%c2, %c0_41, %c0_42] : memref<9x1x128xf32, #tpu.memory_space<vmem>>, vector<1x1x128xf32>
    %59 = vector.shape_cast %58 : vector<1x1x128xf32> to vector<1x128xf32>
    %60 = vector.broadcast %59 : vector<1x128xf32> to vector<2x128xf32>
    %61 = arith.mulf %57, %60 : vector<2x128xf32>
    %c2_43 = arith.constant 2 : index
    %c0_44 = arith.constant 0 : index
    %c0_45 = arith.constant 0 : index
    %62 = vector.load %arg2[%c2_43, %c0_44, %c0_45] : memref<9x1x128xf32, #tpu.memory_space<vmem>>, vector<1x1x128xf32>
    %63 = vector.shape_cast %62 : vector<1x1x128xf32> to vector<1x128xf32>
    %64 = vector.broadcast %63 : vector<1x128xf32> to vector<2x128xf32>
    %65 = arith.mulf %61, %64 : vector<2x128xf32>
    %c2_46 = arith.constant 2 : index
    %c0_47 = arith.constant 0 : index
    %c0_48 = arith.constant 0 : index
    %66 = vector.load %arg3[%c2_46, %c0_47, %c0_48] : memref<9x1x128xf32, #tpu.memory_space<vmem>>, vector<1x1x128xf32>
    %67 = vector.shape_cast %66 : vector<1x1x128xf32> to vector<1x128xf32>
    %68 = vector.broadcast %67 : vector<1x128xf32> to vector<2x128xf32>
    %69 = arith.addf %65, %68 : vector<2x128xf32>
    %cst_49 = arith.constant 0.000000e+00 : f32
    %70 = vector.broadcast %cst_49 : f32 to vector<2x128xf32>
    %71 = arith.maximumf %69, %70 : vector<2x128xf32>
    %72 = arith.truncf %71 : vector<2x128xf32> to vector<2x128xbf16>
    %c2_50 = arith.constant 2 : index
    %c0_51 = arith.constant 0 : index
    %c0_52 = arith.constant 0 : index
    %73 = vector.load %arg4[%c2_50, %c0_51, %c0_52] : memref<9x128x128xbf16, #tpu.memory_space<vmem>>, vector<1x128x128xbf16>
    %74 = vector.shape_cast %73 : vector<1x128x128xbf16> to vector<128x128xbf16>
    %cst_53 = arith.constant dense<0.000000e+00> : vector<2x128xf32>
    %75 = tpu.matmul %72, %74, %cst_53 {dimension_numbers = #tpu.dot_dimension_numbers<[1], [0], [0], [1], [0, 0, 1, 1], [], []>} : vector<2x128xbf16>, vector<128x128xbf16>, vector<2x128xf32> -> vector<2x128xf32>
    %c2_54 = arith.constant 2 : index
    %c0_55 = arith.constant 0 : index
    %c0_56 = arith.constant 0 : index
    %76 = vector.load %arg5[%c2_54, %c0_55, %c0_56] : memref<9x1x128xf32, #tpu.memory_space<vmem>>, vector<1x1x128xf32>
    %77 = vector.shape_cast %76 : vector<1x1x128xf32> to vector<1x128xf32>
    %78 = vector.broadcast %77 : vector<1x128xf32> to vector<2x128xf32>
    %79 = arith.mulf %75, %78 : vector<2x128xf32>
    %c2_57 = arith.constant 2 : index
    %c0_58 = arith.constant 0 : index
    %c0_59 = arith.constant 0 : index
    %80 = vector.load %arg6[%c2_57, %c0_58, %c0_59] : memref<9x1x128xf32, #tpu.memory_space<vmem>>, vector<1x1x128xf32>
    %81 = vector.shape_cast %80 : vector<1x1x128xf32> to vector<1x128xf32>
    %82 = vector.broadcast %81 : vector<1x128xf32> to vector<2x128xf32>
    %83 = arith.addf %79, %82 : vector<2x128xf32>
    %cst_60 = arith.constant 0.000000e+00 : f32
    %84 = vector.broadcast %cst_60 : f32 to vector<2x128xf32>
    %85 = arith.maximumf %83, %84 : vector<2x128xf32>
    %c3 = arith.constant 3 : index
    %c0_61 = arith.constant 0 : index
    %c0_62 = arith.constant 0 : index
    %86 = vector.load %arg1[%c3, %c0_61, %c0_62] : memref<9x1x128xf32, #tpu.memory_space<vmem>>, vector<1x1x128xf32>
    %87 = vector.shape_cast %86 : vector<1x1x128xf32> to vector<1x128xf32>
    %88 = vector.broadcast %87 : vector<1x128xf32> to vector<2x128xf32>
    %89 = arith.mulf %85, %88 : vector<2x128xf32>
    %c3_63 = arith.constant 3 : index
    %c0_64 = arith.constant 0 : index
    %c0_65 = arith.constant 0 : index
    %90 = vector.load %arg2[%c3_63, %c0_64, %c0_65] : memref<9x1x128xf32, #tpu.memory_space<vmem>>, vector<1x1x128xf32>
    %91 = vector.shape_cast %90 : vector<1x1x128xf32> to vector<1x128xf32>
    %92 = vector.broadcast %91 : vector<1x128xf32> to vector<2x128xf32>
    %93 = arith.mulf %89, %92 : vector<2x128xf32>
    %c3_66 = arith.constant 3 : index
    %c0_67 = arith.constant 0 : index
    %c0_68 = arith.constant 0 : index
    %94 = vector.load %arg3[%c3_66, %c0_67, %c0_68] : memref<9x1x128xf32, #tpu.memory_space<vmem>>, vector<1x1x128xf32>
    %95 = vector.shape_cast %94 : vector<1x1x128xf32> to vector<1x128xf32>
    %96 = vector.broadcast %95 : vector<1x128xf32> to vector<2x128xf32>
    %97 = arith.addf %93, %96 : vector<2x128xf32>
    %cst_69 = arith.constant 0.000000e+00 : f32
    %98 = vector.broadcast %cst_69 : f32 to vector<2x128xf32>
    %99 = arith.maximumf %97, %98 : vector<2x128xf32>
    %100 = arith.truncf %99 : vector<2x128xf32> to vector<2x128xbf16>
    %c3_70 = arith.constant 3 : index
    %c0_71 = arith.constant 0 : index
    %c0_72 = arith.constant 0 : index
    %101 = vector.load %arg4[%c3_70, %c0_71, %c0_72] : memref<9x128x128xbf16, #tpu.memory_space<vmem>>, vector<1x128x128xbf16>
    %102 = vector.shape_cast %101 : vector<1x128x128xbf16> to vector<128x128xbf16>
    %cst_73 = arith.constant dense<0.000000e+00> : vector<2x128xf32>
    %103 = tpu.matmul %100, %102, %cst_73 {dimension_numbers = #tpu.dot_dimension_numbers<[1], [0], [0], [1], [0, 0, 1, 1], [], []>} : vector<2x128xbf16>, vector<128x128xbf16>, vector<2x128xf32> -> vector<2x128xf32>
    %c3_74 = arith.constant 3 : index
    %c0_75 = arith.constant 0 : index
    %c0_76 = arith.constant 0 : index
    %104 = vector.load %arg5[%c3_74, %c0_75, %c0_76] : memref<9x1x128xf32, #tpu.memory_space<vmem>>, vector<1x1x128xf32>
    %105 = vector.shape_cast %104 : vector<1x1x128xf32> to vector<1x128xf32>
    %106 = vector.broadcast %105 : vector<1x128xf32> to vector<2x128xf32>
    %107 = arith.mulf %103, %106 : vector<2x128xf32>
    %c3_77 = arith.constant 3 : index
    %c0_78 = arith.constant 0 : index
    %c0_79 = arith.constant 0 : index
    %108 = vector.load %arg6[%c3_77, %c0_78, %c0_79] : memref<9x1x128xf32, #tpu.memory_space<vmem>>, vector<1x1x128xf32>
    %109 = vector.shape_cast %108 : vector<1x1x128xf32> to vector<1x128xf32>
    %110 = vector.broadcast %109 : vector<1x128xf32> to vector<2x128xf32>
    %111 = arith.addf %107, %110 : vector<2x128xf32>
    %cst_80 = arith.constant 0.000000e+00 : f32
    %112 = vector.broadcast %cst_80 : f32 to vector<2x128xf32>
    %113 = arith.maximumf %111, %112 : vector<2x128xf32>
    %c4 = arith.constant 4 : index
    %c0_81 = arith.constant 0 : index
    %c0_82 = arith.constant 0 : index
    %114 = vector.load %arg1[%c4, %c0_81, %c0_82] : memref<9x1x128xf32, #tpu.memory_space<vmem>>, vector<1x1x128xf32>
    %115 = vector.shape_cast %114 : vector<1x1x128xf32> to vector<1x128xf32>
    %116 = vector.broadcast %115 : vector<1x128xf32> to vector<2x128xf32>
    %117 = arith.mulf %113, %116 : vector<2x128xf32>
    %c4_83 = arith.constant 4 : index
    %c0_84 = arith.constant 0 : index
    %c0_85 = arith.constant 0 : index
    %118 = vector.load %arg2[%c4_83, %c0_84, %c0_85] : memref<9x1x128xf32, #tpu.memory_space<vmem>>, vector<1x1x128xf32>
    %119 = vector.shape_cast %118 : vector<1x1x128xf32> to vector<1x128xf32>
    %120 = vector.broadcast %119 : vector<1x128xf32> to vector<2x128xf32>
    %121 = arith.mulf %117, %120 : vector<2x128xf32>
    %c4_86 = arith.constant 4 : index
    %c0_87 = arith.constant 0 : index
    %c0_88 = arith.constant 0 : index
    %122 = vector.load %arg3[%c4_86, %c0_87, %c0_88] : memref<9x1x128xf32, #tpu.memory_space<vmem>>, vector<1x1x128xf32>
    %123 = vector.shape_cast %122 : vector<1x1x128xf32> to vector<1x128xf32>
    %124 = vector.broadcast %123 : vector<1x128xf32> to vector<2x128xf32>
    %125 = arith.addf %121, %124 : vector<2x128xf32>
    %cst_89 = arith.constant 0.000000e+00 : f32
    %126 = vector.broadcast %cst_89 : f32 to vector<2x128xf32>
    %127 = arith.maximumf %125, %126 : vector<2x128xf32>
    %128 = arith.truncf %127 : vector<2x128xf32> to vector<2x128xbf16>
    %c4_90 = arith.constant 4 : index
    %c0_91 = arith.constant 0 : index
    %c0_92 = arith.constant 0 : index
    %129 = vector.load %arg4[%c4_90, %c0_91, %c0_92] : memref<9x128x128xbf16, #tpu.memory_space<vmem>>, vector<1x128x128xbf16>
    %130 = vector.shape_cast %129 : vector<1x128x128xbf16> to vector<128x128xbf16>
    %cst_93 = arith.constant dense<0.000000e+00> : vector<2x128xf32>
    %131 = tpu.matmul %128, %130, %cst_93 {dimension_numbers = #tpu.dot_dimension_numbers<[1], [0], [0], [1], [0, 0, 1, 1], [], []>} : vector<2x128xbf16>, vector<128x128xbf16>, vector<2x128xf32> -> vector<2x128xf32>
    %c4_94 = arith.constant 4 : index
    %c0_95 = arith.constant 0 : index
    %c0_96 = arith.constant 0 : index
    %132 = vector.load %arg5[%c4_94, %c0_95, %c0_96] : memref<9x1x128xf32, #tpu.memory_space<vmem>>, vector<1x1x128xf32>
    %133 = vector.shape_cast %132 : vector<1x1x128xf32> to vector<1x128xf32>
    %134 = vector.broadcast %133 : vector<1x128xf32> to vector<2x128xf32>
    %135 = arith.mulf %131, %134 : vector<2x128xf32>
    %c4_97 = arith.constant 4 : index
    %c0_98 = arith.constant 0 : index
    %c0_99 = arith.constant 0 : index
    %136 = vector.load %arg6[%c4_97, %c0_98, %c0_99] : memref<9x1x128xf32, #tpu.memory_space<vmem>>, vector<1x1x128xf32>
    %137 = vector.shape_cast %136 : vector<1x1x128xf32> to vector<1x128xf32>
    %138 = vector.broadcast %137 : vector<1x128xf32> to vector<2x128xf32>
    %139 = arith.addf %135, %138 : vector<2x128xf32>
    %cst_100 = arith.constant 0.000000e+00 : f32
    %140 = vector.broadcast %cst_100 : f32 to vector<2x128xf32>
    %141 = arith.maximumf %139, %140 : vector<2x128xf32>
    %c5 = arith.constant 5 : index
    %c0_101 = arith.constant 0 : index
    %c0_102 = arith.constant 0 : index
    %142 = vector.load %arg1[%c5, %c0_101, %c0_102] : memref<9x1x128xf32, #tpu.memory_space<vmem>>, vector<1x1x128xf32>
    %143 = vector.shape_cast %142 : vector<1x1x128xf32> to vector<1x128xf32>
    %144 = vector.broadcast %143 : vector<1x128xf32> to vector<2x128xf32>
    %145 = arith.mulf %141, %144 : vector<2x128xf32>
    %c5_103 = arith.constant 5 : index
    %c0_104 = arith.constant 0 : index
    %c0_105 = arith.constant 0 : index
    %146 = vector.load %arg2[%c5_103, %c0_104, %c0_105] : memref<9x1x128xf32, #tpu.memory_space<vmem>>, vector<1x1x128xf32>
    %147 = vector.shape_cast %146 : vector<1x1x128xf32> to vector<1x128xf32>
    %148 = vector.broadcast %147 : vector<1x128xf32> to vector<2x128xf32>
    %149 = arith.mulf %145, %148 : vector<2x128xf32>
    %c5_106 = arith.constant 5 : index
    %c0_107 = arith.constant 0 : index
    %c0_108 = arith.constant 0 : index
    %150 = vector.load %arg3[%c5_106, %c0_107, %c0_108] : memref<9x1x128xf32, #tpu.memory_space<vmem>>, vector<1x1x128xf32>
    %151 = vector.shape_cast %150 : vector<1x1x128xf32> to vector<1x128xf32>
    %152 = vector.broadcast %151 : vector<1x128xf32> to vector<2x128xf32>
    %153 = arith.addf %149, %152 : vector<2x128xf32>
    %cst_109 = arith.constant 0.000000e+00 : f32
    %154 = vector.broadcast %cst_109 : f32 to vector<2x128xf32>
    %155 = arith.maximumf %153, %154 : vector<2x128xf32>
    %156 = arith.truncf %155 : vector<2x128xf32> to vector<2x128xbf16>
    %c5_110 = arith.constant 5 : index
    %c0_111 = arith.constant 0 : index
    %c0_112 = arith.constant 0 : index
    %157 = vector.load %arg4[%c5_110, %c0_111, %c0_112] : memref<9x128x128xbf16, #tpu.memory_space<vmem>>, vector<1x128x128xbf16>
    %158 = vector.shape_cast %157 : vector<1x128x128xbf16> to vector<128x128xbf16>
    %cst_113 = arith.constant dense<0.000000e+00> : vector<2x128xf32>
    %159 = tpu.matmul %156, %158, %cst_113 {dimension_numbers = #tpu.dot_dimension_numbers<[1], [0], [0], [1], [0, 0, 1, 1], [], []>} : vector<2x128xbf16>, vector<128x128xbf16>, vector<2x128xf32> -> vector<2x128xf32>
    %c5_114 = arith.constant 5 : index
    %c0_115 = arith.constant 0 : index
    %c0_116 = arith.constant 0 : index
    %160 = vector.load %arg5[%c5_114, %c0_115, %c0_116] : memref<9x1x128xf32, #tpu.memory_space<vmem>>, vector<1x1x128xf32>
    %161 = vector.shape_cast %160 : vector<1x1x128xf32> to vector<1x128xf32>
    %162 = vector.broadcast %161 : vector<1x128xf32> to vector<2x128xf32>
    %163 = arith.mulf %159, %162 : vector<2x128xf32>
    %c5_117 = arith.constant 5 : index
    %c0_118 = arith.constant 0 : index
    %c0_119 = arith.constant 0 : index
    %164 = vector.load %arg6[%c5_117, %c0_118, %c0_119] : memref<9x1x128xf32, #tpu.memory_space<vmem>>, vector<1x1x128xf32>
    %165 = vector.shape_cast %164 : vector<1x1x128xf32> to vector<1x128xf32>
    %166 = vector.broadcast %165 : vector<1x128xf32> to vector<2x128xf32>
    %167 = arith.addf %163, %166 : vector<2x128xf32>
    %cst_120 = arith.constant 0.000000e+00 : f32
    %168 = vector.broadcast %cst_120 : f32 to vector<2x128xf32>
    %169 = arith.maximumf %167, %168 : vector<2x128xf32>
    %c6 = arith.constant 6 : index
    %c0_121 = arith.constant 0 : index
    %c0_122 = arith.constant 0 : index
    %170 = vector.load %arg1[%c6, %c0_121, %c0_122] : memref<9x1x128xf32, #tpu.memory_space<vmem>>, vector<1x1x128xf32>
    %171 = vector.shape_cast %170 : vector<1x1x128xf32> to vector<1x128xf32>
    %172 = vector.broadcast %171 : vector<1x128xf32> to vector<2x128xf32>
    %173 = arith.mulf %169, %172 : vector<2x128xf32>
    %c6_123 = arith.constant 6 : index
    %c0_124 = arith.constant 0 : index
    %c0_125 = arith.constant 0 : index
    %174 = vector.load %arg2[%c6_123, %c0_124, %c0_125] : memref<9x1x128xf32, #tpu.memory_space<vmem>>, vector<1x1x128xf32>
    %175 = vector.shape_cast %174 : vector<1x1x128xf32> to vector<1x128xf32>
    %176 = vector.broadcast %175 : vector<1x128xf32> to vector<2x128xf32>
    %177 = arith.mulf %173, %176 : vector<2x128xf32>
    %c6_126 = arith.constant 6 : index
    %c0_127 = arith.constant 0 : index
    %c0_128 = arith.constant 0 : index
    %178 = vector.load %arg3[%c6_126, %c0_127, %c0_128] : memref<9x1x128xf32, #tpu.memory_space<vmem>>, vector<1x1x128xf32>
    %179 = vector.shape_cast %178 : vector<1x1x128xf32> to vector<1x128xf32>
    %180 = vector.broadcast %179 : vector<1x128xf32> to vector<2x128xf32>
    %181 = arith.addf %177, %180 : vector<2x128xf32>
    %cst_129 = arith.constant 0.000000e+00 : f32
    %182 = vector.broadcast %cst_129 : f32 to vector<2x128xf32>
    %183 = arith.maximumf %181, %182 : vector<2x128xf32>
    %184 = arith.truncf %183 : vector<2x128xf32> to vector<2x128xbf16>
    %c6_130 = arith.constant 6 : index
    %c0_131 = arith.constant 0 : index
    %c0_132 = arith.constant 0 : index
    %185 = vector.load %arg4[%c6_130, %c0_131, %c0_132] : memref<9x128x128xbf16, #tpu.memory_space<vmem>>, vector<1x128x128xbf16>
    %186 = vector.shape_cast %185 : vector<1x128x128xbf16> to vector<128x128xbf16>
    %cst_133 = arith.constant dense<0.000000e+00> : vector<2x128xf32>
    %187 = tpu.matmul %184, %186, %cst_133 {dimension_numbers = #tpu.dot_dimension_numbers<[1], [0], [0], [1], [0, 0, 1, 1], [], []>} : vector<2x128xbf16>, vector<128x128xbf16>, vector<2x128xf32> -> vector<2x128xf32>
    %c6_134 = arith.constant 6 : index
    %c0_135 = arith.constant 0 : index
    %c0_136 = arith.constant 0 : index
    %188 = vector.load %arg5[%c6_134, %c0_135, %c0_136] : memref<9x1x128xf32, #tpu.memory_space<vmem>>, vector<1x1x128xf32>
    %189 = vector.shape_cast %188 : vector<1x1x128xf32> to vector<1x128xf32>
    %190 = vector.broadcast %189 : vector<1x128xf32> to vector<2x128xf32>
    %191 = arith.mulf %187, %190 : vector<2x128xf32>
    %c6_137 = arith.constant 6 : index
    %c0_138 = arith.constant 0 : index
    %c0_139 = arith.constant 0 : index
    %192 = vector.load %arg6[%c6_137, %c0_138, %c0_139] : memref<9x1x128xf32, #tpu.memory_space<vmem>>, vector<1x1x128xf32>
    %193 = vector.shape_cast %192 : vector<1x1x128xf32> to vector<1x128xf32>
    %194 = vector.broadcast %193 : vector<1x128xf32> to vector<2x128xf32>
    %195 = arith.addf %191, %194 : vector<2x128xf32>
    %cst_140 = arith.constant 0.000000e+00 : f32
    %196 = vector.broadcast %cst_140 : f32 to vector<2x128xf32>
    %197 = arith.maximumf %195, %196 : vector<2x128xf32>
    %c7 = arith.constant 7 : index
    %c0_141 = arith.constant 0 : index
    %c0_142 = arith.constant 0 : index
    %198 = vector.load %arg1[%c7, %c0_141, %c0_142] : memref<9x1x128xf32, #tpu.memory_space<vmem>>, vector<1x1x128xf32>
    %199 = vector.shape_cast %198 : vector<1x1x128xf32> to vector<1x128xf32>
    %200 = vector.broadcast %199 : vector<1x128xf32> to vector<2x128xf32>
    %201 = arith.mulf %197, %200 : vector<2x128xf32>
    %c7_143 = arith.constant 7 : index
    %c0_144 = arith.constant 0 : index
    %c0_145 = arith.constant 0 : index
    %202 = vector.load %arg2[%c7_143, %c0_144, %c0_145] : memref<9x1x128xf32, #tpu.memory_space<vmem>>, vector<1x1x128xf32>
    %203 = vector.shape_cast %202 : vector<1x1x128xf32> to vector<1x128xf32>
    %204 = vector.broadcast %203 : vector<1x128xf32> to vector<2x128xf32>
    %205 = arith.mulf %201, %204 : vector<2x128xf32>
    %c7_146 = arith.constant 7 : index
    %c0_147 = arith.constant 0 : index
    %c0_148 = arith.constant 0 : index
    %206 = vector.load %arg3[%c7_146, %c0_147, %c0_148] : memref<9x1x128xf32, #tpu.memory_space<vmem>>, vector<1x1x128xf32>
    %207 = vector.shape_cast %206 : vector<1x1x128xf32> to vector<1x128xf32>
    %208 = vector.broadcast %207 : vector<1x128xf32> to vector<2x128xf32>
    %209 = arith.addf %205, %208 : vector<2x128xf32>
    %cst_149 = arith.constant 0.000000e+00 : f32
    %210 = vector.broadcast %cst_149 : f32 to vector<2x128xf32>
    %211 = arith.maximumf %209, %210 : vector<2x128xf32>
    %212 = arith.truncf %211 : vector<2x128xf32> to vector<2x128xbf16>
    %c7_150 = arith.constant 7 : index
    %c0_151 = arith.constant 0 : index
    %c0_152 = arith.constant 0 : index
    %213 = vector.load %arg4[%c7_150, %c0_151, %c0_152] : memref<9x128x128xbf16, #tpu.memory_space<vmem>>, vector<1x128x128xbf16>
    %214 = vector.shape_cast %213 : vector<1x128x128xbf16> to vector<128x128xbf16>
    %cst_153 = arith.constant dense<0.000000e+00> : vector<2x128xf32>
    %215 = tpu.matmul %212, %214, %cst_153 {dimension_numbers = #tpu.dot_dimension_numbers<[1], [0], [0], [1], [0, 0, 1, 1], [], []>} : vector<2x128xbf16>, vector<128x128xbf16>, vector<2x128xf32> -> vector<2x128xf32>
    %c7_154 = arith.constant 7 : index
    %c0_155 = arith.constant 0 : index
    %c0_156 = arith.constant 0 : index
    %216 = vector.load %arg5[%c7_154, %c0_155, %c0_156] : memref<9x1x128xf32, #tpu.memory_space<vmem>>, vector<1x1x128xf32>
    %217 = vector.shape_cast %216 : vector<1x1x128xf32> to vector<1x128xf32>
    %218 = vector.broadcast %217 : vector<1x128xf32> to vector<2x128xf32>
    %219 = arith.mulf %215, %218 : vector<2x128xf32>
    %c7_157 = arith.constant 7 : index
    %c0_158 = arith.constant 0 : index
    %c0_159 = arith.constant 0 : index
    %220 = vector.load %arg6[%c7_157, %c0_158, %c0_159] : memref<9x1x128xf32, #tpu.memory_space<vmem>>, vector<1x1x128xf32>
    %221 = vector.shape_cast %220 : vector<1x1x128xf32> to vector<1x128xf32>
    %222 = vector.broadcast %221 : vector<1x128xf32> to vector<2x128xf32>
    %223 = arith.addf %219, %222 : vector<2x128xf32>
    %cst_160 = arith.constant 0.000000e+00 : f32
    %224 = vector.broadcast %cst_160 : f32 to vector<2x128xf32>
    %225 = arith.maximumf %223, %224 : vector<2x128xf32>
    %c8 = arith.constant 8 : index
    %c0_161 = arith.constant 0 : index
    %c0_162 = arith.constant 0 : index
    %226 = vector.load %arg1[%c8, %c0_161, %c0_162] : memref<9x1x128xf32, #tpu.memory_space<vmem>>, vector<1x1x128xf32>
    %227 = vector.shape_cast %226 : vector<1x1x128xf32> to vector<1x128xf32>
    %228 = vector.broadcast %227 : vector<1x128xf32> to vector<2x128xf32>
    %229 = arith.mulf %225, %228 : vector<2x128xf32>
    %c8_163 = arith.constant 8 : index
    %c0_164 = arith.constant 0 : index
    %c0_165 = arith.constant 0 : index
    %230 = vector.load %arg2[%c8_163, %c0_164, %c0_165] : memref<9x1x128xf32, #tpu.memory_space<vmem>>, vector<1x1x128xf32>
    %231 = vector.shape_cast %230 : vector<1x1x128xf32> to vector<1x128xf32>
    %232 = vector.broadcast %231 : vector<1x128xf32> to vector<2x128xf32>
    %233 = arith.mulf %229, %232 : vector<2x128xf32>
    %c8_166 = arith.constant 8 : index
    %c0_167 = arith.constant 0 : index
    %c0_168 = arith.constant 0 : index
    %234 = vector.load %arg3[%c8_166, %c0_167, %c0_168] : memref<9x1x128xf32, #tpu.memory_space<vmem>>, vector<1x1x128xf32>
    %235 = vector.shape_cast %234 : vector<1x1x128xf32> to vector<1x128xf32>
    %236 = vector.broadcast %235 : vector<1x128xf32> to vector<2x128xf32>
    %237 = arith.addf %233, %236 : vector<2x128xf32>
    %cst_169 = arith.constant 0.000000e+00 : f32
    %238 = vector.broadcast %cst_169 : f32 to vector<2x128xf32>
    %239 = arith.maximumf %237, %238 : vector<2x128xf32>
    %240 = arith.truncf %239 : vector<2x128xf32> to vector<2x128xbf16>
    %c8_170 = arith.constant 8 : index
    %c0_171 = arith.constant 0 : index
    %c0_172 = arith.constant 0 : index
    %241 = vector.load %arg4[%c8_170, %c0_171, %c0_172] : memref<9x128x128xbf16, #tpu.memory_space<vmem>>, vector<1x128x128xbf16>
    %242 = vector.shape_cast %241 : vector<1x128x128xbf16> to vector<128x128xbf16>
    %cst_173 = arith.constant dense<0.000000e+00> : vector<2x128xf32>
    %243 = tpu.matmul %240, %242, %cst_173 {dimension_numbers = #tpu.dot_dimension_numbers<[1], [0], [0], [1], [0, 0, 1, 1], [], []>} : vector<2x128xbf16>, vector<128x128xbf16>, vector<2x128xf32> -> vector<2x128xf32>
    %c8_174 = arith.constant 8 : index
    %c0_175 = arith.constant 0 : index
    %c0_176 = arith.constant 0 : index
    %244 = vector.load %arg5[%c8_174, %c0_175, %c0_176] : memref<9x1x128xf32, #tpu.memory_space<vmem>>, vector<1x1x128xf32>
    %245 = vector.shape_cast %244 : vector<1x1x128xf32> to vector<1x128xf32>
    %246 = vector.broadcast %245 : vector<1x128xf32> to vector<2x128xf32>
    %247 = arith.mulf %243, %246 : vector<2x128xf32>
    %c8_177 = arith.constant 8 : index
    %c0_178 = arith.constant 0 : index
    %c0_179 = arith.constant 0 : index
    %248 = vector.load %arg6[%c8_177, %c0_178, %c0_179] : memref<9x1x128xf32, #tpu.memory_space<vmem>>, vector<1x1x128xf32>
    %249 = vector.shape_cast %248 : vector<1x1x128xf32> to vector<1x128xf32>
    %250 = vector.broadcast %249 : vector<1x128xf32> to vector<2x128xf32>
    %251 = arith.addf %247, %250 : vector<2x128xf32>
    %cst_180 = arith.constant 0.000000e+00 : f32
    %252 = vector.broadcast %cst_180 : f32 to vector<2x128xf32>
    %253 = arith.maximumf %251, %252 : vector<2x128xf32>
    %254 = arith.truncf %253 : vector<2x128xf32> to vector<2x128xbf16>
    %c0_181 = arith.constant 0 : index
    %c0_182 = arith.constant 0 : index
    %255 = vector.load %arg7[%c0_181, %c0_182] : memref<128x128xbf16, #tpu.memory_space<vmem>>, vector<128x128xbf16>
    %cst_183 = arith.constant dense<0.000000e+00> : vector<2x128xf32>
    %256 = tpu.matmul %254, %255, %cst_183 {dimension_numbers = #tpu.dot_dimension_numbers<[1], [0], [0], [1], [0, 0, 1, 1], [], []>} : vector<2x128xbf16>, vector<128x128xbf16>, vector<2x128xf32> -> vector<2x128xf32>
    %c0_184 = arith.constant 0 : index
    %c0_185 = arith.constant 0 : index
    %257 = vector.load %arg8[%c0_184, %c0_185] : memref<1x128xf32, #tpu.memory_space<vmem>>, vector<1x128xf32>
    %258 = vector.broadcast %257 : vector<1x128xf32> to vector<2x128xf32>
    %259 = arith.addf %256, %258 : vector<2x128xf32>
    %cst_186 = arith.constant dense<0xFF800000> : vector<2xf32>
    %260 = vector.multi_reduction <maximumf>, %259, %cst_186 [1] : vector<2x128xf32> to vector<2xf32>
    %261 = vector.shape_cast %260 : vector<2xf32> to vector<2x1xf32>
    %262 = vector.broadcast %261 : vector<2x1xf32> to vector<2x128xf32>
    %263 = arith.subf %259, %262 : vector<2x128xf32>
    %264 = math.exp %263 : vector<2x128xf32>
    %cst_187 = arith.constant dense<0.000000e+00> : vector<2xf32>
    %265 = vector.multi_reduction <add>, %264, %cst_187 [1] : vector<2x128xf32> to vector<2xf32>
    %266 = vector.shape_cast %265 : vector<2xf32> to vector<2x1xf32>
    %267 = tpu.reciprocal %266 {approx = true} : vector<2x1xf32> -> vector<2x1xf32>
    %268 = arith.mulf %266, %267 : vector<2x1xf32>
    %cst_188 = arith.constant 2.000000e+00 : f32
    %269 = vector.broadcast %cst_188 : f32 to vector<2x1xf32>
    %270 = arith.subf %269, %268 : vector<2x1xf32>
    %271 = arith.mulf %267, %270 : vector<2x1xf32>
    %272 = arith.mulf %266, %271 : vector<2x1xf32>
    %cst_189 = arith.constant 2.000000e+00 : f32
    %273 = vector.broadcast %cst_189 : f32 to vector<2x1xf32>
    %274 = arith.subf %273, %272 : vector<2x1xf32>
    %275 = arith.mulf %271, %274 : vector<2x1xf32>
    %276 = vector.broadcast %275 : vector<2x1xf32> to vector<2x128xf32>
    %277 = arith.mulf %264, %276 : vector<2x128xf32>
    %c0_190 = arith.constant 0 : index
    %c0_191 = arith.constant 0 : index
    %278 = vector.load %arg9[%c0_190, %c0_191] : memref<2x128xf32, #tpu.memory_space<vmem>>, vector<2x128xf32>
    tpu.vector_store %arg9[%c0_190, %c0_191], %277 {strides = array<i32>} : memref<2x128xf32, #tpu.memory_space<vmem>>, vector<2x128xf32>,
    return
  }
}

</mosaic_0001>

<llo_original>
// kernel: mobilenet_forward.6
$region0: #{mobilenet_forward.6}
  #allocation0 [shape = 'u32[]', space=smem, size = 0x4, offset = 0x4, fixed_abs, tag = 'smem constant byte address 0x4 - core index']
  #allocation1 [shape = 'u32[144,128]{1,0:T(1,128)}', space=vmem, size = 0x12000, scoped, tag = 'internal scratch']
  %s0 = inlined_call_operand.vmem [shape: bf16[1024,128], index: 0, kind: input, shape index: {}]
  %s1 = inlined_call_operand.vmem [shape: bf16[128,128], index: 1, kind: input, shape index: {}]
  %s2 = inlined_call_operand.vmem [shape: f32[1,128], index: 2, kind: input, shape index: {}]
  %s3 = inlined_call_operand.vmem [shape: f32[1,128], index: 3, kind: input, shape index: {}]
  %s4 = inlined_call_operand.vmem [shape: bf16[1024,128], index: 4, kind: output, shape index: {}]
  %s5 = sld [smem:[#allocation0]]
  $region49: #{mobilenet_forward.6} parent=0
    _
  %s7 = ssub.s32 1, %s5
  %s8 = scalar_select 0, %s7, %s5
  loop: start=0, step=1, limit=4
  $region2: #{mobilenet_forward.6} parent=0 // loop_pre_header
    _
  $region3: #{mobilenet_forward.6} parent=0 // loop_header
    %s10 = sphi 0, %s14
    %p11 = scmp.ge.s32.totalorder %s10, 4
    %s20 = sphi 0, %s22
    %s23 = sphi 0, %s20
    %s24 = sphi 0, %s23
    %s40 = sphi 0, %s24
    %s44 = sphi 0, %s44
    %s46 = sphi 0, %s44
    %s47 = sphi 0, %s46
    %s61 = sphi 0, %s47
    %s65 = sphi 0, %s65
    %s67 = sphi 0, %s65
    %s68 = sphi 0, %s67
    %s82 = sphi 0, %s68
    %s86 = sphi 0, %s86
    %s88 = sphi 0, %s86
    %s89 = sphi 0, %s88
    %s103 = sphi 0, %s89
    %s109 = sphi 0, %s111
    %s112 = sphi 0, %s109
    %s113 = sphi 0, %s112
    %s129 = sphi 0, %s113
  $region4: #{mobilenet_forward.6} parent=0 // loop_header_branch
    %13 = sbr.rel (%p11) target = $region8
  $region5: #{mobilenet_forward.6} parent=0 // loop_body
    %s15 = ssub.s32 %s10, 1
    %s16 = ssub.s32 %s10, 2
    %s17 = sadd.s32 %s10, 1
    %s18 = ssub.s32 %s10, %s17
    %p19 = scmp.eq.s32.totalorder %s18, 0
    %s21 = sadd.s32 %s20, 1
    %s22 = scalar_select %p19, %s20, %s21
    %p25 = pneg %p19
    %p26 = scmp.eq.s32.totalorder %s10, 1
    %p27 = por %p25, %p26
    %p28 = scmp.ne.s32.totalorder %s20, %s23
    %p29 = scmp.eq.s32.totalorder %s10, 0
    %p30 = por %p28, %p29
    %p31 = scmp.ne.s32.totalorder %s20, %s23
    %p32 = scmp.eq.s32.totalorder %s15, 1
    %p33 = por %p31, %p32
    %p34 = scmp.ne.s32.totalorder %s23, %s24
    %p35 = scmp.eq.s32.totalorder %s15, 0
    %p36 = por %p34, %p35
    %p37 = scmp.ne.s32.totalorder %s23, %s24
    %p38 = scmp.eq.s32.totalorder %s16, 1
    %p39 = por %p37, %p38
    %p41 = scmp.ne.s32.totalorder %s24, %s40
    %p42 = scmp.eq.s32.totalorder %s16, 0
    %p43 = por %p41, %p42
    %s45 = sadd.s32 %s44, 1
    %p48 = scmp.eq.s32.totalorder %s10, 1
    %p49 = scmp.ne.s32.totalorder %s44, %s46
    %p50 = scmp.eq.s32.totalorder %s10, 0
    %p51 = por %p49, %p50
    %p52 = scmp.ne.s32.totalorder %s44, %s46
    %p53 = scmp.eq.s32.totalorder %s15, 1
    %p54 = por %p52, %p53
    %p55 = scmp.ne.s32.totalorder %s46, %s47
    %p56 = scmp.eq.s32.totalorder %s15, 0
    %p57 = por %p55, %p56
    %p58 = scmp.ne.s32.totalorder %s46, %s47
    %p59 = scmp.eq.s32.totalorder %s16, 1
    %p60 = por %p58, %p59
    %p62 = scmp.ne.s32.totalorder %s47, %s61
    %p63 = scmp.eq.s32.totalorder %s16, 0
    %p64 = por %p62, %p63
    %s66 = sadd.s32 %s65, 1
    %p69 = scmp.eq.s32.totalorder %s10, 1
    %p70 = scmp.ne.s32.totalorder %s65, %s67
    %p71 = scmp.eq.s32.totalorder %s10, 0
    %p72 = por %p70, %p71
    %p73 = scmp.ne.s32.totalorder %s65, %s67
    %p74 = scmp.eq.s32.totalorder %s15, 1
    %p75 = por %p73, %p74
    %p76 = scmp.ne.s32.totalorder %s67, %s68
    %p77 = scmp.eq.s32.totalorder %s15, 0
    %p78 = por %p76, %p77
    %p79 = scmp.ne.s32.totalorder %s67, %s68
    %p80 = scmp.eq.s32.totalorder %s16, 1
    %p81 = por %p79, %p80
    %p83 = scmp.ne.s32.totalorder %s68, %s82
    %p84 = scmp.eq.s32.totalorder %s16, 0
    %p85 = por %p83, %p84
    %s87 = sadd.s32 %s86, 1
    %p90 = scmp.eq.s32.totalorder %s10, 1
    %p91 = scmp.ne.s32.totalorder %s86, %s88
    %p92 = scmp.eq.s32.totalorder %s10, 0
    %p93 = por %p91, %p92
    %p94 = scmp.ne.s32.totalorder %s86, %s88
    %p95 = scmp.eq.s32.totalorder %s15, 1
    %p96 = por %p94, %p95
    %p97 = scmp.ne.s32.totalorder %s88, %s89
    %p98 = scmp.eq.s32.totalorder %s15, 0
    %p99 = por %p97, %p98
    %p100 = scmp.ne.s32.totalorder %s88, %s89
    %p101 = scmp.eq.s32.totalorder %s16, 1
    %p102 = por %p100, %p101
    %p104 = scmp.ne.s32.totalorder %s89, %s103
    %p105 = scmp.eq.s32.totalorder %s16, 0
    %p106 = por %p104, %p105
    %s107 = ssub.s32 %s10, %s17
    %p108 = scmp.eq.s32.totalorder %s107, 0
    %s110 = sadd.s32 %s109, 1
    %s111 = scalar_select %p108, %s109, %s110
    %p114 = pneg %p108
    %p115 = scmp.eq.s32.totalorder %s10, 1
    %p116 = por %p114, %p115
    %p117 = scmp.ne.s32.totalorder %s109, %s112
    %p118 = scmp.eq.s32.totalorder %s10, 0
    %p119 = por %p117, %p118
    %p120 = scmp.ne.s32.totalorder %s109, %s112
    %p121 = scmp.eq.s32.totalorder %s15, 1
    %p122 = por %p120, %p121
    %p123 = scmp.ne.s32.totalorder %s112, %s113
    %p124 = scmp.eq.s32.totalorder %s15, 0
    %p125 = por %p123, %p124
    %p126 = scmp.ne.s32.totalorder %s112, %s113
    %p127 = scmp.eq.s32.totalorder %s16, 1
    %p128 = por %p126, %p127
    %p130 = scmp.ne.s32.totalorder %s113, %s129
    %p131 = scmp.eq.s32.totalorder %s16, 0
    %p132 = por %p130, %p131
    %p133 = scmp.le.s32.totalorder 1, %s10
    %p134 = scmp.lt.s32.totalorder %s10, 3
    %p135 = pnand %p133, %p134
    %p136 = pneg %p135
    // Predicated region
    $region9: #{mobilenet_forward.6} parent=5 // pred_check
      _
    $region10: #{mobilenet_forward.6} parent=5 // pred_check_branch
      %138 = sbr.rel (%p135) target = $region12
    $region11: #{mobilenet_forward.6} parent=5 // pred_region
      %s139 = ssub.s32 %s10, 1
      // Predicated region
      $region13: #{mobilenet_forward.6} parent=11 // pred_check
        %p140 = pneg %p57
      $region14: #{mobilenet_forward.6} parent=11 // pred_check_branch
        %142 = sbr.rel (%p140) target = $region16
      $region15: #{mobilenet_forward.6} parent=11 // pred_region
        _
      $region16: #{mobilenet_forward.6} parent=11 // pred_fallthru
        _
      // Predicated region
      $region17: #{mobilenet_forward.6} parent=11 // pred_check
        %p143 = pneg %p78
      $region18: #{mobilenet_forward.6} parent=11 // pred_check_branch
        %145 = sbr.rel (%p143) target = $region20
      $region19: #{mobilenet_forward.6} parent=11 // pred_region
        _
      $region20: #{mobilenet_forward.6} parent=11 // pred_fallthru
        _
      // Predicated region
      $region21: #{mobilenet_forward.6} parent=11 // pred_check
        %p146 = pneg %p99
      $region22: #{mobilenet_forward.6} parent=11 // pred_check_branch
        %148 = sbr.rel (%p146) target = $region24
      $region23: #{mobilenet_forward.6} parent=11 // pred_region
        _
      $region24: #{mobilenet_forward.6} parent=11 // pred_fallthru
        _
    $region12: #{mobilenet_forward.6} parent=5 // pred_fallthru
      _
    %p149 = scmp.lt.s32.totalorder %s10, 2
    // Predicated region
    $region25: #{mobilenet_forward.6} parent=5 // pred_check
      %p150 = pneg %p149
    $region26: #{mobilenet_forward.6} parent=5 // pred_check_branch
      %152 = sbr.rel (%p150) target = $region28
    $region27: #{mobilenet_forward.6} parent=5 // pred_region
      // Predicated region
      $region29: #{mobilenet_forward.6} parent=27 // pred_check
        %p153 = pneg %p30
      $region30: #{mobilenet_forward.6} parent=27 // pred_check_branch
        %155 = sbr.rel (%p153) target = $region32
      $region31: #{mobilenet_forward.6} parent=27 // pred_region
        %s156 = smul.u32 64, %s10
        %p157 = scmp.lt.s32.totalorder %s156, 127
        %s158 = scalar_select %p157, %s156, 127
        %s159 = smul.addr %s158, 4
        %s160 = scalar_lea.vmem %s0, %s159
        %s161 = smul.u32 64, %s10
      $region32: #{mobilenet_forward.6} parent=27 // pred_fallthru
        _
    $region28: #{mobilenet_forward.6} parent=5 // pred_fallthru
      _
    %p162 = scmp.le.s32.totalorder 1, %s10
    %p163 = scmp.lt.s32.totalorder %s10, 3
    %p164 = pnand %p162, %p163
    %p165 = pneg %p164
    // Predicated region
    $region33: #{mobilenet_forward.6} parent=5 // pred_check
      _
    $region34: #{mobilenet_forward.6} parent=5 // pred_check_branch
      %167 = sbr.rel (%p164) target = $region36
    $region35: #{mobilenet_forward.6} parent=5 // pred_region
      %s168 = ssub.s32 %s10, 1
      %s169 = smul.u32 64, %s15
      %p170 = scmp.lt.s32.totalorder %s169, 127
      %s171 = scalar_select %p170, %s169, 127
      %s172 = smul.addr %s171, 4
      %s173 = scalar_lea.vmem %s0, %s172
      %p174 = pneg %p36
      %p175 = pneg %p33
      %p176 = pneg %p57
      %p177 = pneg %p54
      %p178 = pneg %p78
      %p179 = pneg %p75
      %p180 = pneg %p99
      %p181 = pneg %p96
      %p182 = pneg %p125
      %p183 = pneg %p122
      %s184 = smul.u32 64, %s15
      %p185 = scmp.lt.s32.totalorder %s184, 127
      %s186 = scalar_select %p185, %s184, 127
      %s187 = smul.addr %s186, 4
      %s188 = scalar_lea.vmem %s4, %s187
      %s189 = smul.u32 64, %s15
      %p190 = scmp.lt.s32.totalorder %s189, 127
      %s191 = scalar_select %p190, %s189, 127
      %s192 = smul.addr %s191, 4
      %s193 = scalar_lea.vmem %s0, %s192
      %s194 = smul.u32 64, %s15
      %s195 = smul.u32 64, %s15
      %p196 = scmp.lt.s32.totalorder %s195, 127
      %s197 = scalar_select %p196, %s195, 127
      %s198 = smul.addr %s197, 4
      %s199 = scalar_lea.vmem %s4, %s198
      %s200 = smul.u32 64, %s15
      %v202 = vld [vmem:[%s193] sm:$0xf]
      %v203 = vld [vmem:[%s193 + $0x4] sm:$0xf]
      %v204 = vld [vmem:[%s193 + $0x8] sm:$0xf]
      %v205 = vld [vmem:[%s193 + $0xc] sm:$0xf]
      %v206 = vld [vmem:[%s193 + $0x10] sm:$0xf]
      %v207 = vld [vmem:[%s193 + $0x14] sm:$0xf]
      %v208 = vld [vmem:[%s193 + $0x18] sm:$0xf]
      %v209 = vld [vmem:[%s193 + $0x1c] sm:$0xf]
      %v210 = vld [vmem:[%s193 + $0x20] sm:$0xf]
      %v211 = vld [vmem:[%s193 + $0x24] sm:$0xf]
      %v212 = vld [vmem:[%s193 + $0x28] sm:$0xf]
      %v213 = vld [vmem:[%s193 + $0x2c] sm:$0xf]
      %v214 = vld [vmem:[%s193 + $0x30] sm:$0xf]
      %v215 = vld [vmem:[%s193 + $0x34] sm:$0xf]
      %v216 = vld [vmem:[%s193 + $0x38] sm:$0xf]
      %v217 = vld [vmem:[%s193 + $0x3c] sm:$0xf]
      %v218 = vld [vmem:[%s193 + $0x40] sm:$0xf]
      %v219 = vld [vmem:[%s193 + $0x44] sm:$0xf]
      %v220 = vld [vmem:[%s193 + $0x48] sm:$0xf]
      %v221 = vld [vmem:[%s193 + $0x4c] sm:$0xf]
      %v222 = vld [vmem:[%s193 + $0x50] sm:$0xf]
      %v223 = vld [vmem:[%s193 + $0x54] sm:$0xf]
      %v224 = vld [vmem:[%s193 + $0x58] sm:$0xf]
      %v225 = vld [vmem:[%s193 + $0x5c] sm:$0xf]
      %v226 = vld [vmem:[%s193 + $0x60] sm:$0xf]
      %v227 = vld [vmem:[%s193 + $0x64] sm:$0xf]
      %v228 = vld [vmem:[%s193 + $0x68] sm:$0xf]
      %v229 = vld [vmem:[%s193 + $0x6c] sm:$0xf]
      %v230 = vld [vmem:[%s193 + $0x70] sm:$0xf]
      %v231 = vld [vmem:[%s193 + $0x74] sm:$0xf]
      %v232 = vld [vmem:[%s193 + $0x78] sm:$0xf]
      %v233 = vld [vmem:[%s193 + $0x7c] sm:$0xf]
      %v234 = vld [vmem:[%s193 + $0x80] sm:$0xf]
      %v235 = vld [vmem:[%s193 + $0x84] sm:$0xf]
      %v236 = vld [vmem:[%s193 + $0x88] sm:$0xf]
      %v237 = vld [vmem:[%s193 + $0x8c] sm:$0xf]
      %v238 = vld [vmem:[%s193 + $0x90] sm:$0xf]
      %v239 = vld [vmem:[%s193 + $0x94] sm:$0xf]
      %v240 = vld [vmem:[%s193 + $0x98] sm:$0xf]
      %v241 = vld [vmem:[%s193 + $0x9c] sm:$0xf]
      %v242 = vld [vmem:[%s193 + $0xa0] sm:$0xf]
      %v243 = vld [vmem:[%s193 + $0xa4] sm:$0xf]
      %v244 = vld [vmem:[%s193 + $0xa8] sm:$0xf]
      %v245 = vld [vmem:[%s193 + $0xac] sm:$0xf]
      %v246 = vld [vmem:[%s193 + $0xb0] sm:$0xf]
      %v247 = vld [vmem:[%s193 + $0xb4] sm:$0xf]
      %v248 = vld [vmem:[%s193 + $0xb8] sm:$0xf]
      %v249 = vld [vmem:[%s193 + $0xbc] sm:$0xf]
      %v250 = vld [vmem:[%s193 + $0xc0] sm:$0xf]
      %v251 = vld [vmem:[%s193 + $0xc4] sm:$0xf]
      %v252 = vld [vmem:[%s193 + $0xc8] sm:$0xf]
      %v253 = vld [vmem:[%s193 + $0xcc] sm:$0xf]
      %v254 = vld [vmem:[%s193 + $0xd0] sm:$0xf]
      %v255 = vld [vmem:[%s193 + $0xd4] sm:$0xf]
      %v256 = vld [vmem:[%s193 + $0xd8] sm:$0xf]
      %v257 = vld [vmem:[%s193 + $0xdc] sm:$0xf]
      %v258 = vld [vmem:[%s193 + $0xe0] sm:$0xf]
      %v259 = vld [vmem:[%s193 + $0xe4] sm:$0xf]
      %v260 = vld [vmem:[%s193 + $0xe8] sm:$0xf]
      %v261 = vld [vmem:[%s193 + $0xec] sm:$0xf]
      %v262 = vld [vmem:[%s193 + $0xf0] sm:$0xf]
      %v263 = vld [vmem:[%s193 + $0xf4] sm:$0xf]
      %v264 = vld [vmem:[%s193 + $0xf8] sm:$0xf]
      %v265 = vld [vmem:[%s193 + $0xfc] sm:$0xf]
      %v266 = vld [vmem:[%s1] sm:$0xf]
      %v267 = vld [vmem:[%s1 + $0x4] sm:$0xf]
      %v268 = vld [vmem:[%s1 + $0x8] sm:$0xf]
      %v269 = vld [vmem:[%s1 + $0xc] sm:$0xf]
      %v270 = vld [vmem:[%s1 + $0x10] sm:$0xf]
      %v271 = vld [vmem:[%s1 + $0x14] sm:$0xf]
      %v272 = vld [vmem:[%s1 + $0x18] sm:$0xf]
      %v273 = vld [vmem:[%s1 + $0x1c] sm:$0xf]
      %v274 = vld [vmem:[%s1 + $0x20] sm:$0xf]
      %v275 = vld [vmem:[%s1 + $0x24] sm:$0xf]
      %v276 = vld [vmem:[%s1 + $0x28] sm:$0xf]
      %v277 = vld [vmem:[%s1 + $0x2c] sm:$0xf]
      %v278 = vld [vmem:[%s1 + $0x30] sm:$0xf]
      %v279 = vld [vmem:[%s1 + $0x34] sm:$0xf]
      %v280 = vld [vmem:[%s1 + $0x38] sm:$0xf]
      %v281 = vld [vmem:[%s1 + $0x3c] sm:$0xf]
      %v346 = vunpack.c.l.b16 %v202
      %v347 = vunpack.c.l.b16 %v203
      %v348 = vunpack.c.l.b16 %v204
      %v349 = vunpack.c.l.b16 %v205
      %v350 = vunpack.c.l.b16 %v206
      %v351 = vunpack.c.l.b16 %v207
      %v352 = vunpack.c.l.b16 %v208
      %v353 = vunpack.c.l.b16 %v209
      %v354 = vunpack.c.l.b16 %v210
      %v355 = vunpack.c.l.b16 %v211
      %v356 = vunpack.c.l.b16 %v212
      %v357 = vunpack.c.l.b16 %v213
      %v358 = vunpack.c.l.b16 %v214
      %v359 = vunpack.c.l.b16 %v215
      %v360 = vunpack.c.l.b16 %v216
      %v361 = vunpack.c.l.b16 %v217
      %v362 = vunpack.c.l.b16 %v218
      %v363 = vunpack.c.l.b16 %v219
      %v364 = vunpack.c.l.b16 %v220
      %v365 = vunpack.c.l.b16 %v221
      %v366 = vunpack.c.l.b16 %v222
      %v367 = vunpack.c.l.b16 %v223
      %v368 = vunpack.c.l.b16 %v224
      %v369 = vunpack.c.l.b16 %v225
      %v370 = vunpack.c.l.b16 %v226
      %v371 = vunpack.c.l.b16 %v227
      %v372 = vunpack.c.l.b16 %v228
      %v373 = vunpack.c.l.b16 %v229
      %v374 = vunpack.c.l.b16 %v230
      %v375 = vunpack.c.l.b16 %v231
      %v376 = vunpack.c.l.b16 %v232
      %v377 = vunpack.c.l.b16 %v233
      %v378 = vunpack.c.l.b16 %v234
      %v379 = vunpack.c.l.b16 %v235
      %v380 = vunpack.c.l.b16 %v236
      %v381 = vunpack.c.l.b16 %v237
      %v382 = vunpack.c.l.b16 %v238
      %v383 = vunpack.c.l.b16 %v239
      %v384 = vunpack.c.l.b16 %v240
      %v385 = vunpack.c.l.b16 %v241
      %v386 = vunpack.c.l.b16 %v242
      %v387 = vunpack.c.l.b16 %v243
      %v388 = vunpack.c.l.b16 %v244
      %v389 = vunpack.c.l.b16 %v245
      %v390 = vunpack.c.l.b16 %v246
      %v391 = vunpack.c.l.b16 %v247
      %v392 = vunpack.c.l.b16 %v248
      %v393 = vunpack.c.l.b16 %v249
      %v394 = vunpack.c.l.b16 %v250
      %v395 = vunpack.c.l.b16 %v251
      %v396 = vunpack.c.l.b16 %v252
      %v397 = vunpack.c.l.b16 %v253
      %v398 = vunpack.c.l.b16 %v254
      %v399 = vunpack.c.l.b16 %v255
      %v400 = vunpack.c.l.b16 %v256
      %v401 = vunpack.c.l.b16 %v257
      %v402 = vunpack.c.l.b16 %v258
      %v403 = vunpack.c.l.b16 %v259
      %v404 = vunpack.c.l.b16 %v260
      %v405 = vunpack.c.l.b16 %v261
      %v406 = vunpack.c.l.b16 %v262
      %v407 = vunpack.c.l.b16 %v263
      %v408 = vunpack.c.l.b16 %v264
      %v409 = vunpack.c.l.b16 %v265
      %v410 = vpack.c.b16 %v347, %v346
      %v411 = vpack.c.b16 %v349, %v348
      %v412 = vpack.c.b16 %v351, %v350
      %v413 = vpack.c.b16 %v353, %v352
      %v414 = vpack.c.b16 %v355, %v354
      %v415 = vpack.c.b16 %v357, %v356
      %v416 = vpack.c.b16 %v359, %v358
      %v417 = vpack.c.b16 %v361, %v360
      %v418 = vpack.c.b16 %v363, %v362
      %v419 = vpack.c.b16 %v365, %v364
      %v420 = vpack.c.b16 %v367, %v366
      %v421 = vpack.c.b16 %v369, %v368
      %v422 = vpack.c.b16 %v371, %v370
      %v423 = vpack.c.b16 %v373, %v372
      %v424 = vpack.c.b16 %v375, %v374
      %v425 = vpack.c.b16 %v377, %v376
      %v426 = vpack.c.b16 %v379, %v378
      %v427 = vpack.c.b16 %v381, %v380
      %v428 = vpack.c.b16 %v383, %v382
      %v429 = vpack.c.b16 %v385, %v384
      %v430 = vpack.c.b16 %v387, %v386
      %v431 = vpack.c.b16 %v389, %v388
      %v432 = vpack.c.b16 %v391, %v390
      %v433 = vpack.c.b16 %v393, %v392
      %v434 = vpack.c.b16 %v395, %v394
      %v435 = vpack.c.b16 %v397, %v396
      %v436 = vpack.c.b16 %v399, %v398
      %v437 = vpack.c.b16 %v401, %v400
      %v438 = vpack.c.b16 %v403, %v402
      %v439 = vpack.c.b16 %v405, %v404
      %v440 = vpack.c.b16 %v407, %v406
      %v441 = vpack.c.b16 %v409, %v408
      %v490 = vunpack.c.l.b16 %v266
      %v491 = vunpack.c.l.b16 %v267
      %v492 = vunpack.c.l.b16 %v268
      %v493 = vunpack.c.l.b16 %v269
      %v494 = vunpack.c.l.b16 %v270
      %v495 = vunpack.c.l.b16 %v271
      %v496 = vunpack.c.l.b16 %v272
      %v497 = vunpack.c.l.b16 %v273
      %v498 = vunpack.c.l.b16 %v274
      %v499 = vunpack.c.l.b16 %v275
      %v500 = vunpack.c.l.b16 %v276
      %v501 = vunpack.c.l.b16 %v277
      %v502 = vunpack.c.l.b16 %v278
      %v503 = vunpack.c.l.b16 %v279
      %v504 = vunpack.c.l.b16 %v280
      %v505 = vunpack.c.l.b16 %v281
      %v506 = vpack.c.b16 %v491, %v490
      %v507 = vpack.c.b16 %v493, %v492
      %v508 = vpack.c.b16 %v495, %v494
      %v509 = vpack.c.b16 %v497, %v496
      %v510 = vpack.c.b16 %v499, %v498
      %v511 = vpack.c.b16 %v501, %v500
      %v512 = vpack.c.b16 %v503, %v502
      %v513 = vpack.c.b16 %v505, %v504
      %522 = vmatprep.subr.bf16.mxu0 0
      %523 = vmatpush1.bf16.msra.mxu0 %v506
      %524 = vmatprep.subr.bf16.mxu0 0
      %525 = vmatpush1.bf16.msra.mxu0 %v507
      %526 = vmatprep.subr.bf16.mxu0 0
      %527 = vmatpush1.bf16.msra.mxu0 %v508
      %528 = vmatprep.subr.bf16.mxu0 0
      %529 = vmatpush1.bf16.msra.mxu0 %v509
      %530 = vmatprep.subr.bf16.mxu0 0
      %531 = vmatpush1.bf16.msra.mxu0 %v510
      %532 = vmatprep.subr.bf16.mxu0 0
      %533 = vmatpush1.bf16.msra.mxu0 %v511
      %534 = vmatprep.subr.bf16.mxu0 0
      %535 = vmatpush1.bf16.msra.mxu0 %v512
      %536 = vmatprep.subr.bf16.mxu0 0
      %537 = vmatpush1.bf16.msra.mxu0 %v513
      %538 = vmatprep.subr.bf16.mxu0 0
      %539 = vmatpush1.bf16.msra.mxu0 0
      %540 = vmatprep.subr.bf16.mxu0 0
      %541 = vmatpush1.bf16.msra.mxu0 0
      %542 = vmatprep.subr.bf16.mxu0 0
      %543 = vmatpush1.bf16.msra.mxu0 0
      %544 = vmatprep.subr.bf16.mxu0 0
      %545 = vmatpush1.bf16.msra.mxu0 0
      %546 = vmatprep.subr.bf16.mxu0 0
      %547 = vmatpush1.bf16.msra.mxu0 0
      %548 = vmatprep.subr.bf16.mxu0 0
      %549 = vmatpush1.bf16.msra.mxu0 0
      %550 = vmatprep.subr.bf16.mxu0 0
      %551 = vmatpush1.bf16.msra.mxu0 0
      %552 = vmatprep.subr.bf16.mxu0 0
      %553 = vmatpush1.bf16.msra.mxu0 0
      %554 = vmatprep.mubr.bf16.mxu0 0
      %555 = vmatmul.mubr.bf16.gmra.mrb[0].mxu0 %v410
      %v556 = vpop.f32.mrb[0].mxu0
      %v557 = vadd.f32 0.0, %v556
      %v558 = vpop.f32.mrb[0].mxu0
      %v559 = vpop.f32.mrb[0].mxu0
      %v560 = vadd.f32 0.0, %v559
      %v561 = vpop.f32.mrb[0].mxu0
      %562 = vmatprep.mubr.bf16.mxu0 0
      %563 = vmatmul.mubr.bf16.gmra.mrb[0].mxu0 %v411
      %v564 = vpop.f32.mrb[0].mxu0
      %v565 = vadd.f32 0.0, %v564
      %v566 = vpop.f32.mrb[0].mxu0
      %v567 = vpop.f32.mrb[0].mxu0
      %v568 = vadd.f32 0.0, %v567
      %v569 = vpop.f32.mrb[0].mxu0
      %570 = vmatprep.mubr.bf16.mxu0 0
      %571 = vmatmul.mubr.bf16.gmra.mrb[0].mxu0 %v412
      %v572 = vpop.f32.mrb[0].mxu0
      %v573 = vadd.f32 0.0, %v572
      %v574 = vpop.f32.mrb[0].mxu0
      %v575 = vpop.f32.mrb[0].mxu0
      %v576 = vadd.f32 0.0, %v575
      %v577 = vpop.f32.mrb[0].mxu0
      %578 = vmatprep.mubr.bf16.mxu0 0
      %579 = vmatmul.mubr.bf16.gmra.mrb[0].mxu0 %v413
      %v580 = vpop.f32.mrb[0].mxu0
      %v581 = vadd.f32 0.0, %v580
      %v582 = vpop.f32.mrb[0].mxu0
      %v583 = vpop.f32.mrb[0].mxu0
      %v584 = vadd.f32 0.0, %v583
      %v585 = vpop.f32.mrb[0].mxu0
      %586 = vmatprep.mubr.bf16.mxu0 0
      %587 = vmatmul.mubr.bf16.gmra.mrb[0].mxu0 %v414
      %v588 = vpop.f32.mrb[0].mxu0
      %v589 = vadd.f32 0.0, %v588
      %v590 = vpop.f32.mrb[0].mxu0
      %v591 = vpop.f32.mrb[0].mxu0
      %v592 = vadd.f32 0.0, %v591
      %v593 = vpop.f32.mrb[0].mxu0
      %594 = vmatprep.mubr.bf16.mxu0 0
      %595 = vmatmul.mubr.bf16.gmra.mrb[0].mxu0 %v415
      %v596 = vpop.f32.mrb[0].mxu0
      %v597 = vadd.f32 0.0, %v596
      %v598 = vpop.f32.mrb[0].mxu0
      %v599 = vpop.f32.mrb[0].mxu0
      %v600 = vadd.f32 0.0, %v599
      %v601 = vpop.f32.mrb[0].mxu0
      %602 = vmatprep.mubr.bf16.mxu0 0
      %603 = vmatmul.mubr.bf16.gmra.mrb[0].mxu0 %v416
      %v604 = vpop.f32.mrb[0].mxu0
      %v605 = vadd.f32 0.0, %v604
      %v606 = vpop.f32.mrb[0].mxu0
      %v607 = vpop.f32.mrb[0].mxu0
      %v608 = vadd.f32 0.0, %v607
      %v609 = vpop.f32.mrb[0].mxu0
      %610 = vmatprep.mubr.bf16.mxu0 0
      %611 = vmatmul.mubr.bf16.gmra.mrb[0].mxu0 %v417
      %v612 = vpop.f32.mrb[0].mxu0
      %v613 = vadd.f32 0.0, %v612
      %v614 = vpop.f32.mrb[0].mxu0
      %v615 = vpop.f32.mrb[0].mxu0
      %v616 = vadd.f32 0.0, %v615
      %v617 = vpop.f32.mrb[0].mxu0
      %618 = vmatprep.mubr.bf16.mxu0 0
      %619 = vmatmul.mubr.bf16.gmra.mrb[0].mxu0 %v418
      %v620 = vpop.f32.mrb[0].mxu0
      %v621 = vadd.f32 0.0, %v620
      %v622 = vpop.f32.mrb[0].mxu0
      %v623 = vpop.f32.mrb[0].mxu0
      %v624 = vadd.f32 0.0, %v623
      %v625 = vpop.f32.mrb[0].mxu0
      %626 = vmatprep.mubr.bf16.mxu0 0
      %627 = vmatmul.mubr.bf16.gmra.mrb[0].mxu0 %v419
      %v628 = vpop.f32.mrb[0].mxu0
      %v629 = vadd.f32 0.0, %v628
      %v630 = vpop.f32.mrb[0].mxu0
      %v631 = vpop.f32.mrb[0].mxu0
      %v632 = vadd.f32 0.0, %v631
      %v633 = vpop.f32.mrb[0].mxu0
      %634 = vmatprep.mubr.bf16.mxu0 0
      %635 = vmatmul.mubr.bf16.gmra.mrb[0].mxu0 %v420
      %v636 = vpop.f32.mrb[0].mxu0
      %v637 = vadd.f32 0.0, %v636
      %v638 = vpop.f32.mrb[0].mxu0
      %v639 = vpop.f32.mrb[0].mxu0
      %v640 = vadd.f32 0.0, %v639
      %v641 = vpop.f32.mrb[0].mxu0
      %642 = vmatprep.mubr.bf16.mxu0 0
      %643 = vmatmul.mubr.bf16.gmra.mrb[0].mxu0 %v421
      %v644 = vpop.f32.mrb[0].mxu0
      %v645 = vadd.f32 0.0, %v644
      %v646 = vpop.f32.mrb[0].mxu0
      %v647 = vpop.f32.mrb[0].mxu0
      %v648 = vadd.f32 0.0, %v647
      %v649 = vpop.f32.mrb[0].mxu0
      %650 = vmatprep.mubr.bf16.mxu0 0
      %651 = vmatmul.mubr.bf16.gmra.mrb[0].mxu0 %v422
      %v652 = vpop.f32.mrb[0].mxu0
      %v653 = vadd.f32 0.0, %v652
      %v654 = vpop.f32.mrb[0].mxu0
      %v655 = vpop.f32.mrb[0].mxu0
      %v656 = vadd.f32 0.0, %v655
      %v657 = vpop.f32.mrb[0].mxu0
      %658 = vmatprep.mubr.bf16.mxu0 0
      %659 = vmatmul.mubr.bf16.gmra.mrb[0].mxu0 %v423
      %v660 = vpop.f32.mrb[0].mxu0
      %v661 = vadd.f32 0.0, %v660
      %v662 = vpop.f32.mrb[0].mxu0
      %v663 = vpop.f32.mrb[0].mxu0
      %v664 = vadd.f32 0.0, %v663
      %v665 = vpop.f32.mrb[0].mxu0
      %666 = vmatprep.mubr.bf16.mxu0 0
      %667 = vmatmul.mubr.bf16.gmra.mrb[0].mxu0 %v424
      %v668 = vpop.f32.mrb[0].mxu0
      %v669 = vadd.f32 0.0, %v668
      %v670 = vpop.f32.mrb[0].mxu0
      %v671 = vpop.f32.mrb[0].mxu0
      %v672 = vadd.f32 0.0, %v671
      %v673 = vpop.f32.mrb[0].mxu0
      %674 = vmatprep.mubr.bf16.mxu0 0
      %675 = vmatmul.mubr.bf16.gmra.mrb[0].mxu0 %v425
      %v676 = vpop.f32.mrb[0].mxu0
      %v677 = vadd.f32 0.0, %v676
      %v678 = vpop.f32.mrb[0].mxu0
      %v679 = vpop.f32.mrb[0].mxu0
      %v680 = vadd.f32 0.0, %v679
      %v681 = vpop.f32.mrb[0].mxu0
      %682 = vmatprep.mubr.bf16.mxu0 0
      %683 = vmatmul.mubr.bf16.gmra.mrb[0].mxu0 %v426
      %v684 = vpop.f32.mrb[0].mxu0
      %v685 = vadd.f32 0.0, %v684
      %v686 = vpop.f32.mrb[0].mxu0
      %v687 = vpop.f32.mrb[0].mxu0
      %v688 = vadd.f32 0.0, %v687
      %v689 = vpop.f32.mrb[0].mxu0
      %690 = vmatprep.mubr.bf16.mxu0 0
      %691 = vmatmul.mubr.bf16.gmra.mrb[0].mxu0 %v427
      %v692 = vpop.f32.mrb[0].mxu0
      %v693 = vadd.f32 0.0, %v692
      %v694 = vpop.f32.mrb[0].mxu0
      %v695 = vpop.f32.mrb[0].mxu0
      %v696 = vadd.f32 0.0, %v695
      %v697 = vpop.f32.mrb[0].mxu0
      %698 = vmatprep.mubr.bf16.mxu0 0
      %699 = vmatmul.mubr.bf16.gmra.mrb[0].mxu0 %v428
      %v700 = vpop.f32.mrb[0].mxu0
      %v701 = vadd.f32 0.0, %v700
      %v702 = vpop.f32.mrb[0].mxu0
      %v703 = vpop.f32.mrb[0].mxu0
      %v704 = vadd.f32 0.0, %v703
      %v705 = vpop.f32.mrb[0].mxu0
      %706 = vmatprep.mubr.bf16.mxu0 0
      %707 = vmatmul.mubr.bf16.gmra.mrb[0].mxu0 %v429
      %v708 = vpop.f32.mrb[0].mxu0
      %v709 = vadd.f32 0.0, %v708
      %v710 = vpop.f32.mrb[0].mxu0
      %v711 = vpop.f32.mrb[0].mxu0
      %v712 = vadd.f32 0.0, %v711
      %v713 = vpop.f32.mrb[0].mxu0
      %714 = vmatprep.mubr.bf16.mxu0 0
      %715 = vmatmul.mubr.bf16.gmra.mrb[0].mxu0 %v430
      %v716 = vpop.f32.mrb[0].mxu0
      %v717 = vadd.f32 0.0, %v716
      %v718 = vpop.f32.mrb[0].mxu0
      %v719 = vpop.f32.mrb[0].mxu0
      %v720 = vadd.f32 0.0, %v719
      %v721 = vpop.f32.mrb[0].mxu0
      %722 = vmatprep.mubr.bf16.mxu0 0
      %723 = vmatmul.mubr.bf16.gmra.mrb[0].mxu0 %v431
      %v724 = vpop.f32.mrb[0].mxu0
      %v725 = vadd.f32 0.0, %v724
      %v726 = vpop.f32.mrb[0].mxu0
      %v727 = vpop.f32.mrb[0].mxu0
      %v728 = vadd.f32 0.0, %v727
      %v729 = vpop.f32.mrb[0].mxu0
      %730 = vmatprep.mubr.bf16.mxu0 0
      %731 = vmatmul.mubr.bf16.gmra.mrb[0].mxu0 %v432
      %v732 = vpop.f32.mrb[0].mxu0
      %v733 = vadd.f32 0.0, %v732
      %v734 = vpop.f32.mrb[0].mxu0
      %v735 = vpop.f32.mrb[0].mxu0
      %v736 = vadd.f32 0.0, %v735
      %v737 = vpop.f32.mrb[0].mxu0
      %738 = vmatprep.mubr.bf16.mxu0 0
      %739 = vmatmul.mubr.bf16.gmra.mrb[0].mxu0 %v433
      %v740 = vpop.f32.mrb[0].mxu0
      %v741 = vadd.f32 0.0, %v740
      %v742 = vpop.f32.mrb[0].mxu0
      %v743 = vpop.f32.mrb[0].mxu0
      %v744 = vadd.f32 0.0, %v743
      %v745 = vpop.f32.mrb[0].mxu0
      %746 = vmatprep.mubr.bf16.mxu0 0
      %747 = vmatmul.mubr.bf16.gmra.mrb[0].mxu0 %v434
      %v748 = vpop.f32.mrb[0].mxu0
      %v749 = vadd.f32 0.0, %v748
      %v750 = vpop.f32.mrb[0].mxu0
      %v751 = vpop.f32.mrb[0].mxu0
      %v752 = vadd.f32 0.0, %v751
      %v753 = vpop.f32.mrb[0].mxu0
      %754 = vmatprep.mubr.bf16.mxu0 0
      %755 = vmatmul.mubr.bf16.gmra.mrb[0].mxu0 %v435
      %v756 = vpop.f32.mrb[0].mxu0
      %v757 = vadd.f32 0.0, %v756
      %v758 = vpop.f32.mrb[0].mxu0
      %v759 = vpop.f32.mrb[0].mxu0
      %v760 = vadd.f32 0.0, %v759
      %v761 = vpop.f32.mrb[0].mxu0
      %762 = vmatprep.mubr.bf16.mxu0 0
      %763 = vmatmul.mubr.bf16.gmra.mrb[0].mxu0 %v436
      %v764 = vpop.f32.mrb[0].mxu0
      %v765 = vadd.f32 0.0, %v764
      %v766 = vpop.f32.mrb[0].mxu0
      %v767 = vpop.f32.mrb[0].mxu0
      %v768 = vadd.f32 0.0, %v767
      %v769 = vpop.f32.mrb[0].mxu0
      %770 = vmatprep.mubr.bf16.mxu0 0
      %771 = vmatmul.mubr.bf16.gmra.mrb[0].mxu0 %v437
      %v772 = vpop.f32.mrb[0].mxu0
      %v773 = vadd.f32 0.0, %v772
      %v774 = vpop.f32.mrb[0].mxu0
      %v775 = vpop.f32.mrb[0].mxu0
      %v776 = vadd.f32 0.0, %v775
      %v777 = vpop.f32.mrb[0].mxu0
      %778 = vmatprep.mubr.bf16.mxu0 0
      %779 = vmatmul.mubr.bf16.gmra.mrb[0].mxu0 %v438
      %v780 = vpop.f32.mrb[0].mxu0
      %v781 = vadd.f32 0.0, %v780
      %v782 = vpop.f32.mrb[0].mxu0
      %v783 = vpop.f32.mrb[0].mxu0
      %v784 = vadd.f32 0.0, %v783
      %v785 = vpop.f32.mrb[0].mxu0
      %786 = vmatprep.mubr.bf16.mxu0 0
      %787 = vmatmul.mubr.bf16.gmra.mrb[0].mxu0 %v439
      %v788 = vpop.f32.mrb[0].mxu0
      %v789 = vadd.f32 0.0, %v788
      %v790 = vpop.f32.mrb[0].mxu0
      %v791 = vpop.f32.mrb[0].mxu0
      %v792 = vadd.f32 0.0, %v791
      %v793 = vpop.f32.mrb[0].mxu0
      %794 = vmatprep.mubr.bf16.mxu0 0
      %795 = vmatmul.mubr.bf16.gmra.mrb[0].mxu0 %v440
      %v796 = vpop.f32.mrb[0].mxu0
      %v797 = vadd.f32 0.0, %v796
      %v798 = vpop.f32.mrb[0].mxu0
      %v799 = vpop.f32.mrb[0].mxu0
      %v800 = vadd.f32 0.0, %v799
      %v801 = vpop.f32.mrb[0].mxu0
      %802 = vmatprep.mubr.bf16.mxu0 0
      %803 = vmatmul.mubr.bf16.gmra.mrb[0].mxu0 %v441
      %v804 = vpop.f32.mrb[0].mxu0
      %v805 = vadd.f32 0.0, %v804
      %v806 = vpop.f32.mrb[0].mxu0
      %v807 = vpop.f32.mrb[0].mxu0
      %v808 = vadd.f32 0.0, %v807
      %v809 = vpop.f32.mrb[0].mxu0
      %810 = vdwg.mxu0
      %v811 = vld [vmem:[%s2] sm:$0x1]
      %v813 = vlaneseq
      %v814 = vshrl.u32 %v813, 7
      %v815 = vsub.s32 0, %v814
      %v816 = vrot.slane %v811, %v815
      %v818 = vmul.f32 %v557, %v816
      %v819 = vmul.f32 %v560, %v816
      %v820 = vmul.f32 %v565, %v816
      %v821 = vmul.f32 %v568, %v816
      %v822 = vmul.f32 %v573, %v816
      %v823 = vmul.f32 %v576, %v816
      %v824 = vmul.f32 %v581, %v816
      %v825 = vmul.f32 %v584, %v816
      %v826 = vmul.f32 %v589, %v816
      %v827 = vmul.f32 %v592, %v816
      %v828 = vmul.f32 %v597, %v816
      %v829 = vmul.f32 %v600, %v816
      %v830 = vmul.f32 %v605, %v816
      %v831 = vmul.f32 %v608, %v816
      %v832 = vmul.f32 %v613, %v816
      %v833 = vmul.f32 %v616, %v816
      %v834 = vmul.f32 %v621, %v816
      %v835 = vmul.f32 %v624, %v816
      %v836 = vmul.f32 %v629, %v816
      %v837 = vmul.f32 %v632, %v816
      %v838 = vmul.f32 %v637, %v816
      %v839 = vmul.f32 %v640, %v816
      %v840 = vmul.f32 %v645, %v816
      %v841 = vmul.f32 %v648, %v816
      %v842 = vmul.f32 %v653, %v816
      %v843 = vmul.f32 %v656, %v816
      %v844 = vmul.f32 %v661, %v816
      %v845 = vmul.f32 %v664, %v816
      %v846 = vmul.f32 %v669, %v816
      %v847 = vmul.f32 %v672, %v816
      %v848 = vmul.f32 %v677, %v816
      %v849 = vmul.f32 %v680, %v816
      %v850 = vmul.f32 %v685, %v816
      %v851 = vmul.f32 %v688, %v816
      %v852 = vmul.f32 %v693, %v816
      %v853 = vmul.f32 %v696, %v816
      %v854 = vmul.f32 %v701, %v816
      %v855 = vmul.f32 %v704, %v816
      %v856 = vmul.f32 %v709, %v816
      %v857 = vmul.f32 %v712, %v816
      %v858 = vmul.f32 %v717, %v816
      %v859 = vmul.f32 %v720, %v816
      %v860 = vmul.f32 %v725, %v816
      %v861 = vmul.f32 %v728, %v816
      %v862 = vmul.f32 %v733, %v816
      %v863 = vmul.f32 %v736, %v816
      %v864 = vmul.f32 %v741, %v816
      %v865 = vmul.f32 %v744, %v816
      %v866 = vmul.f32 %v749, %v816
      %v867 = vmul.f32 %v752, %v816
      %v868 = vmul.f32 %v757, %v816
      %v869 = vmul.f32 %v760, %v816
      %v870 = vmul.f32 %v765, %v816
      %v871 = vmul.f32 %v768, %v816
      %v872 = vmul.f32 %v773, %v816
      %v873 = vmul.f32 %v776, %v816
      %v874 = vmul.f32 %v781, %v816
      %v875 = vmul.f32 %v784, %v816
      %v876 = vmul.f32 %v789, %v816
      %v877 = vmul.f32 %v792, %v816
      %v878 = vmul.f32 %v797, %v816
      %v879 = vmul.f32 %v800, %v816
      %v880 = vmul.f32 %v805, %v816
      %v881 = vmul.f32 %v808, %v816
      %v882 = vld [vmem:[%s3] sm:$0x1]
      %v884 = vlaneseq
      %v885 = vshrl.u32 %v884, 7
      %v886 = vsub.s32 0, %v885
      %v887 = vrot.slane %v882, %v886
      %v889 = vadd.f32 %v818, %v887
      %v890 = vadd.f32 %v819, %v887
      %v891 = vadd.f32 %v820, %v887
      %v892 = vadd.f32 %v821, %v887
      %v893 = vadd.f32 %v822, %v887
      %v894 = vadd.f32 %v823, %v887
      %v895 = vadd.f32 %v824, %v887
      %v896 = vadd.f32 %v825, %v887
      %v897 = vadd.f32 %v826, %v887
      %v898 = vadd.f32 %v827, %v887
      %v899 = vadd.f32 %v828, %v887
      %v900 = vadd.f32 %v829, %v887
      %v901 = vadd.f32 %v830, %v887
      %v902 = vadd.f32 %v831, %v887
      %v903 = vadd.f32 %v832, %v887
      %v904 = vadd.f32 %v833, %v887
      %v905 = vadd.f32 %v834, %v887
      %v906 = vadd.f32 %v835, %v887
      %v907 = vadd.f32 %v836, %v887
      %v908 = vadd.f32 %v837, %v887
      %v909 = vadd.f32 %v838, %v887
      %v910 = vadd.f32 %v839, %v887
      %v911 = vadd.f32 %v840, %v887
      %v912 = vadd.f32 %v841, %v887
      %v913 = vadd.f32 %v842, %v887
      %v914 = vadd.f32 %v843, %v887
      %v915 = vadd.f32 %v844, %v887
      %v916 = vadd.f32 %v845, %v887
      %v917 = vadd.f32 %v846, %v887
      %v918 = vadd.f32 %v847, %v887
      %v919 = vadd.f32 %v848, %v887
      %v920 = vadd.f32 %v849, %v887
      %v921 = vadd.f32 %v850, %v887
      %v922 = vadd.f32 %v851, %v887
      %v923 = vadd.f32 %v852, %v887
      %v924 = vadd.f32 %v853, %v887
      %v925 = vadd.f32 %v854, %v887
      %v926 = vadd.f32 %v855, %v887
      %v927 = vadd.f32 %v856, %v887
      %v928 = vadd.f32 %v857, %v887
      %v929 = vadd.f32 %v858, %v887
      %v930 = vadd.f32 %v859, %v887
      %v931 = vadd.f32 %v860, %v887
      %v932 = vadd.f32 %v861, %v887
      %v933 = vadd.f32 %v862, %v887
      %v934 = vadd.f32 %v863, %v887
      %v935 = vadd.f32 %v864, %v887
      %v936 = vadd.f32 %v865, %v887
      %v937 = vadd.f32 %v866, %v887
      %v938 = vadd.f32 %v867, %v887
      %v939 = vadd.f32 %v868, %v887
      %v940 = vadd.f32 %v869, %v887
      %v941 = vadd.f32 %v870, %v887
      %v942 = vadd.f32 %v871, %v887
      %v943 = vadd.f32 %v872, %v887
      %v944 = vadd.f32 %v873, %v887
      %v945 = vadd.f32 %v874, %v887
      %v946 = vadd.f32 %v875, %v887
      %v947 = vadd.f32 %v876, %v887
      %v948 = vadd.f32 %v877, %v887
      %v949 = vadd.f32 %v878, %v887
      %v950 = vadd.f32 %v879, %v887
      %v951 = vadd.f32 %v880, %v887
      %v952 = vadd.f32 %v881, %v887
      %v953 = vmax.f32 %v889, 0.0
      %v954 = vmax.f32 %v890, 0.0
      %v955 = vmax.f32 %v891, 0.0
      %v956 = vmax.f32 %v892, 0.0
      %v957 = vmax.f32 %v893, 0.0
      %v958 = vmax.f32 %v894, 0.0
      %v959 = vmax.f32 %v895, 0.0
      %v960 = vmax.f32 %v896, 0.0
      %v961 = vmax.f32 %v897, 0.0
      %v962 = vmax.f32 %v898, 0.0
      %v963 = vmax.f32 %v899, 0.0
      %v964 = vmax.f32 %v900, 0.0
      %v965 = vmax.f32 %v901, 0.0
      %v966 = vmax.f32 %v902, 0.0
      %v967 = vmax.f32 %v903, 0.0
      %v968 = vmax.f32 %v904, 0.0
      %v969 = vmax.f32 %v905, 0.0
      %v970 = vmax.f32 %v906, 0.0
      %v971 = vmax.f32 %v907, 0.0
      %v972 = vmax.f32 %v908, 0.0
      %v973 = vmax.f32 %v909, 0.0
      %v974 = vmax.f32 %v910, 0.0
      %v975 = vmax.f32 %v911, 0.0
      %v976 = vmax.f32 %v912, 0.0
      %v977 = vmax.f32 %v913, 0.0
      %v978 = vmax.f32 %v914, 0.0
      %v979 = vmax.f32 %v915, 0.0
      %v980 = vmax.f32 %v916, 0.0
      %v981 = vmax.f32 %v917, 0.0
      %v982 = vmax.f32 %v918, 0.0
      %v983 = vmax.f32 %v919, 0.0
      %v984 = vmax.f32 %v920, 0.0
      %v985 = vmax.f32 %v921, 0.0
      %v986 = vmax.f32 %v922, 0.0
      %v987 = vmax.f32 %v923, 0.0
      %v988 = vmax.f32 %v924, 0.0
      %v989 = vmax.f32 %v925, 0.0
      %v990 = vmax.f32 %v926, 0.0
      %v991 = vmax.f32 %v927, 0.0
      %v992 = vmax.f32 %v928, 0.0
      %v993 = vmax.f32 %v929, 0.0
      %v994 = vmax.f32 %v930, 0.0
      %v995 = vmax.f32 %v931, 0.0
      %v996 = vmax.f32 %v932, 0.0
      %v997 = vmax.f32 %v933, 0.0
      %v998 = vmax.f32 %v934, 0.0
      %v999 = vmax.f32 %v935, 0.0
      %v1000 = vmax.f32 %v936, 0.0
      %v1001 = vmax.f32 %v937, 0.0
      %v1002 = vmax.f32 %v938, 0.0
      %v1003 = vmax.f32 %v939, 0.0
      %v1004 = vmax.f32 %v940, 0.0
      %v1005 = vmax.f32 %v941, 0.0
      %v1006 = vmax.f32 %v942, 0.0
      %v1007 = vmax.f32 %v943, 0.0
      %v1008 = vmax.f32 %v944, 0.0
      %v1009 = vmax.f32 %v945, 0.0
      %v1010 = vmax.f32 %v946, 0.0
      %v1011 = vmax.f32 %v947, 0.0
      %v1012 = vmax.f32 %v948, 0.0
      %v1013 = vmax.f32 %v949, 0.0
      %v1014 = vmax.f32 %v950, 0.0
      %v1015 = vmax.f32 %v951, 0.0
      %v1016 = vmax.f32 %v952, 0.0
      %v1017 = vpack.c.bf16 %v954, %v953
      %v1018 = vpack.c.bf16 %v956, %v955
      %v1019 = vpack.c.bf16 %v958, %v957
      %v1020 = vpack.c.bf16 %v960, %v959
      %v1021 = vpack.c.bf16 %v962, %v961
      %v1022 = vpack.c.bf16 %v964, %v963
      %v1023 = vpack.c.bf16 %v966, %v965
      %v1024 = vpack.c.bf16 %v968, %v967
      %v1025 = vpack.c.bf16 %v970, %v969
      %v1026 = vpack.c.bf16 %v972, %v971
      %v1027 = vpack.c.bf16 %v974, %v973
      %v1028 = vpack.c.bf16 %v976, %v975
      %v1029 = vpack.c.bf16 %v978, %v977
      %v1030 = vpack.c.bf16 %v980, %v979
      %v1031 = vpack.c.bf16 %v982, %v981
      %v1032 = vpack.c.bf16 %v984, %v983
      %v1033 = vpack.c.bf16 %v986, %v985
      %v1034 = vpack.c.bf16 %v988, %v987
      %v1035 = vpack.c.bf16 %v990, %v989
      %v1036 = vpack.c.bf16 %v992, %v991
      %v1037 = vpack.c.bf16 %v994, %v993
      %v1038 = vpack.c.bf16 %v996, %v995
      %v1039 = vpack.c.bf16 %v998, %v997
      %v1040 = vpack.c.bf16 %v1000, %v999
      %v1041 = vpack.c.bf16 %v1002, %v1001
      %v1042 = vpack.c.bf16 %v1004, %v1003
      %v1043 = vpack.c.bf16 %v1006, %v1005
      %v1044 = vpack.c.bf16 %v1008, %v1007
      %v1045 = vpack.c.bf16 %v1010, %v1009
      %v1046 = vpack.c.bf16 %v1012, %v1011
      %v1047 = vpack.c.bf16 %v1014, %v1013
      %v1048 = vpack.c.bf16 %v1016, %v1015
      %v1081 = vunpack.c.l.b16 %v1017
      %v1082 = vunpack.c.h.b16 %v1017
      %v1083 = vunpack.c.l.b16 %v1018
      %v1084 = vunpack.c.h.b16 %v1018
      %v1085 = vunpack.c.l.b16 %v1019
      %v1086 = vunpack.c.h.b16 %v1019
      %v1087 = vunpack.c.l.b16 %v1020
      %v1088 = vunpack.c.h.b16 %v1020
      %v1089 = vunpack.c.l.b16 %v1021
      %v1090 = vunpack.c.h.b16 %v1021
      %v1091 = vunpack.c.l.b16 %v1022
      %v1092 = vunpack.c.h.b16 %v1022
      %v1093 = vunpack.c.l.b16 %v1023
      %v1094 = vunpack.c.h.b16 %v1023
      %v1095 = vunpack.c.l.b16 %v1024
      %v1096 = vunpack.c.h.b16 %v1024
      %v1097 = vunpack.c.l.b16 %v1025
      %v1098 = vunpack.c.h.b16 %v1025
      %v1099 = vunpack.c.l.b16 %v1026
      %v1100 = vunpack.c.h.b16 %v1026
      %v1101 = vunpack.c.l.b16 %v1027
      %v1102 = vunpack.c.h.b16 %v1027
      %v1103 = vunpack.c.l.b16 %v1028
      %v1104 = vunpack.c.h.b16 %v1028
      %v1105 = vunpack.c.l.b16 %v1029
      %v1106 = vunpack.c.h.b16 %v1029
      %v1107 = vunpack.c.l.b16 %v1030
      %v1108 = vunpack.c.h.b16 %v1030
      %v1109 = vunpack.c.l.b16 %v1031
      %v1110 = vunpack.c.h.b16 %v1031
      %v1111 = vunpack.c.l.b16 %v1032
      %v1112 = vunpack.c.h.b16 %v1032
      %v1113 = vunpack.c.l.b16 %v1033
      %v1114 = vunpack.c.h.b16 %v1033
      %v1115 = vunpack.c.l.b16 %v1034
      %v1116 = vunpack.c.h.b16 %v1034
      %v1117 = vunpack.c.l.b16 %v1035
      %v1118 = vunpack.c.h.b16 %v1035
      %v1119 = vunpack.c.l.b16 %v1036
      %v1120 = vunpack.c.h.b16 %v1036
      %v1121 = vunpack.c.l.b16 %v1037
      %v1122 = vunpack.c.h.b16 %v1037
      %v1123 = vunpack.c.l.b16 %v1038
      %v1124 = vunpack.c.h.b16 %v1038
      %v1125 = vunpack.c.l.b16 %v1039
      %v1126 = vunpack.c.h.b16 %v1039
      %v1127 = vunpack.c.l.b16 %v1040
      %v1128 = vunpack.c.h.b16 %v1040
      %v1129 = vunpack.c.l.b16 %v1041
      %v1130 = vunpack.c.h.b16 %v1041
      %v1131 = vunpack.c.l.b16 %v1042
      %v1132 = vunpack.c.h.b16 %v1042
      %v1133 = vunpack.c.l.b16 %v1043
      %v1134 = vunpack.c.h.b16 %v1043
      %v1135 = vunpack.c.l.b16 %v1044
      %v1136 = vunpack.c.h.b16 %v1044
      %v1137 = vunpack.c.l.b16 %v1045
      %v1138 = vunpack.c.h.b16 %v1045
      %v1139 = vunpack.c.l.b16 %v1046
      %v1140 = vunpack.c.h.b16 %v1046
      %v1141 = vunpack.c.l.b16 %v1047
      %v1142 = vunpack.c.h.b16 %v1047
      %v1143 = vunpack.c.l.b16 %v1048
      %v1144 = vunpack.c.h.b16 %v1048
      %v1145 = vpack.c.b16 %v1081, %v1081
      %v1146 = vpack.c.b16 %v1082, %v1082
      %v1147 = vpack.c.b16 %v1083, %v1083
      %v1148 = vpack.c.b16 %v1084, %v1084
      %v1149 = vpack.c.b16 %v1085, %v1085
      %v1150 = vpack.c.b16 %v1086, %v1086
      %v1151 = vpack.c.b16 %v1087, %v1087
      %v1152 = vpack.c.b16 %v1088, %v1088
      %v1153 = vpack.c.b16 %v1089, %v1089
      %v1154 = vpack.c.b16 %v1090, %v1090
      %v1155 = vpack.c.b16 %v1091, %v1091
      %v1156 = vpack.c.b16 %v1092, %v1092
      %v1157 = vpack.c.b16 %v1093, %v1093
      %v1158 = vpack.c.b16 %v1094, %v1094
      %v1159 = vpack.c.b16 %v1095, %v1095
      %v1160 = vpack.c.b16 %v1096, %v1096
      %v1161 = vpack.c.b16 %v1097, %v1097
      %v1162 = vpack.c.b16 %v1098, %v1098
      %v1163 = vpack.c.b16 %v1099, %v1099
      %v1164 = vpack.c.b16 %v1100, %v1100
      %v1165 = vpack.c.b16 %v1101, %v1101
      %v1166 = vpack.c.b16 %v1102, %v1102
      %v1167 = vpack.c.b16 %v1103, %v1103
      %v1168 = vpack.c.b16 %v1104, %v1104
      %v1169 = vpack.c.b16 %v1105, %v1105
      %v1170 = vpack.c.b16 %v1106, %v1106
      %v1171 = vpack.c.b16 %v1107, %v1107
      %v1172 = vpack.c.b16 %v1108, %v1108
      %v1173 = vpack.c.b16 %v1109, %v1109
      %v1174 = vpack.c.b16 %v1110, %v1110
      %v1175 = vpack.c.b16 %v1111, %v1111
      %v1176 = vpack.c.b16 %v1112, %v1112
      %v1177 = vpack.c.b16 %v1113, %v1113
      %v1178 = vpack.c.b16 %v1114, %v1114
      %v1179 = vpack.c.b16 %v1115, %v1115
      %v1180 = vpack.c.b16 %v1116, %v1116
      %v1181 = vpack.c.b16 %v1117, %v1117
      %v1182 = vpack.c.b16 %v1118, %v1118
      %v1183 = vpack.c.b16 %v1119, %v1119
      %v1184 = vpack.c.b16 %v1120, %v1120
      %v1185 = vpack.c.b16 %v1121, %v1121
      %v1186 = vpack.c.b16 %v1122, %v1122
      %v1187 = vpack.c.b16 %v1123, %v1123
      %v1188 = vpack.c.b16 %v1124, %v1124
      %v1189 = vpack.c.b16 %v1125, %v1125
      %v1190 = vpack.c.b16 %v1126, %v1126
      %v1191 = vpack.c.b16 %v1127, %v1127
      %v1192 = vpack.c.b16 %v1128, %v1128
      %v1193 = vpack.c.b16 %v1129, %v1129
      %v1194 = vpack.c.b16 %v1130, %v1130
      %v1195 = vpack.c.b16 %v1131, %v1131
      %v1196 = vpack.c.b16 %v1132, %v1132
      %v1197 = vpack.c.b16 %v1133, %v1133
      %v1198 = vpack.c.b16 %v1134, %v1134
      %v1199 = vpack.c.b16 %v1135, %v1135
      %v1200 = vpack.c.b16 %v1136, %v1136
      %v1201 = vpack.c.b16 %v1137, %v1137
      %v1202 = vpack.c.b16 %v1138, %v1138
      %v1203 = vpack.c.b16 %v1139, %v1139
      %v1204 = vpack.c.b16 %v1140, %v1140
      %v1205 = vpack.c.b16 %v1141, %v1141
      %v1206 = vpack.c.b16 %v1142, %v1142
      %v1207 = vpack.c.b16 %v1143, %v1143
      %v1208 = vpack.c.b16 %v1144, %v1144
      %1273 = vst [vmem:[%s199] sm:$0xf] %v1145
      %1274 = vst [vmem:[%s199 + $0x4] sm:$0xf] %v1146
      %1275 = vst [vmem:[%s199 + $0x8] sm:$0xf] %v1147
      %1276 = vst [vmem:[%s199 + $0xc] sm:$0xf] %v1148
      %1277 = vst [vmem:[%s199 + $0x10] sm:$0xf] %v1149
      %1278 = vst [vmem:[%s199 + $0x14] sm:$0xf] %v1150
      %1279 = vst [vmem:[%s199 + $0x18] sm:$0xf] %v1151
      %1280 = vst [vmem:[%s199 + $0x1c] sm:$0xf] %v1152
      %1281 = vst [vmem:[%s199 + $0x20] sm:$0xf] %v1153
      %1282 = vst [vmem:[%s199 + $0x24] sm:$0xf] %v1154
      %1283 = vst [vmem:[%s199 + $0x28] sm:$0xf] %v1155
      %1284 = vst [vmem:[%s199 + $0x2c] sm:$0xf] %v1156
      %1285 = vst [vmem:[%s199 + $0x30] sm:$0xf] %v1157
      %1286 = vst [vmem:[%s199 + $0x34] sm:$0xf] %v1158
      %1287 = vst [vmem:[%s199 + $0x38] sm:$0xf] %v1159
      %1288 = vst [vmem:[%s199 + $0x3c] sm:$0xf] %v1160
      %1289 = vst [vmem:[%s199 + $0x40] sm:$0xf] %v1161
      %1290 = vst [vmem:[%s199 + $0x44] sm:$0xf] %v1162
      %1291 = vst [vmem:[%s199 + $0x48] sm:$0xf] %v1163
      %1292 = vst [vmem:[%s199 + $0x4c] sm:$0xf] %v1164
      %1293 = vst [vmem:[%s199 + $0x50] sm:$0xf] %v1165
      %1294 = vst [vmem:[%s199 + $0x54] sm:$0xf] %v1166
      %1295 = vst [vmem:[%s199 + $0x58] sm:$0xf] %v1167
      %1296 = vst [vmem:[%s199 + $0x5c] sm:$0xf] %v1168
      %1297 = vst [vmem:[%s199 + $0x60] sm:$0xf] %v1169
      %1298 = vst [vmem:[%s199 + $0x64] sm:$0xf] %v1170
      %1299 = vst [vmem:[%s199 + $0x68] sm:$0xf] %v1171
      %1300 = vst [vmem:[%s199 + $0x6c] sm:$0xf] %v1172
      %1301 = vst [vmem:[%s199 + $0x70] sm:$0xf] %v1173
      %1302 = vst [vmem:[%s199 + $0x74] sm:$0xf] %v1174
      %1303 = vst [vmem:[%s199 + $0x78] sm:$0xf] %v1175
      %1304 = vst [vmem:[%s199 + $0x7c] sm:$0xf] %v1176
      %1305 = vst [vmem:[%s199 + $0x80] sm:$0xf] %v1177
      %1306 = vst [vmem:[%s199 + $0x84] sm:$0xf] %v1178
      %1307 = vst [vmem:[%s199 + $0x88] sm:$0xf] %v1179
      %1308 = vst [vmem:[%s199 + $0x8c] sm:$0xf] %v1180
      %1309 = vst [vmem:[%s199 + $0x90] sm:$0xf] %v1181
      %1310 = vst [vmem:[%s199 + $0x94] sm:$0xf] %v1182
      %1311 = vst [vmem:[%s199 + $0x98] sm:$0xf] %v1183
      %1312 = vst [vmem:[%s199 + $0x9c] sm:$0xf] %v1184
      %1313 = vst [vmem:[%s199 + $0xa0] sm:$0xf] %v1185
      %1314 = vst [vmem:[%s199 + $0xa4] sm:$0xf] %v1186
      %1315 = vst [vmem:[%s199 + $0xa8] sm:$0xf] %v1187
      %1316 = vst [vmem:[%s199 + $0xac] sm:$0xf] %v1188
      %1317 = vst [vmem:[%s199 + $0xb0] sm:$0xf] %v1189
      %1318 = vst [vmem:[%s199 + $0xb4] sm:$0xf] %v1190
      %1319 = vst [vmem:[%s199 + $0xb8] sm:$0xf] %v1191
      %1320 = vst [vmem:[%s199 + $0xbc] sm:$0xf] %v1192
      %1321 = vst [vmem:[%s199 + $0xc0] sm:$0xf] %v1193
      %1322 = vst [vmem:[%s199 + $0xc4] sm:$0xf] %v1194
      %1323 = vst [vmem:[%s199 + $0xc8] sm:$0xf] %v1195
      %1324 = vst [vmem:[%s199 + $0xcc] sm:$0xf] %v1196
      %1325 = vst [vmem:[%s199 + $0xd0] sm:$0xf] %v1197
      %1326 = vst [vmem:[%s199 + $0xd4] sm:$0xf] %v1198
      %1327 = vst [vmem:[%s199 + $0xd8] sm:$0xf] %v1199
      %1328 = vst [vmem:[%s199 + $0xdc] sm:$0xf] %v1200
      %1329 = vst [vmem:[%s199 + $0xe0] sm:$0xf] %v1201
      %1330 = vst [vmem:[%s199 + $0xe4] sm:$0xf] %v1202
      %1331 = vst [vmem:[%s199 + $0xe8] sm:$0xf] %v1203
      %1332 = vst [vmem:[%s199 + $0xec] sm:$0xf] %v1204
      %1333 = vst [vmem:[%s199 + $0xf0] sm:$0xf] %v1205
      %1334 = vst [vmem:[%s199 + $0xf4] sm:$0xf] %v1206
      %1335 = vst [vmem:[%s199 + $0xf8] sm:$0xf] %v1207
      %1336 = vst [vmem:[%s199 + $0xfc] sm:$0xf] %v1208
      %s1337 = smul.u32 64, %s15
      %p1338 = scmp.lt.s32.totalorder %s1337, 127
      %s1339 = scalar_select %p1338, %s1337, 127
      %s1340 = smul.addr %s1339, 4
      %s1341 = scalar_lea.vmem %s4, %s1340
      // Predicated region
      $region37: #{mobilenet_forward.6} parent=35 // pred_check
        %p1342 = pneg %p122
      $region38: #{mobilenet_forward.6} parent=35 // pred_check_branch
        %1344 = sbr.rel (%p1342) target = $region40
      $region39: #{mobilenet_forward.6} parent=35 // pred_region
        %s1345 = smul.u32 64, %s15
      $region40: #{mobilenet_forward.6} parent=35 // pred_fallthru
        _
    $region36: #{mobilenet_forward.6} parent=5 // pred_fallthru
      _
    %p1346 = scmp.le.s32.totalorder 2, %s10
    // Predicated region
    $region41: #{mobilenet_forward.6} parent=5 // pred_check
      %p1347 = pneg %p1346
    $region42: #{mobilenet_forward.6} parent=5 // pred_check_branch
      %1349 = sbr.rel (%p1347) target = $region44
    $region43: #{mobilenet_forward.6} parent=5 // pred_region
      %s1350 = ssub.s32 %s10, 2
      // Predicated region
      $region45: #{mobilenet_forward.6} parent=43 // pred_check
        %p1351 = pneg %p128
      $region46: #{mobilenet_forward.6} parent=43 // pred_check_branch
        %1353 = sbr.rel (%p1351) target = $region48
      $region47: #{mobilenet_forward.6} parent=43 // pred_region
        %s1354 = smul.u32 64, %s16
        %p1355 = scmp.lt.s32.totalorder %s1354, 127
        %s1356 = scalar_select %p1355, %s1354, 127
        %s1357 = smul.addr %s1356, 4
        %s1358 = scalar_lea.vmem %s4, %s1357
      $region48: #{mobilenet_forward.6} parent=43 // pred_fallthru
        _
    $region44: #{mobilenet_forward.6} parent=5 // pred_fallthru
      _
  $region6: #{mobilenet_forward.6} parent=0 // loop_footer
    %s14 = sadd.s32 1, %s10
  $region7: #{mobilenet_forward.6} parent=0 // loop_footer_branch
    %9 = sbr.rel target = $region3
  $region8: #{mobilenet_forward.6} parent=0 // loop_exit
    _

// kernel: mobilenet_forward.7
$region0: #{mobilenet_forward.7}
  #allocation0 [shape = 'u32[]', space=smem, size = 0x4, offset = 0x4, fixed_abs, tag = 'smem constant byte address 0x4 - core index']
  #allocation1 [shape = 'u32[144,128]{1,0:T(1,128)}', space=vmem, size = 0x12000, scoped, tag = 'internal scratch']
  %s0 = inlined_call_operand.vmem [shape: bf16[2,10,10,10,128], index: 0, kind: input, shape index: {}]
  %s1 = inlined_call_operand.vmem [shape: f32[27,1,128], index: 1, kind: input, shape index: {}]
  %s2 = inlined_call_operand.vmem [shape: f32[1,128], index: 2, kind: input, shape index: {}]
  %s3 = inlined_call_operand.vmem [shape: f32[1,128], index: 3, kind: input, shape index: {}]
  %s4 = inlined_call_operand.vmem [shape: bf16[128,128], index: 4, kind: input, shape index: {}]
  %s5 = inlined_call_operand.vmem [shape: f32[1,128], index: 5, kind: input, shape index: {}]
  %s6 = inlined_call_operand.vmem [shape: f32[1,128], index: 6, kind: input, shape index: {}]
  %s7 = inlined_call_operand.vmem [shape: bf16[2,4,4,8,128], index: 7, kind: output, shape index: {}]
  %s8 = sld [smem:[#allocation0]]
  $region61: #{mobilenet_forward.7} parent=0
    _
  %s10 = ssub.s32 1, %s8
  %s11 = scalar_select 0, %s10, %s8
  loop: start=0, step=1, limit=10
  $region2: #{mobilenet_forward.7} parent=0 // loop_pre_header
    _
  $region3: #{mobilenet_forward.7} parent=0 // loop_header
    %s13 = sphi 0, %s17
    %p14 = scmp.ge.s32.totalorder %s13, 10
    %s20 = sphi 0, %s32
    %s21 = sphi 0, %s28
    %s22 = sphi 0, %s20
    %s23 = sphi 0, %s21
    %s24 = sphi 0, %s22
    %s25 = sphi 0, %s23
    %s35 = sphi 0, %s37
    %s38 = sphi 0, %s35
    %s39 = sphi 0, %s38
    %s55 = sphi 0, %s39
    %s59 = sphi 0, %s59
    %s61 = sphi 0, %s59
    %s62 = sphi 0, %s61
    %s76 = sphi 0, %s62
    %s80 = sphi 0, %s80
    %s82 = sphi 0, %s80
    %s83 = sphi 0, %s82
    %s97 = sphi 0, %s83
    %s101 = sphi 0, %s101
    %s103 = sphi 0, %s101
    %s104 = sphi 0, %s103
    %s118 = sphi 0, %s104
    %s122 = sphi 0, %s122
    %s124 = sphi 0, %s122
    %s125 = sphi 0, %s124
    %s139 = sphi 0, %s125
    %s143 = sphi 0, %s143
    %s145 = sphi 0, %s143
    %s146 = sphi 0, %s145
    %s160 = sphi 0, %s146
    %s164 = sphi 0, %s164
    %s166 = sphi 0, %s164
    %s167 = sphi 0, %s166
    %s181 = sphi 0, %s167
    %s189 = sphi 0, %s191
    %s192 = sphi 0, %s189
    %s193 = sphi 0, %s192
    %s209 = sphi 0, %s193
  $region4: #{mobilenet_forward.7} parent=0 // loop_header_branch
    %16 = sbr.rel (%p14) target = $region8
  $region5: #{mobilenet_forward.7} parent=0 // loop_body
    %s18 = ssub.s32 %s13, 1
    %s19 = ssub.s32 %s13, 2
    %s26 = sadd.s32 1, %s21
    %p27 = scmp.ge.s32.totalorder %s26, 4
    %s28 = scalar_select %p27, 0, %s26
    %s29 = sadd.s32 1, %s20
    %s30 = scalar_select %p27, %s29, %s20
    %p31 = scmp.ge.s32.totalorder %s30, 2
    %s32 = scalar_select %p31, 0, %s30
    %s33 = ssub.s32 %s20, %s32
    %p34 = scmp.eq.s32.totalorder %s33, 0
    %s36 = sadd.s32 %s35, 1
    %s37 = scalar_select %p34, %s35, %s36
    %p40 = pneg %p34
    %p41 = scmp.eq.s32.totalorder %s13, 7
    %p42 = por %p40, %p41
    %p43 = scmp.ne.s32.totalorder %s35, %s38
    %p44 = scmp.eq.s32.totalorder %s13, 0
    %p45 = por %p43, %p44
    %p46 = scmp.ne.s32.totalorder %s35, %s38
    %p47 = scmp.eq.s32.totalorder %s18, 7
    %p48 = por %p46, %p47
    %p49 = scmp.ne.s32.totalorder %s38, %s39
    %p50 = scmp.eq.s32.totalorder %s18, 0
    %p51 = por %p49, %p50
    %p52 = scmp.ne.s32.totalorder %s38, %s39
    %p53 = scmp.eq.s32.totalorder %s19, 7
    %p54 = por %p52, %p53
    %p56 = scmp.ne.s32.totalorder %s39, %s55
    %p57 = scmp.eq.s32.totalorder %s19, 0
    %p58 = por %p56, %p57
    %s60 = sadd.s32 %s59, 1
    %p63 = scmp.eq.s32.totalorder %s13, 7
    %p64 = scmp.ne.s32.totalorder %s59, %s61
    %p65 = scmp.eq.s32.totalorder %s13, 0
    %p66 = por %p64, %p65
    %p67 = scmp.ne.s32.totalorder %s59, %s61
    %p68 = scmp.eq.s32.totalorder %s18, 7
    %p69 = por %p67, %p68
    %p70 = scmp.ne.s32.totalorder %s61, %s62
    %p71 = scmp.eq.s32.totalorder %s18, 0
    %p72 = por %p70, %p71
    %p73 = scmp.ne.s32.totalorder %s61, %s62
    %p74 = scmp.eq.s32.totalorder %s19, 7
    %p75 = por %p73, %p74
    %p77 = scmp.ne.s32.totalorder %s62, %s76
    %p78 = scmp.eq.s32.totalorder %s19, 0
    %p79 = por %p77, %p78
    %s81 = sadd.s32 %s80, 1
    %p84 = scmp.eq.s32.totalorder %s13, 7
    %p85 = scmp.ne.s32.totalorder %s80, %s82
    %p86 = scmp.eq.s32.totalorder %s13, 0
    %p87 = por %p85, %p86
    %p88 = scmp.ne.s32.totalorder %s80, %s82
    %p89 = scmp.eq.s32.totalorder %s18, 7
    %p90 = por %p88, %p89
    %p91 = scmp.ne.s32.totalorder %s82, %s83
    %p92 = scmp.eq.s32.totalorder %s18, 0
    %p93 = por %p91, %p92
    %p94 = scmp.ne.s32.totalorder %s82, %s83
    %p95 = scmp.eq.s32.totalorder %s19, 7
    %p96 = por %p94, %p95
    %p98 = scmp.ne.s32.totalorder %s83, %s97
    %p99 = scmp.eq.s32.totalorder %s19, 0
    %p100 = por %p98, %p99
    %s102 = sadd.s32 %s101, 1
    %p105 = scmp.eq.s32.totalorder %s13, 7
    %p106 = scmp.ne.s32.totalorder %s101, %s103
    %p107 = scmp.eq.s32.totalorder %s13, 0
    %p108 = por %p106, %p107
    %p109 = scmp.ne.s32.totalorder %s101, %s103
    %p110 = scmp.eq.s32.totalorder %s18, 7
    %p111 = por %p109, %p110
    %p112 = scmp.ne.s32.totalorder %s103, %s104
    %p113 = scmp.eq.s32.totalorder %s18, 0
    %p114 = por %p112, %p113
    %p115 = scmp.ne.s32.totalorder %s103, %s104
    %p116 = scmp.eq.s32.totalorder %s19, 7
    %p117 = por %p115, %p116
    %p119 = scmp.ne.s32.totalorder %s104, %s118
    %p120 = scmp.eq.s32.totalorder %s19, 0
    %p121 = por %p119, %p120
    %s123 = sadd.s32 %s122, 1
    %p126 = scmp.eq.s32.totalorder %s13, 7
    %p127 = scmp.ne.s32.totalorder %s122, %s124
    %p128 = scmp.eq.s32.totalorder %s13, 0
    %p129 = por %p127, %p128
    %p130 = scmp.ne.s32.totalorder %s122, %s124
    %p131 = scmp.eq.s32.totalorder %s18, 7
    %p132 = por %p130, %p131
    %p133 = scmp.ne.s32.totalorder %s124, %s125
    %p134 = scmp.eq.s32.totalorder %s18, 0
    %p135 = por %p133, %p134
    %p136 = scmp.ne.s32.totalorder %s124, %s125
    %p137 = scmp.eq.s32.totalorder %s19, 7
    %p138 = por %p136, %p137
    %p140 = scmp.ne.s32.totalorder %s125, %s139
    %p141 = scmp.eq.s32.totalorder %s19, 0
    %p142 = por %p140, %p141
    %s144 = sadd.s32 %s143, 1
    %p147 = scmp.eq.s32.totalorder %s13, 7
    %p148 = scmp.ne.s32.totalorder %s143, %s145
    %p149 = scmp.eq.s32.totalorder %s13, 0
    %p150 = por %p148, %p149
    %p151 = scmp.ne.s32.totalorder %s143, %s145
    %p152 = scmp.eq.s32.totalorder %s18, 7
    %p153 = por %p151, %p152
    %p154 = scmp.ne.s32.totalorder %s145, %s146
    %p155 = scmp.eq.s32.totalorder %s18, 0
    %p156 = por %p154, %p155
    %p157 = scmp.ne.s32.totalorder %s145, %s146
    %p158 = scmp.eq.s32.totalorder %s19, 7
    %p159 = por %p157, %p158
    %p161 = scmp.ne.s32.totalorder %s146, %s160
    %p162 = scmp.eq.s32.totalorder %s19, 0
    %p163 = por %p161, %p162
    %s165 = sadd.s32 %s164, 1
    %p168 = scmp.eq.s32.totalorder %s13, 7
    %p169 = scmp.ne.s32.totalorder %s164, %s166
    %p170 = scmp.eq.s32.totalorder %s13, 0
    %p171 = por %p169, %p170
    %p172 = scmp.ne.s32.totalorder %s164, %s166
    %p173 = scmp.eq.s32.totalorder %s18, 7
    %p174 = por %p172, %p173
    %p175 = scmp.ne.s32.totalorder %s166, %s167
    %p176 = scmp.eq.s32.totalorder %s18, 0
    %p177 = por %p175, %p176
    %p178 = scmp.ne.s32.totalorder %s166, %s167
    %p179 = scmp.eq.s32.totalorder %s19, 7
    %p180 = por %p178, %p179
    %p182 = scmp.ne.s32.totalorder %s167, %s181
    %p183 = scmp.eq.s32.totalorder %s19, 0
    %p184 = por %p182, %p183
    %s185 = ssub.s32 %s20, %s32
    %s186 = ssub.s32 %s21, %s28
    %s187 = sor.u32 %s185, %s186
    %p188 = scmp.eq.s32.totalorder %s187, 0
    %s190 = sadd.s32 %s189, 1
    %s191 = scalar_select %p188, %s189, %s190
    %p194 = pneg %p188
    %p195 = scmp.eq.s32.totalorder %s13, 7
    %p196 = por %p194, %p195
    %p197 = scmp.ne.s32.totalorder %s189, %s192
    %p198 = scmp.eq.s32.totalorder %s13, 0
    %p199 = por %p197, %p198
    %p200 = scmp.ne.s32.totalorder %s189, %s192
    %p201 = scmp.eq.s32.totalorder %s18, 7
    %p202 = por %p200, %p201
    %p203 = scmp.ne.s32.totalorder %s192, %s193
    %p204 = scmp.eq.s32.totalorder %s18, 0
    %p205 = por %p203, %p204
    %p206 = scmp.ne.s32.totalorder %s192, %s193
    %p207 = scmp.eq.s32.totalorder %s19, 7
    %p208 = por %p206, %p207
    %p210 = scmp.ne.s32.totalorder %s193, %s209
    %p211 = scmp.eq.s32.totalorder %s19, 0
    %p212 = por %p210, %p211
    %p213 = scmp.le.s32.totalorder 1, %s13
    %p214 = scmp.lt.s32.totalorder %s13, 9
    %p215 = pnand %p213, %p214
    %p216 = pneg %p215
    // Predicated region
    $region9: #{mobilenet_forward.7} parent=5 // pred_check
      _
    $region10: #{mobilenet_forward.7} parent=5 // pred_check_branch
      %218 = sbr.rel (%p215) target = $region12
    $region11: #{mobilenet_forward.7} parent=5 // pred_region
      %s219 = ssub.s32 %s13, 1
      // Predicated region
      $region13: #{mobilenet_forward.7} parent=11 // pred_check
        %p220 = pneg %p72
      $region14: #{mobilenet_forward.7} parent=11 // pred_check_branch
        %222 = sbr.rel (%p220) target = $region16
      $region15: #{mobilenet_forward.7} parent=11 // pred_region
        _
      $region16: #{mobilenet_forward.7} parent=11 // pred_fallthru
        _
      // Predicated region
      $region17: #{mobilenet_forward.7} parent=11 // pred_check
        %p223 = pneg %p93
      $region18: #{mobilenet_forward.7} parent=11 // pred_check_branch
        %225 = sbr.rel (%p223) target = $region20
      $region19: #{mobilenet_forward.7} parent=11 // pred_region
        _
      $region20: #{mobilenet_forward.7} parent=11 // pred_fallthru
        _
      // Predicated region
      $region21: #{mobilenet_forward.7} parent=11 // pred_check
        %p226 = pneg %p114
      $region22: #{mobilenet_forward.7} parent=11 // pred_check_branch
        %228 = sbr.rel (%p226) target = $region24
      $region23: #{mobilenet_forward.7} parent=11 // pred_region
        _
      $region24: #{mobilenet_forward.7} parent=11 // pred_fallthru
        _
      // Predicated region
      $region25: #{mobilenet_forward.7} parent=11 // pred_check
        %p229 = pneg %p135
      $region26: #{mobilenet_forward.7} parent=11 // pred_check_branch
        %231 = sbr.rel (%p229) target = $region28
      $region27: #{mobilenet_forward.7} parent=11 // pred_region
        _
      $region28: #{mobilenet_forward.7} parent=11 // pred_fallthru
        _
      // Predicated region
      $region29: #{mobilenet_forward.7} parent=11 // pred_check
        %p232 = pneg %p156
      $region30: #{mobilenet_forward.7} parent=11 // pred_check_branch
        %234 = sbr.rel (%p232) target = $region32
      $region31: #{mobilenet_forward.7} parent=11 // pred_region
        _
      $region32: #{mobilenet_forward.7} parent=11 // pred_fallthru
        _
      // Predicated region
      $region33: #{mobilenet_forward.7} parent=11 // pred_check
        %p235 = pneg %p177
      $region34: #{mobilenet_forward.7} parent=11 // pred_check_branch
        %237 = sbr.rel (%p235) target = $region36
      $region35: #{mobilenet_forward.7} parent=11 // pred_region
        _
      $region36: #{mobilenet_forward.7} parent=11 // pred_fallthru
        _
    $region12: #{mobilenet_forward.7} parent=5 // pred_fallthru
      _
    %p238 = scmp.lt.s32.totalorder %s13, 8
    // Predicated region
    $region37: #{mobilenet_forward.7} parent=5 // pred_check
      %p239 = pneg %p238
    $region38: #{mobilenet_forward.7} parent=5 // pred_check_branch
      %241 = sbr.rel (%p239) target = $region40
    $region39: #{mobilenet_forward.7} parent=5 // pred_region
      // Predicated region
      $region41: #{mobilenet_forward.7} parent=39 // pred_check
        %p242 = pneg %p45
      $region42: #{mobilenet_forward.7} parent=39 // pred_check_branch
        %244 = sbr.rel (%p242) target = $region44
      $region43: #{mobilenet_forward.7} parent=39 // pred_region
        %p245 = scmp.lt.s32.totalorder %s20, 1
        %s246 = scalar_select %p245, %s20, 1
        %s247 = smul.addr %s246, 200
        %s248 = smul.addr %s247, 4
        %s249 = scalar_lea.vmem %s0, %s248
      $region44: #{mobilenet_forward.7} parent=39 // pred_fallthru
        _
    $region40: #{mobilenet_forward.7} parent=5 // pred_fallthru
      _
    %p250 = scmp.le.s32.totalorder 1, %s13
    %p251 = scmp.lt.s32.totalorder %s13, 9
    %p252 = pnand %p250, %p251
    %p253 = pneg %p252
    // Predicated region
    $region45: #{mobilenet_forward.7} parent=5 // pred_check
      _
    $region46: #{mobilenet_forward.7} parent=5 // pred_check_branch
      %255 = sbr.rel (%p252) target = $region48
    $region47: #{mobilenet_forward.7} parent=5 // pred_region
      %s256 = ssub.s32 %s13, 1
      %p257 = scmp.lt.s32.totalorder %s22, 1
      %s258 = scalar_select %p257, %s22, 1
      %s259 = smul.addr %s258, 200
      %s260 = smul.addr %s259, 4
      %s261 = scalar_lea.vmem %s0, %s260
      %p262 = pneg %p51
      %p263 = pneg %p48
      %p264 = pneg %p72
      %p265 = pneg %p69
      %p266 = pneg %p93
      %p267 = pneg %p90
      %p268 = pneg %p114
      %p269 = pneg %p111
      %p270 = pneg %p135
      %p271 = pneg %p132
      %p272 = pneg %p156
      %p273 = pneg %p153
      %p274 = pneg %p177
      %p275 = pneg %p174
      %p276 = pneg %p205
      %p277 = pneg %p202
      %p278 = scmp.lt.s32.totalorder %s22, 1
      %s279 = scalar_select %p278, %s22, 1
      %p280 = scmp.lt.s32.totalorder %s23, 3
      %s281 = scalar_select %p280, %s23, 3
      %s282 = smul.addr %s281, 4
      %s283 = smul.addr %s279, 16
      %s284 = sadd.s32 %s282, %s283
      %s285 = smul.addr %s284, 4
      %s286 = scalar_lea.vmem %s7, %s285
      %p287 = scmp.lt.s32.totalorder %s22, 1
      %s288 = scalar_select %p287, %s22, 1
      %s289 = smul.addr %s288, 200
      %s290 = smul.addr %s289, 4
      %s291 = scalar_lea.vmem %s0, %s290
      %p292 = scmp.lt.s32.totalorder %s22, 1
      %s293 = scalar_select %p292, %s22, 1
      %p294 = scmp.lt.s32.totalorder %s23, 3
      %s295 = scalar_select %p294, %s23, 3
      %s296 = smul.addr %s295, 4
      %s297 = smul.addr %s293, 16
      %s298 = sadd.s32 %s296, %s297
      %s299 = smul.addr %s298, 4
      %s300 = scalar_lea.vmem %s7, %s299
      %s302 = smul.u32 %s23, 2
      %s303 = smul.u32 %s302, 20
      %s304 = smul.addr %s303, 4
      %s305 = scalar_lea.vmem %s291, %s304
      %v306 = vld [vmem:[%s305] sm:$0xf]
      %v307 = vld [vmem:[%s305 + $0x4] sm:$0x1]
      %v308 = vld [vmem:[%s305 + $0x8] sm:$0xf]
      %v309 = vld [vmem:[%s305 + $0xc] sm:$0x1]
      %v310 = vld [vmem:[%s305 + $0x10] sm:$0xf]
      %v311 = vld [vmem:[%s305 + $0x14] sm:$0x1]
      %v312 = vld [vmem:[%s305 + $0x18] sm:$0xf]
      %v313 = vld [vmem:[%s305 + $0x1c] sm:$0x1]
      %v314 = vld [vmem:[%s305 + $0x20] sm:$0xf]
      %v315 = vld [vmem:[%s305 + $0x24] sm:$0x1]
      %v316 = vld [vmem:[%s305 + $0x28] sm:$0xf]
      %v317 = vld [vmem:[%s305 + $0x2c] sm:$0x1]
      %v318 = vld [vmem:[%s305 + $0x30] sm:$0xf]
      %v319 = vld [vmem:[%s305 + $0x34] sm:$0x1]
      %v320 = vld [vmem:[%s305 + $0x38] sm:$0xf]
      %v321 = vld [vmem:[%s305 + $0x3c] sm:$0x1]
      %v322 = vld [vmem:[%s305 + $0x40] sm:$0xf]
      %v323 = vld [vmem:[%s305 + $0x44] sm:$0x1]
      %v324 = vld [vmem:[%s1] sm:$0x1]
      %s325 = scalar_lea.vmem %s1, 1
      %v326 = vld [vmem:[%s325] sm:$0x1]
      %s327 = scalar_lea.vmem %s1, 2
      %v328 = vld [vmem:[%s327] sm:$0x1]
      %v329 = vunpack.c.l.bf16 %v306
      %v330 = vunpack.c.l.bf16 %v307
      %v332 = vlaneseq
      %v333 = vshrl.u32 %v332, 7
      %v334 = vsub.s32 0, %v333
      %v335 = vrot.slane %v324, %v334
      %v337 = vmul.f32 %v329, %v335
      %v339 = vlaneseq
      %v340 = vshrl.u32 %v339, 7
      %v341 = vsub.s32 0, %v340
      %v342 = vrot.slane %v326, %v341
      %v344 = vmul.f32 %v329, %v342
      %v345 = vmul.f32 %v330, %v342
      %vm348 = vcmask 1046528
      %v349 = vrot.slane %v344, 1
      %v350 = vrot.slane %v345, 1
      %v351 = vsel %vm348, %v349, %v350
      %v353 = vadd.f32 %v337, %v351
      %v355 = vlaneseq
      %v356 = vshrl.u32 %v355, 7
      %v357 = vsub.s32 0, %v356
      %v358 = vrot.slane %v328, %v357
      %v360 = vmul.f32 %v329, %v358
      %v361 = vmul.f32 %v330, %v358
      %vm364 = vcmask 1045504
      %v365 = vrot.slane %v360, 2
      %v366 = vrot.slane %v361, 2
      %v367 = vsel %vm364, %v365, %v366
      %v369 = vadd.f32 %v353, %v367
      %v370 = vunpack.c.l.bf16 %v310
      %v371 = vunpack.c.l.bf16 %v311
      %v372 = vmul.f32 %v370, %v335
      %v373 = vmul.f32 %v370, %v342
      %v374 = vmul.f32 %v371, %v342
      %v377 = vrot.slane %v373, 1
      %v378 = vrot.slane %v374, 1
      %v379 = vsel %vm348, %v377, %v378
      %v381 = vadd.f32 %v372, %v379
      %v382 = vmul.f32 %v370, %v358
      %v383 = vmul.f32 %v371, %v358
      %v386 = vrot.slane %v382, 2
      %v387 = vrot.slane %v383, 2
      %v388 = vsel %vm364, %v386, %v387
      %v390 = vadd.f32 %v381, %v388
      %v391 = vunpack.c.l.bf16 %v314
      %v392 = vunpack.c.l.bf16 %v315
      %v393 = vmul.f32 %v391, %v335
      %v394 = vmul.f32 %v391, %v342
      %v395 = vmul.f32 %v392, %v342
      %v398 = vrot.slane %v394, 1
      %v399 = vrot.slane %v395, 1
      %v400 = vsel %vm348, %v398, %v399
      %v402 = vadd.f32 %v393, %v400
      %v403 = vmul.f32 %v391, %v358
      %v404 = vmul.f32 %v392, %v358
      %v407 = vrot.slane %v403, 2
      %v408 = vrot.slane %v404, 2
      %v409 = vsel %vm364, %v407, %v408
      %v411 = vadd.f32 %v402, %v409
      %v412 = vunpack.c.l.bf16 %v318
      %v413 = vunpack.c.l.bf16 %v319
      %v414 = vmul.f32 %v412, %v335
      %v415 = vmul.f32 %v412, %v342
      %v416 = vmul.f32 %v413, %v342
      %v419 = vrot.slane %v415, 1
      %v420 = vrot.slane %v416, 1
      %v421 = vsel %vm348, %v419, %v420
      %v423 = vadd.f32 %v414, %v421
      %v424 = vmul.f32 %v412, %v358
      %v425 = vmul.f32 %v413, %v358
      %v428 = vrot.slane %v424, 2
      %v429 = vrot.slane %v425, 2
      %v430 = vsel %vm364, %v428, %v429
      %v432 = vadd.f32 %v423, %v430
      %s433 = scalar_lea.vmem %s1, 3
      %v434 = vld [vmem:[%s433] sm:$0x1]
      %s435 = scalar_lea.vmem %s1, 4
      %v436 = vld [vmem:[%s435] sm:$0x1]
      %s437 = scalar_lea.vmem %s1, 5
      %v438 = vld [vmem:[%s437] sm:$0x1]
      %v439 = vunpack.c.l.bf16 %v308
      %v440 = vunpack.c.l.bf16 %v309
      %v442 = vlaneseq
      %v443 = vshrl.u32 %v442, 7
      %v444 = vsub.s32 0, %v443
      %v445 = vrot.slane %v434, %v444
      %v447 = vmul.f32 %v439, %v445
      %v448 = vadd.f32 %v369, %v447
      %v450 = vlaneseq
      %v451 = vshrl.u32 %v450, 7
      %v452 = vsub.s32 0, %v451
      %v453 = vrot.slane %v436, %v452
      %v455 = vmul.f32 %v439, %v453
      %v456 = vmul.f32 %v440, %v453
      %v459 = vrot.slane %v455, 1
      %v460 = vrot.slane %v456, 1
      %v461 = vsel %vm348, %v459, %v460
      %v463 = vadd.f32 %v448, %v461
      %v465 = vlaneseq
      %v466 = vshrl.u32 %v465, 7
      %v467 = vsub.s32 0, %v466
      %v468 = vrot.slane %v438, %v467
      %v470 = vmul.f32 %v439, %v468
      %v471 = vmul.f32 %v440, %v468
      %v474 = vrot.slane %v470, 2
      %v475 = vrot.slane %v471, 2
      %v476 = vsel %vm364, %v474, %v475
      %v478 = vadd.f32 %v463, %v476
      %v479 = vunpack.c.l.bf16 %v312
      %v480 = vunpack.c.l.bf16 %v313
      %v481 = vmul.f32 %v479, %v445
      %v482 = vadd.f32 %v390, %v481
      %v483 = vmul.f32 %v479, %v453
      %v484 = vmul.f32 %v480, %v453
      %v487 = vrot.slane %v483, 1
      %v488 = vrot.slane %v484, 1
      %v489 = vsel %vm348, %v487, %v488
      %v491 = vadd.f32 %v482, %v489
      %v492 = vmul.f32 %v479, %v468
      %v493 = vmul.f32 %v480, %v468
      %v496 = vrot.slane %v492, 2
      %v497 = vrot.slane %v493, 2
      %v498 = vsel %vm364, %v496, %v497
      %v500 = vadd.f32 %v491, %v498
      %v501 = vunpack.c.l.bf16 %v316
      %v502 = vunpack.c.l.bf16 %v317
      %v503 = vmul.f32 %v501, %v445
      %v504 = vadd.f32 %v411, %v503
      %v505 = vmul.f32 %v501, %v453
      %v506 = vmul.f32 %v502, %v453
      %v509 = vrot.slane %v505, 1
      %v510 = vrot.slane %v506, 1
      %v511 = vsel %vm348, %v509, %v510
      %v513 = vadd.f32 %v504, %v511
      %v514 = vmul.f32 %v501, %v468
      %v515 = vmul.f32 %v502, %v468
      %v518 = vrot.slane %v514, 2
      %v519 = vrot.slane %v515, 2
      %v520 = vsel %vm364, %v518, %v519
      %v522 = vadd.f32 %v513, %v520
      %v523 = vunpack.c.l.bf16 %v320
      %v524 = vunpack.c.l.bf16 %v321
      %v525 = vmul.f32 %v523, %v445
      %v526 = vadd.f32 %v432, %v525
      %v527 = vmul.f32 %v523, %v453
      %v528 = vmul.f32 %v524, %v453
      %v531 = vrot.slane %v527, 1
      %v532 = vrot.slane %v528, 1
      %v533 = vsel %vm348, %v531, %v532
      %v535 = vadd.f32 %v526, %v533
      %v536 = vmul.f32 %v523, %v468
      %v537 = vmul.f32 %v524, %v468
      %v540 = vrot.slane %v536, 2
      %v541 = vrot.slane %v537, 2
      %v542 = vsel %vm364, %v540, %v541
      %v544 = vadd.f32 %v535, %v542
      %s545 = scalar_lea.vmem %s1, 6
      %v546 = vld [vmem:[%s545] sm:$0x1]
      %s547 = scalar_lea.vmem %s1, 7
      %v548 = vld [vmem:[%s547] sm:$0x1]
      %s549 = scalar_lea.vmem %s1, 8
      %v550 = vld [vmem:[%s549] sm:$0x1]
      %v552 = vlaneseq
      %v553 = vshrl.u32 %v552, 7
      %v554 = vsub.s32 0, %v553
      %v555 = vrot.slane %v546, %v554
      %v557 = vmul.f32 %v370, %v555
      %v558 = vadd.f32 %v478, %v557
      %v560 = vlaneseq
      %v561 = vshrl.u32 %v560, 7
      %v562 = vsub.s32 0, %v561
      %v563 = vrot.slane %v548, %v562
      %v565 = vmul.f32 %v370, %v563
      %v566 = vmul.f32 %v371, %v563
      %v569 = vrot.slane %v565, 1
      %v570 = vrot.slane %v566, 1
      %v571 = vsel %vm348, %v569, %v570
      %v573 = vadd.f32 %v558, %v571
      %v575 = vlaneseq
      %v576 = vshrl.u32 %v575, 7
      %v577 = vsub.s32 0, %v576
      %v578 = vrot.slane %v550, %v577
      %v580 = vmul.f32 %v370, %v578
      %v581 = vmul.f32 %v371, %v578
      %v584 = vrot.slane %v580, 2
      %v585 = vrot.slane %v581, 2
      %v586 = vsel %vm364, %v584, %v585
      %v588 = vadd.f32 %v573, %v586
      %v589 = vmul.f32 %v391, %v555
      %v590 = vadd.f32 %v500, %v589
      %v591 = vmul.f32 %v391, %v563
      %v592 = vmul.f32 %v392, %v563
      %v595 = vrot.slane %v591, 1
      %v596 = vrot.slane %v592, 1
      %v597 = vsel %vm348, %v595, %v596
      %v599 = vadd.f32 %v590, %v597
      %v600 = vmul.f32 %v391, %v578
      %v601 = vmul.f32 %v392, %v578
      %v604 = vrot.slane %v600, 2
      %v605 = vrot.slane %v601, 2
      %v606 = vsel %vm364, %v604, %v605
      %v608 = vadd.f32 %v599, %v606
      %v609 = vmul.f32 %v412, %v555
      %v610 = vadd.f32 %v522, %v609
      %v611 = vmul.f32 %v412, %v563
      %v612 = vmul.f32 %v413, %v563
      %v615 = vrot.slane %v611, 1
      %v616 = vrot.slane %v612, 1
      %v617 = vsel %vm348, %v615, %v616
      %v619 = vadd.f32 %v610, %v617
      %v620 = vmul.f32 %v412, %v578
      %v621 = vmul.f32 %v413, %v578
      %v624 = vrot.slane %v620, 2
      %v625 = vrot.slane %v621, 2
      %v626 = vsel %vm364, %v624, %v625
      %v628 = vadd.f32 %v619, %v626
      %v629 = vunpack.c.l.bf16 %v322
      %v630 = vunpack.c.l.bf16 %v323
      %v631 = vmul.f32 %v629, %v555
      %v632 = vadd.f32 %v544, %v631
      %v633 = vmul.f32 %v629, %v563
      %v634 = vmul.f32 %v630, %v563
      %v637 = vrot.slane %v633, 1
      %v638 = vrot.slane %v634, 1
      %v639 = vsel %vm348, %v637, %v638
      %v641 = vadd.f32 %v632, %v639
      %v642 = vmul.f32 %v629, %v578
      %v643 = vmul.f32 %v630, %v578
      %v646 = vrot.slane %v642, 2
      %v647 = vrot.slane %v643, 2
      %v648 = vsel %vm364, %v646, %v647
      %v650 = vadd.f32 %v641, %v648
      %s651 = sadd.s32 %s302, 1
      %s652 = smul.u32 %s651, 20
      %s653 = smul.addr %s652, 4
      %s654 = scalar_lea.vmem %s291, %s653
      %v655 = vld [vmem:[%s654] sm:$0xf]
      %v656 = vld [vmem:[%s654 + $0x4] sm:$0x1]
      %v657 = vld [vmem:[%s654 + $0x8] sm:$0xf]
      %v658 = vld [vmem:[%s654 + $0xc] sm:$0x1]
      %v659 = vld [vmem:[%s654 + $0x10] sm:$0xf]
      %v660 = vld [vmem:[%s654 + $0x14] sm:$0x1]
      %v661 = vld [vmem:[%s654 + $0x18] sm:$0xf]
      %v662 = vld [vmem:[%s654 + $0x1c] sm:$0x1]
      %v663 = vld [vmem:[%s654 + $0x20] sm:$0xf]
      %v664 = vld [vmem:[%s654 + $0x24] sm:$0x1]
      %v665 = vld [vmem:[%s654 + $0x28] sm:$0xf]
      %v666 = vld [vmem:[%s654 + $0x2c] sm:$0x1]
      %v667 = vld [vmem:[%s654 + $0x30] sm:$0xf]
      %v668 = vld [vmem:[%s654 + $0x34] sm:$0x1]
      %v669 = vld [vmem:[%s654 + $0x38] sm:$0xf]
      %v670 = vld [vmem:[%s654 + $0x3c] sm:$0x1]
      %v671 = vld [vmem:[%s654 + $0x40] sm:$0xf]
      %v672 = vld [vmem:[%s654 + $0x44] sm:$0x1]
      %s673 = scalar_lea.vmem %s1, 9
      %v674 = vld [vmem:[%s673] sm:$0x1]
      %s675 = scalar_lea.vmem %s1, 10
      %v676 = vld [vmem:[%s675] sm:$0x1]
      %s677 = scalar_lea.vmem %s1, 11
      %v678 = vld [vmem:[%s677] sm:$0x1]
      %v679 = vunpack.c.l.bf16 %v655
      %v680 = vunpack.c.l.bf16 %v656
      %v682 = vlaneseq
      %v683 = vshrl.u32 %v682, 7
      %v684 = vsub.s32 0, %v683
      %v685 = vrot.slane %v674, %v684
      %v687 = vmul.f32 %v679, %v685
      %v688 = vadd.f32 %v588, %v687
      %v690 = vlaneseq
      %v691 = vshrl.u32 %v690, 7
      %v692 = vsub.s32 0, %v691
      %v693 = vrot.slane %v676, %v692
      %v695 = vmul.f32 %v679, %v693
      %v696 = vmul.f32 %v680, %v693
      %v699 = vrot.slane %v695, 1
      %v700 = vrot.slane %v696, 1
      %v701 = vsel %vm348, %v699, %v700
      %v703 = vadd.f32 %v688, %v701
      %v705 = vlaneseq
      %v706 = vshrl.u32 %v705, 7
      %v707 = vsub.s32 0, %v706
      %v708 = vrot.slane %v678, %v707
      %v710 = vmul.f32 %v679, %v708
      %v711 = vmul.f32 %v680, %v708
      %v714 = vrot.slane %v710, 2
      %v715 = vrot.slane %v711, 2
      %v716 = vsel %vm364, %v714, %v715
      %v718 = vadd.f32 %v703, %v716
      %v719 = vunpack.c.l.bf16 %v659
      %v720 = vunpack.c.l.bf16 %v660
      %v721 = vmul.f32 %v719, %v685
      %v722 = vadd.f32 %v608, %v721
      %v723 = vmul.f32 %v719, %v693
      %v724 = vmul.f32 %v720, %v693
      %v727 = vrot.slane %v723, 1
      %v728 = vrot.slane %v724, 1
      %v729 = vsel %vm348, %v727, %v728
      %v731 = vadd.f32 %v722, %v729
      %v732 = vmul.f32 %v719, %v708
      %v733 = vmul.f32 %v720, %v708
      %v736 = vrot.slane %v732, 2
      %v737 = vrot.slane %v733, 2
      %v738 = vsel %vm364, %v736, %v737
      %v740 = vadd.f32 %v731, %v738
      %v741 = vunpack.c.l.bf16 %v663
      %v742 = vunpack.c.l.bf16 %v664
      %v743 = vmul.f32 %v741, %v685
      %v744 = vadd.f32 %v628, %v743
      %v745 = vmul.f32 %v741, %v693
      %v746 = vmul.f32 %v742, %v693
      %v749 = vrot.slane %v745, 1
      %v750 = vrot.slane %v746, 1
      %v751 = vsel %vm348, %v749, %v750
      %v753 = vadd.f32 %v744, %v751
      %v754 = vmul.f32 %v741, %v708
      %v755 = vmul.f32 %v742, %v708
      %v758 = vrot.slane %v754, 2
      %v759 = vrot.slane %v755, 2
      %v760 = vsel %vm364, %v758, %v759
      %v762 = vadd.f32 %v753, %v760
      %v763 = vunpack.c.l.bf16 %v667
      %v764 = vunpack.c.l.bf16 %v668
      %v765 = vmul.f32 %v763, %v685
      %v766 = vadd.f32 %v650, %v765
      %v767 = vmul.f32 %v763, %v693
      %v768 = vmul.f32 %v764, %v693
      %v771 = vrot.slane %v767, 1
      %v772 = vrot.slane %v768, 1
      %v773 = vsel %vm348, %v771, %v772
      %v775 = vadd.f32 %v766, %v773
      %v776 = vmul.f32 %v763, %v708
      %v777 = vmul.f32 %v764, %v708
      %v780 = vrot.slane %v776, 2
      %v781 = vrot.slane %v777, 2
      %v782 = vsel %vm364, %v780, %v781
      %v784 = vadd.f32 %v775, %v782
      %s785 = scalar_lea.vmem %s1, 12
      %v786 = vld [vmem:[%s785] sm:$0x1]
      %s787 = scalar_lea.vmem %s1, 13
      %v788 = vld [vmem:[%s787] sm:$0x1]
      %s789 = scalar_lea.vmem %s1, 14
      %v790 = vld [vmem:[%s789] sm:$0x1]
      %v791 = vunpack.c.l.bf16 %v657
      %v792 = vunpack.c.l.bf16 %v658
      %v794 = vlaneseq
      %v795 = vshrl.u32 %v794, 7
      %v796 = vsub.s32 0, %v795
      %v797 = vrot.slane %v786, %v796
      %v799 = vmul.f32 %v791, %v797
      %v800 = vadd.f32 %v718, %v799
      %v802 = vlaneseq
      %v803 = vshrl.u32 %v802, 7
      %v804 = vsub.s32 0, %v803
      %v805 = vrot.slane %v788, %v804
      %v807 = vmul.f32 %v791, %v805
      %v808 = vmul.f32 %v792, %v805
      %v811 = vrot.slane %v807, 1
      %v812 = vrot.slane %v808, 1
      %v813 = vsel %vm348, %v811, %v812
      %v815 = vadd.f32 %v800, %v813
      %v817 = vlaneseq
      %v818 = vshrl.u32 %v817, 7
      %v819 = vsub.s32 0, %v818
      %v820 = vrot.slane %v790, %v819
      %v822 = vmul.f32 %v791, %v820
      %v823 = vmul.f32 %v792, %v820
      %v826 = vrot.slane %v822, 2
      %v827 = vrot.slane %v823, 2
      %v828 = vsel %vm364, %v826, %v827
      %v830 = vadd.f32 %v815, %v828
      %v831 = vunpack.c.l.bf16 %v661
      %v832 = vunpack.c.l.bf16 %v662
      %v833 = vmul.f32 %v831, %v797
      %v834 = vadd.f32 %v740, %v833
      %v835 = vmul.f32 %v831, %v805
      %v836 = vmul.f32 %v832, %v805
      %v839 = vrot.slane %v835, 1
      %v840 = vrot.slane %v836, 1
      %v841 = vsel %vm348, %v839, %v840
      %v843 = vadd.f32 %v834, %v841
      %v844 = vmul.f32 %v831, %v820
      %v845 = vmul.f32 %v832, %v820
      %v848 = vrot.slane %v844, 2
      %v849 = vrot.slane %v845, 2
      %v850 = vsel %vm364, %v848, %v849
      %v852 = vadd.f32 %v843, %v850
      %v853 = vunpack.c.l.bf16 %v665
      %v854 = vunpack.c.l.bf16 %v666
      %v855 = vmul.f32 %v853, %v797
      %v856 = vadd.f32 %v762, %v855
      %v857 = vmul.f32 %v853, %v805
      %v858 = vmul.f32 %v854, %v805
      %v861 = vrot.slane %v857, 1
      %v862 = vrot.slane %v858, 1
      %v863 = vsel %vm348, %v861, %v862
      %v865 = vadd.f32 %v856, %v863
      %v866 = vmul.f32 %v853, %v820
      %v867 = vmul.f32 %v854, %v820
      %v870 = vrot.slane %v866, 2
      %v871 = vrot.slane %v867, 2
      %v872 = vsel %vm364, %v870, %v871
      %v874 = vadd.f32 %v865, %v872
      %v875 = vunpack.c.l.bf16 %v669
      %v876 = vunpack.c.l.bf16 %v670
      %v877 = vmul.f32 %v875, %v797
      %v878 = vadd.f32 %v784, %v877
      %v879 = vmul.f32 %v875, %v805
      %v880 = vmul.f32 %v876, %v805
      %v883 = vrot.slane %v879, 1
      %v884 = vrot.slane %v880, 1
      %v885 = vsel %vm348, %v883, %v884
      %v887 = vadd.f32 %v878, %v885
      %v888 = vmul.f32 %v875, %v820
      %v889 = vmul.f32 %v876, %v820
      %v892 = vrot.slane %v888, 2
      %v893 = vrot.slane %v889, 2
      %v894 = vsel %vm364, %v892, %v893
      %v896 = vadd.f32 %v887, %v894
      %s897 = scalar_lea.vmem %s1, 15
      %v898 = vld [vmem:[%s897] sm:$0x1]
      %s899 = scalar_lea.vmem %s1, 16
      %v900 = vld [vmem:[%s899] sm:$0x1]
      %s901 = scalar_lea.vmem %s1, 17
      %v902 = vld [vmem:[%s901] sm:$0x1]
      %v904 = vlaneseq
      %v905 = vshrl.u32 %v904, 7
      %v906 = vsub.s32 0, %v905
      %v907 = vrot.slane %v898, %v906
      %v909 = vmul.f32 %v719, %v907
      %v910 = vadd.f32 %v830, %v909
      %v912 = vlaneseq
      %v913 = vshrl.u32 %v912, 7
      %v914 = vsub.s32 0, %v913
      %v915 = vrot.slane %v900, %v914
      %v917 = vmul.f32 %v719, %v915
      %v918 = vmul.f32 %v720, %v915
      %v921 = vrot.slane %v917, 1
      %v922 = vrot.slane %v918, 1
      %v923 = vsel %vm348, %v921, %v922
      %v925 = vadd.f32 %v910, %v923
      %v927 = vlaneseq
      %v928 = vshrl.u32 %v927, 7
      %v929 = vsub.s32 0, %v928
      %v930 = vrot.slane %v902, %v929
      %v932 = vmul.f32 %v719, %v930
      %v933 = vmul.f32 %v720, %v930
      %v936 = vrot.slane %v932, 2
      %v937 = vrot.slane %v933, 2
      %v938 = vsel %vm364, %v936, %v937
      %v940 = vadd.f32 %v925, %v938
      %v941 = vmul.f32 %v741, %v907
      %v942 = vadd.f32 %v852, %v941
      %v943 = vmul.f32 %v741, %v915
      %v944 = vmul.f32 %v742, %v915
      %v947 = vrot.slane %v943, 1
      %v948 = vrot.slane %v944, 1
      %v949 = vsel %vm348, %v947, %v948
      %v951 = vadd.f32 %v942, %v949
      %v952 = vmul.f32 %v741, %v930
      %v953 = vmul.f32 %v742, %v930
      %v956 = vrot.slane %v952, 2
      %v957 = vrot.slane %v953, 2
      %v958 = vsel %vm364, %v956, %v957
      %v960 = vadd.f32 %v951, %v958
      %v961 = vmul.f32 %v763, %v907
      %v962 = vadd.f32 %v874, %v961
      %v963 = vmul.f32 %v763, %v915
      %v964 = vmul.f32 %v764, %v915
      %v967 = vrot.slane %v963, 1
      %v968 = vrot.slane %v964, 1
      %v969 = vsel %vm348, %v967, %v968
      %v971 = vadd.f32 %v962, %v969
      %v972 = vmul.f32 %v763, %v930
      %v973 = vmul.f32 %v764, %v930
      %v976 = vrot.slane %v972, 2
      %v977 = vrot.slane %v973, 2
      %v978 = vsel %vm364, %v976, %v977
      %v980 = vadd.f32 %v971, %v978
      %v981 = vunpack.c.l.bf16 %v671
      %v982 = vunpack.c.l.bf16 %v672
      %v983 = vmul.f32 %v981, %v907
      %v984 = vadd.f32 %v896, %v983
      %v985 = vmul.f32 %v981, %v915
      %v986 = vmul.f32 %v982, %v915
      %v989 = vrot.slane %v985, 1
      %v990 = vrot.slane %v986, 1
      %v991 = vsel %vm348, %v989, %v990
      %v993 = vadd.f32 %v984, %v991
      %v994 = vmul.f32 %v981, %v930
      %v995 = vmul.f32 %v982, %v930
      %v998 = vrot.slane %v994, 2
      %v999 = vrot.slane %v995, 2
      %v1000 = vsel %vm364, %v998, %v999
      %v1002 = vadd.f32 %v993, %v1000
      %s1003 = sadd.s32 %s302, 2
      %s1004 = smul.u32 %s1003, 20
      %s1005 = smul.addr %s1004, 4
      %s1006 = scalar_lea.vmem %s291, %s1005
      %v1007 = vld [vmem:[%s1006] sm:$0xf]
      %v1008 = vld [vmem:[%s1006 + $0x4] sm:$0x1]
      %v1009 = vld [vmem:[%s1006 + $0x8] sm:$0xf]
      %v1010 = vld [vmem:[%s1006 + $0xc] sm:$0x1]
      %v1011 = vld [vmem:[%s1006 + $0x10] sm:$0xf]
      %v1012 = vld [vmem:[%s1006 + $0x14] sm:$0x1]
      %v1013 = vld [vmem:[%s1006 + $0x18] sm:$0xf]
      %v1014 = vld [vmem:[%s1006 + $0x1c] sm:$0x1]
      %v1015 = vld [vmem:[%s1006 + $0x20] sm:$0xf]
      %v1016 = vld [vmem:[%s1006 + $0x24] sm:$0x1]
      %v1017 = vld [vmem:[%s1006 + $0x28] sm:$0xf]
      %v1018 = vld [vmem:[%s1006 + $0x2c] sm:$0x1]
      %v1019 = vld [vmem:[%s1006 + $0x30] sm:$0xf]
      %v1020 = vld [vmem:[%s1006 + $0x34] sm:$0x1]
      %v1021 = vld [vmem:[%s1006 + $0x38] sm:$0xf]
      %v1022 = vld [vmem:[%s1006 + $0x3c] sm:$0x1]
      %v1023 = vld [vmem:[%s1006 + $0x40] sm:$0xf]
      %v1024 = vld [vmem:[%s1006 + $0x44] sm:$0x1]
      %s1025 = scalar_lea.vmem %s1, 18
      %v1026 = vld [vmem:[%s1025] sm:$0x1]
      %s1027 = scalar_lea.vmem %s1, 19
      %v1028 = vld [vmem:[%s1027] sm:$0x1]
      %s1029 = scalar_lea.vmem %s1, 20
      %v1030 = vld [vmem:[%s1029] sm:$0x1]
      %v1031 = vunpack.c.l.bf16 %v1007
      %v1032 = vunpack.c.l.bf16 %v1008
      %v1034 = vlaneseq
      %v1035 = vshrl.u32 %v1034, 7
      %v1036 = vsub.s32 0, %v1035
      %v1037 = vrot.slane %v1026, %v1036
      %v1039 = vmul.f32 %v1031, %v1037
      %v1040 = vadd.f32 %v940, %v1039
      %v1042 = vlaneseq
      %v1043 = vshrl.u32 %v1042, 7
      %v1044 = vsub.s32 0, %v1043
      %v1045 = vrot.slane %v1028, %v1044
      %v1047 = vmul.f32 %v1031, %v1045
      %v1048 = vmul.f32 %v1032, %v1045
      %v1051 = vrot.slane %v1047, 1
      %v1052 = vrot.slane %v1048, 1
      %v1053 = vsel %vm348, %v1051, %v1052
      %v1055 = vadd.f32 %v1040, %v1053
      %v1057 = vlaneseq
      %v1058 = vshrl.u32 %v1057, 7
      %v1059 = vsub.s32 0, %v1058
      %v1060 = vrot.slane %v1030, %v1059
      %v1062 = vmul.f32 %v1031, %v1060
      %v1063 = vmul.f32 %v1032, %v1060
      %v1066 = vrot.slane %v1062, 2
      %v1067 = vrot.slane %v1063, 2
      %v1068 = vsel %vm364, %v1066, %v1067
      %v1070 = vadd.f32 %v1055, %v1068
      %v1071 = vunpack.c.l.bf16 %v1011
      %v1072 = vunpack.c.l.bf16 %v1012
      %v1073 = vmul.f32 %v1071, %v1037
      %v1074 = vadd.f32 %v960, %v1073
      %v1075 = vmul.f32 %v1071, %v1045
      %v1076 = vmul.f32 %v1072, %v1045
      %v1079 = vrot.slane %v1075, 1
      %v1080 = vrot.slane %v1076, 1
      %v1081 = vsel %vm348, %v1079, %v1080
      %v1083 = vadd.f32 %v1074, %v1081
      %v1084 = vmul.f32 %v1071, %v1060
      %v1085 = vmul.f32 %v1072, %v1060
      %v1088 = vrot.slane %v1084, 2
      %v1089 = vrot.slane %v1085, 2
      %v1090 = vsel %vm364, %v1088, %v1089
      %v1092 = vadd.f32 %v1083, %v1090
      %v1093 = vunpack.c.l.bf16 %v1015
      %v1094 = vunpack.c.l.bf16 %v1016
      %v1095 = vmul.f32 %v1093, %v1037
      %v1096 = vadd.f32 %v980, %v1095
      %v1097 = vmul.f32 %v1093, %v1045
      %v1098 = vmul.f32 %v1094, %v1045
      %v1101 = vrot.slane %v1097, 1
      %v1102 = vrot.slane %v1098, 1
      %v1103 = vsel %vm348, %v1101, %v1102
      %v1105 = vadd.f32 %v1096, %v1103
      %v1106 = vmul.f32 %v1093, %v1060
      %v1107 = vmul.f32 %v1094, %v1060
      %v1110 = vrot.slane %v1106, 2
      %v1111 = vrot.slane %v1107, 2
      %v1112 = vsel %vm364, %v1110, %v1111
      %v1114 = vadd.f32 %v1105, %v1112
      %v1115 = vunpack.c.l.bf16 %v1019
      %v1116 = vunpack.c.l.bf16 %v1020
      %v1117 = vmul.f32 %v1115, %v1037
      %v1118 = vadd.f32 %v1002, %v1117
      %v1119 = vmul.f32 %v1115, %v1045
      %v1120 = vmul.f32 %v1116, %v1045
      %v1123 = vrot.slane %v1119, 1
      %v1124 = vrot.slane %v1120, 1
      %v1125 = vsel %vm348, %v1123, %v1124
      %v1127 = vadd.f32 %v1118, %v1125
      %v1128 = vmul.f32 %v1115, %v1060
      %v1129 = vmul.f32 %v1116, %v1060
      %v1132 = vrot.slane %v1128, 2
      %v1133 = vrot.slane %v1129, 2
      %v1134 = vsel %vm364, %v1132, %v1133
      %v1136 = vadd.f32 %v1127, %v1134
      %s1137 = scalar_lea.vmem %s1, 21
      %v1138 = vld [vmem:[%s1137] sm:$0x1]
      %s1139 = scalar_lea.vmem %s1, 22
      %v1140 = vld [vmem:[%s1139] sm:$0x1]
      %s1141 = scalar_lea.vmem %s1, 23
      %v1142 = vld [vmem:[%s1141] sm:$0x1]
      %v1143 = vunpack.c.l.bf16 %v1009
      %v1144 = vunpack.c.l.bf16 %v1010
      %v1146 = vlaneseq
      %v1147 = vshrl.u32 %v1146, 7
      %v1148 = vsub.s32 0, %v1147
      %v1149 = vrot.slane %v1138, %v1148
      %v1151 = vmul.f32 %v1143, %v1149
      %v1152 = vadd.f32 %v1070, %v1151
      %v1154 = vlaneseq
      %v1155 = vshrl.u32 %v1154, 7
      %v1156 = vsub.s32 0, %v1155
      %v1157 = vrot.slane %v1140, %v1156
      %v1159 = vmul.f32 %v1143, %v1157
      %v1160 = vmul.f32 %v1144, %v1157
      %v1163 = vrot.slane %v1159, 1
      %v1164 = vrot.slane %v1160, 1
      %v1165 = vsel %vm348, %v1163, %v1164
      %v1167 = vadd.f32 %v1152, %v1165
      %v1169 = vlaneseq
      %v1170 = vshrl.u32 %v1169, 7
      %v1171 = vsub.s32 0, %v1170
      %v1172 = vrot.slane %v1142, %v1171
      %v1174 = vmul.f32 %v1143, %v1172
      %v1175 = vmul.f32 %v1144, %v1172
      %v1178 = vrot.slane %v1174, 2
      %v1179 = vrot.slane %v1175, 2
      %v1180 = vsel %vm364, %v1178, %v1179
      %v1182 = vadd.f32 %v1167, %v1180
      %v1183 = vunpack.c.l.bf16 %v1013
      %v1184 = vunpack.c.l.bf16 %v1014
      %v1185 = vmul.f32 %v1183, %v1149
      %v1186 = vadd.f32 %v1092, %v1185
      %v1187 = vmul.f32 %v1183, %v1157
      %v1188 = vmul.f32 %v1184, %v1157
      %v1191 = vrot.slane %v1187, 1
      %v1192 = vrot.slane %v1188, 1
      %v1193 = vsel %vm348, %v1191, %v1192
      %v1195 = vadd.f32 %v1186, %v1193
      %v1196 = vmul.f32 %v1183, %v1172
      %v1197 = vmul.f32 %v1184, %v1172
      %v1200 = vrot.slane %v1196, 2
      %v1201 = vrot.slane %v1197, 2
      %v1202 = vsel %vm364, %v1200, %v1201
      %v1204 = vadd.f32 %v1195, %v1202
      %v1205 = vunpack.c.l.bf16 %v1017
      %v1206 = vunpack.c.l.bf16 %v1018
      %v1207 = vmul.f32 %v1205, %v1149
      %v1208 = vadd.f32 %v1114, %v1207
      %v1209 = vmul.f32 %v1205, %v1157
      %v1210 = vmul.f32 %v1206, %v1157
      %v1213 = vrot.slane %v1209, 1
      %v1214 = vrot.slane %v1210, 1
      %v1215 = vsel %vm348, %v1213, %v1214
      %v1217 = vadd.f32 %v1208, %v1215
      %v1218 = vmul.f32 %v1205, %v1172
      %v1219 = vmul.f32 %v1206, %v1172
      %v1222 = vrot.slane %v1218, 2
      %v1223 = vrot.slane %v1219, 2
      %v1224 = vsel %vm364, %v1222, %v1223
      %v1226 = vadd.f32 %v1217, %v1224
      %v1227 = vunpack.c.l.bf16 %v1021
      %v1228 = vunpack.c.l.bf16 %v1022
      %v1229 = vmul.f32 %v1227, %v1149
      %v1230 = vadd.f32 %v1136, %v1229
      %v1231 = vmul.f32 %v1227, %v1157
      %v1232 = vmul.f32 %v1228, %v1157
      %v1235 = vrot.slane %v1231, 1
      %v1236 = vrot.slane %v1232, 1
      %v1237 = vsel %vm348, %v1235, %v1236
      %v1239 = vadd.f32 %v1230, %v1237
      %v1240 = vmul.f32 %v1227, %v1172
      %v1241 = vmul.f32 %v1228, %v1172
      %v1244 = vrot.slane %v1240, 2
      %v1245 = vrot.slane %v1241, 2
      %v1246 = vsel %vm364, %v1244, %v1245
      %v1248 = vadd.f32 %v1239, %v1246
      %s1249 = scalar_lea.vmem %s1, 24
      %v1250 = vld [vmem:[%s1249] sm:$0x1]
      %s1251 = scalar_lea.vmem %s1, 25
      %v1252 = vld [vmem:[%s1251] sm:$0x1]
      %s1253 = scalar_lea.vmem %s1, 26
      %v1254 = vld [vmem:[%s1253] sm:$0x1]
      %v1256 = vlaneseq
      %v1257 = vshrl.u32 %v1256, 7
      %v1258 = vsub.s32 0, %v1257
      %v1259 = vrot.slane %v1250, %v1258
      %v1261 = vmul.f32 %v1071, %v1259
      %v1262 = vadd.f32 %v1182, %v1261
      %v1264 = vlaneseq
      %v1265 = vshrl.u32 %v1264, 7
      %v1266 = vsub.s32 0, %v1265
      %v1267 = vrot.slane %v1252, %v1266
      %v1269 = vmul.f32 %v1071, %v1267
      %v1270 = vmul.f32 %v1072, %v1267
      %v1273 = vrot.slane %v1269, 1
      %v1274 = vrot.slane %v1270, 1
      %v1275 = vsel %vm348, %v1273, %v1274
      %v1277 = vadd.f32 %v1262, %v1275
      %v1279 = vlaneseq
      %v1280 = vshrl.u32 %v1279, 7
      %v1281 = vsub.s32 0, %v1280
      %v1282 = vrot.slane %v1254, %v1281
      %v1284 = vmul.f32 %v1071, %v1282
      %v1285 = vmul.f32 %v1072, %v1282
      %v1288 = vrot.slane %v1284, 2
      %v1289 = vrot.slane %v1285, 2
      %v1290 = vsel %vm364, %v1288, %v1289
      %v1292 = vadd.f32 %v1277, %v1290
      %v1293 = vmul.f32 %v1093, %v1259
      %v1294 = vadd.f32 %v1204, %v1293
      %v1295 = vmul.f32 %v1093, %v1267
      %v1296 = vmul.f32 %v1094, %v1267
      %v1299 = vrot.slane %v1295, 1
      %v1300 = vrot.slane %v1296, 1
      %v1301 = vsel %vm348, %v1299, %v1300
      %v1303 = vadd.f32 %v1294, %v1301
      %v1304 = vmul.f32 %v1093, %v1282
      %v1305 = vmul.f32 %v1094, %v1282
      %v1308 = vrot.slane %v1304, 2
      %v1309 = vrot.slane %v1305, 2
      %v1310 = vsel %vm364, %v1308, %v1309
      %v1312 = vadd.f32 %v1303, %v1310
      %v1313 = vmul.f32 %v1115, %v1259
      %v1314 = vadd.f32 %v1226, %v1313
      %v1315 = vmul.f32 %v1115, %v1267
      %v1316 = vmul.f32 %v1116, %v1267
      %v1319 = vrot.slane %v1315, 1
      %v1320 = vrot.slane %v1316, 1
      %v1321 = vsel %vm348, %v1319, %v1320
      %v1323 = vadd.f32 %v1314, %v1321
      %v1324 = vmul.f32 %v1115, %v1282
      %v1325 = vmul.f32 %v1116, %v1282
      %v1328 = vrot.slane %v1324, 2
      %v1329 = vrot.slane %v1325, 2
      %v1330 = vsel %vm364, %v1328, %v1329
      %v1332 = vadd.f32 %v1323, %v1330
      %v1333 = vunpack.c.l.bf16 %v1023
      %v1334 = vunpack.c.l.bf16 %v1024
      %v1335 = vmul.f32 %v1333, %v1259
      %v1336 = vadd.f32 %v1248, %v1335
      %v1337 = vmul.f32 %v1333, %v1267
      %v1338 = vmul.f32 %v1334, %v1267
      %v1341 = vrot.slane %v1337, 1
      %v1342 = vrot.slane %v1338, 1
      %v1343 = vsel %vm348, %v1341, %v1342
      %v1345 = vadd.f32 %v1336, %v1343
      %v1346 = vmul.f32 %v1333, %v1282
      %v1347 = vmul.f32 %v1334, %v1282
      %v1350 = vrot.slane %v1346, 2
      %v1351 = vrot.slane %v1347, 2
      %v1352 = vsel %vm364, %v1350, %v1351
      %v1354 = vadd.f32 %v1345, %v1352
      %v1355 = vld [vmem:[%s2] sm:$0x1]
      %v1356 = vld [vmem:[%s3] sm:$0x1]
      %v1357 = vld [vmem:[%s4] sm:$0xf]
      %v1358 = vld [vmem:[%s4 + $0x4] sm:$0xf]
      %v1359 = vld [vmem:[%s4 + $0x8] sm:$0xf]
      %v1360 = vld [vmem:[%s4 + $0xc] sm:$0xf]
      %v1361 = vld [vmem:[%s4 + $0x10] sm:$0xf]
      %v1362 = vld [vmem:[%s4 + $0x14] sm:$0xf]
      %v1363 = vld [vmem:[%s4 + $0x18] sm:$0xf]
      %v1364 = vld [vmem:[%s4 + $0x1c] sm:$0xf]
      %v1365 = vld [vmem:[%s4 + $0x20] sm:$0xf]
      %v1366 = vld [vmem:[%s4 + $0x24] sm:$0xf]
      %v1367 = vld [vmem:[%s4 + $0x28] sm:$0xf]
      %v1368 = vld [vmem:[%s4 + $0x2c] sm:$0xf]
      %v1369 = vld [vmem:[%s4 + $0x30] sm:$0xf]
      %v1370 = vld [vmem:[%s4 + $0x34] sm:$0xf]
      %v1371 = vld [vmem:[%s4 + $0x38] sm:$0xf]
      %v1372 = vld [vmem:[%s4 + $0x3c] sm:$0xf]
      %v1373 = vld [vmem:[%s5] sm:$0x1]
      %v1374 = vld [vmem:[%s6] sm:$0x1]
      %v1376 = vlaneseq
      %v1377 = vshrl.u32 %v1376, 7
      %v1378 = vsub.s32 0, %v1377
      %v1379 = vrot.slane %v1355, %v1378
      %v1381 = vmul.f32 %v1292, %v1379
      %v1383 = vlaneseq
      %v1384 = vshrl.u32 %v1383, 7
      %v1385 = vsub.s32 0, %v1384
      %v1386 = vrot.slane %v1356, %v1385
      %v1388 = vadd.f32 %v1381, %v1386
      %v1389 = vmax.f32 %v1388, 0.0
      %v1390 = vpack.c.bf16 %v1389, %v1389
      %v1407 = vunpack.c.l.b16 %v1357
      %v1408 = vunpack.c.l.b16 %v1358
      %v1409 = vunpack.c.l.b16 %v1359
      %v1410 = vunpack.c.l.b16 %v1360
      %v1411 = vunpack.c.l.b16 %v1361
      %v1412 = vunpack.c.l.b16 %v1362
      %v1413 = vunpack.c.l.b16 %v1363
      %v1414 = vunpack.c.l.b16 %v1364
      %v1415 = vunpack.c.l.b16 %v1365
      %v1416 = vunpack.c.l.b16 %v1366
      %v1417 = vunpack.c.l.b16 %v1367
      %v1418 = vunpack.c.l.b16 %v1368
      %v1419 = vunpack.c.l.b16 %v1369
      %v1420 = vunpack.c.l.b16 %v1370
      %v1421 = vunpack.c.l.b16 %v1371
      %v1422 = vunpack.c.l.b16 %v1372
      %v1423 = vpack.c.b16 %v1408, %v1407
      %v1424 = vpack.c.b16 %v1410, %v1409
      %v1425 = vpack.c.b16 %v1412, %v1411
      %v1426 = vpack.c.b16 %v1414, %v1413
      %v1427 = vpack.c.b16 %v1416, %v1415
      %v1428 = vpack.c.b16 %v1418, %v1417
      %v1429 = vpack.c.b16 %v1420, %v1419
      %v1430 = vpack.c.b16 %v1422, %v1421
      %1439 = vmatprep.subr.bf16.mxu0 0
      %1440 = vmatpush1.bf16.msra.mxu0 %v1423
      %1441 = vmatprep.subr.bf16.mxu0 0
      %1442 = vmatpush1.bf16.msra.mxu0 %v1424
      %1443 = vmatprep.subr.bf16.mxu0 0
      %1444 = vmatpush1.bf16.msra.mxu0 %v1425
      %1445 = vmatprep.subr.bf16.mxu0 0
      %1446 = vmatpush1.bf16.msra.mxu0 %v1426
      %1447 = vmatprep.subr.bf16.mxu0 0
      %1448 = vmatpush1.bf16.msra.mxu0 %v1427
      %1449 = vmatprep.subr.bf16.mxu0 0
      %1450 = vmatpush1.bf16.msra.mxu0 %v1428
      %1451 = vmatprep.subr.bf16.mxu0 0
      %1452 = vmatpush1.bf16.msra.mxu0 %v1429
      %1453 = vmatprep.subr.bf16.mxu0 0
      %1454 = vmatpush1.bf16.msra.mxu0 %v1430
      %1455 = vmatprep.subr.bf16.mxu0 0
      %1456 = vmatpush1.bf16.msra.mxu0 0
      %1457 = vmatprep.subr.bf16.mxu0 0
      %1458 = vmatpush1.bf16.msra.mxu0 0
      %1459 = vmatprep.subr.bf16.mxu0 0
      %1460 = vmatpush1.bf16.msra.mxu0 0
      %1461 = vmatprep.subr.bf16.mxu0 0
      %1462 = vmatpush1.bf16.msra.mxu0 0
      %1463 = vmatprep.subr.bf16.mxu0 0
      %1464 = vmatpush1.bf16.msra.mxu0 0
      %1465 = vmatprep.subr.bf16.mxu0 0
      %1466 = vmatpush1.bf16.msra.mxu0 0
      %1467 = vmatprep.subr.bf16.mxu0 0
      %1468 = vmatpush1.bf16.msra.mxu0 0
      %1469 = vmatprep.subr.bf16.mxu0 0
      %1470 = vmatpush1.bf16.msra.mxu0 0
      %1471 = vmatprep.mubr.bf16.mxu0 0
      %1472 = vmatmul.mubr.bf16.gmra.mrb[0].mxu0 %v1390
      %v1473 = vpop.f32.mrb[0].mxu0
      %v1474 = vadd.f32 0.0, %v1473
      %v1475 = vpop.f32.mrb[0].mxu0
      %v1476 = vpop.f32.mrb[0].mxu0
      %v1477 = vpop.f32.mrb[0].mxu0
      %1478 = vdwg.mxu0
      %v1480 = vlaneseq
      %v1481 = vshrl.u32 %v1480, 7
      %v1482 = vsub.s32 0, %v1481
      %v1483 = vrot.slane %v1373, %v1482
      %v1485 = vmul.f32 %v1474, %v1483
      %v1487 = vlaneseq
      %v1488 = vshrl.u32 %v1487, 7
      %v1489 = vsub.s32 0, %v1488
      %v1490 = vrot.slane %v1374, %v1489
      %v1492 = vadd.f32 %v1485, %v1490
      %v1493 = vmax.f32 %v1492, 0.0
      %v1494 = vpack.c.bf16 %v1493, %v1493
      %1495 = vst [vmem:[%s300] sm:$0xf] %v1494
      %v1496 = vmul.f32 %v1312, %v1379
      %v1497 = vadd.f32 %v1496, %v1386
      %v1498 = vmax.f32 %v1497, 0.0
      %v1499 = vpack.c.bf16 %v1498, %v1498
      %1500 = vmatprep.subr.bf16.mxu0 0
      %1501 = vmatpush1.bf16.msra.mxu0 %v1423
      %1502 = vmatprep.subr.bf16.mxu0 0
      %1503 = vmatpush1.bf16.msra.mxu0 %v1424
      %1504 = vmatprep.subr.bf16.mxu0 0
      %1505 = vmatpush1.bf16.msra.mxu0 %v1425
      %1506 = vmatprep.subr.bf16.mxu0 0
      %1507 = vmatpush1.bf16.msra.mxu0 %v1426
      %1508 = vmatprep.subr.bf16.mxu0 0
      %1509 = vmatpush1.bf16.msra.mxu0 %v1427
      %1510 = vmatprep.subr.bf16.mxu0 0
      %1511 = vmatpush1.bf16.msra.mxu0 %v1428
      %1512 = vmatprep.subr.bf16.mxu0 0
      %1513 = vmatpush1.bf16.msra.mxu0 %v1429
      %1514 = vmatprep.subr.bf16.mxu0 0
      %1515 = vmatpush1.bf16.msra.mxu0 %v1430
      %1516 = vmatprep.subr.bf16.mxu0 0
      %1517 = vmatpush1.bf16.msra.mxu0 0
      %1518 = vmatprep.subr.bf16.mxu0 0
      %1519 = vmatpush1.bf16.msra.mxu0 0
      %1520 = vmatprep.subr.bf16.mxu0 0
      %1521 = vmatpush1.bf16.msra.mxu0 0
      %1522 = vmatprep.subr.bf16.mxu0 0
      %1523 = vmatpush1.bf16.msra.mxu0 0
      %1524 = vmatprep.subr.bf16.mxu0 0
      %1525 = vmatpush1.bf16.msra.mxu0 0
      %1526 = vmatprep.subr.bf16.mxu0 0
      %1527 = vmatpush1.bf16.msra.mxu0 0
      %1528 = vmatprep.subr.bf16.mxu0 0
      %1529 = vmatpush1.bf16.msra.mxu0 0
      %1530 = vmatprep.subr.bf16.mxu0 0
      %1531 = vmatpush1.bf16.msra.mxu0 0
      %1532 = vmatprep.mubr.bf16.mxu0 0
      %1533 = vmatmul.mubr.bf16.gmra.mrb[0].mxu0 %v1499
      %v1534 = vpop.f32.mrb[0].mxu0
      %v1535 = vadd.f32 0.0, %v1534
      %v1536 = vpop.f32.mrb[0].mxu0
      %v1537 = vpop.f32.mrb[0].mxu0
      %v1538 = vpop.f32.mrb[0].mxu0
      %1539 = vdwg.mxu0
      %v1540 = vmul.f32 %v1535, %v1483
      %v1541 = vadd.f32 %v1540, %v1490
      %v1542 = vmax.f32 %v1541, 0.0
      %v1543 = vpack.c.bf16 %v1542, %v1542
      %s1544 = scalar_lea.vmem %s300, 4
      %1545 = vst [vmem:[%s1544] sm:$0xf] %v1543
      %v1546 = vmul.f32 %v1332, %v1379
      %v1547 = vadd.f32 %v1546, %v1386
      %v1548 = vmax.f32 %v1547, 0.0
      %v1549 = vpack.c.bf16 %v1548, %v1548
      %1550 = vmatprep.subr.bf16.mxu0 0
      %1551 = vmatpush1.bf16.msra.mxu0 %v1423
      %1552 = vmatprep.subr.bf16.mxu0 0
      %1553 = vmatpush1.bf16.msra.mxu0 %v1424
      %1554 = vmatprep.subr.bf16.mxu0 0
      %1555 = vmatpush1.bf16.msra.mxu0 %v1425
      %1556 = vmatprep.subr.bf16.mxu0 0
      %1557 = vmatpush1.bf16.msra.mxu0 %v1426
      %1558 = vmatprep.subr.bf16.mxu0 0
      %1559 = vmatpush1.bf16.msra.mxu0 %v1427
      %1560 = vmatprep.subr.bf16.mxu0 0
      %1561 = vmatpush1.bf16.msra.mxu0 %v1428
      %1562 = vmatprep.subr.bf16.mxu0 0
      %1563 = vmatpush1.bf16.msra.mxu0 %v1429
      %1564 = vmatprep.subr.bf16.mxu0 0
      %1565 = vmatpush1.bf16.msra.mxu0 %v1430
      %1566 = vmatprep.subr.bf16.mxu0 0
      %1567 = vmatpush1.bf16.msra.mxu0 0
      %1568 = vmatprep.subr.bf16.mxu0 0
      %1569 = vmatpush1.bf16.msra.mxu0 0
      %1570 = vmatprep.subr.bf16.mxu0 0
      %1571 = vmatpush1.bf16.msra.mxu0 0
      %1572 = vmatprep.subr.bf16.mxu0 0
      %1573 = vmatpush1.bf16.msra.mxu0 0
      %1574 = vmatprep.subr.bf16.mxu0 0
      %1575 = vmatpush1.bf16.msra.mxu0 0
      %1576 = vmatprep.subr.bf16.mxu0 0
      %1577 = vmatpush1.bf16.msra.mxu0 0
      %1578 = vmatprep.subr.bf16.mxu0 0
      %1579 = vmatpush1.bf16.msra.mxu0 0
      %1580 = vmatprep.subr.bf16.mxu0 0
      %1581 = vmatpush1.bf16.msra.mxu0 0
      %1582 = vmatprep.mubr.bf16.mxu0 0
      %1583 = vmatmul.mubr.bf16.gmra.mrb[0].mxu0 %v1549
      %v1584 = vpop.f32.mrb[0].mxu0
      %v1585 = vadd.f32 0.0, %v1584
      %v1586 = vpop.f32.mrb[0].mxu0
      %v1587 = vpop.f32.mrb[0].mxu0
      %v1588 = vpop.f32.mrb[0].mxu0
      %1589 = vdwg.mxu0
      %v1590 = vmul.f32 %v1585, %v1483
      %v1591 = vadd.f32 %v1590, %v1490
      %v1592 = vmax.f32 %v1591, 0.0
      %v1593 = vpack.c.bf16 %v1592, %v1592
      %s1594 = scalar_lea.vmem %s300, 8
      %1595 = vst [vmem:[%s1594] sm:$0xf] %v1593
      %v1596 = vmul.f32 %v1354, %v1379
      %v1597 = vadd.f32 %v1596, %v1386
      %v1598 = vmax.f32 %v1597, 0.0
      %v1599 = vpack.c.bf16 %v1598, %v1598
      %1600 = vmatprep.subr.bf16.mxu0 0
      %1601 = vmatpush1.bf16.msra.mxu0 %v1423
      %1602 = vmatprep.subr.bf16.mxu0 0
      %1603 = vmatpush1.bf16.msra.mxu0 %v1424
      %1604 = vmatprep.subr.bf16.mxu0 0
      %1605 = vmatpush1.bf16.msra.mxu0 %v1425
      %1606 = vmatprep.subr.bf16.mxu0 0
      %1607 = vmatpush1.bf16.msra.mxu0 %v1426
      %1608 = vmatprep.subr.bf16.mxu0 0
      %1609 = vmatpush1.bf16.msra.mxu0 %v1427
      %1610 = vmatprep.subr.bf16.mxu0 0
      %1611 = vmatpush1.bf16.msra.mxu0 %v1428
      %1612 = vmatprep.subr.bf16.mxu0 0
      %1613 = vmatpush1.bf16.msra.mxu0 %v1429
      %1614 = vmatprep.subr.bf16.mxu0 0
      %1615 = vmatpush1.bf16.msra.mxu0 %v1430
      %1616 = vmatprep.subr.bf16.mxu0 0
      %1617 = vmatpush1.bf16.msra.mxu0 0
      %1618 = vmatprep.subr.bf16.mxu0 0
      %1619 = vmatpush1.bf16.msra.mxu0 0
      %1620 = vmatprep.subr.bf16.mxu0 0
      %1621 = vmatpush1.bf16.msra.mxu0 0
      %1622 = vmatprep.subr.bf16.mxu0 0
      %1623 = vmatpush1.bf16.msra.mxu0 0
      %1624 = vmatprep.subr.bf16.mxu0 0
      %1625 = vmatpush1.bf16.msra.mxu0 0
      %1626 = vmatprep.subr.bf16.mxu0 0
      %1627 = vmatpush1.bf16.msra.mxu0 0
      %1628 = vmatprep.subr.bf16.mxu0 0
      %1629 = vmatpush1.bf16.msra.mxu0 0
      %1630 = vmatprep.subr.bf16.mxu0 0
      %1631 = vmatpush1.bf16.msra.mxu0 0
      %1632 = vmatprep.mubr.bf16.mxu0 0
      %1633 = vmatmul.mubr.bf16.gmra.mrb[0].mxu0 %v1599
      %v1634 = vpop.f32.mrb[0].mxu0
      %v1635 = vadd.f32 0.0, %v1634
      %v1636 = vpop.f32.mrb[0].mxu0
      %v1637 = vpop.f32.mrb[0].mxu0
      %v1638 = vpop.f32.mrb[0].mxu0
      %1639 = vdwg.mxu0
      %v1640 = vmul.f32 %v1635, %v1483
      %v1641 = vadd.f32 %v1640, %v1490
      %v1642 = vmax.f32 %v1641, 0.0
      %v1643 = vpack.c.bf16 %v1642, %v1642
      %s1644 = scalar_lea.vmem %s300, 12
      %1645 = vst [vmem:[%s1644] sm:$0xf] %v1643
      %p1646 = scmp.lt.s32.totalorder %s22, 1
      %s1647 = scalar_select %p1646, %s22, 1
      %p1648 = scmp.lt.s32.totalorder %s23, 3
      %s1649 = scalar_select %p1648, %s23, 3
      %s1650 = smul.addr %s1649, 4
      %s1651 = smul.addr %s1647, 16
      %s1652 = sadd.s32 %s1650, %s1651
      %s1653 = smul.addr %s1652, 4
      %s1654 = scalar_lea.vmem %s7, %s1653
      // Predicated region
      $region49: #{mobilenet_forward.7} parent=47 // pred_check
        %p1655 = pneg %p202
      $region50: #{mobilenet_forward.7} parent=47 // pred_check_branch
        %1657 = sbr.rel (%p1655) target = $region52
      $region51: #{mobilenet_forward.7} parent=47 // pred_region
        _
      $region52: #{mobilenet_forward.7} parent=47 // pred_fallthru
        _
    $region48: #{mobilenet_forward.7} parent=5 // pred_fallthru
      _
    %p1658 = scmp.le.s32.totalorder 2, %s13
    // Predicated region
    $region53: #{mobilenet_forward.7} parent=5 // pred_check
      %p1659 = pneg %p1658
    $region54: #{mobilenet_forward.7} parent=5 // pred_check_branch
      %1661 = sbr.rel (%p1659) target = $region56
    $region55: #{mobilenet_forward.7} parent=5 // pred_region
      %s1662 = ssub.s32 %s13, 2
      // Predicated region
      $region57: #{mobilenet_forward.7} parent=55 // pred_check
        %p1663 = pneg %p208
      $region58: #{mobilenet_forward.7} parent=55 // pred_check_branch
        %1665 = sbr.rel (%p1663) target = $region60
      $region59: #{mobilenet_forward.7} parent=55 // pred_region
        %p1666 = scmp.lt.s32.totalorder %s24, 1
        %s1667 = scalar_select %p1666, %s24, 1
        %p1668 = scmp.lt.s32.totalorder %s25, 3
        %s1669 = scalar_select %p1668, %s25, 3
        %s1670 = smul.addr %s1669, 4
        %s1671 = smul.addr %s1667, 16
        %s1672 = sadd.s32 %s1670, %s1671
        %s1673 = smul.addr %s1672, 4
        %s1674 = scalar_lea.vmem %s7, %s1673
      $region60: #{mobilenet_forward.7} parent=55 // pred_fallthru
        _
    $region56: #{mobilenet_forward.7} parent=5 // pred_fallthru
      _
  $region6: #{mobilenet_forward.7} parent=0 // loop_footer
    %s17 = sadd.s32 1, %s13
  $region7: #{mobilenet_forward.7} parent=0 // loop_footer_branch
    %12 = sbr.rel target = $region3
  $region8: #{mobilenet_forward.7} parent=0 // loop_exit
    _

// kernel: mobilenet_forward.8
$region0: #{mobilenet_forward.8}
  #allocation0 [shape = 'u32[]', space=smem, size = 0x4, offset = 0x4, fixed_abs, tag = 'smem constant byte address 0x4 - core index']
  #allocation1 [shape = 'u32[144,128]{1,0:T(1,128)}', space=vmem, size = 0x12000, scoped, tag = 'internal scratch']
  %s0 = inlined_call_operand.vmem [shape: bf16[2,6,6,6,128], index: 0, kind: input, shape index: {}]
  %s1 = inlined_call_operand.vmem [shape: f32[27,1,128], index: 1, kind: input, shape index: {}]
  %s2 = inlined_call_operand.vmem [shape: f32[1,128], index: 2, kind: input, shape index: {}]
  %s3 = inlined_call_operand.vmem [shape: f32[1,128], index: 3, kind: input, shape index: {}]
  %s4 = inlined_call_operand.vmem [shape: bf16[128,128], index: 4, kind: input, shape index: {}]
  %s5 = inlined_call_operand.vmem [shape: f32[1,128], index: 5, kind: input, shape index: {}]
  %s6 = inlined_call_operand.vmem [shape: f32[1,128], index: 6, kind: input, shape index: {}]
  %s7 = inlined_call_operand.vmem [shape: bf16[2,2,2,4,128], index: 7, kind: output, shape index: {}]
  %s8 = sld [smem:[#allocation0]]
  $region61: #{mobilenet_forward.8} parent=0
    _
  %s10 = ssub.s32 1, %s8
  %s11 = scalar_select 0, %s10, %s8
  loop: start=0, step=1, limit=6
  $region2: #{mobilenet_forward.8} parent=0 // loop_pre_header
    _
  $region3: #{mobilenet_forward.8} parent=0 // loop_header
    %s13 = sphi 0, %s17
    %p14 = scmp.ge.s32.totalorder %s13, 6
    %s20 = sphi 0, %s32
    %s21 = sphi 0, %s28
    %s22 = sphi 0, %s20
    %s23 = sphi 0, %s21
    %s24 = sphi 0, %s22
    %s25 = sphi 0, %s23
    %s35 = sphi 0, %s37
    %s38 = sphi 0, %s35
    %s39 = sphi 0, %s38
    %s55 = sphi 0, %s39
    %s59 = sphi 0, %s59
    %s61 = sphi 0, %s59
    %s62 = sphi 0, %s61
    %s76 = sphi 0, %s62
    %s80 = sphi 0, %s80
    %s82 = sphi 0, %s80
    %s83 = sphi 0, %s82
    %s97 = sphi 0, %s83
    %s101 = sphi 0, %s101
    %s103 = sphi 0, %s101
    %s104 = sphi 0, %s103
    %s118 = sphi 0, %s104
    %s122 = sphi 0, %s122
    %s124 = sphi 0, %s122
    %s125 = sphi 0, %s124
    %s139 = sphi 0, %s125
    %s143 = sphi 0, %s143
    %s145 = sphi 0, %s143
    %s146 = sphi 0, %s145
    %s160 = sphi 0, %s146
    %s164 = sphi 0, %s164
    %s166 = sphi 0, %s164
    %s167 = sphi 0, %s166
    %s181 = sphi 0, %s167
    %s189 = sphi 0, %s191
    %s192 = sphi 0, %s189
    %s193 = sphi 0, %s192
    %s209 = sphi 0, %s193
  $region4: #{mobilenet_forward.8} parent=0 // loop_header_branch
    %16 = sbr.rel (%p14) target = $region8
  $region5: #{mobilenet_forward.8} parent=0 // loop_body
    %s18 = ssub.s32 %s13, 1
    %s19 = ssub.s32 %s13, 2
    %s26 = sadd.s32 1, %s21
    %p27 = scmp.ge.s32.totalorder %s26, 2
    %s28 = scalar_select %p27, 0, %s26
    %s29 = sadd.s32 1, %s20
    %s30 = scalar_select %p27, %s29, %s20
    %p31 = scmp.ge.s32.totalorder %s30, 2
    %s32 = scalar_select %p31, 0, %s30
    %s33 = ssub.s32 %s20, %s32
    %p34 = scmp.eq.s32.totalorder %s33, 0
    %s36 = sadd.s32 %s35, 1
    %s37 = scalar_select %p34, %s35, %s36
    %p40 = pneg %p34
    %p41 = scmp.eq.s32.totalorder %s13, 3
    %p42 = por %p40, %p41
    %p43 = scmp.ne.s32.totalorder %s35, %s38
    %p44 = scmp.eq.s32.totalorder %s13, 0
    %p45 = por %p43, %p44
    %p46 = scmp.ne.s32.totalorder %s35, %s38
    %p47 = scmp.eq.s32.totalorder %s18, 3
    %p48 = por %p46, %p47
    %p49 = scmp.ne.s32.totalorder %s38, %s39
    %p50 = scmp.eq.s32.totalorder %s18, 0
    %p51 = por %p49, %p50
    %p52 = scmp.ne.s32.totalorder %s38, %s39
    %p53 = scmp.eq.s32.totalorder %s19, 3
    %p54 = por %p52, %p53
    %p56 = scmp.ne.s32.totalorder %s39, %s55
    %p57 = scmp.eq.s32.totalorder %s19, 0
    %p58 = por %p56, %p57
    %s60 = sadd.s32 %s59, 1
    %p63 = scmp.eq.s32.totalorder %s13, 3
    %p64 = scmp.ne.s32.totalorder %s59, %s61
    %p65 = scmp.eq.s32.totalorder %s13, 0
    %p66 = por %p64, %p65
    %p67 = scmp.ne.s32.totalorder %s59, %s61
    %p68 = scmp.eq.s32.totalorder %s18, 3
    %p69 = por %p67, %p68
    %p70 = scmp.ne.s32.totalorder %s61, %s62
    %p71 = scmp.eq.s32.totalorder %s18, 0
    %p72 = por %p70, %p71
    %p73 = scmp.ne.s32.totalorder %s61, %s62
    %p74 = scmp.eq.s32.totalorder %s19, 3
    %p75 = por %p73, %p74
    %p77 = scmp.ne.s32.totalorder %s62, %s76
    %p78 = scmp.eq.s32.totalorder %s19, 0
    %p79 = por %p77, %p78
    %s81 = sadd.s32 %s80, 1
    %p84 = scmp.eq.s32.totalorder %s13, 3
    %p85 = scmp.ne.s32.totalorder %s80, %s82
    %p86 = scmp.eq.s32.totalorder %s13, 0
    %p87 = por %p85, %p86
    %p88 = scmp.ne.s32.totalorder %s80, %s82
    %p89 = scmp.eq.s32.totalorder %s18, 3
    %p90 = por %p88, %p89
    %p91 = scmp.ne.s32.totalorder %s82, %s83
    %p92 = scmp.eq.s32.totalorder %s18, 0
    %p93 = por %p91, %p92
    %p94 = scmp.ne.s32.totalorder %s82, %s83
    %p95 = scmp.eq.s32.totalorder %s19, 3
    %p96 = por %p94, %p95
    %p98 = scmp.ne.s32.totalorder %s83, %s97
    %p99 = scmp.eq.s32.totalorder %s19, 0
    %p100 = por %p98, %p99
    %s102 = sadd.s32 %s101, 1
    %p105 = scmp.eq.s32.totalorder %s13, 3
    %p106 = scmp.ne.s32.totalorder %s101, %s103
    %p107 = scmp.eq.s32.totalorder %s13, 0
    %p108 = por %p106, %p107
    %p109 = scmp.ne.s32.totalorder %s101, %s103
    %p110 = scmp.eq.s32.totalorder %s18, 3
    %p111 = por %p109, %p110
    %p112 = scmp.ne.s32.totalorder %s103, %s104
    %p113 = scmp.eq.s32.totalorder %s18, 0
    %p114 = por %p112, %p113
    %p115 = scmp.ne.s32.totalorder %s103, %s104
    %p116 = scmp.eq.s32.totalorder %s19, 3
    %p117 = por %p115, %p116
    %p119 = scmp.ne.s32.totalorder %s104, %s118
    %p120 = scmp.eq.s32.totalorder %s19, 0
    %p121 = por %p119, %p120
    %s123 = sadd.s32 %s122, 1
    %p126 = scmp.eq.s32.totalorder %s13, 3
    %p127 = scmp.ne.s32.totalorder %s122, %s124
    %p128 = scmp.eq.s32.totalorder %s13, 0
    %p129 = por %p127, %p128
    %p130 = scmp.ne.s32.totalorder %s122, %s124
    %p131 = scmp.eq.s32.totalorder %s18, 3
    %p132 = por %p130, %p131
    %p133 = scmp.ne.s32.totalorder %s124, %s125
    %p134 = scmp.eq.s32.totalorder %s18, 0
    %p135 = por %p133, %p134
    %p136 = scmp.ne.s32.totalorder %s124, %s125
    %p137 = scmp.eq.s32.totalorder %s19, 3
    %p138 = por %p136, %p137
    %p140 = scmp.ne.s32.totalorder %s125, %s139
    %p141 = scmp.eq.s32.totalorder %s19, 0
    %p142 = por %p140, %p141
    %s144 = sadd.s32 %s143, 1
    %p147 = scmp.eq.s32.totalorder %s13, 3
    %p148 = scmp.ne.s32.totalorder %s143, %s145
    %p149 = scmp.eq.s32.totalorder %s13, 0
    %p150 = por %p148, %p149
    %p151 = scmp.ne.s32.totalorder %s143, %s145
    %p152 = scmp.eq.s32.totalorder %s18, 3
    %p153 = por %p151, %p152
    %p154 = scmp.ne.s32.totalorder %s145, %s146
    %p155 = scmp.eq.s32.totalorder %s18, 0
    %p156 = por %p154, %p155
    %p157 = scmp.ne.s32.totalorder %s145, %s146
    %p158 = scmp.eq.s32.totalorder %s19, 3
    %p159 = por %p157, %p158
    %p161 = scmp.ne.s32.totalorder %s146, %s160
    %p162 = scmp.eq.s32.totalorder %s19, 0
    %p163 = por %p161, %p162
    %s165 = sadd.s32 %s164, 1
    %p168 = scmp.eq.s32.totalorder %s13, 3
    %p169 = scmp.ne.s32.totalorder %s164, %s166
    %p170 = scmp.eq.s32.totalorder %s13, 0
    %p171 = por %p169, %p170
    %p172 = scmp.ne.s32.totalorder %s164, %s166
    %p173 = scmp.eq.s32.totalorder %s18, 3
    %p174 = por %p172, %p173
    %p175 = scmp.ne.s32.totalorder %s166, %s167
    %p176 = scmp.eq.s32.totalorder %s18, 0
    %p177 = por %p175, %p176
    %p178 = scmp.ne.s32.totalorder %s166, %s167
    %p179 = scmp.eq.s32.totalorder %s19, 3
    %p180 = por %p178, %p179
    %p182 = scmp.ne.s32.totalorder %s167, %s181
    %p183 = scmp.eq.s32.totalorder %s19, 0
    %p184 = por %p182, %p183
    %s185 = ssub.s32 %s20, %s32
    %s186 = ssub.s32 %s21, %s28
    %s187 = sor.u32 %s185, %s186
    %p188 = scmp.eq.s32.totalorder %s187, 0
    %s190 = sadd.s32 %s189, 1
    %s191 = scalar_select %p188, %s189, %s190
    %p194 = pneg %p188
    %p195 = scmp.eq.s32.totalorder %s13, 3
    %p196 = por %p194, %p195
    %p197 = scmp.ne.s32.totalorder %s189, %s192
    %p198 = scmp.eq.s32.totalorder %s13, 0
    %p199 = por %p197, %p198
    %p200 = scmp.ne.s32.totalorder %s189, %s192
    %p201 = scmp.eq.s32.totalorder %s18, 3
    %p202 = por %p200, %p201
    %p203 = scmp.ne.s32.totalorder %s192, %s193
    %p204 = scmp.eq.s32.totalorder %s18, 0
    %p205 = por %p203, %p204
    %p206 = scmp.ne.s32.totalorder %s192, %s193
    %p207 = scmp.eq.s32.totalorder %s19, 3
    %p208 = por %p206, %p207
    %p210 = scmp.ne.s32.totalorder %s193, %s209
    %p211 = scmp.eq.s32.totalorder %s19, 0
    %p212 = por %p210, %p211
    %p213 = scmp.le.s32.totalorder 1, %s13
    %p214 = scmp.lt.s32.totalorder %s13, 5
    %p215 = pnand %p213, %p214
    %p216 = pneg %p215
    // Predicated region
    $region9: #{mobilenet_forward.8} parent=5 // pred_check
      _
    $region10: #{mobilenet_forward.8} parent=5 // pred_check_branch
      %218 = sbr.rel (%p215) target = $region12
    $region11: #{mobilenet_forward.8} parent=5 // pred_region
      %s219 = ssub.s32 %s13, 1
      // Predicated region
      $region13: #{mobilenet_forward.8} parent=11 // pred_check
        %p220 = pneg %p72
      $region14: #{mobilenet_forward.8} parent=11 // pred_check_branch
        %222 = sbr.rel (%p220) target = $region16
      $region15: #{mobilenet_forward.8} parent=11 // pred_region
        _
      $region16: #{mobilenet_forward.8} parent=11 // pred_fallthru
        _
      // Predicated region
      $region17: #{mobilenet_forward.8} parent=11 // pred_check
        %p223 = pneg %p93
      $region18: #{mobilenet_forward.8} parent=11 // pred_check_branch
        %225 = sbr.rel (%p223) target = $region20
      $region19: #{mobilenet_forward.8} parent=11 // pred_region
        _
      $region20: #{mobilenet_forward.8} parent=11 // pred_fallthru
        _
      // Predicated region
      $region21: #{mobilenet_forward.8} parent=11 // pred_check
        %p226 = pneg %p114
      $region22: #{mobilenet_forward.8} parent=11 // pred_check_branch
        %228 = sbr.rel (%p226) target = $region24
      $region23: #{mobilenet_forward.8} parent=11 // pred_region
        _
      $region24: #{mobilenet_forward.8} parent=11 // pred_fallthru
        _
      // Predicated region
      $region25: #{mobilenet_forward.8} parent=11 // pred_check
        %p229 = pneg %p135
      $region26: #{mobilenet_forward.8} parent=11 // pred_check_branch
        %231 = sbr.rel (%p229) target = $region28
      $region27: #{mobilenet_forward.8} parent=11 // pred_region
        _
      $region28: #{mobilenet_forward.8} parent=11 // pred_fallthru
        _
      // Predicated region
      $region29: #{mobilenet_forward.8} parent=11 // pred_check
        %p232 = pneg %p156
      $region30: #{mobilenet_forward.8} parent=11 // pred_check_branch
        %234 = sbr.rel (%p232) target = $region32
      $region31: #{mobilenet_forward.8} parent=11 // pred_region
        _
      $region32: #{mobilenet_forward.8} parent=11 // pred_fallthru
        _
      // Predicated region
      $region33: #{mobilenet_forward.8} parent=11 // pred_check
        %p235 = pneg %p177
      $region34: #{mobilenet_forward.8} parent=11 // pred_check_branch
        %237 = sbr.rel (%p235) target = $region36
      $region35: #{mobilenet_forward.8} parent=11 // pred_region
        _
      $region36: #{mobilenet_forward.8} parent=11 // pred_fallthru
        _
    $region12: #{mobilenet_forward.8} parent=5 // pred_fallthru
      _
    %p238 = scmp.lt.s32.totalorder %s13, 4
    // Predicated region
    $region37: #{mobilenet_forward.8} parent=5 // pred_check
      %p239 = pneg %p238
    $region38: #{mobilenet_forward.8} parent=5 // pred_check_branch
      %241 = sbr.rel (%p239) target = $region40
    $region39: #{mobilenet_forward.8} parent=5 // pred_region
      // Predicated region
      $region41: #{mobilenet_forward.8} parent=39 // pred_check
        %p242 = pneg %p45
      $region42: #{mobilenet_forward.8} parent=39 // pred_check_branch
        %244 = sbr.rel (%p242) target = $region44
      $region43: #{mobilenet_forward.8} parent=39 // pred_region
        %p245 = scmp.lt.s32.totalorder %s20, 1
        %s246 = scalar_select %p245, %s20, 1
        %s247 = smul.addr %s246, 36
        %s248 = smul.addr %s247, 4
        %s249 = scalar_lea.vmem %s0, %s248
      $region44: #{mobilenet_forward.8} parent=39 // pred_fallthru
        _
    $region40: #{mobilenet_forward.8} parent=5 // pred_fallthru
      _
    %p250 = scmp.le.s32.totalorder 1, %s13
    %p251 = scmp.lt.s32.totalorder %s13, 5
    %p252 = pnand %p250, %p251
    %p253 = pneg %p252
    // Predicated region
    $region45: #{mobilenet_forward.8} parent=5 // pred_check
      _
    $region46: #{mobilenet_forward.8} parent=5 // pred_check_branch
      %255 = sbr.rel (%p252) target = $region48
    $region47: #{mobilenet_forward.8} parent=5 // pred_region
      %s256 = ssub.s32 %s13, 1
      %p257 = scmp.lt.s32.totalorder %s22, 1
      %s258 = scalar_select %p257, %s22, 1
      %s259 = smul.addr %s258, 36
      %s260 = smul.addr %s259, 4
      %s261 = scalar_lea.vmem %s0, %s260
      %p262 = pneg %p51
      %p263 = pneg %p48
      %p264 = pneg %p72
      %p265 = pneg %p69
      %p266 = pneg %p93
      %p267 = pneg %p90
      %p268 = pneg %p114
      %p269 = pneg %p111
      %p270 = pneg %p135
      %p271 = pneg %p132
      %p272 = pneg %p156
      %p273 = pneg %p153
      %p274 = pneg %p177
      %p275 = pneg %p174
      %p276 = pneg %p205
      %p277 = pneg %p202
      %p278 = scmp.lt.s32.totalorder %s22, 1
      %s279 = scalar_select %p278, %s22, 1
      %p280 = scmp.lt.s32.totalorder %s23, 1
      %s281 = scalar_select %p280, %s23, 1
      %s282 = smul.addr %s281, 2
      %s283 = smul.addr %s279, 4
      %s284 = sadd.s32 %s282, %s283
      %s285 = smul.addr %s284, 2
      %s286 = scalar_lea.vmem %s7, %s285
      %p287 = scmp.lt.s32.totalorder %s22, 1
      %s288 = scalar_select %p287, %s22, 1
      %s289 = smul.addr %s288, 36
      %s290 = smul.addr %s289, 4
      %s291 = scalar_lea.vmem %s0, %s290
      %p292 = scmp.lt.s32.totalorder %s22, 1
      %s293 = scalar_select %p292, %s22, 1
      %p294 = scmp.lt.s32.totalorder %s23, 1
      %s295 = scalar_select %p294, %s23, 1
      %s296 = smul.addr %s295, 2
      %s297 = smul.addr %s293, 4
      %s298 = sadd.s32 %s296, %s297
      %s299 = smul.addr %s298, 2
      %s300 = scalar_lea.vmem %s7, %s299
      %s302 = smul.u32 %s23, 2
      %s303 = smul.u32 %s302, 6
      %s304 = smul.addr %s303, 4
      %s305 = scalar_lea.vmem %s291, %s304
      %v306 = vld [vmem:[%s305] sm:$0x7]
      %v307 = vld [vmem:[%s305 + $0x4] sm:$0x7]
      %v308 = vld [vmem:[%s305 + $0x8] sm:$0x7]
      %v309 = vld [vmem:[%s305 + $0xc] sm:$0x7]
      %v310 = vld [vmem:[%s305 + $0x10] sm:$0x7]
      %v311 = vld [vmem:[%s1] sm:$0x1]
      %s312 = scalar_lea.vmem %s1, 1
      %v313 = vld [vmem:[%s312] sm:$0x1]
      %s314 = scalar_lea.vmem %s1, 2
      %v315 = vld [vmem:[%s314] sm:$0x1]
      %v316 = vunpack.c.l.bf16 %v306
      %v318 = vlaneseq
      %v319 = vshrl.u32 %v318, 7
      %v320 = vsub.s32 0, %v319
      %v321 = vrot.slane %v311, %v320
      %v323 = vmul.f32 %v316, %v321
      %v325 = vlaneseq
      %v326 = vshrl.u32 %v325, 7
      %v327 = vsub.s32 0, %v326
      %v328 = vrot.slane %v313, %v327
      %v330 = vmul.f32 %v316, %v328
      %v332 = vrot.slane %v330, 1
      %v334 = vadd.f32 %v323, %v332
      %v336 = vlaneseq
      %v337 = vshrl.u32 %v336, 7
      %v338 = vsub.s32 0, %v337
      %v339 = vrot.slane %v315, %v338
      %v341 = vmul.f32 %v316, %v339
      %v343 = vrot.slane %v341, 2
      %v345 = vadd.f32 %v334, %v343
      %v346 = vunpack.c.l.bf16 %v308
      %v347 = vmul.f32 %v346, %v321
      %v348 = vmul.f32 %v346, %v328
      %v350 = vrot.slane %v348, 1
      %v352 = vadd.f32 %v347, %v350
      %v353 = vmul.f32 %v346, %v339
      %v355 = vrot.slane %v353, 2
      %v357 = vadd.f32 %v352, %v355
      %s358 = scalar_lea.vmem %s1, 3
      %v359 = vld [vmem:[%s358] sm:$0x1]
      %s360 = scalar_lea.vmem %s1, 4
      %v361 = vld [vmem:[%s360] sm:$0x1]
      %s362 = scalar_lea.vmem %s1, 5
      %v363 = vld [vmem:[%s362] sm:$0x1]
      %v364 = vunpack.c.l.bf16 %v307
      %v366 = vlaneseq
      %v367 = vshrl.u32 %v366, 7
      %v368 = vsub.s32 0, %v367
      %v369 = vrot.slane %v359, %v368
      %v371 = vmul.f32 %v364, %v369
      %v372 = vadd.f32 %v345, %v371
      %v374 = vlaneseq
      %v375 = vshrl.u32 %v374, 7
      %v376 = vsub.s32 0, %v375
      %v377 = vrot.slane %v361, %v376
      %v379 = vmul.f32 %v364, %v377
      %v381 = vrot.slane %v379, 1
      %v383 = vadd.f32 %v372, %v381
      %v385 = vlaneseq
      %v386 = vshrl.u32 %v385, 7
      %v387 = vsub.s32 0, %v386
      %v388 = vrot.slane %v363, %v387
      %v390 = vmul.f32 %v364, %v388
      %v392 = vrot.slane %v390, 2
      %v394 = vadd.f32 %v383, %v392
      %v395 = vunpack.c.l.bf16 %v309
      %v396 = vmul.f32 %v395, %v369
      %v397 = vadd.f32 %v357, %v396
      %v398 = vmul.f32 %v395, %v377
      %v400 = vrot.slane %v398, 1
      %v402 = vadd.f32 %v397, %v400
      %v403 = vmul.f32 %v395, %v388
      %v405 = vrot.slane %v403, 2
      %v407 = vadd.f32 %v402, %v405
      %s408 = scalar_lea.vmem %s1, 6
      %v409 = vld [vmem:[%s408] sm:$0x1]
      %s410 = scalar_lea.vmem %s1, 7
      %v411 = vld [vmem:[%s410] sm:$0x1]
      %s412 = scalar_lea.vmem %s1, 8
      %v413 = vld [vmem:[%s412] sm:$0x1]
      %v415 = vlaneseq
      %v416 = vshrl.u32 %v415, 7
      %v417 = vsub.s32 0, %v416
      %v418 = vrot.slane %v409, %v417
      %v420 = vmul.f32 %v346, %v418
      %v421 = vadd.f32 %v394, %v420
      %v423 = vlaneseq
      %v424 = vshrl.u32 %v423, 7
      %v425 = vsub.s32 0, %v424
      %v426 = vrot.slane %v411, %v425
      %v428 = vmul.f32 %v346, %v426
      %v430 = vrot.slane %v428, 1
      %v432 = vadd.f32 %v421, %v430
      %v434 = vlaneseq
      %v435 = vshrl.u32 %v434, 7
      %v436 = vsub.s32 0, %v435
      %v437 = vrot.slane %v413, %v436
      %v439 = vmul.f32 %v346, %v437
      %v441 = vrot.slane %v439, 2
      %v443 = vadd.f32 %v432, %v441
      %v444 = vunpack.c.l.bf16 %v310
      %v445 = vmul.f32 %v444, %v418
      %v446 = vadd.f32 %v407, %v445
      %v447 = vmul.f32 %v444, %v426
      %v449 = vrot.slane %v447, 1
      %v451 = vadd.f32 %v446, %v449
      %v452 = vmul.f32 %v444, %v437
      %v454 = vrot.slane %v452, 2
      %v456 = vadd.f32 %v451, %v454
      %s457 = sadd.s32 %s302, 1
      %s458 = smul.u32 %s457, 6
      %s459 = smul.addr %s458, 4
      %s460 = scalar_lea.vmem %s291, %s459
      %v461 = vld [vmem:[%s460] sm:$0x7]
      %v462 = vld [vmem:[%s460 + $0x4] sm:$0x7]
      %v463 = vld [vmem:[%s460 + $0x8] sm:$0x7]
      %v464 = vld [vmem:[%s460 + $0xc] sm:$0x7]
      %v465 = vld [vmem:[%s460 + $0x10] sm:$0x7]
      %s466 = scalar_lea.vmem %s1, 9
      %v467 = vld [vmem:[%s466] sm:$0x1]
      %s468 = scalar_lea.vmem %s1, 10
      %v469 = vld [vmem:[%s468] sm:$0x1]
      %s470 = scalar_lea.vmem %s1, 11
      %v471 = vld [vmem:[%s470] sm:$0x1]
      %v472 = vunpack.c.l.bf16 %v461
      %v474 = vlaneseq
      %v475 = vshrl.u32 %v474, 7
      %v476 = vsub.s32 0, %v475
      %v477 = vrot.slane %v467, %v476
      %v479 = vmul.f32 %v472, %v477
      %v480 = vadd.f32 %v443, %v479
      %v482 = vlaneseq
      %v483 = vshrl.u32 %v482, 7
      %v484 = vsub.s32 0, %v483
      %v485 = vrot.slane %v469, %v484
      %v487 = vmul.f32 %v472, %v485
      %v489 = vrot.slane %v487, 1
      %v491 = vadd.f32 %v480, %v489
      %v493 = vlaneseq
      %v494 = vshrl.u32 %v493, 7
      %v495 = vsub.s32 0, %v494
      %v496 = vrot.slane %v471, %v495
      %v498 = vmul.f32 %v472, %v496
      %v500 = vrot.slane %v498, 2
      %v502 = vadd.f32 %v491, %v500
      %v503 = vunpack.c.l.bf16 %v463
      %v504 = vmul.f32 %v503, %v477
      %v505 = vadd.f32 %v456, %v504
      %v506 = vmul.f32 %v503, %v485
      %v508 = vrot.slane %v506, 1
      %v510 = vadd.f32 %v505, %v508
      %v511 = vmul.f32 %v503, %v496
      %v513 = vrot.slane %v511, 2
      %v515 = vadd.f32 %v510, %v513
      %s516 = scalar_lea.vmem %s1, 12
      %v517 = vld [vmem:[%s516] sm:$0x1]
      %s518 = scalar_lea.vmem %s1, 13
      %v519 = vld [vmem:[%s518] sm:$0x1]
      %s520 = scalar_lea.vmem %s1, 14
      %v521 = vld [vmem:[%s520] sm:$0x1]
      %v522 = vunpack.c.l.bf16 %v462
      %v524 = vlaneseq
      %v525 = vshrl.u32 %v524, 7
      %v526 = vsub.s32 0, %v525
      %v527 = vrot.slane %v517, %v526
      %v529 = vmul.f32 %v522, %v527
      %v530 = vadd.f32 %v502, %v529
      %v532 = vlaneseq
      %v533 = vshrl.u32 %v532, 7
      %v534 = vsub.s32 0, %v533
      %v535 = vrot.slane %v519, %v534
      %v537 = vmul.f32 %v522, %v535
      %v539 = vrot.slane %v537, 1
      %v541 = vadd.f32 %v530, %v539
      %v543 = vlaneseq
      %v544 = vshrl.u32 %v543, 7
      %v545 = vsub.s32 0, %v544
      %v546 = vrot.slane %v521, %v545
      %v548 = vmul.f32 %v522, %v546
      %v550 = vrot.slane %v548, 2
      %v552 = vadd.f32 %v541, %v550
      %v553 = vunpack.c.l.bf16 %v464
      %v554 = vmul.f32 %v553, %v527
      %v555 = vadd.f32 %v515, %v554
      %v556 = vmul.f32 %v553, %v535
      %v558 = vrot.slane %v556, 1
      %v560 = vadd.f32 %v555, %v558
      %v561 = vmul.f32 %v553, %v546
      %v563 = vrot.slane %v561, 2
      %v565 = vadd.f32 %v560, %v563
      %s566 = scalar_lea.vmem %s1, 15
      %v567 = vld [vmem:[%s566] sm:$0x1]
      %s568 = scalar_lea.vmem %s1, 16
      %v569 = vld [vmem:[%s568] sm:$0x1]
      %s570 = scalar_lea.vmem %s1, 17
      %v571 = vld [vmem:[%s570] sm:$0x1]
      %v573 = vlaneseq
      %v574 = vshrl.u32 %v573, 7
      %v575 = vsub.s32 0, %v574
      %v576 = vrot.slane %v567, %v575
      %v578 = vmul.f32 %v503, %v576
      %v579 = vadd.f32 %v552, %v578
      %v581 = vlaneseq
      %v582 = vshrl.u32 %v581, 7
      %v583 = vsub.s32 0, %v582
      %v584 = vrot.slane %v569, %v583
      %v586 = vmul.f32 %v503, %v584
      %v588 = vrot.slane %v586, 1
      %v590 = vadd.f32 %v579, %v588
      %v592 = vlaneseq
      %v593 = vshrl.u32 %v592, 7
      %v594 = vsub.s32 0, %v593
      %v595 = vrot.slane %v571, %v594
      %v597 = vmul.f32 %v503, %v595
      %v599 = vrot.slane %v597, 2
      %v601 = vadd.f32 %v590, %v599
      %v602 = vunpack.c.l.bf16 %v465
      %v603 = vmul.f32 %v602, %v576
      %v604 = vadd.f32 %v565, %v603
      %v605 = vmul.f32 %v602, %v584
      %v607 = vrot.slane %v605, 1
      %v609 = vadd.f32 %v604, %v607
      %v610 = vmul.f32 %v602, %v595
      %v612 = vrot.slane %v610, 2
      %v614 = vadd.f32 %v609, %v612
      %s615 = sadd.s32 %s302, 2
      %s616 = smul.u32 %s615, 6
      %s617 = smul.addr %s616, 4
      %s618 = scalar_lea.vmem %s291, %s617
      %v619 = vld [vmem:[%s618] sm:$0x7]
      %v620 = vld [vmem:[%s618 + $0x4] sm:$0x7]
      %v621 = vld [vmem:[%s618 + $0x8] sm:$0x7]
      %v622 = vld [vmem:[%s618 + $0xc] sm:$0x7]
      %v623 = vld [vmem:[%s618 + $0x10] sm:$0x7]
      %s624 = scalar_lea.vmem %s1, 18
      %v625 = vld [vmem:[%s624] sm:$0x1]
      %s626 = scalar_lea.vmem %s1, 19
      %v627 = vld [vmem:[%s626] sm:$0x1]
      %s628 = scalar_lea.vmem %s1, 20
      %v629 = vld [vmem:[%s628] sm:$0x1]
      %v630 = vunpack.c.l.bf16 %v619
      %v632 = vlaneseq
      %v633 = vshrl.u32 %v632, 7
      %v634 = vsub.s32 0, %v633
      %v635 = vrot.slane %v625, %v634
      %v637 = vmul.f32 %v630, %v635
      %v638 = vadd.f32 %v601, %v637
      %v640 = vlaneseq
      %v641 = vshrl.u32 %v640, 7
      %v642 = vsub.s32 0, %v641
      %v643 = vrot.slane %v627, %v642
      %v645 = vmul.f32 %v630, %v643
      %v647 = vrot.slane %v645, 1
      %v649 = vadd.f32 %v638, %v647
      %v651 = vlaneseq
      %v652 = vshrl.u32 %v651, 7
      %v653 = vsub.s32 0, %v652
      %v654 = vrot.slane %v629, %v653
      %v656 = vmul.f32 %v630, %v654
      %v658 = vrot.slane %v656, 2
      %v660 = vadd.f32 %v649, %v658
      %v661 = vunpack.c.l.bf16 %v621
      %v662 = vmul.f32 %v661, %v635
      %v663 = vadd.f32 %v614, %v662
      %v664 = vmul.f32 %v661, %v643
      %v666 = vrot.slane %v664, 1
      %v668 = vadd.f32 %v663, %v666
      %v669 = vmul.f32 %v661, %v654
      %v671 = vrot.slane %v669, 2
      %v673 = vadd.f32 %v668, %v671
      %s674 = scalar_lea.vmem %s1, 21
      %v675 = vld [vmem:[%s674] sm:$0x1]
      %s676 = scalar_lea.vmem %s1, 22
      %v677 = vld [vmem:[%s676] sm:$0x1]
      %s678 = scalar_lea.vmem %s1, 23
      %v679 = vld [vmem:[%s678] sm:$0x1]
      %v680 = vunpack.c.l.bf16 %v620
      %v682 = vlaneseq
      %v683 = vshrl.u32 %v682, 7
      %v684 = vsub.s32 0, %v683
      %v685 = vrot.slane %v675, %v684
      %v687 = vmul.f32 %v680, %v685
      %v688 = vadd.f32 %v660, %v687
      %v690 = vlaneseq
      %v691 = vshrl.u32 %v690, 7
      %v692 = vsub.s32 0, %v691
      %v693 = vrot.slane %v677, %v692
      %v695 = vmul.f32 %v680, %v693
      %v697 = vrot.slane %v695, 1
      %v699 = vadd.f32 %v688, %v697
      %v701 = vlaneseq
      %v702 = vshrl.u32 %v701, 7
      %v703 = vsub.s32 0, %v702
      %v704 = vrot.slane %v679, %v703
      %v706 = vmul.f32 %v680, %v704
      %v708 = vrot.slane %v706, 2
      %v710 = vadd.f32 %v699, %v708
      %v711 = vunpack.c.l.bf16 %v622
      %v712 = vmul.f32 %v711, %v685
      %v713 = vadd.f32 %v673, %v712
      %v714 = vmul.f32 %v711, %v693
      %v716 = vrot.slane %v714, 1
      %v718 = vadd.f32 %v713, %v716
      %v719 = vmul.f32 %v711, %v704
      %v721 = vrot.slane %v719, 2
      %v723 = vadd.f32 %v718, %v721
      %s724 = scalar_lea.vmem %s1, 24
      %v725 = vld [vmem:[%s724] sm:$0x1]
      %s726 = scalar_lea.vmem %s1, 25
      %v727 = vld [vmem:[%s726] sm:$0x1]
      %s728 = scalar_lea.vmem %s1, 26
      %v729 = vld [vmem:[%s728] sm:$0x1]
      %v731 = vlaneseq
      %v732 = vshrl.u32 %v731, 7
      %v733 = vsub.s32 0, %v732
      %v734 = vrot.slane %v725, %v733
      %v736 = vmul.f32 %v661, %v734
      %v737 = vadd.f32 %v710, %v736
      %v739 = vlaneseq
      %v740 = vshrl.u32 %v739, 7
      %v741 = vsub.s32 0, %v740
      %v742 = vrot.slane %v727, %v741
      %v744 = vmul.f32 %v661, %v742
      %v746 = vrot.slane %v744, 1
      %v748 = vadd.f32 %v737, %v746
      %v750 = vlaneseq
      %v751 = vshrl.u32 %v750, 7
      %v752 = vsub.s32 0, %v751
      %v753 = vrot.slane %v729, %v752
      %v755 = vmul.f32 %v661, %v753
      %v757 = vrot.slane %v755, 2
      %v759 = vadd.f32 %v748, %v757
      %v760 = vunpack.c.l.bf16 %v623
      %v761 = vmul.f32 %v760, %v734
      %v762 = vadd.f32 %v723, %v761
      %v763 = vmul.f32 %v760, %v742
      %v765 = vrot.slane %v763, 1
      %v767 = vadd.f32 %v762, %v765
      %v768 = vmul.f32 %v760, %v753
      %v770 = vrot.slane %v768, 2
      %v772 = vadd.f32 %v767, %v770
      %v773 = vld [vmem:[%s2] sm:$0x1]
      %v774 = vld [vmem:[%s3] sm:$0x1]
      %v775 = vld [vmem:[%s4] sm:$0xf]
      %v776 = vld [vmem:[%s4 + $0x4] sm:$0xf]
      %v777 = vld [vmem:[%s4 + $0x8] sm:$0xf]
      %v778 = vld [vmem:[%s4 + $0xc] sm:$0xf]
      %v779 = vld [vmem:[%s4 + $0x10] sm:$0xf]
      %v780 = vld [vmem:[%s4 + $0x14] sm:$0xf]
      %v781 = vld [vmem:[%s4 + $0x18] sm:$0xf]
      %v782 = vld [vmem:[%s4 + $0x1c] sm:$0xf]
      %v783 = vld [vmem:[%s4 + $0x20] sm:$0xf]
      %v784 = vld [vmem:[%s4 + $0x24] sm:$0xf]
      %v785 = vld [vmem:[%s4 + $0x28] sm:$0xf]
      %v786 = vld [vmem:[%s4 + $0x2c] sm:$0xf]
      %v787 = vld [vmem:[%s4 + $0x30] sm:$0xf]
      %v788 = vld [vmem:[%s4 + $0x34] sm:$0xf]
      %v789 = vld [vmem:[%s4 + $0x38] sm:$0xf]
      %v790 = vld [vmem:[%s4 + $0x3c] sm:$0xf]
      %v791 = vld [vmem:[%s5] sm:$0x1]
      %v792 = vld [vmem:[%s6] sm:$0x1]
      %v794 = vlaneseq
      %v795 = vshrl.u32 %v794, 7
      %v796 = vsub.s32 0, %v795
      %v797 = vrot.slane %v773, %v796
      %v799 = vmul.f32 %v759, %v797
      %v801 = vlaneseq
      %v802 = vshrl.u32 %v801, 7
      %v803 = vsub.s32 0, %v802
      %v804 = vrot.slane %v774, %v803
      %v806 = vadd.f32 %v799, %v804
      %v807 = vmax.f32 %v806, 0.0
      %v808 = vpack.c.bf16 %v807, %v807
      %v825 = vunpack.c.l.b16 %v775
      %v826 = vunpack.c.l.b16 %v776
      %v827 = vunpack.c.l.b16 %v777
      %v828 = vunpack.c.l.b16 %v778
      %v829 = vunpack.c.l.b16 %v779
      %v830 = vunpack.c.l.b16 %v780
      %v831 = vunpack.c.l.b16 %v781
      %v832 = vunpack.c.l.b16 %v782
      %v833 = vunpack.c.l.b16 %v783
      %v834 = vunpack.c.l.b16 %v784
      %v835 = vunpack.c.l.b16 %v785
      %v836 = vunpack.c.l.b16 %v786
      %v837 = vunpack.c.l.b16 %v787
      %v838 = vunpack.c.l.b16 %v788
      %v839 = vunpack.c.l.b16 %v789
      %v840 = vunpack.c.l.b16 %v790
      %v841 = vpack.c.b16 %v826, %v825
      %v842 = vpack.c.b16 %v828, %v827
      %v843 = vpack.c.b16 %v830, %v829
      %v844 = vpack.c.b16 %v832, %v831
      %v845 = vpack.c.b16 %v834, %v833
      %v846 = vpack.c.b16 %v836, %v835
      %v847 = vpack.c.b16 %v838, %v837
      %v848 = vpack.c.b16 %v840, %v839
      %857 = vmatprep.subr.bf16.mxu0 0
      %858 = vmatpush1.bf16.msra.mxu0 %v841
      %859 = vmatprep.subr.bf16.mxu0 0
      %860 = vmatpush1.bf16.msra.mxu0 %v842
      %861 = vmatprep.subr.bf16.mxu0 0
      %862 = vmatpush1.bf16.msra.mxu0 %v843
      %863 = vmatprep.subr.bf16.mxu0 0
      %864 = vmatpush1.bf16.msra.mxu0 %v844
      %865 = vmatprep.subr.bf16.mxu0 0
      %866 = vmatpush1.bf16.msra.mxu0 %v845
      %867 = vmatprep.subr.bf16.mxu0 0
      %868 = vmatpush1.bf16.msra.mxu0 %v846
      %869 = vmatprep.subr.bf16.mxu0 0
      %870 = vmatpush1.bf16.msra.mxu0 %v847
      %871 = vmatprep.subr.bf16.mxu0 0
      %872 = vmatpush1.bf16.msra.mxu0 %v848
      %873 = vmatprep.subr.bf16.mxu0 0
      %874 = vmatpush1.bf16.msra.mxu0 0
      %875 = vmatprep.subr.bf16.mxu0 0
      %876 = vmatpush1.bf16.msra.mxu0 0
      %877 = vmatprep.subr.bf16.mxu0 0
      %878 = vmatpush1.bf16.msra.mxu0 0
      %879 = vmatprep.subr.bf16.mxu0 0
      %880 = vmatpush1.bf16.msra.mxu0 0
      %881 = vmatprep.subr.bf16.mxu0 0
      %882 = vmatpush1.bf16.msra.mxu0 0
      %883 = vmatprep.subr.bf16.mxu0 0
      %884 = vmatpush1.bf16.msra.mxu0 0
      %885 = vmatprep.subr.bf16.mxu0 0
      %886 = vmatpush1.bf16.msra.mxu0 0
      %887 = vmatprep.subr.bf16.mxu0 0
      %888 = vmatpush1.bf16.msra.mxu0 0
      %889 = vmatprep.mubr.bf16.mxu0 0
      %890 = vmatmul.mubr.bf16.gmra.mrb[0].mxu0 %v808
      %v891 = vpop.f32.mrb[0].mxu0
      %v892 = vadd.f32 0.0, %v891
      %v893 = vpop.f32.mrb[0].mxu0
      %v894 = vpop.f32.mrb[0].mxu0
      %v895 = vpop.f32.mrb[0].mxu0
      %896 = vdwg.mxu0
      %v898 = vlaneseq
      %v899 = vshrl.u32 %v898, 7
      %v900 = vsub.s32 0, %v899
      %v901 = vrot.slane %v791, %v900
      %v903 = vmul.f32 %v892, %v901
      %v905 = vlaneseq
      %v906 = vshrl.u32 %v905, 7
      %v907 = vsub.s32 0, %v906
      %v908 = vrot.slane %v792, %v907
      %v910 = vadd.f32 %v903, %v908
      %v911 = vmax.f32 %v910, 0.0
      %v912 = vpack.c.bf16 %v911, %v911
      %913 = vst [vmem:[%s300] sm:$0x3] %v912
      %v914 = vmul.f32 %v772, %v797
      %v915 = vadd.f32 %v914, %v804
      %v916 = vmax.f32 %v915, 0.0
      %v917 = vpack.c.bf16 %v916, %v916
      %918 = vmatprep.subr.bf16.mxu0 0
      %919 = vmatpush1.bf16.msra.mxu0 %v841
      %920 = vmatprep.subr.bf16.mxu0 0
      %921 = vmatpush1.bf16.msra.mxu0 %v842
      %922 = vmatprep.subr.bf16.mxu0 0
      %923 = vmatpush1.bf16.msra.mxu0 %v843
      %924 = vmatprep.subr.bf16.mxu0 0
      %925 = vmatpush1.bf16.msra.mxu0 %v844
      %926 = vmatprep.subr.bf16.mxu0 0
      %927 = vmatpush1.bf16.msra.mxu0 %v845
      %928 = vmatprep.subr.bf16.mxu0 0
      %929 = vmatpush1.bf16.msra.mxu0 %v846
      %930 = vmatprep.subr.bf16.mxu0 0
      %931 = vmatpush1.bf16.msra.mxu0 %v847
      %932 = vmatprep.subr.bf16.mxu0 0
      %933 = vmatpush1.bf16.msra.mxu0 %v848
      %934 = vmatprep.subr.bf16.mxu0 0
      %935 = vmatpush1.bf16.msra.mxu0 0
      %936 = vmatprep.subr.bf16.mxu0 0
      %937 = vmatpush1.bf16.msra.mxu0 0
      %938 = vmatprep.subr.bf16.mxu0 0
      %939 = vmatpush1.bf16.msra.mxu0 0
      %940 = vmatprep.subr.bf16.mxu0 0
      %941 = vmatpush1.bf16.msra.mxu0 0
      %942 = vmatprep.subr.bf16.mxu0 0
      %943 = vmatpush1.bf16.msra.mxu0 0
      %944 = vmatprep.subr.bf16.mxu0 0
      %945 = vmatpush1.bf16.msra.mxu0 0
      %946 = vmatprep.subr.bf16.mxu0 0
      %947 = vmatpush1.bf16.msra.mxu0 0
      %948 = vmatprep.subr.bf16.mxu0 0
      %949 = vmatpush1.bf16.msra.mxu0 0
      %950 = vmatprep.mubr.bf16.mxu0 0
      %951 = vmatmul.mubr.bf16.gmra.mrb[0].mxu0 %v917
      %v952 = vpop.f32.mrb[0].mxu0
      %v953 = vadd.f32 0.0, %v952
      %v954 = vpop.f32.mrb[0].mxu0
      %v955 = vpop.f32.mrb[0].mxu0
      %v956 = vpop.f32.mrb[0].mxu0
      %957 = vdwg.mxu0
      %v958 = vmul.f32 %v953, %v901
      %v959 = vadd.f32 %v958, %v908
      %v960 = vmax.f32 %v959, 0.0
      %v961 = vpack.c.bf16 %v960, %v960
      %s962 = scalar_lea.vmem %s300, 2
      %963 = vst [vmem:[%s962] sm:$0x3] %v961
      %p964 = scmp.lt.s32.totalorder %s22, 1
      %s965 = scalar_select %p964, %s22, 1
      %p966 = scmp.lt.s32.totalorder %s23, 1
      %s967 = scalar_select %p966, %s23, 1
      %s968 = smul.addr %s967, 2
      %s969 = smul.addr %s965, 4
      %s970 = sadd.s32 %s968, %s969
      %s971 = smul.addr %s970, 2
      %s972 = scalar_lea.vmem %s7, %s971
      // Predicated region
      $region49: #{mobilenet_forward.8} parent=47 // pred_check
        %p973 = pneg %p202
      $region50: #{mobilenet_forward.8} parent=47 // pred_check_branch
        %975 = sbr.rel (%p973) target = $region52
      $region51: #{mobilenet_forward.8} parent=47 // pred_region
        _
      $region52: #{mobilenet_forward.8} parent=47 // pred_fallthru
        _
    $region48: #{mobilenet_forward.8} parent=5 // pred_fallthru
      _
    %p976 = scmp.le.s32.totalorder 2, %s13
    // Predicated region
    $region53: #{mobilenet_forward.8} parent=5 // pred_check
      %p977 = pneg %p976
    $region54: #{mobilenet_forward.8} parent=5 // pred_check_branch
      %979 = sbr.rel (%p977) target = $region56
    $region55: #{mobilenet_forward.8} parent=5 // pred_region
      %s980 = ssub.s32 %s13, 2
      // Predicated region
      $region57: #{mobilenet_forward.8} parent=55 // pred_check
        %p981 = pneg %p208
      $region58: #{mobilenet_forward.8} parent=55 // pred_check_branch
        %983 = sbr.rel (%p981) target = $region60
      $region59: #{mobilenet_forward.8} parent=55 // pred_region
        %p984 = scmp.lt.s32.totalorder %s24, 1
        %s985 = scalar_select %p984, %s24, 1
        %p986 = scmp.lt.s32.totalorder %s25, 1
        %s987 = scalar_select %p986, %s25, 1
        %s988 = smul.addr %s987, 2
        %s989 = smul.addr %s985, 4
        %s990 = sadd.s32 %s988, %s989
        %s991 = smul.addr %s990, 2
        %s992 = scalar_lea.vmem %s7, %s991
      $region60: #{mobilenet_forward.8} parent=55 // pred_fallthru
        _
    $region56: #{mobilenet_forward.8} parent=5 // pred_fallthru
      _
  $region6: #{mobilenet_forward.8} parent=0 // loop_footer
    %s17 = sadd.s32 1, %s13
  $region7: #{mobilenet_forward.8} parent=0 // loop_footer_branch
    %12 = sbr.rel target = $region3
  $region8: #{mobilenet_forward.8} parent=0 // loop_exit
    _

// kernel: mobilenet_forward.9
$region0: #{mobilenet_forward.9}
  #allocation0 [shape = 'u32[]', space=smem, size = 0x4, offset = 0x4, fixed_abs, tag = 'smem constant byte address 0x4 - core index']
  #allocation1 [shape = 'u32[144,128]{1,0:T(1,128)}', space=vmem, size = 0x12000, scoped, tag = 'internal scratch']
  %s0 = inlined_call_operand.vmem [shape: bf16[2,4,4,4,128], index: 0, kind: input, shape index: {}]
  %s1 = inlined_call_operand.vmem [shape: f32[27,1,128], index: 1, kind: input, shape index: {}]
  %s2 = inlined_call_operand.vmem [shape: f32[1,128], index: 2, kind: input, shape index: {}]
  %s3 = inlined_call_operand.vmem [shape: f32[1,128], index: 3, kind: input, shape index: {}]
  %s4 = inlined_call_operand.vmem [shape: bf16[128,128], index: 4, kind: input, shape index: {}]
  %s5 = inlined_call_operand.vmem [shape: f32[1,128], index: 5, kind: input, shape index: {}]
  %s6 = inlined_call_operand.vmem [shape: f32[1,128], index: 6, kind: input, shape index: {}]
  %s7 = inlined_call_operand.vmem [shape: bf16[2,2,2,2,128], index: 7, kind: output, shape index: {}]
  %s8 = sld [smem:[#allocation0]]
  $region61: #{mobilenet_forward.9} parent=0
    _
  %s10 = ssub.s32 1, %s8
  %s11 = scalar_select 0, %s10, %s8
  loop: start=0, step=1, limit=6
  $region2: #{mobilenet_forward.9} parent=0 // loop_pre_header
    _
  $region3: #{mobilenet_forward.9} parent=0 // loop_header
    %s13 = sphi 0, %s17
    %p14 = scmp.ge.s32.totalorder %s13, 6
    %s20 = sphi 0, %s32
    %s21 = sphi 0, %s28
    %s22 = sphi 0, %s20
    %s23 = sphi 0, %s21
    %s24 = sphi 0, %s22
    %s25 = sphi 0, %s23
    %s35 = sphi 0, %s37
    %s38 = sphi 0, %s35
    %s39 = sphi 0, %s38
    %s55 = sphi 0, %s39
    %s59 = sphi 0, %s59
    %s61 = sphi 0, %s59
    %s62 = sphi 0, %s61
    %s76 = sphi 0, %s62
    %s80 = sphi 0, %s80
    %s82 = sphi 0, %s80
    %s83 = sphi 0, %s82
    %s97 = sphi 0, %s83
    %s101 = sphi 0, %s101
    %s103 = sphi 0, %s101
    %s104 = sphi 0, %s103
    %s118 = sphi 0, %s104
    %s122 = sphi 0, %s122
    %s124 = sphi 0, %s122
    %s125 = sphi 0, %s124
    %s139 = sphi 0, %s125
    %s143 = sphi 0, %s143
    %s145 = sphi 0, %s143
    %s146 = sphi 0, %s145
    %s160 = sphi 0, %s146
    %s164 = sphi 0, %s164
    %s166 = sphi 0, %s164
    %s167 = sphi 0, %s166
    %s181 = sphi 0, %s167
    %s189 = sphi 0, %s191
    %s192 = sphi 0, %s189
    %s193 = sphi 0, %s192
    %s209 = sphi 0, %s193
  $region4: #{mobilenet_forward.9} parent=0 // loop_header_branch
    %16 = sbr.rel (%p14) target = $region8
  $region5: #{mobilenet_forward.9} parent=0 // loop_body
    %s18 = ssub.s32 %s13, 1
    %s19 = ssub.s32 %s13, 2
    %s26 = sadd.s32 1, %s21
    %p27 = scmp.ge.s32.totalorder %s26, 2
    %s28 = scalar_select %p27, 0, %s26
    %s29 = sadd.s32 1, %s20
    %s30 = scalar_select %p27, %s29, %s20
    %p31 = scmp.ge.s32.totalorder %s30, 2
    %s32 = scalar_select %p31, 0, %s30
    %s33 = ssub.s32 %s20, %s32
    %p34 = scmp.eq.s32.totalorder %s33, 0
    %s36 = sadd.s32 %s35, 1
    %s37 = scalar_select %p34, %s35, %s36
    %p40 = pneg %p34
    %p41 = scmp.eq.s32.totalorder %s13, 3
    %p42 = por %p40, %p41
    %p43 = scmp.ne.s32.totalorder %s35, %s38
    %p44 = scmp.eq.s32.totalorder %s13, 0
    %p45 = por %p43, %p44
    %p46 = scmp.ne.s32.totalorder %s35, %s38
    %p47 = scmp.eq.s32.totalorder %s18, 3
    %p48 = por %p46, %p47
    %p49 = scmp.ne.s32.totalorder %s38, %s39
    %p50 = scmp.eq.s32.totalorder %s18, 0
    %p51 = por %p49, %p50
    %p52 = scmp.ne.s32.totalorder %s38, %s39
    %p53 = scmp.eq.s32.totalorder %s19, 3
    %p54 = por %p52, %p53
    %p56 = scmp.ne.s32.totalorder %s39, %s55
    %p57 = scmp.eq.s32.totalorder %s19, 0
    %p58 = por %p56, %p57
    %s60 = sadd.s32 %s59, 1
    %p63 = scmp.eq.s32.totalorder %s13, 3
    %p64 = scmp.ne.s32.totalorder %s59, %s61
    %p65 = scmp.eq.s32.totalorder %s13, 0
    %p66 = por %p64, %p65
    %p67 = scmp.ne.s32.totalorder %s59, %s61
    %p68 = scmp.eq.s32.totalorder %s18, 3
    %p69 = por %p67, %p68
    %p70 = scmp.ne.s32.totalorder %s61, %s62
    %p71 = scmp.eq.s32.totalorder %s18, 0
    %p72 = por %p70, %p71
    %p73 = scmp.ne.s32.totalorder %s61, %s62
    %p74 = scmp.eq.s32.totalorder %s19, 3
    %p75 = por %p73, %p74
    %p77 = scmp.ne.s32.totalorder %s62, %s76
    %p78 = scmp.eq.s32.totalorder %s19, 0
    %p79 = por %p77, %p78
    %s81 = sadd.s32 %s80, 1
    %p84 = scmp.eq.s32.totalorder %s13, 3
    %p85 = scmp.ne.s32.totalorder %s80, %s82
    %p86 = scmp.eq.s32.totalorder %s13, 0
    %p87 = por %p85, %p86
    %p88 = scmp.ne.s32.totalorder %s80, %s82
    %p89 = scmp.eq.s32.totalorder %s18, 3
    %p90 = por %p88, %p89
    %p91 = scmp.ne.s32.totalorder %s82, %s83
    %p92 = scmp.eq.s32.totalorder %s18, 0
    %p93 = por %p91, %p92
    %p94 = scmp.ne.s32.totalorder %s82, %s83
    %p95 = scmp.eq.s32.totalorder %s19, 3
    %p96 = por %p94, %p95
    %p98 = scmp.ne.s32.totalorder %s83, %s97
    %p99 = scmp.eq.s32.totalorder %s19, 0
    %p100 = por %p98, %p99
    %s102 = sadd.s32 %s101, 1
    %p105 = scmp.eq.s32.totalorder %s13, 3
    %p106 = scmp.ne.s32.totalorder %s101, %s103
    %p107 = scmp.eq.s32.totalorder %s13, 0
    %p108 = por %p106, %p107
    %p109 = scmp.ne.s32.totalorder %s101, %s103
    %p110 = scmp.eq.s32.totalorder %s18, 3
    %p111 = por %p109, %p110
    %p112 = scmp.ne.s32.totalorder %s103, %s104
    %p113 = scmp.eq.s32.totalorder %s18, 0
    %p114 = por %p112, %p113
    %p115 = scmp.ne.s32.totalorder %s103, %s104
    %p116 = scmp.eq.s32.totalorder %s19, 3
    %p117 = por %p115, %p116
    %p119 = scmp.ne.s32.totalorder %s104, %s118
    %p120 = scmp.eq.s32.totalorder %s19, 0
    %p121 = por %p119, %p120
    %s123 = sadd.s32 %s122, 1
    %p126 = scmp.eq.s32.totalorder %s13, 3
    %p127 = scmp.ne.s32.totalorder %s122, %s124
    %p128 = scmp.eq.s32.totalorder %s13, 0
    %p129 = por %p127, %p128
    %p130 = scmp.ne.s32.totalorder %s122, %s124
    %p131 = scmp.eq.s32.totalorder %s18, 3
    %p132 = por %p130, %p131
    %p133 = scmp.ne.s32.totalorder %s124, %s125
    %p134 = scmp.eq.s32.totalorder %s18, 0
    %p135 = por %p133, %p134
    %p136 = scmp.ne.s32.totalorder %s124, %s125
    %p137 = scmp.eq.s32.totalorder %s19, 3
    %p138 = por %p136, %p137
    %p140 = scmp.ne.s32.totalorder %s125, %s139
    %p141 = scmp.eq.s32.totalorder %s19, 0
    %p142 = por %p140, %p141
    %s144 = sadd.s32 %s143, 1
    %p147 = scmp.eq.s32.totalorder %s13, 3
    %p148 = scmp.ne.s32.totalorder %s143, %s145
    %p149 = scmp.eq.s32.totalorder %s13, 0
    %p150 = por %p148, %p149
    %p151 = scmp.ne.s32.totalorder %s143, %s145
    %p152 = scmp.eq.s32.totalorder %s18, 3
    %p153 = por %p151, %p152
    %p154 = scmp.ne.s32.totalorder %s145, %s146
    %p155 = scmp.eq.s32.totalorder %s18, 0
    %p156 = por %p154, %p155
    %p157 = scmp.ne.s32.totalorder %s145, %s146
    %p158 = scmp.eq.s32.totalorder %s19, 3
    %p159 = por %p157, %p158
    %p161 = scmp.ne.s32.totalorder %s146, %s160
    %p162 = scmp.eq.s32.totalorder %s19, 0
    %p163 = por %p161, %p162
    %s165 = sadd.s32 %s164, 1
    %p168 = scmp.eq.s32.totalorder %s13, 3
    %p169 = scmp.ne.s32.totalorder %s164, %s166
    %p170 = scmp.eq.s32.totalorder %s13, 0
    %p171 = por %p169, %p170
    %p172 = scmp.ne.s32.totalorder %s164, %s166
    %p173 = scmp.eq.s32.totalorder %s18, 3
    %p174 = por %p172, %p173
    %p175 = scmp.ne.s32.totalorder %s166, %s167
    %p176 = scmp.eq.s32.totalorder %s18, 0
    %p177 = por %p175, %p176
    %p178 = scmp.ne.s32.totalorder %s166, %s167
    %p179 = scmp.eq.s32.totalorder %s19, 3
    %p180 = por %p178, %p179
    %p182 = scmp.ne.s32.totalorder %s167, %s181
    %p183 = scmp.eq.s32.totalorder %s19, 0
    %p184 = por %p182, %p183
    %s185 = ssub.s32 %s20, %s32
    %s186 = ssub.s32 %s21, %s28
    %s187 = sor.u32 %s185, %s186
    %p188 = scmp.eq.s32.totalorder %s187, 0
    %s190 = sadd.s32 %s189, 1
    %s191 = scalar_select %p188, %s189, %s190
    %p194 = pneg %p188
    %p195 = scmp.eq.s32.totalorder %s13, 3
    %p196 = por %p194, %p195
    %p197 = scmp.ne.s32.totalorder %s189, %s192
    %p198 = scmp.eq.s32.totalorder %s13, 0
    %p199 = por %p197, %p198
    %p200 = scmp.ne.s32.totalorder %s189, %s192
    %p201 = scmp.eq.s32.totalorder %s18, 3
    %p202 = por %p200, %p201
    %p203 = scmp.ne.s32.totalorder %s192, %s193
    %p204 = scmp.eq.s32.totalorder %s18, 0
    %p205 = por %p203, %p204
    %p206 = scmp.ne.s32.totalorder %s192, %s193
    %p207 = scmp.eq.s32.totalorder %s19, 3
    %p208 = por %p206, %p207
    %p210 = scmp.ne.s32.totalorder %s193, %s209
    %p211 = scmp.eq.s32.totalorder %s19, 0
    %p212 = por %p210, %p211
    %p213 = scmp.le.s32.totalorder 1, %s13
    %p214 = scmp.lt.s32.totalorder %s13, 5
    %p215 = pnand %p213, %p214
    %p216 = pneg %p215
    // Predicated region
    $region9: #{mobilenet_forward.9} parent=5 // pred_check
      _
    $region10: #{mobilenet_forward.9} parent=5 // pred_check_branch
      %218 = sbr.rel (%p215) target = $region12
    $region11: #{mobilenet_forward.9} parent=5 // pred_region
      %s219 = ssub.s32 %s13, 1
      // Predicated region
      $region13: #{mobilenet_forward.9} parent=11 // pred_check
        %p220 = pneg %p72
      $region14: #{mobilenet_forward.9} parent=11 // pred_check_branch
        %222 = sbr.rel (%p220) target = $region16
      $region15: #{mobilenet_forward.9} parent=11 // pred_region
        _
      $region16: #{mobilenet_forward.9} parent=11 // pred_fallthru
        _
      // Predicated region
      $region17: #{mobilenet_forward.9} parent=11 // pred_check
        %p223 = pneg %p93
      $region18: #{mobilenet_forward.9} parent=11 // pred_check_branch
        %225 = sbr.rel (%p223) target = $region20
      $region19: #{mobilenet_forward.9} parent=11 // pred_region
        _
      $region20: #{mobilenet_forward.9} parent=11 // pred_fallthru
        _
      // Predicated region
      $region21: #{mobilenet_forward.9} parent=11 // pred_check
        %p226 = pneg %p114
      $region22: #{mobilenet_forward.9} parent=11 // pred_check_branch
        %228 = sbr.rel (%p226) target = $region24
      $region23: #{mobilenet_forward.9} parent=11 // pred_region
        _
      $region24: #{mobilenet_forward.9} parent=11 // pred_fallthru
        _
      // Predicated region
      $region25: #{mobilenet_forward.9} parent=11 // pred_check
        %p229 = pneg %p135
      $region26: #{mobilenet_forward.9} parent=11 // pred_check_branch
        %231 = sbr.rel (%p229) target = $region28
      $region27: #{mobilenet_forward.9} parent=11 // pred_region
        _
      $region28: #{mobilenet_forward.9} parent=11 // pred_fallthru
        _
      // Predicated region
      $region29: #{mobilenet_forward.9} parent=11 // pred_check
        %p232 = pneg %p156
      $region30: #{mobilenet_forward.9} parent=11 // pred_check_branch
        %234 = sbr.rel (%p232) target = $region32
      $region31: #{mobilenet_forward.9} parent=11 // pred_region
        _
      $region32: #{mobilenet_forward.9} parent=11 // pred_fallthru
        _
      // Predicated region
      $region33: #{mobilenet_forward.9} parent=11 // pred_check
        %p235 = pneg %p177
      $region34: #{mobilenet_forward.9} parent=11 // pred_check_branch
        %237 = sbr.rel (%p235) target = $region36
      $region35: #{mobilenet_forward.9} parent=11 // pred_region
        _
      $region36: #{mobilenet_forward.9} parent=11 // pred_fallthru
        _
    $region12: #{mobilenet_forward.9} parent=5 // pred_fallthru
      _
    %p238 = scmp.lt.s32.totalorder %s13, 4
    // Predicated region
    $region37: #{mobilenet_forward.9} parent=5 // pred_check
      %p239 = pneg %p238
    $region38: #{mobilenet_forward.9} parent=5 // pred_check_branch
      %241 = sbr.rel (%p239) target = $region40
    $region39: #{mobilenet_forward.9} parent=5 // pred_region
      // Predicated region
      $region41: #{mobilenet_forward.9} parent=39 // pred_check
        %p242 = pneg %p45
      $region42: #{mobilenet_forward.9} parent=39 // pred_check_branch
        %244 = sbr.rel (%p242) target = $region44
      $region43: #{mobilenet_forward.9} parent=39 // pred_region
        %p245 = scmp.lt.s32.totalorder %s20, 1
        %s246 = scalar_select %p245, %s20, 1
        %s247 = smul.addr %s246, 16
        %s248 = smul.addr %s247, 2
        %s249 = scalar_lea.vmem %s0, %s248
      $region44: #{mobilenet_forward.9} parent=39 // pred_fallthru
        _
    $region40: #{mobilenet_forward.9} parent=5 // pred_fallthru
      _
    %p250 = scmp.le.s32.totalorder 1, %s13
    %p251 = scmp.lt.s32.totalorder %s13, 5
    %p252 = pnand %p250, %p251
    %p253 = pneg %p252
    // Predicated region
    $region45: #{mobilenet_forward.9} parent=5 // pred_check
      _
    $region46: #{mobilenet_forward.9} parent=5 // pred_check_branch
      %255 = sbr.rel (%p252) target = $region48
    $region47: #{mobilenet_forward.9} parent=5 // pred_region
      %s256 = ssub.s32 %s13, 1
      %p257 = scmp.lt.s32.totalorder %s22, 1
      %s258 = scalar_select %p257, %s22, 1
      %s259 = smul.addr %s258, 16
      %s260 = smul.addr %s259, 2
      %s261 = scalar_lea.vmem %s0, %s260
      %p262 = pneg %p51
      %p263 = pneg %p48
      %p264 = pneg %p72
      %p265 = pneg %p69
      %p266 = pneg %p93
      %p267 = pneg %p90
      %p268 = pneg %p114
      %p269 = pneg %p111
      %p270 = pneg %p135
      %p271 = pneg %p132
      %p272 = pneg %p156
      %p273 = pneg %p153
      %p274 = pneg %p177
      %p275 = pneg %p174
      %p276 = pneg %p205
      %p277 = pneg %p202
      %p278 = scmp.lt.s32.totalorder %s22, 1
      %s279 = scalar_select %p278, %s22, 1
      %p280 = scmp.lt.s32.totalorder %s23, 1
      %s281 = scalar_select %p280, %s23, 1
      %s282 = smul.addr %s281, 2
      %s283 = smul.addr %s279, 4
      %s284 = sadd.s32 %s282, %s283
      %s285 = scalar_lea.vmem %s7, %s284
      %p286 = scmp.lt.s32.totalorder %s22, 1
      %s287 = scalar_select %p286, %s22, 1
      %s288 = smul.addr %s287, 16
      %s289 = smul.addr %s288, 2
      %s290 = scalar_lea.vmem %s0, %s289
      %p291 = scmp.lt.s32.totalorder %s22, 1
      %s292 = scalar_select %p291, %s22, 1
      %p293 = scmp.lt.s32.totalorder %s23, 1
      %s294 = scalar_select %p293, %s23, 1
      %s295 = smul.addr %s294, 2
      %s296 = smul.addr %s292, 4
      %s297 = sadd.s32 %s295, %s296
      %s298 = scalar_lea.vmem %s7, %s297
      %s300 = smul.u32 %s23, 4
      %s301 = smul.addr %s300, 2
      %s302 = scalar_lea.vmem %s290, %s301
      %v303 = vld [vmem:[%s302] sm:$0x3]
      %v304 = vld [vmem:[%s302 + $0x2] sm:$0x3]
      %v305 = vld [vmem:[%s302 + $0x4] sm:$0x3]
      %v306 = vld [vmem:[%s302 + $0x6] sm:$0x3]
      %v307 = vld [vmem:[%s1] sm:$0x1]
      %s308 = scalar_lea.vmem %s1, 1
      %v309 = vld [vmem:[%s308] sm:$0x1]
      %s310 = scalar_lea.vmem %s1, 2
      %v311 = vld [vmem:[%s310] sm:$0x1]
      %v312 = vunpack.c.l.bf16 %v303
      %v314 = vlaneseq
      %v315 = vshrl.u32 %v314, 7
      %v316 = vsub.s32 0, %v315
      %v317 = vrot.slane %v307, %v316
      %v319 = vmul.f32 %v312, %v317
      %v321 = vlaneseq
      %v322 = vshrl.u32 %v321, 7
      %v323 = vsub.s32 0, %v322
      %v324 = vrot.slane %v309, %v323
      %v326 = vmul.f32 %v312, %v324
      %v328 = vrot.slane %v326, 5
      %v329 = vrot.slane %v328, 4
      %v331 = vadd.f32 %v319, %v329
      %v333 = vlaneseq
      %v334 = vshrl.u32 %v333, 7
      %v335 = vsub.s32 0, %v334
      %v336 = vrot.slane %v311, %v335
      %v338 = vmul.f32 %v312, %v336
      %v340 = vrot.slane %v338, 6
      %v341 = vrot.slane %v340, 4
      %v343 = vadd.f32 %v331, %v341
      %v344 = vunpack.c.l.bf16 %v304
      %v345 = vmul.f32 %v344, %v317
      %v346 = vmul.f32 %v344, %v324
      %v348 = vrot.slane %v346, 5
      %v349 = vrot.slane %v348, 4
      %v351 = vadd.f32 %v345, %v349
      %v352 = vmul.f32 %v344, %v336
      %v354 = vrot.slane %v352, 6
      %v355 = vrot.slane %v354, 4
      %v357 = vadd.f32 %v351, %v355
      %s358 = scalar_lea.vmem %s1, 3
      %v359 = vld [vmem:[%s358] sm:$0x1]
      %s360 = scalar_lea.vmem %s1, 4
      %v361 = vld [vmem:[%s360] sm:$0x1]
      %s362 = scalar_lea.vmem %s1, 5
      %v363 = vld [vmem:[%s362] sm:$0x1]
      %v365 = vlaneseq
      %v366 = vshrl.u32 %v365, 7
      %v367 = vsub.s32 0, %v366
      %v368 = vrot.slane %v359, %v367
      %v370 = vmul.f32 %v344, %v368
      %v371 = vadd.f32 %v343, %v370
      %v373 = vlaneseq
      %v374 = vshrl.u32 %v373, 7
      %v375 = vsub.s32 0, %v374
      %v376 = vrot.slane %v361, %v375
      %v378 = vmul.f32 %v344, %v376
      %v380 = vrot.slane %v378, 5
      %v381 = vrot.slane %v380, 4
      %v383 = vadd.f32 %v371, %v381
      %v385 = vlaneseq
      %v386 = vshrl.u32 %v385, 7
      %v387 = vsub.s32 0, %v386
      %v388 = vrot.slane %v363, %v387
      %v390 = vmul.f32 %v344, %v388
      %v392 = vrot.slane %v390, 6
      %v393 = vrot.slane %v392, 4
      %v395 = vadd.f32 %v383, %v393
      %v396 = vunpack.c.l.bf16 %v305
      %v397 = vmul.f32 %v396, %v368
      %v398 = vadd.f32 %v357, %v397
      %v399 = vmul.f32 %v396, %v376
      %v401 = vrot.slane %v399, 5
      %v402 = vrot.slane %v401, 4
      %v404 = vadd.f32 %v398, %v402
      %v405 = vmul.f32 %v396, %v388
      %v407 = vrot.slane %v405, 6
      %v408 = vrot.slane %v407, 4
      %v410 = vadd.f32 %v404, %v408
      %s411 = scalar_lea.vmem %s1, 6
      %v412 = vld [vmem:[%s411] sm:$0x1]
      %s413 = scalar_lea.vmem %s1, 7
      %v414 = vld [vmem:[%s413] sm:$0x1]
      %s415 = scalar_lea.vmem %s1, 8
      %v416 = vld [vmem:[%s415] sm:$0x1]
      %v418 = vlaneseq
      %v419 = vshrl.u32 %v418, 7
      %v420 = vsub.s32 0, %v419
      %v421 = vrot.slane %v412, %v420
      %v423 = vmul.f32 %v396, %v421
      %v424 = vadd.f32 %v395, %v423
      %v426 = vlaneseq
      %v427 = vshrl.u32 %v426, 7
      %v428 = vsub.s32 0, %v427
      %v429 = vrot.slane %v414, %v428
      %v431 = vmul.f32 %v396, %v429
      %v433 = vrot.slane %v431, 5
      %v434 = vrot.slane %v433, 4
      %v436 = vadd.f32 %v424, %v434
      %v438 = vlaneseq
      %v439 = vshrl.u32 %v438, 7
      %v440 = vsub.s32 0, %v439
      %v441 = vrot.slane %v416, %v440
      %v443 = vmul.f32 %v396, %v441
      %v445 = vrot.slane %v443, 6
      %v446 = vrot.slane %v445, 4
      %v448 = vadd.f32 %v436, %v446
      %v449 = vunpack.c.l.bf16 %v306
      %v450 = vmul.f32 %v449, %v421
      %v451 = vadd.f32 %v410, %v450
      %v452 = vmul.f32 %v449, %v429
      %v454 = vrot.slane %v452, 5
      %v455 = vrot.slane %v454, 4
      %v457 = vadd.f32 %v451, %v455
      %v458 = vmul.f32 %v449, %v441
      %v460 = vrot.slane %v458, 6
      %v461 = vrot.slane %v460, 4
      %v463 = vadd.f32 %v457, %v461
      %s464 = sadd.s32 %s23, 1
      %s465 = smul.u32 %s464, 4
      %s466 = smul.addr %s465, 2
      %s467 = scalar_lea.vmem %s290, %s466
      %v468 = vld [vmem:[%s467] sm:$0x3]
      %v469 = vld [vmem:[%s467 + $0x2] sm:$0x3]
      %v470 = vld [vmem:[%s467 + $0x4] sm:$0x3]
      %v471 = vld [vmem:[%s467 + $0x6] sm:$0x3]
      %s472 = scalar_lea.vmem %s1, 9
      %v473 = vld [vmem:[%s472] sm:$0x1]
      %s474 = scalar_lea.vmem %s1, 10
      %v475 = vld [vmem:[%s474] sm:$0x1]
      %s476 = scalar_lea.vmem %s1, 11
      %v477 = vld [vmem:[%s476] sm:$0x1]
      %v478 = vunpack.c.l.bf16 %v468
      %v480 = vlaneseq
      %v481 = vshrl.u32 %v480, 7
      %v482 = vsub.s32 0, %v481
      %v483 = vrot.slane %v473, %v482
      %v485 = vmul.f32 %v478, %v483
      %v486 = vadd.f32 %v448, %v485
      %v488 = vlaneseq
      %v489 = vshrl.u32 %v488, 7
      %v490 = vsub.s32 0, %v489
      %v491 = vrot.slane %v475, %v490
      %v493 = vmul.f32 %v478, %v491
      %v495 = vrot.slane %v493, 5
      %v496 = vrot.slane %v495, 4
      %v498 = vadd.f32 %v486, %v496
      %v500 = vlaneseq
      %v501 = vshrl.u32 %v500, 7
      %v502 = vsub.s32 0, %v501
      %v503 = vrot.slane %v477, %v502
      %v505 = vmul.f32 %v478, %v503
      %v507 = vrot.slane %v505, 6
      %v508 = vrot.slane %v507, 4
      %v510 = vadd.f32 %v498, %v508
      %v511 = vunpack.c.l.bf16 %v469
      %v512 = vmul.f32 %v511, %v483
      %v513 = vadd.f32 %v463, %v512
      %v514 = vmul.f32 %v511, %v491
      %v516 = vrot.slane %v514, 5
      %v517 = vrot.slane %v516, 4
      %v519 = vadd.f32 %v513, %v517
      %v520 = vmul.f32 %v511, %v503
      %v522 = vrot.slane %v520, 6
      %v523 = vrot.slane %v522, 4
      %v525 = vadd.f32 %v519, %v523
      %s526 = scalar_lea.vmem %s1, 12
      %v527 = vld [vmem:[%s526] sm:$0x1]
      %s528 = scalar_lea.vmem %s1, 13
      %v529 = vld [vmem:[%s528] sm:$0x1]
      %s530 = scalar_lea.vmem %s1, 14
      %v531 = vld [vmem:[%s530] sm:$0x1]
      %v533 = vlaneseq
      %v534 = vshrl.u32 %v533, 7
      %v535 = vsub.s32 0, %v534
      %v536 = vrot.slane %v527, %v535
      %v538 = vmul.f32 %v511, %v536
      %v539 = vadd.f32 %v510, %v538
      %v541 = vlaneseq
      %v542 = vshrl.u32 %v541, 7
      %v543 = vsub.s32 0, %v542
      %v544 = vrot.slane %v529, %v543
      %v546 = vmul.f32 %v511, %v544
      %v548 = vrot.slane %v546, 5
      %v549 = vrot.slane %v548, 4
      %v551 = vadd.f32 %v539, %v549
      %v553 = vlaneseq
      %v554 = vshrl.u32 %v553, 7
      %v555 = vsub.s32 0, %v554
      %v556 = vrot.slane %v531, %v555
      %v558 = vmul.f32 %v511, %v556
      %v560 = vrot.slane %v558, 6
      %v561 = vrot.slane %v560, 4
      %v563 = vadd.f32 %v551, %v561
      %v564 = vunpack.c.l.bf16 %v470
      %v565 = vmul.f32 %v564, %v536
      %v566 = vadd.f32 %v525, %v565
      %v567 = vmul.f32 %v564, %v544
      %v569 = vrot.slane %v567, 5
      %v570 = vrot.slane %v569, 4
      %v572 = vadd.f32 %v566, %v570
      %v573 = vmul.f32 %v564, %v556
      %v575 = vrot.slane %v573, 6
      %v576 = vrot.slane %v575, 4
      %v578 = vadd.f32 %v572, %v576
      %s579 = scalar_lea.vmem %s1, 15
      %v580 = vld [vmem:[%s579] sm:$0x1]
      %s581 = scalar_lea.vmem %s1, 16
      %v582 = vld [vmem:[%s581] sm:$0x1]
      %s583 = scalar_lea.vmem %s1, 17
      %v584 = vld [vmem:[%s583] sm:$0x1]
      %v586 = vlaneseq
      %v587 = vshrl.u32 %v586, 7
      %v588 = vsub.s32 0, %v587
      %v589 = vrot.slane %v580, %v588
      %v591 = vmul.f32 %v564, %v589
      %v592 = vadd.f32 %v563, %v591
      %v594 = vlaneseq
      %v595 = vshrl.u32 %v594, 7
      %v596 = vsub.s32 0, %v595
      %v597 = vrot.slane %v582, %v596
      %v599 = vmul.f32 %v564, %v597
      %v601 = vrot.slane %v599, 5
      %v602 = vrot.slane %v601, 4
      %v604 = vadd.f32 %v592, %v602
      %v606 = vlaneseq
      %v607 = vshrl.u32 %v606, 7
      %v608 = vsub.s32 0, %v607
      %v609 = vrot.slane %v584, %v608
      %v611 = vmul.f32 %v564, %v609
      %v613 = vrot.slane %v611, 6
      %v614 = vrot.slane %v613, 4
      %v616 = vadd.f32 %v604, %v614
      %v617 = vunpack.c.l.bf16 %v471
      %v618 = vmul.f32 %v617, %v589
      %v619 = vadd.f32 %v578, %v618
      %v620 = vmul.f32 %v617, %v597
      %v622 = vrot.slane %v620, 5
      %v623 = vrot.slane %v622, 4
      %v625 = vadd.f32 %v619, %v623
      %v626 = vmul.f32 %v617, %v609
      %v628 = vrot.slane %v626, 6
      %v629 = vrot.slane %v628, 4
      %v631 = vadd.f32 %v625, %v629
      %s632 = sadd.s32 %s23, 2
      %s633 = smul.u32 %s632, 4
      %s634 = smul.addr %s633, 2
      %s635 = scalar_lea.vmem %s290, %s634
      %v636 = vld [vmem:[%s635] sm:$0x3]
      %v637 = vld [vmem:[%s635 + $0x2] sm:$0x3]
      %v638 = vld [vmem:[%s635 + $0x4] sm:$0x3]
      %v639 = vld [vmem:[%s635 + $0x6] sm:$0x3]
      %s640 = scalar_lea.vmem %s1, 18
      %v641 = vld [vmem:[%s640] sm:$0x1]
      %s642 = scalar_lea.vmem %s1, 19
      %v643 = vld [vmem:[%s642] sm:$0x1]
      %s644 = scalar_lea.vmem %s1, 20
      %v645 = vld [vmem:[%s644] sm:$0x1]
      %v646 = vunpack.c.l.bf16 %v636
      %v648 = vlaneseq
      %v649 = vshrl.u32 %v648, 7
      %v650 = vsub.s32 0, %v649
      %v651 = vrot.slane %v641, %v650
      %v653 = vmul.f32 %v646, %v651
      %v654 = vadd.f32 %v616, %v653
      %v656 = vlaneseq
      %v657 = vshrl.u32 %v656, 7
      %v658 = vsub.s32 0, %v657
      %v659 = vrot.slane %v643, %v658
      %v661 = vmul.f32 %v646, %v659
      %v663 = vrot.slane %v661, 5
      %v664 = vrot.slane %v663, 4
      %v666 = vadd.f32 %v654, %v664
      %v668 = vlaneseq
      %v669 = vshrl.u32 %v668, 7
      %v670 = vsub.s32 0, %v669
      %v671 = vrot.slane %v645, %v670
      %v673 = vmul.f32 %v646, %v671
      %v675 = vrot.slane %v673, 6
      %v676 = vrot.slane %v675, 4
      %v678 = vadd.f32 %v666, %v676
      %v679 = vunpack.c.l.bf16 %v637
      %v680 = vmul.f32 %v679, %v651
      %v681 = vadd.f32 %v631, %v680
      %v682 = vmul.f32 %v679, %v659
      %v684 = vrot.slane %v682, 5
      %v685 = vrot.slane %v684, 4
      %v687 = vadd.f32 %v681, %v685
      %v688 = vmul.f32 %v679, %v671
      %v690 = vrot.slane %v688, 6
      %v691 = vrot.slane %v690, 4
      %v693 = vadd.f32 %v687, %v691
      %s694 = scalar_lea.vmem %s1, 21
      %v695 = vld [vmem:[%s694] sm:$0x1]
      %s696 = scalar_lea.vmem %s1, 22
      %v697 = vld [vmem:[%s696] sm:$0x1]
      %s698 = scalar_lea.vmem %s1, 23
      %v699 = vld [vmem:[%s698] sm:$0x1]
      %v701 = vlaneseq
      %v702 = vshrl.u32 %v701, 7
      %v703 = vsub.s32 0, %v702
      %v704 = vrot.slane %v695, %v703
      %v706 = vmul.f32 %v679, %v704
      %v707 = vadd.f32 %v678, %v706
      %v709 = vlaneseq
      %v710 = vshrl.u32 %v709, 7
      %v711 = vsub.s32 0, %v710
      %v712 = vrot.slane %v697, %v711
      %v714 = vmul.f32 %v679, %v712
      %v716 = vrot.slane %v714, 5
      %v717 = vrot.slane %v716, 4
      %v719 = vadd.f32 %v707, %v717
      %v721 = vlaneseq
      %v722 = vshrl.u32 %v721, 7
      %v723 = vsub.s32 0, %v722
      %v724 = vrot.slane %v699, %v723
      %v726 = vmul.f32 %v679, %v724
      %v728 = vrot.slane %v726, 6
      %v729 = vrot.slane %v728, 4
      %v731 = vadd.f32 %v719, %v729
      %v732 = vunpack.c.l.bf16 %v638
      %v733 = vmul.f32 %v732, %v704
      %v734 = vadd.f32 %v693, %v733
      %v735 = vmul.f32 %v732, %v712
      %v737 = vrot.slane %v735, 5
      %v738 = vrot.slane %v737, 4
      %v740 = vadd.f32 %v734, %v738
      %v741 = vmul.f32 %v732, %v724
      %v743 = vrot.slane %v741, 6
      %v744 = vrot.slane %v743, 4
      %v746 = vadd.f32 %v740, %v744
      %s747 = scalar_lea.vmem %s1, 24
      %v748 = vld [vmem:[%s747] sm:$0x1]
      %s749 = scalar_lea.vmem %s1, 25
      %v750 = vld [vmem:[%s749] sm:$0x1]
      %s751 = scalar_lea.vmem %s1, 26
      %v752 = vld [vmem:[%s751] sm:$0x1]
      %v754 = vlaneseq
      %v755 = vshrl.u32 %v754, 7
      %v756 = vsub.s32 0, %v755
      %v757 = vrot.slane %v748, %v756
      %v759 = vmul.f32 %v732, %v757
      %v760 = vadd.f32 %v731, %v759
      %v762 = vlaneseq
      %v763 = vshrl.u32 %v762, 7
      %v764 = vsub.s32 0, %v763
      %v765 = vrot.slane %v750, %v764
      %v767 = vmul.f32 %v732, %v765
      %v769 = vrot.slane %v767, 5
      %v770 = vrot.slane %v769, 4
      %v772 = vadd.f32 %v760, %v770
      %v774 = vlaneseq
      %v775 = vshrl.u32 %v774, 7
      %v776 = vsub.s32 0, %v775
      %v777 = vrot.slane %v752, %v776
      %v779 = vmul.f32 %v732, %v777
      %v781 = vrot.slane %v779, 6
      %v782 = vrot.slane %v781, 4
      %v784 = vadd.f32 %v772, %v782
      %v785 = vunpack.c.l.bf16 %v639
      %v786 = vmul.f32 %v785, %v757
      %v787 = vadd.f32 %v746, %v786
      %v788 = vmul.f32 %v785, %v765
      %v790 = vrot.slane %v788, 5
      %v791 = vrot.slane %v790, 4
      %v793 = vadd.f32 %v787, %v791
      %v794 = vmul.f32 %v785, %v777
      %v796 = vrot.slane %v794, 6
      %v797 = vrot.slane %v796, 4
      %v799 = vadd.f32 %v793, %v797
      %v800 = vld [vmem:[%s2] sm:$0x1]
      %v801 = vld [vmem:[%s3] sm:$0x1]
      %v802 = vld [vmem:[%s4] sm:$0xf]
      %v803 = vld [vmem:[%s4 + $0x4] sm:$0xf]
      %v804 = vld [vmem:[%s4 + $0x8] sm:$0xf]
      %v805 = vld [vmem:[%s4 + $0xc] sm:$0xf]
      %v806 = vld [vmem:[%s4 + $0x10] sm:$0xf]
      %v807 = vld [vmem:[%s4 + $0x14] sm:$0xf]
      %v808 = vld [vmem:[%s4 + $0x18] sm:$0xf]
      %v809 = vld [vmem:[%s4 + $0x1c] sm:$0xf]
      %v810 = vld [vmem:[%s4 + $0x20] sm:$0xf]
      %v811 = vld [vmem:[%s4 + $0x24] sm:$0xf]
      %v812 = vld [vmem:[%s4 + $0x28] sm:$0xf]
      %v813 = vld [vmem:[%s4 + $0x2c] sm:$0xf]
      %v814 = vld [vmem:[%s4 + $0x30] sm:$0xf]
      %v815 = vld [vmem:[%s4 + $0x34] sm:$0xf]
      %v816 = vld [vmem:[%s4 + $0x38] sm:$0xf]
      %v817 = vld [vmem:[%s4 + $0x3c] sm:$0xf]
      %v818 = vld [vmem:[%s5] sm:$0x1]
      %v819 = vld [vmem:[%s6] sm:$0x1]
      %v821 = vlaneseq
      %v822 = vshrl.u32 %v821, 7
      %v823 = vsub.s32 0, %v822
      %v824 = vrot.slane %v800, %v823
      %v826 = vmul.f32 %v784, %v824
      %v828 = vlaneseq
      %v829 = vshrl.u32 %v828, 7
      %v830 = vsub.s32 0, %v829
      %v831 = vrot.slane %v801, %v830
      %v833 = vadd.f32 %v826, %v831
      %v834 = vmax.f32 %v833, 0.0
      %v835 = vpack.c.bf16 %v834, %v834
      %v852 = vunpack.c.l.b16 %v802
      %v853 = vunpack.c.l.b16 %v803
      %v854 = vunpack.c.l.b16 %v804
      %v855 = vunpack.c.l.b16 %v805
      %v856 = vunpack.c.l.b16 %v806
      %v857 = vunpack.c.l.b16 %v807
      %v858 = vunpack.c.l.b16 %v808
      %v859 = vunpack.c.l.b16 %v809
      %v860 = vunpack.c.l.b16 %v810
      %v861 = vunpack.c.l.b16 %v811
      %v862 = vunpack.c.l.b16 %v812
      %v863 = vunpack.c.l.b16 %v813
      %v864 = vunpack.c.l.b16 %v814
      %v865 = vunpack.c.l.b16 %v815
      %v866 = vunpack.c.l.b16 %v816
      %v867 = vunpack.c.l.b16 %v817
      %v868 = vpack.c.b16 %v853, %v852
      %v869 = vpack.c.b16 %v855, %v854
      %v870 = vpack.c.b16 %v857, %v856
      %v871 = vpack.c.b16 %v859, %v858
      %v872 = vpack.c.b16 %v861, %v860
      %v873 = vpack.c.b16 %v863, %v862
      %v874 = vpack.c.b16 %v865, %v864
      %v875 = vpack.c.b16 %v867, %v866
      %884 = vmatprep.subr.bf16.mxu0 0
      %885 = vmatpush1.bf16.msra.mxu0 %v868
      %886 = vmatprep.subr.bf16.mxu0 0
      %887 = vmatpush1.bf16.msra.mxu0 %v869
      %888 = vmatprep.subr.bf16.mxu0 0
      %889 = vmatpush1.bf16.msra.mxu0 %v870
      %890 = vmatprep.subr.bf16.mxu0 0
      %891 = vmatpush1.bf16.msra.mxu0 %v871
      %892 = vmatprep.subr.bf16.mxu0 0
      %893 = vmatpush1.bf16.msra.mxu0 %v872
      %894 = vmatprep.subr.bf16.mxu0 0
      %895 = vmatpush1.bf16.msra.mxu0 %v873
      %896 = vmatprep.subr.bf16.mxu0 0
      %897 = vmatpush1.bf16.msra.mxu0 %v874
      %898 = vmatprep.subr.bf16.mxu0 0
      %899 = vmatpush1.bf16.msra.mxu0 %v875
      %900 = vmatprep.subr.bf16.mxu0 0
      %901 = vmatpush1.bf16.msra.mxu0 0
      %902 = vmatprep.subr.bf16.mxu0 0
      %903 = vmatpush1.bf16.msra.mxu0 0
      %904 = vmatprep.subr.bf16.mxu0 0
      %905 = vmatpush1.bf16.msra.mxu0 0
      %906 = vmatprep.subr.bf16.mxu0 0
      %907 = vmatpush1.bf16.msra.mxu0 0
      %908 = vmatprep.subr.bf16.mxu0 0
      %909 = vmatpush1.bf16.msra.mxu0 0
      %910 = vmatprep.subr.bf16.mxu0 0
      %911 = vmatpush1.bf16.msra.mxu0 0
      %912 = vmatprep.subr.bf16.mxu0 0
      %913 = vmatpush1.bf16.msra.mxu0 0
      %914 = vmatprep.subr.bf16.mxu0 0
      %915 = vmatpush1.bf16.msra.mxu0 0
      %916 = vmatprep.mubr.bf16.mxu0 0
      %917 = vmatmul.mubr.bf16.gmra.mrb[0].mxu0 %v835
      %v918 = vpop.f32.mrb[0].mxu0
      %v919 = vadd.f32 0.0, %v918
      %v920 = vpop.f32.mrb[0].mxu0
      %v921 = vpop.f32.mrb[0].mxu0
      %v922 = vpop.f32.mrb[0].mxu0
      %923 = vdwg.mxu0
      %v925 = vlaneseq
      %v926 = vshrl.u32 %v925, 7
      %v927 = vsub.s32 0, %v926
      %v928 = vrot.slane %v818, %v927
      %v930 = vmul.f32 %v919, %v928
      %v932 = vlaneseq
      %v933 = vshrl.u32 %v932, 7
      %v934 = vsub.s32 0, %v933
      %v935 = vrot.slane %v819, %v934
      %v937 = vadd.f32 %v930, %v935
      %v938 = vmax.f32 %v937, 0.0
      %v939 = vpack.c.bf16 %v938, %v938
      %940 = vst [vmem:[%s298] sm:$0x1] %v939
      %v941 = vmul.f32 %v799, %v824
      %v942 = vadd.f32 %v941, %v831
      %v943 = vmax.f32 %v942, 0.0
      %v944 = vpack.c.bf16 %v943, %v943
      %945 = vmatprep.subr.bf16.mxu0 0
      %946 = vmatpush1.bf16.msra.mxu0 %v868
      %947 = vmatprep.subr.bf16.mxu0 0
      %948 = vmatpush1.bf16.msra.mxu0 %v869
      %949 = vmatprep.subr.bf16.mxu0 0
      %950 = vmatpush1.bf16.msra.mxu0 %v870
      %951 = vmatprep.subr.bf16.mxu0 0
      %952 = vmatpush1.bf16.msra.mxu0 %v871
      %953 = vmatprep.subr.bf16.mxu0 0
      %954 = vmatpush1.bf16.msra.mxu0 %v872
      %955 = vmatprep.subr.bf16.mxu0 0
      %956 = vmatpush1.bf16.msra.mxu0 %v873
      %957 = vmatprep.subr.bf16.mxu0 0
      %958 = vmatpush1.bf16.msra.mxu0 %v874
      %959 = vmatprep.subr.bf16.mxu0 0
      %960 = vmatpush1.bf16.msra.mxu0 %v875
      %961 = vmatprep.subr.bf16.mxu0 0
      %962 = vmatpush1.bf16.msra.mxu0 0
      %963 = vmatprep.subr.bf16.mxu0 0
      %964 = vmatpush1.bf16.msra.mxu0 0
      %965 = vmatprep.subr.bf16.mxu0 0
      %966 = vmatpush1.bf16.msra.mxu0 0
      %967 = vmatprep.subr.bf16.mxu0 0
      %968 = vmatpush1.bf16.msra.mxu0 0
      %969 = vmatprep.subr.bf16.mxu0 0
      %970 = vmatpush1.bf16.msra.mxu0 0
      %971 = vmatprep.subr.bf16.mxu0 0
      %972 = vmatpush1.bf16.msra.mxu0 0
      %973 = vmatprep.subr.bf16.mxu0 0
      %974 = vmatpush1.bf16.msra.mxu0 0
      %975 = vmatprep.subr.bf16.mxu0 0
      %976 = vmatpush1.bf16.msra.mxu0 0
      %977 = vmatprep.mubr.bf16.mxu0 0
      %978 = vmatmul.mubr.bf16.gmra.mrb[0].mxu0 %v944
      %v979 = vpop.f32.mrb[0].mxu0
      %v980 = vadd.f32 0.0, %v979
      %v981 = vpop.f32.mrb[0].mxu0
      %v982 = vpop.f32.mrb[0].mxu0
      %v983 = vpop.f32.mrb[0].mxu0
      %984 = vdwg.mxu0
      %v985 = vmul.f32 %v980, %v928
      %v986 = vadd.f32 %v985, %v935
      %v987 = vmax.f32 %v986, 0.0
      %v988 = vpack.c.bf16 %v987, %v987
      %s989 = scalar_lea.vmem %s298, 1
      %990 = vst [vmem:[%s989] sm:$0x1] %v988
      %p991 = scmp.lt.s32.totalorder %s22, 1
      %s992 = scalar_select %p991, %s22, 1
      %p993 = scmp.lt.s32.totalorder %s23, 1
      %s994 = scalar_select %p993, %s23, 1
      %s995 = smul.addr %s994, 2
      %s996 = smul.addr %s992, 4
      %s997 = sadd.s32 %s995, %s996
      %s998 = scalar_lea.vmem %s7, %s997
      // Predicated region
      $region49: #{mobilenet_forward.9} parent=47 // pred_check
        %p999 = pneg %p202
      $region50: #{mobilenet_forward.9} parent=47 // pred_check_branch
        %1001 = sbr.rel (%p999) target = $region52
      $region51: #{mobilenet_forward.9} parent=47 // pred_region
        _
      $region52: #{mobilenet_forward.9} parent=47 // pred_fallthru
        _
    $region48: #{mobilenet_forward.9} parent=5 // pred_fallthru
      _
    %p1002 = scmp.le.s32.totalorder 2, %s13
    // Predicated region
    $region53: #{mobilenet_forward.9} parent=5 // pred_check
      %p1003 = pneg %p1002
    $region54: #{mobilenet_forward.9} parent=5 // pred_check_branch
      %1005 = sbr.rel (%p1003) target = $region56
    $region55: #{mobilenet_forward.9} parent=5 // pred_region
      %s1006 = ssub.s32 %s13, 2
      // Predicated region
      $region57: #{mobilenet_forward.9} parent=55 // pred_check
        %p1007 = pneg %p208
      $region58: #{mobilenet_forward.9} parent=55 // pred_check_branch
        %1009 = sbr.rel (%p1007) target = $region60
      $region59: #{mobilenet_forward.9} parent=55 // pred_region
        %p1010 = scmp.lt.s32.totalorder %s24, 1
        %s1011 = scalar_select %p1010, %s24, 1
        %p1012 = scmp.lt.s32.totalorder %s25, 1
        %s1013 = scalar_select %p1012, %s25, 1
        %s1014 = smul.addr %s1013, 2
        %s1015 = smul.addr %s1011, 4
        %s1016 = sadd.s32 %s1014, %s1015
        %s1017 = scalar_lea.vmem %s7, %s1016
      $region60: #{mobilenet_forward.9} parent=55 // pred_fallthru
        _
    $region56: #{mobilenet_forward.9} parent=5 // pred_fallthru
      _
  $region6: #{mobilenet_forward.9} parent=0 // loop_footer
    %s17 = sadd.s32 1, %s13
  $region7: #{mobilenet_forward.9} parent=0 // loop_footer_branch
    %12 = sbr.rel target = $region3
  $region8: #{mobilenet_forward.9} parent=0 // loop_exit
    _

// kernel: mobilenet_forward.10
$region0: #{mobilenet_forward.10}
  #allocation0 [shape = 'u32[]', space=smem, size = 0x4, offset = 0x4, fixed_abs, tag = 'smem constant byte address 0x4 - core index']
  #allocation1 [shape = 'u32[144,128]{1,0:T(1,128)}', space=vmem, size = 0x12000, scoped, tag = 'internal scratch']
  %s0 = inlined_call_operand.vmem [shape: bf16[2,4,4,4,128], index: 0, kind: input, shape index: {}]
  %s1 = inlined_call_operand.vmem [shape: f32[27,1,128], index: 1, kind: input, shape index: {}]
  %s2 = inlined_call_operand.vmem [shape: f32[1,128], index: 2, kind: input, shape index: {}]
  %s3 = inlined_call_operand.vmem [shape: f32[1,128], index: 3, kind: input, shape index: {}]
  %s4 = inlined_call_operand.vmem [shape: bf16[128,128], index: 4, kind: input, shape index: {}]
  %s5 = inlined_call_operand.vmem [shape: f32[1,128], index: 5, kind: input, shape index: {}]
  %s6 = inlined_call_operand.vmem [shape: f32[1,128], index: 6, kind: input, shape index: {}]
  %s7 = inlined_call_operand.vmem [shape: bf16[2,1,1,2,128], index: 7, kind: output, shape index: {}]
  %s8 = sld [smem:[#allocation0]]
  $region61: #{mobilenet_forward.10} parent=0
    _
  %s10 = ssub.s32 1, %s8
  %s11 = scalar_select 0, %s10, %s8
  loop: start=0, step=1, limit=4
  $region2: #{mobilenet_forward.10} parent=0 // loop_pre_header
    _
  $region3: #{mobilenet_forward.10} parent=0 // loop_header
    %s13 = sphi 0, %s17
    %p14 = scmp.ge.s32.totalorder %s13, 4
    %s20 = sphi 0, %s32
    %s21 = sphi 0, %s28
    %s22 = sphi 0, %s20
    %s23 = sphi 0, %s21
    %s24 = sphi 0, %s22
    %s25 = sphi 0, %s23
    %s35 = sphi 0, %s37
    %s38 = sphi 0, %s35
    %s39 = sphi 0, %s38
    %s55 = sphi 0, %s39
    %s59 = sphi 0, %s59
    %s61 = sphi 0, %s59
    %s62 = sphi 0, %s61
    %s76 = sphi 0, %s62
    %s80 = sphi 0, %s80
    %s82 = sphi 0, %s80
    %s83 = sphi 0, %s82
    %s97 = sphi 0, %s83
    %s101 = sphi 0, %s101
    %s103 = sphi 0, %s101
    %s104 = sphi 0, %s103
    %s118 = sphi 0, %s104
    %s122 = sphi 0, %s122
    %s124 = sphi 0, %s122
    %s125 = sphi 0, %s124
    %s139 = sphi 0, %s125
    %s143 = sphi 0, %s143
    %s145 = sphi 0, %s143
    %s146 = sphi 0, %s145
    %s160 = sphi 0, %s146
    %s164 = sphi 0, %s164
    %s166 = sphi 0, %s164
    %s167 = sphi 0, %s166
    %s181 = sphi 0, %s167
    %s189 = sphi 0, %s191
    %s192 = sphi 0, %s189
    %s193 = sphi 0, %s192
    %s209 = sphi 0, %s193
  $region4: #{mobilenet_forward.10} parent=0 // loop_header_branch
    %16 = sbr.rel (%p14) target = $region8
  $region5: #{mobilenet_forward.10} parent=0 // loop_body
    %s18 = ssub.s32 %s13, 1
    %s19 = ssub.s32 %s13, 2
    %s26 = sadd.s32 1, %s21
    %p27 = scmp.ge.s32.totalorder %s26, 1
    %s28 = scalar_select %p27, 0, %s26
    %s29 = sadd.s32 1, %s20
    %s30 = scalar_select %p27, %s29, %s20
    %p31 = scmp.ge.s32.totalorder %s30, 2
    %s32 = scalar_select %p31, 0, %s30
    %s33 = ssub.s32 %s20, %s32
    %p34 = scmp.eq.s32.totalorder %s33, 0
    %s36 = sadd.s32 %s35, 1
    %s37 = scalar_select %p34, %s35, %s36
    %p40 = pneg %p34
    %p41 = scmp.eq.s32.totalorder %s13, 1
    %p42 = por %p40, %p41
    %p43 = scmp.ne.s32.totalorder %s35, %s38
    %p44 = scmp.eq.s32.totalorder %s13, 0
    %p45 = por %p43, %p44
    %p46 = scmp.ne.s32.totalorder %s35, %s38
    %p47 = scmp.eq.s32.totalorder %s18, 1
    %p48 = por %p46, %p47
    %p49 = scmp.ne.s32.totalorder %s38, %s39
    %p50 = scmp.eq.s32.totalorder %s18, 0
    %p51 = por %p49, %p50
    %p52 = scmp.ne.s32.totalorder %s38, %s39
    %p53 = scmp.eq.s32.totalorder %s19, 1
    %p54 = por %p52, %p53
    %p56 = scmp.ne.s32.totalorder %s39, %s55
    %p57 = scmp.eq.s32.totalorder %s19, 0
    %p58 = por %p56, %p57
    %s60 = sadd.s32 %s59, 1
    %p63 = scmp.eq.s32.totalorder %s13, 1
    %p64 = scmp.ne.s32.totalorder %s59, %s61
    %p65 = scmp.eq.s32.totalorder %s13, 0
    %p66 = por %p64, %p65
    %p67 = scmp.ne.s32.totalorder %s59, %s61
    %p68 = scmp.eq.s32.totalorder %s18, 1
    %p69 = por %p67, %p68
    %p70 = scmp.ne.s32.totalorder %s61, %s62
    %p71 = scmp.eq.s32.totalorder %s18, 0
    %p72 = por %p70, %p71
    %p73 = scmp.ne.s32.totalorder %s61, %s62
    %p74 = scmp.eq.s32.totalorder %s19, 1
    %p75 = por %p73, %p74
    %p77 = scmp.ne.s32.totalorder %s62, %s76
    %p78 = scmp.eq.s32.totalorder %s19, 0
    %p79 = por %p77, %p78
    %s81 = sadd.s32 %s80, 1
    %p84 = scmp.eq.s32.totalorder %s13, 1
    %p85 = scmp.ne.s32.totalorder %s80, %s82
    %p86 = scmp.eq.s32.totalorder %s13, 0
    %p87 = por %p85, %p86
    %p88 = scmp.ne.s32.totalorder %s80, %s82
    %p89 = scmp.eq.s32.totalorder %s18, 1
    %p90 = por %p88, %p89
    %p91 = scmp.ne.s32.totalorder %s82, %s83
    %p92 = scmp.eq.s32.totalorder %s18, 0
    %p93 = por %p91, %p92
    %p94 = scmp.ne.s32.totalorder %s82, %s83
    %p95 = scmp.eq.s32.totalorder %s19, 1
    %p96 = por %p94, %p95
    %p98 = scmp.ne.s32.totalorder %s83, %s97
    %p99 = scmp.eq.s32.totalorder %s19, 0
    %p100 = por %p98, %p99
    %s102 = sadd.s32 %s101, 1
    %p105 = scmp.eq.s32.totalorder %s13, 1
    %p106 = scmp.ne.s32.totalorder %s101, %s103
    %p107 = scmp.eq.s32.totalorder %s13, 0
    %p108 = por %p106, %p107
    %p109 = scmp.ne.s32.totalorder %s101, %s103
    %p110 = scmp.eq.s32.totalorder %s18, 1
    %p111 = por %p109, %p110
    %p112 = scmp.ne.s32.totalorder %s103, %s104
    %p113 = scmp.eq.s32.totalorder %s18, 0
    %p114 = por %p112, %p113
    %p115 = scmp.ne.s32.totalorder %s103, %s104
    %p116 = scmp.eq.s32.totalorder %s19, 1
    %p117 = por %p115, %p116
    %p119 = scmp.ne.s32.totalorder %s104, %s118
    %p120 = scmp.eq.s32.totalorder %s19, 0
    %p121 = por %p119, %p120
    %s123 = sadd.s32 %s122, 1
    %p126 = scmp.eq.s32.totalorder %s13, 1
    %p127 = scmp.ne.s32.totalorder %s122, %s124
    %p128 = scmp.eq.s32.totalorder %s13, 0
    %p129 = por %p127, %p128
    %p130 = scmp.ne.s32.totalorder %s122, %s124
    %p131 = scmp.eq.s32.totalorder %s18, 1
    %p132 = por %p130, %p131
    %p133 = scmp.ne.s32.totalorder %s124, %s125
    %p134 = scmp.eq.s32.totalorder %s18, 0
    %p135 = por %p133, %p134
    %p136 = scmp.ne.s32.totalorder %s124, %s125
    %p137 = scmp.eq.s32.totalorder %s19, 1
    %p138 = por %p136, %p137
    %p140 = scmp.ne.s32.totalorder %s125, %s139
    %p141 = scmp.eq.s32.totalorder %s19, 0
    %p142 = por %p140, %p141
    %s144 = sadd.s32 %s143, 1
    %p147 = scmp.eq.s32.totalorder %s13, 1
    %p148 = scmp.ne.s32.totalorder %s143, %s145
    %p149 = scmp.eq.s32.totalorder %s13, 0
    %p150 = por %p148, %p149
    %p151 = scmp.ne.s32.totalorder %s143, %s145
    %p152 = scmp.eq.s32.totalorder %s18, 1
    %p153 = por %p151, %p152
    %p154 = scmp.ne.s32.totalorder %s145, %s146
    %p155 = scmp.eq.s32.totalorder %s18, 0
    %p156 = por %p154, %p155
    %p157 = scmp.ne.s32.totalorder %s145, %s146
    %p158 = scmp.eq.s32.totalorder %s19, 1
    %p159 = por %p157, %p158
    %p161 = scmp.ne.s32.totalorder %s146, %s160
    %p162 = scmp.eq.s32.totalorder %s19, 0
    %p163 = por %p161, %p162
    %s165 = sadd.s32 %s164, 1
    %p168 = scmp.eq.s32.totalorder %s13, 1
    %p169 = scmp.ne.s32.totalorder %s164, %s166
    %p170 = scmp.eq.s32.totalorder %s13, 0
    %p171 = por %p169, %p170
    %p172 = scmp.ne.s32.totalorder %s164, %s166
    %p173 = scmp.eq.s32.totalorder %s18, 1
    %p174 = por %p172, %p173
    %p175 = scmp.ne.s32.totalorder %s166, %s167
    %p176 = scmp.eq.s32.totalorder %s18, 0
    %p177 = por %p175, %p176
    %p178 = scmp.ne.s32.totalorder %s166, %s167
    %p179 = scmp.eq.s32.totalorder %s19, 1
    %p180 = por %p178, %p179
    %p182 = scmp.ne.s32.totalorder %s167, %s181
    %p183 = scmp.eq.s32.totalorder %s19, 0
    %p184 = por %p182, %p183
    %s185 = ssub.s32 %s20, %s32
    %s186 = ssub.s32 %s21, %s28
    %s187 = sor.u32 %s185, %s186
    %p188 = scmp.eq.s32.totalorder %s187, 0
    %s190 = sadd.s32 %s189, 1
    %s191 = scalar_select %p188, %s189, %s190
    %p194 = pneg %p188
    %p195 = scmp.eq.s32.totalorder %s13, 1
    %p196 = por %p194, %p195
    %p197 = scmp.ne.s32.totalorder %s189, %s192
    %p198 = scmp.eq.s32.totalorder %s13, 0
    %p199 = por %p197, %p198
    %p200 = scmp.ne.s32.totalorder %s189, %s192
    %p201 = scmp.eq.s32.totalorder %s18, 1
    %p202 = por %p200, %p201
    %p203 = scmp.ne.s32.totalorder %s192, %s193
    %p204 = scmp.eq.s32.totalorder %s18, 0
    %p205 = por %p203, %p204
    %p206 = scmp.ne.s32.totalorder %s192, %s193
    %p207 = scmp.eq.s32.totalorder %s19, 1
    %p208 = por %p206, %p207
    %p210 = scmp.ne.s32.totalorder %s193, %s209
    %p211 = scmp.eq.s32.totalorder %s19, 0
    %p212 = por %p210, %p211
    %p213 = scmp.le.s32.totalorder 1, %s13
    %p214 = scmp.lt.s32.totalorder %s13, 3
    %p215 = pnand %p213, %p214
    %p216 = pneg %p215
    // Predicated region
    $region9: #{mobilenet_forward.10} parent=5 // pred_check
      _
    $region10: #{mobilenet_forward.10} parent=5 // pred_check_branch
      %218 = sbr.rel (%p215) target = $region12
    $region11: #{mobilenet_forward.10} parent=5 // pred_region
      %s219 = ssub.s32 %s13, 1
      // Predicated region
      $region13: #{mobilenet_forward.10} parent=11 // pred_check
        %p220 = pneg %p72
      $region14: #{mobilenet_forward.10} parent=11 // pred_check_branch
        %222 = sbr.rel (%p220) target = $region16
      $region15: #{mobilenet_forward.10} parent=11 // pred_region
        _
      $region16: #{mobilenet_forward.10} parent=11 // pred_fallthru
        _
      // Predicated region
      $region17: #{mobilenet_forward.10} parent=11 // pred_check
        %p223 = pneg %p93
      $region18: #{mobilenet_forward.10} parent=11 // pred_check_branch
        %225 = sbr.rel (%p223) target = $region20
      $region19: #{mobilenet_forward.10} parent=11 // pred_region
        _
      $region20: #{mobilenet_forward.10} parent=11 // pred_fallthru
        _
      // Predicated region
      $region21: #{mobilenet_forward.10} parent=11 // pred_check
        %p226 = pneg %p114
      $region22: #{mobilenet_forward.10} parent=11 // pred_check_branch
        %228 = sbr.rel (%p226) target = $region24
      $region23: #{mobilenet_forward.10} parent=11 // pred_region
        _
      $region24: #{mobilenet_forward.10} parent=11 // pred_fallthru
        _
      // Predicated region
      $region25: #{mobilenet_forward.10} parent=11 // pred_check
        %p229 = pneg %p135
      $region26: #{mobilenet_forward.10} parent=11 // pred_check_branch
        %231 = sbr.rel (%p229) target = $region28
      $region27: #{mobilenet_forward.10} parent=11 // pred_region
        _
      $region28: #{mobilenet_forward.10} parent=11 // pred_fallthru
        _
      // Predicated region
      $region29: #{mobilenet_forward.10} parent=11 // pred_check
        %p232 = pneg %p156
      $region30: #{mobilenet_forward.10} parent=11 // pred_check_branch
        %234 = sbr.rel (%p232) target = $region32
      $region31: #{mobilenet_forward.10} parent=11 // pred_region
        _
      $region32: #{mobilenet_forward.10} parent=11 // pred_fallthru
        _
      // Predicated region
      $region33: #{mobilenet_forward.10} parent=11 // pred_check
        %p235 = pneg %p177
      $region34: #{mobilenet_forward.10} parent=11 // pred_check_branch
        %237 = sbr.rel (%p235) target = $region36
      $region35: #{mobilenet_forward.10} parent=11 // pred_region
        _
      $region36: #{mobilenet_forward.10} parent=11 // pred_fallthru
        _
    $region12: #{mobilenet_forward.10} parent=5 // pred_fallthru
      _
    %p238 = scmp.lt.s32.totalorder %s13, 2
    // Predicated region
    $region37: #{mobilenet_forward.10} parent=5 // pred_check
      %p239 = pneg %p238
    $region38: #{mobilenet_forward.10} parent=5 // pred_check_branch
      %241 = sbr.rel (%p239) target = $region40
    $region39: #{mobilenet_forward.10} parent=5 // pred_region
      // Predicated region
      $region41: #{mobilenet_forward.10} parent=39 // pred_check
        %p242 = pneg %p45
      $region42: #{mobilenet_forward.10} parent=39 // pred_check_branch
        %244 = sbr.rel (%p242) target = $region44
      $region43: #{mobilenet_forward.10} parent=39 // pred_region
        %p245 = scmp.lt.s32.totalorder %s20, 1
        %s246 = scalar_select %p245, %s20, 1
        %s247 = smul.addr %s246, 16
        %s248 = smul.addr %s247, 2
        %s249 = scalar_lea.vmem %s0, %s248
      $region44: #{mobilenet_forward.10} parent=39 // pred_fallthru
        _
    $region40: #{mobilenet_forward.10} parent=5 // pred_fallthru
      _
    %p250 = scmp.le.s32.totalorder 1, %s13
    %p251 = scmp.lt.s32.totalorder %s13, 3
    %p252 = pnand %p250, %p251
    %p253 = pneg %p252
    // Predicated region
    $region45: #{mobilenet_forward.10} parent=5 // pred_check
      _
    $region46: #{mobilenet_forward.10} parent=5 // pred_check_branch
      %255 = sbr.rel (%p252) target = $region48
    $region47: #{mobilenet_forward.10} parent=5 // pred_region
      %s256 = ssub.s32 %s13, 1
      %p257 = scmp.lt.s32.totalorder %s22, 1
      %s258 = scalar_select %p257, %s22, 1
      %s259 = smul.addr %s258, 16
      %s260 = smul.addr %s259, 2
      %s261 = scalar_lea.vmem %s0, %s260
      %p262 = pneg %p51
      %p263 = pneg %p48
      %p264 = pneg %p72
      %p265 = pneg %p69
      %p266 = pneg %p93
      %p267 = pneg %p90
      %p268 = pneg %p114
      %p269 = pneg %p111
      %p270 = pneg %p135
      %p271 = pneg %p132
      %p272 = pneg %p156
      %p273 = pneg %p153
      %p274 = pneg %p177
      %p275 = pneg %p174
      %p276 = pneg %p205
      %p277 = pneg %p202
      %p278 = scmp.lt.s32.totalorder %s22, 1
      %s279 = scalar_select %p278, %s22, 1
      %p280 = scmp.lt.s32.totalorder %s23, 0
      %s281 = scalar_select %p280, %s23, 0
      %s282 = sadd.s32 %s281, %s279
      %s283 = scalar_lea.vmem %s7, %s282
      %p284 = scmp.lt.s32.totalorder %s22, 1
      %s285 = scalar_select %p284, %s22, 1
      %s286 = smul.addr %s285, 16
      %s287 = smul.addr %s286, 2
      %s288 = scalar_lea.vmem %s0, %s287
      %p289 = scmp.lt.s32.totalorder %s22, 1
      %s290 = scalar_select %p289, %s22, 1
      %p291 = scmp.lt.s32.totalorder %s23, 0
      %s292 = scalar_select %p291, %s23, 0
      %s293 = sadd.s32 %s292, %s290
      %s294 = scalar_lea.vmem %s7, %s293
      %s296 = smul.u32 %s23, 2
      %s297 = smul.u32 %s296, 4
      %s298 = smul.addr %s297, 2
      %s299 = scalar_lea.vmem %s288, %s298
      %v300 = vld [vmem:[%s299] sm:$0x3]
      %v301 = vld [vmem:[%s299 + $0x2] sm:$0x3]
      %v302 = vld [vmem:[%s299 + $0x4] sm:$0x3]
      %v303 = vld [vmem:[%s1] sm:$0x1]
      %s304 = scalar_lea.vmem %s1, 1
      %v305 = vld [vmem:[%s304] sm:$0x1]
      %s306 = scalar_lea.vmem %s1, 2
      %v307 = vld [vmem:[%s306] sm:$0x1]
      %v308 = vunpack.c.l.bf16 %v300
      %v310 = vlaneseq
      %v311 = vshrl.u32 %v310, 7
      %v312 = vsub.s32 0, %v311
      %v313 = vrot.slane %v303, %v312
      %v315 = vmul.f32 %v308, %v313
      %v317 = vlaneseq
      %v318 = vshrl.u32 %v317, 7
      %v319 = vsub.s32 0, %v318
      %v320 = vrot.slane %v305, %v319
      %v322 = vmul.f32 %v308, %v320
      %v324 = vrot.slane %v322, 5
      %v325 = vrot.slane %v324, 4
      %v327 = vadd.f32 %v315, %v325
      %v329 = vlaneseq
      %v330 = vshrl.u32 %v329, 7
      %v331 = vsub.s32 0, %v330
      %v332 = vrot.slane %v307, %v331
      %v334 = vmul.f32 %v308, %v332
      %v336 = vrot.slane %v334, 6
      %v337 = vrot.slane %v336, 4
      %v339 = vadd.f32 %v327, %v337
      %s340 = scalar_lea.vmem %s1, 3
      %v341 = vld [vmem:[%s340] sm:$0x1]
      %s342 = scalar_lea.vmem %s1, 4
      %v343 = vld [vmem:[%s342] sm:$0x1]
      %s344 = scalar_lea.vmem %s1, 5
      %v345 = vld [vmem:[%s344] sm:$0x1]
      %v346 = vunpack.c.l.bf16 %v301
      %v348 = vlaneseq
      %v349 = vshrl.u32 %v348, 7
      %v350 = vsub.s32 0, %v349
      %v351 = vrot.slane %v341, %v350
      %v353 = vmul.f32 %v346, %v351
      %v354 = vadd.f32 %v339, %v353
      %v356 = vlaneseq
      %v357 = vshrl.u32 %v356, 7
      %v358 = vsub.s32 0, %v357
      %v359 = vrot.slane %v343, %v358
      %v361 = vmul.f32 %v346, %v359
      %v363 = vrot.slane %v361, 5
      %v364 = vrot.slane %v363, 4
      %v366 = vadd.f32 %v354, %v364
      %v368 = vlaneseq
      %v369 = vshrl.u32 %v368, 7
      %v370 = vsub.s32 0, %v369
      %v371 = vrot.slane %v345, %v370
      %v373 = vmul.f32 %v346, %v371
      %v375 = vrot.slane %v373, 6
      %v376 = vrot.slane %v375, 4
      %v378 = vadd.f32 %v366, %v376
      %s379 = scalar_lea.vmem %s1, 6
      %v380 = vld [vmem:[%s379] sm:$0x1]
      %s381 = scalar_lea.vmem %s1, 7
      %v382 = vld [vmem:[%s381] sm:$0x1]
      %s383 = scalar_lea.vmem %s1, 8
      %v384 = vld [vmem:[%s383] sm:$0x1]
      %v385 = vunpack.c.l.bf16 %v302
      %v387 = vlaneseq
      %v388 = vshrl.u32 %v387, 7
      %v389 = vsub.s32 0, %v388
      %v390 = vrot.slane %v380, %v389
      %v392 = vmul.f32 %v385, %v390
      %v393 = vadd.f32 %v378, %v392
      %v395 = vlaneseq
      %v396 = vshrl.u32 %v395, 7
      %v397 = vsub.s32 0, %v396
      %v398 = vrot.slane %v382, %v397
      %v400 = vmul.f32 %v385, %v398
      %v402 = vrot.slane %v400, 5
      %v403 = vrot.slane %v402, 4
      %v405 = vadd.f32 %v393, %v403
      %v407 = vlaneseq
      %v408 = vshrl.u32 %v407, 7
      %v409 = vsub.s32 0, %v408
      %v410 = vrot.slane %v384, %v409
      %v412 = vmul.f32 %v385, %v410
      %v414 = vrot.slane %v412, 6
      %v415 = vrot.slane %v414, 4
      %v417 = vadd.f32 %v405, %v415
      %s418 = sadd.s32 %s296, 1
      %s419 = smul.u32 %s418, 4
      %s420 = smul.addr %s419, 2
      %s421 = scalar_lea.vmem %s288, %s420
      %v422 = vld [vmem:[%s421] sm:$0x3]
      %v423 = vld [vmem:[%s421 + $0x2] sm:$0x3]
      %v424 = vld [vmem:[%s421 + $0x4] sm:$0x3]
      %s425 = scalar_lea.vmem %s1, 9
      %v426 = vld [vmem:[%s425] sm:$0x1]
      %s427 = scalar_lea.vmem %s1, 10
      %v428 = vld [vmem:[%s427] sm:$0x1]
      %s429 = scalar_lea.vmem %s1, 11
      %v430 = vld [vmem:[%s429] sm:$0x1]
      %v431 = vunpack.c.l.bf16 %v422
      %v433 = vlaneseq
      %v434 = vshrl.u32 %v433, 7
      %v435 = vsub.s32 0, %v434
      %v436 = vrot.slane %v426, %v435
      %v438 = vmul.f32 %v431, %v436
      %v439 = vadd.f32 %v417, %v438
      %v441 = vlaneseq
      %v442 = vshrl.u32 %v441, 7
      %v443 = vsub.s32 0, %v442
      %v444 = vrot.slane %v428, %v443
      %v446 = vmul.f32 %v431, %v444
      %v448 = vrot.slane %v446, 5
      %v449 = vrot.slane %v448, 4
      %v451 = vadd.f32 %v439, %v449
      %v453 = vlaneseq
      %v454 = vshrl.u32 %v453, 7
      %v455 = vsub.s32 0, %v454
      %v456 = vrot.slane %v430, %v455
      %v458 = vmul.f32 %v431, %v456
      %v460 = vrot.slane %v458, 6
      %v461 = vrot.slane %v460, 4
      %v463 = vadd.f32 %v451, %v461
      %s464 = scalar_lea.vmem %s1, 12
      %v465 = vld [vmem:[%s464] sm:$0x1]
      %s466 = scalar_lea.vmem %s1, 13
      %v467 = vld [vmem:[%s466] sm:$0x1]
      %s468 = scalar_lea.vmem %s1, 14
      %v469 = vld [vmem:[%s468] sm:$0x1]
      %v470 = vunpack.c.l.bf16 %v423
      %v472 = vlaneseq
      %v473 = vshrl.u32 %v472, 7
      %v474 = vsub.s32 0, %v473
      %v475 = vrot.slane %v465, %v474
      %v477 = vmul.f32 %v470, %v475
      %v478 = vadd.f32 %v463, %v477
      %v480 = vlaneseq
      %v481 = vshrl.u32 %v480, 7
      %v482 = vsub.s32 0, %v481
      %v483 = vrot.slane %v467, %v482
      %v485 = vmul.f32 %v470, %v483
      %v487 = vrot.slane %v485, 5
      %v488 = vrot.slane %v487, 4
      %v490 = vadd.f32 %v478, %v488
      %v492 = vlaneseq
      %v493 = vshrl.u32 %v492, 7
      %v494 = vsub.s32 0, %v493
      %v495 = vrot.slane %v469, %v494
      %v497 = vmul.f32 %v470, %v495
      %v499 = vrot.slane %v497, 6
      %v500 = vrot.slane %v499, 4
      %v502 = vadd.f32 %v490, %v500
      %s503 = scalar_lea.vmem %s1, 15
      %v504 = vld [vmem:[%s503] sm:$0x1]
      %s505 = scalar_lea.vmem %s1, 16
      %v506 = vld [vmem:[%s505] sm:$0x1]
      %s507 = scalar_lea.vmem %s1, 17
      %v508 = vld [vmem:[%s507] sm:$0x1]
      %v509 = vunpack.c.l.bf16 %v424
      %v511 = vlaneseq
      %v512 = vshrl.u32 %v511, 7
      %v513 = vsub.s32 0, %v512
      %v514 = vrot.slane %v504, %v513
      %v516 = vmul.f32 %v509, %v514
      %v517 = vadd.f32 %v502, %v516
      %v519 = vlaneseq
      %v520 = vshrl.u32 %v519, 7
      %v521 = vsub.s32 0, %v520
      %v522 = vrot.slane %v506, %v521
      %v524 = vmul.f32 %v509, %v522
      %v526 = vrot.slane %v524, 5
      %v527 = vrot.slane %v526, 4
      %v529 = vadd.f32 %v517, %v527
      %v531 = vlaneseq
      %v532 = vshrl.u32 %v531, 7
      %v533 = vsub.s32 0, %v532
      %v534 = vrot.slane %v508, %v533
      %v536 = vmul.f32 %v509, %v534
      %v538 = vrot.slane %v536, 6
      %v539 = vrot.slane %v538, 4
      %v541 = vadd.f32 %v529, %v539
      %s542 = sadd.s32 %s296, 2
      %s543 = smul.u32 %s542, 4
      %s544 = smul.addr %s543, 2
      %s545 = scalar_lea.vmem %s288, %s544
      %v546 = vld [vmem:[%s545] sm:$0x3]
      %v547 = vld [vmem:[%s545 + $0x2] sm:$0x3]
      %v548 = vld [vmem:[%s545 + $0x4] sm:$0x3]
      %s549 = scalar_lea.vmem %s1, 18
      %v550 = vld [vmem:[%s549] sm:$0x1]
      %s551 = scalar_lea.vmem %s1, 19
      %v552 = vld [vmem:[%s551] sm:$0x1]
      %s553 = scalar_lea.vmem %s1, 20
      %v554 = vld [vmem:[%s553] sm:$0x1]
      %v555 = vunpack.c.l.bf16 %v546
      %v557 = vlaneseq
      %v558 = vshrl.u32 %v557, 7
      %v559 = vsub.s32 0, %v558
      %v560 = vrot.slane %v550, %v559
      %v562 = vmul.f32 %v555, %v560
      %v563 = vadd.f32 %v541, %v562
      %v565 = vlaneseq
      %v566 = vshrl.u32 %v565, 7
      %v567 = vsub.s32 0, %v566
      %v568 = vrot.slane %v552, %v567
      %v570 = vmul.f32 %v555, %v568
      %v572 = vrot.slane %v570, 5
      %v573 = vrot.slane %v572, 4
      %v575 = vadd.f32 %v563, %v573
      %v577 = vlaneseq
      %v578 = vshrl.u32 %v577, 7
      %v579 = vsub.s32 0, %v578
      %v580 = vrot.slane %v554, %v579
      %v582 = vmul.f32 %v555, %v580
      %v584 = vrot.slane %v582, 6
      %v585 = vrot.slane %v584, 4
      %v587 = vadd.f32 %v575, %v585
      %s588 = scalar_lea.vmem %s1, 21
      %v589 = vld [vmem:[%s588] sm:$0x1]
      %s590 = scalar_lea.vmem %s1, 22
      %v591 = vld [vmem:[%s590] sm:$0x1]
      %s592 = scalar_lea.vmem %s1, 23
      %v593 = vld [vmem:[%s592] sm:$0x1]
      %v594 = vunpack.c.l.bf16 %v547
      %v596 = vlaneseq
      %v597 = vshrl.u32 %v596, 7
      %v598 = vsub.s32 0, %v597
      %v599 = vrot.slane %v589, %v598
      %v601 = vmul.f32 %v594, %v599
      %v602 = vadd.f32 %v587, %v601
      %v604 = vlaneseq
      %v605 = vshrl.u32 %v604, 7
      %v606 = vsub.s32 0, %v605
      %v607 = vrot.slane %v591, %v606
      %v609 = vmul.f32 %v594, %v607
      %v611 = vrot.slane %v609, 5
      %v612 = vrot.slane %v611, 4
      %v614 = vadd.f32 %v602, %v612
      %v616 = vlaneseq
      %v617 = vshrl.u32 %v616, 7
      %v618 = vsub.s32 0, %v617
      %v619 = vrot.slane %v593, %v618
      %v621 = vmul.f32 %v594, %v619
      %v623 = vrot.slane %v621, 6
      %v624 = vrot.slane %v623, 4
      %v626 = vadd.f32 %v614, %v624
      %s627 = scalar_lea.vmem %s1, 24
      %v628 = vld [vmem:[%s627] sm:$0x1]
      %s629 = scalar_lea.vmem %s1, 25
      %v630 = vld [vmem:[%s629] sm:$0x1]
      %s631 = scalar_lea.vmem %s1, 26
      %v632 = vld [vmem:[%s631] sm:$0x1]
      %v633 = vunpack.c.l.bf16 %v548
      %v635 = vlaneseq
      %v636 = vshrl.u32 %v635, 7
      %v637 = vsub.s32 0, %v636
      %v638 = vrot.slane %v628, %v637
      %v640 = vmul.f32 %v633, %v638
      %v641 = vadd.f32 %v626, %v640
      %v643 = vlaneseq
      %v644 = vshrl.u32 %v643, 7
      %v645 = vsub.s32 0, %v644
      %v646 = vrot.slane %v630, %v645
      %v648 = vmul.f32 %v633, %v646
      %v650 = vrot.slane %v648, 5
      %v651 = vrot.slane %v650, 4
      %v653 = vadd.f32 %v641, %v651
      %v655 = vlaneseq
      %v656 = vshrl.u32 %v655, 7
      %v657 = vsub.s32 0, %v656
      %v658 = vrot.slane %v632, %v657
      %v660 = vmul.f32 %v633, %v658
      %v662 = vrot.slane %v660, 6
      %v663 = vrot.slane %v662, 4
      %v665 = vadd.f32 %v653, %v663
      %v666 = vld [vmem:[%s2] sm:$0x1]
      %v667 = vld [vmem:[%s3] sm:$0x1]
      %v668 = vld [vmem:[%s4] sm:$0xf]
      %v669 = vld [vmem:[%s4 + $0x4] sm:$0xf]
      %v670 = vld [vmem:[%s4 + $0x8] sm:$0xf]
      %v671 = vld [vmem:[%s4 + $0xc] sm:$0xf]
      %v672 = vld [vmem:[%s4 + $0x10] sm:$0xf]
      %v673 = vld [vmem:[%s4 + $0x14] sm:$0xf]
      %v674 = vld [vmem:[%s4 + $0x18] sm:$0xf]
      %v675 = vld [vmem:[%s4 + $0x1c] sm:$0xf]
      %v676 = vld [vmem:[%s4 + $0x20] sm:$0xf]
      %v677 = vld [vmem:[%s4 + $0x24] sm:$0xf]
      %v678 = vld [vmem:[%s4 + $0x28] sm:$0xf]
      %v679 = vld [vmem:[%s4 + $0x2c] sm:$0xf]
      %v680 = vld [vmem:[%s4 + $0x30] sm:$0xf]
      %v681 = vld [vmem:[%s4 + $0x34] sm:$0xf]
      %v682 = vld [vmem:[%s4 + $0x38] sm:$0xf]
      %v683 = vld [vmem:[%s4 + $0x3c] sm:$0xf]
      %v684 = vld [vmem:[%s5] sm:$0x1]
      %v685 = vld [vmem:[%s6] sm:$0x1]
      %v687 = vlaneseq
      %v688 = vshrl.u32 %v687, 7
      %v689 = vsub.s32 0, %v688
      %v690 = vrot.slane %v666, %v689
      %v692 = vmul.f32 %v665, %v690
      %v694 = vlaneseq
      %v695 = vshrl.u32 %v694, 7
      %v696 = vsub.s32 0, %v695
      %v697 = vrot.slane %v667, %v696
      %v699 = vadd.f32 %v692, %v697
      %v700 = vmax.f32 %v699, 0.0
      %v701 = vpack.c.bf16 %v700, %v700
      %v718 = vunpack.c.l.b16 %v668
      %v719 = vunpack.c.l.b16 %v669
      %v720 = vunpack.c.l.b16 %v670
      %v721 = vunpack.c.l.b16 %v671
      %v722 = vunpack.c.l.b16 %v672
      %v723 = vunpack.c.l.b16 %v673
      %v724 = vunpack.c.l.b16 %v674
      %v725 = vunpack.c.l.b16 %v675
      %v726 = vunpack.c.l.b16 %v676
      %v727 = vunpack.c.l.b16 %v677
      %v728 = vunpack.c.l.b16 %v678
      %v729 = vunpack.c.l.b16 %v679
      %v730 = vunpack.c.l.b16 %v680
      %v731 = vunpack.c.l.b16 %v681
      %v732 = vunpack.c.l.b16 %v682
      %v733 = vunpack.c.l.b16 %v683
      %v734 = vpack.c.b16 %v719, %v718
      %v735 = vpack.c.b16 %v721, %v720
      %v736 = vpack.c.b16 %v723, %v722
      %v737 = vpack.c.b16 %v725, %v724
      %v738 = vpack.c.b16 %v727, %v726
      %v739 = vpack.c.b16 %v729, %v728
      %v740 = vpack.c.b16 %v731, %v730
      %v741 = vpack.c.b16 %v733, %v732
      %750 = vmatprep.subr.bf16.mxu0 0
      %751 = vmatpush1.bf16.msra.mxu0 %v734
      %752 = vmatprep.subr.bf16.mxu0 0
      %753 = vmatpush1.bf16.msra.mxu0 %v735
      %754 = vmatprep.subr.bf16.mxu0 0
      %755 = vmatpush1.bf16.msra.mxu0 %v736
      %756 = vmatprep.subr.bf16.mxu0 0
      %757 = vmatpush1.bf16.msra.mxu0 %v737
      %758 = vmatprep.subr.bf16.mxu0 0
      %759 = vmatpush1.bf16.msra.mxu0 %v738
      %760 = vmatprep.subr.bf16.mxu0 0
      %761 = vmatpush1.bf16.msra.mxu0 %v739
      %762 = vmatprep.subr.bf16.mxu0 0
      %763 = vmatpush1.bf16.msra.mxu0 %v740
      %764 = vmatprep.subr.bf16.mxu0 0
      %765 = vmatpush1.bf16.msra.mxu0 %v741
      %766 = vmatprep.subr.bf16.mxu0 0
      %767 = vmatpush1.bf16.msra.mxu0 0
      %768 = vmatprep.subr.bf16.mxu0 0
      %769 = vmatpush1.bf16.msra.mxu0 0
      %770 = vmatprep.subr.bf16.mxu0 0
      %771 = vmatpush1.bf16.msra.mxu0 0
      %772 = vmatprep.subr.bf16.mxu0 0
      %773 = vmatpush1.bf16.msra.mxu0 0
      %774 = vmatprep.subr.bf16.mxu0 0
      %775 = vmatpush1.bf16.msra.mxu0 0
      %776 = vmatprep.subr.bf16.mxu0 0
      %777 = vmatpush1.bf16.msra.mxu0 0
      %778 = vmatprep.subr.bf16.mxu0 0
      %779 = vmatpush1.bf16.msra.mxu0 0
      %780 = vmatprep.subr.bf16.mxu0 0
      %781 = vmatpush1.bf16.msra.mxu0 0
      %782 = vmatprep.mubr.bf16.mxu0 0
      %783 = vmatmul.mubr.bf16.gmra.mrb[0].mxu0 %v701
      %v784 = vpop.f32.mrb[0].mxu0
      %v785 = vadd.f32 0.0, %v784
      %v786 = vpop.f32.mrb[0].mxu0
      %v787 = vpop.f32.mrb[0].mxu0
      %v788 = vpop.f32.mrb[0].mxu0
      %789 = vdwg.mxu0
      %v791 = vlaneseq
      %v792 = vshrl.u32 %v791, 7
      %v793 = vsub.s32 0, %v792
      %v794 = vrot.slane %v684, %v793
      %v796 = vmul.f32 %v785, %v794
      %v798 = vlaneseq
      %v799 = vshrl.u32 %v798, 7
      %v800 = vsub.s32 0, %v799
      %v801 = vrot.slane %v685, %v800
      %v803 = vadd.f32 %v796, %v801
      %v804 = vmax.f32 %v803, 0.0
      %v805 = vpack.c.bf16 %v804, %v804
      %806 = vst [vmem:[%s294] sm:$0x1] %v805
      %p807 = scmp.lt.s32.totalorder %s22, 1
      %s808 = scalar_select %p807, %s22, 1
      %p809 = scmp.lt.s32.totalorder %s23, 0
      %s810 = scalar_select %p809, %s23, 0
      %s811 = sadd.s32 %s810, %s808
      %s812 = scalar_lea.vmem %s7, %s811
      // Predicated region
      $region49: #{mobilenet_forward.10} parent=47 // pred_check
        %p813 = pneg %p202
      $region50: #{mobilenet_forward.10} parent=47 // pred_check_branch
        %815 = sbr.rel (%p813) target = $region52
      $region51: #{mobilenet_forward.10} parent=47 // pred_region
        _
      $region52: #{mobilenet_forward.10} parent=47 // pred_fallthru
        _
    $region48: #{mobilenet_forward.10} parent=5 // pred_fallthru
      _
    %p816 = scmp.le.s32.totalorder 2, %s13
    // Predicated region
    $region53: #{mobilenet_forward.10} parent=5 // pred_check
      %p817 = pneg %p816
    $region54: #{mobilenet_forward.10} parent=5 // pred_check_branch
      %819 = sbr.rel (%p817) target = $region56
    $region55: #{mobilenet_forward.10} parent=5 // pred_region
      %s820 = ssub.s32 %s13, 2
      // Predicated region
      $region57: #{mobilenet_forward.10} parent=55 // pred_check
        %p821 = pneg %p208
      $region58: #{mobilenet_forward.10} parent=55 // pred_check_branch
        %823 = sbr.rel (%p821) target = $region60
      $region59: #{mobilenet_forward.10} parent=55 // pred_region
        %p824 = scmp.lt.s32.totalorder %s24, 1
        %s825 = scalar_select %p824, %s24, 1
        %p826 = scmp.lt.s32.totalorder %s25, 0
        %s827 = scalar_select %p826, %s25, 0
        %s828 = sadd.s32 %s827, %s825
        %s829 = scalar_lea.vmem %s7, %s828
      $region60: #{mobilenet_forward.10} parent=55 // pred_fallthru
        _
    $region56: #{mobilenet_forward.10} parent=5 // pred_fallthru
      _
  $region6: #{mobilenet_forward.10} parent=0 // loop_footer
    %s17 = sadd.s32 1, %s13
  $region7: #{mobilenet_forward.10} parent=0 // loop_footer_branch
    %12 = sbr.rel target = $region3
  $region8: #{mobilenet_forward.10} parent=0 // loop_exit
    _

// kernel: mobilenet_forward.11
$region0: #{mobilenet_forward.11}
  #allocation0 [shape = 'u32[]', space=smem, size = 0x4, offset = 0x4, fixed_abs, tag = 'smem constant byte address 0x4 - core index']
  #allocation1 [shape = 'u32[144,128]{1,0:T(1,128)}', space=vmem, size = 0x12000, scoped, tag = 'internal scratch']
  %s0 = inlined_call_operand.vmem [shape: bf16[2,128], index: 0, kind: input, shape index: {}]
  %s1 = inlined_call_operand.vmem [shape: f32[9,1,128], index: 1, kind: input, shape index: {}]
  %s2 = inlined_call_operand.vmem [shape: f32[9,1,128], index: 2, kind: input, shape index: {}]
  %s3 = inlined_call_operand.vmem [shape: f32[9,1,128], index: 3, kind: input, shape index: {}]
  %s4 = inlined_call_operand.vmem [shape: bf16[9,128,128], index: 4, kind: input, shape index: {}]
  %s5 = inlined_call_operand.vmem [shape: f32[9,1,128], index: 5, kind: input, shape index: {}]
  %s6 = inlined_call_operand.vmem [shape: f32[9,1,128], index: 6, kind: input, shape index: {}]
  %s7 = inlined_call_operand.vmem [shape: bf16[128,128], index: 7, kind: input, shape index: {}]
  %s8 = inlined_call_operand.vmem [shape: f32[1,128], index: 8, kind: input, shape index: {}]
  %s9 = inlined_call_operand.hbm [shape: f32[2,128], index: 9, kind: output, shape index: {}]
  %s10 = sld [smem:[#allocation0]]
  $region46: #{mobilenet_forward.11} parent=0
    _
  %s12 = ssub.s32 1, %s10
  %s13 = scalar_select 0, %s12, %s10
  $region1: #{mobilenet_forward.11} parent=0
    #allocation2 [shape = 'u8[1024]{0}', space=vmem, size = 0x400, scoped, tag = 'output window, operand 0, single buffered']
    #allocation3 [shape = 's32[1]{0}', space=sflag, size = 0x4, scoped, tag = 'scoped memory for mobilenet_forward.11']
    %14 = vsyncpa [#allocation3], 0
    // Predicated region
    $region2: #{mobilenet_forward.11} parent=1 // pred_check
      _
    $region3: #{mobilenet_forward.11} parent=1 // pred_check_branch
      %16 = sbr.rel (0) target = $region5
    $region4: #{mobilenet_forward.11} parent=1 // pred_region
      _
    $region5: #{mobilenet_forward.11} parent=1 // pred_fallthru
      _
    // Predicated region
    $region6: #{mobilenet_forward.11} parent=1 // pred_check
      _
    $region7: #{mobilenet_forward.11} parent=1 // pred_check_branch
      %18 = sbr.rel (0) target = $region9
    $region8: #{mobilenet_forward.11} parent=1 // pred_region
      _
    $region9: #{mobilenet_forward.11} parent=1 // pred_fallthru
      _
    // Predicated region
    $region10: #{mobilenet_forward.11} parent=1 // pred_check
      _
    $region11: #{mobilenet_forward.11} parent=1 // pred_check_branch
      %20 = sbr.rel (0) target = $region13
    $region12: #{mobilenet_forward.11} parent=1 // pred_region
      _
    $region13: #{mobilenet_forward.11} parent=1 // pred_fallthru
      _
    // Predicated region
    $region14: #{mobilenet_forward.11} parent=1 // pred_check
      _
    $region15: #{mobilenet_forward.11} parent=1 // pred_check_branch
      %22 = sbr.rel (0) target = $region17
    $region16: #{mobilenet_forward.11} parent=1 // pred_region
      _
    $region17: #{mobilenet_forward.11} parent=1 // pred_fallthru
      _
    // Predicated region
    $region18: #{mobilenet_forward.11} parent=1 // pred_check
      _
    $region19: #{mobilenet_forward.11} parent=1 // pred_check_branch
      %24 = sbr.rel (0) target = $region21
    $region20: #{mobilenet_forward.11} parent=1 // pred_region
      _
    $region21: #{mobilenet_forward.11} parent=1 // pred_fallthru
      _
    // Predicated region
    $region22: #{mobilenet_forward.11} parent=1 // pred_check
      _
    $region23: #{mobilenet_forward.11} parent=1 // pred_check_branch
      %26 = sbr.rel (0) target = $region25
    $region24: #{mobilenet_forward.11} parent=1 // pred_region
      _
    $region25: #{mobilenet_forward.11} parent=1 // pred_fallthru
      _
    // Predicated region
    $region26: #{mobilenet_forward.11} parent=1 // pred_check
      _
    $region27: #{mobilenet_forward.11} parent=1 // pred_check_branch
      %28 = sbr.rel (0) target = $region29
    $region28: #{mobilenet_forward.11} parent=1 // pred_region
      _
    $region29: #{mobilenet_forward.11} parent=1 // pred_fallthru
      _
    // Predicated region
    $region30: #{mobilenet_forward.11} parent=1 // pred_check
      _
    $region31: #{mobilenet_forward.11} parent=1 // pred_check_branch
      %30 = sbr.rel (0) target = $region33
    $region32: #{mobilenet_forward.11} parent=1 // pred_region
      _
    $region33: #{mobilenet_forward.11} parent=1 // pred_fallthru
      _
    // Predicated region
    $region34: #{mobilenet_forward.11} parent=1 // pred_check
      _
    $region35: #{mobilenet_forward.11} parent=1 // pred_check_branch
      %32 = sbr.rel (0) target = $region37
    $region36: #{mobilenet_forward.11} parent=1 // pred_region
      _
    $region37: #{mobilenet_forward.11} parent=1 // pred_fallthru
      _
    %v34 = vld [vmem:[%s0] sm:$0x1]
    %v35 = vunpack.c.l.bf16 %v34
    %v36 = vld [vmem:[%s1] sm:$0x1]
    %v38 = vlaneseq
    %v39 = vshrl.u32 %v38, 7
    %v40 = vsub.s32 0, %v39
    %v41 = vrot.slane %v36, %v40
    %v43 = vmul.f32 %v35, %v41
    %v44 = vld [vmem:[%s2] sm:$0x1]
    %v46 = vlaneseq
    %v47 = vshrl.u32 %v46, 7
    %v48 = vsub.s32 0, %v47
    %v49 = vrot.slane %v44, %v48
    %v51 = vmul.f32 %v43, %v49
    %v52 = vld [vmem:[%s3] sm:$0x1]
    %v54 = vlaneseq
    %v55 = vshrl.u32 %v54, 7
    %v56 = vsub.s32 0, %v55
    %v57 = vrot.slane %v52, %v56
    %v59 = vadd.f32 %v51, %v57
    %v60 = vmax.f32 %v59, 0.0
    %v61 = vpack.c.bf16 %v60, %v60
    %v62 = vld [vmem:[%s4] sm:$0xf]
    %v63 = vld [vmem:[%s4 + $0x4] sm:$0xf]
    %v64 = vld [vmem:[%s4 + $0x8] sm:$0xf]
    %v65 = vld [vmem:[%s4 + $0xc] sm:$0xf]
    %v66 = vld [vmem:[%s4 + $0x10] sm:$0xf]
    %v67 = vld [vmem:[%s4 + $0x14] sm:$0xf]
    %v68 = vld [vmem:[%s4 + $0x18] sm:$0xf]
    %v69 = vld [vmem:[%s4 + $0x1c] sm:$0xf]
    %v70 = vld [vmem:[%s4 + $0x20] sm:$0xf]
    %v71 = vld [vmem:[%s4 + $0x24] sm:$0xf]
    %v72 = vld [vmem:[%s4 + $0x28] sm:$0xf]
    %v73 = vld [vmem:[%s4 + $0x2c] sm:$0xf]
    %v74 = vld [vmem:[%s4 + $0x30] sm:$0xf]
    %v75 = vld [vmem:[%s4 + $0x34] sm:$0xf]
    %v76 = vld [vmem:[%s4 + $0x38] sm:$0xf]
    %v77 = vld [vmem:[%s4 + $0x3c] sm:$0xf]
    %v94 = vunpack.c.l.b16 %v62
    %v95 = vunpack.c.l.b16 %v63
    %v96 = vunpack.c.l.b16 %v64
    %v97 = vunpack.c.l.b16 %v65
    %v98 = vunpack.c.l.b16 %v66
    %v99 = vunpack.c.l.b16 %v67
    %v100 = vunpack.c.l.b16 %v68
    %v101 = vunpack.c.l.b16 %v69
    %v102 = vunpack.c.l.b16 %v70
    %v103 = vunpack.c.l.b16 %v71
    %v104 = vunpack.c.l.b16 %v72
    %v105 = vunpack.c.l.b16 %v73
    %v106 = vunpack.c.l.b16 %v74
    %v107 = vunpack.c.l.b16 %v75
    %v108 = vunpack.c.l.b16 %v76
    %v109 = vunpack.c.l.b16 %v77
    %v110 = vpack.c.b16 %v95, %v94
    %v111 = vpack.c.b16 %v97, %v96
    %v112 = vpack.c.b16 %v99, %v98
    %v113 = vpack.c.b16 %v101, %v100
    %v114 = vpack.c.b16 %v103, %v102
    %v115 = vpack.c.b16 %v105, %v104
    %v116 = vpack.c.b16 %v107, %v106
    %v117 = vpack.c.b16 %v109, %v108
    %126 = vmatprep.subr.bf16.mxu0 0
    %127 = vmatpush1.bf16.msra.mxu0 %v110
    %128 = vmatprep.subr.bf16.mxu0 0
    %129 = vmatpush1.bf16.msra.mxu0 %v111
    %130 = vmatprep.subr.bf16.mxu0 0
    %131 = vmatpush1.bf16.msra.mxu0 %v112
    %132 = vmatprep.subr.bf16.mxu0 0
    %133 = vmatpush1.bf16.msra.mxu0 %v113
    %134 = vmatprep.subr.bf16.mxu0 0
    %135 = vmatpush1.bf16.msra.mxu0 %v114
    %136 = vmatprep.subr.bf16.mxu0 0
    %137 = vmatpush1.bf16.msra.mxu0 %v115
    %138 = vmatprep.subr.bf16.mxu0 0
    %139 = vmatpush1.bf16.msra.mxu0 %v116
    %140 = vmatprep.subr.bf16.mxu0 0
    %141 = vmatpush1.bf16.msra.mxu0 %v117
    %142 = vmatprep.subr.bf16.mxu0 0
    %143 = vmatpush1.bf16.msra.mxu0 0
    %144 = vmatprep.subr.bf16.mxu0 0
    %145 = vmatpush1.bf16.msra.mxu0 0
    %146 = vmatprep.subr.bf16.mxu0 0
    %147 = vmatpush1.bf16.msra.mxu0 0
    %148 = vmatprep.subr.bf16.mxu0 0
    %149 = vmatpush1.bf16.msra.mxu0 0
    %150 = vmatprep.subr.bf16.mxu0 0
    %151 = vmatpush1.bf16.msra.mxu0 0
    %152 = vmatprep.subr.bf16.mxu0 0
    %153 = vmatpush1.bf16.msra.mxu0 0
    %154 = vmatprep.subr.bf16.mxu0 0
    %155 = vmatpush1.bf16.msra.mxu0 0
    %156 = vmatprep.subr.bf16.mxu0 0
    %157 = vmatpush1.bf16.msra.mxu0 0
    %158 = vmatprep.mubr.bf16.mxu0 0
    %159 = vmatmul.mubr.bf16.gmra.mrb[0].mxu0 %v61
    %v160 = vpop.f32.mrb[0].mxu0
    %v161 = vadd.f32 0.0, %v160
    %v162 = vpop.f32.mrb[0].mxu0
    %v163 = vpop.f32.mrb[0].mxu0
    %v164 = vpop.f32.mrb[0].mxu0
    %165 = vdwg.mxu0
    %v166 = vld [vmem:[%s5] sm:$0x1]
    %v168 = vlaneseq
    %v169 = vshrl.u32 %v168, 7
    %v170 = vsub.s32 0, %v169
    %v171 = vrot.slane %v166, %v170
    %v173 = vmul.f32 %v161, %v171
    %v174 = vld [vmem:[%s6] sm:$0x1]
    %v176 = vlaneseq
    %v177 = vshrl.u32 %v176, 7
    %v178 = vsub.s32 0, %v177
    %v179 = vrot.slane %v174, %v178
    %v181 = vadd.f32 %v173, %v179
    %v182 = vmax.f32 %v181, 0.0
    %s183 = scalar_lea.vmem %s1, 1
    %v184 = vld [vmem:[%s183] sm:$0x1]
    %v186 = vlaneseq
    %v187 = vshrl.u32 %v186, 7
    %v188 = vsub.s32 0, %v187
    %v189 = vrot.slane %v184, %v188
    %v191 = vmul.f32 %v182, %v189
    %s192 = scalar_lea.vmem %s2, 1
    %v193 = vld [vmem:[%s192] sm:$0x1]
    %v195 = vlaneseq
    %v196 = vshrl.u32 %v195, 7
    %v197 = vsub.s32 0, %v196
    %v198 = vrot.slane %v193, %v197
    %v200 = vmul.f32 %v191, %v198
    %s201 = scalar_lea.vmem %s3, 1
    %v202 = vld [vmem:[%s201] sm:$0x1]
    %v204 = vlaneseq
    %v205 = vshrl.u32 %v204, 7
    %v206 = vsub.s32 0, %v205
    %v207 = vrot.slane %v202, %v206
    %v209 = vadd.f32 %v200, %v207
    %v210 = vmax.f32 %v209, 0.0
    %v211 = vpack.c.bf16 %v210, %v210
    %s212 = scalar_lea.vmem %s4, 64
    %v213 = vld [vmem:[%s212] sm:$0xf]
    %v214 = vld [vmem:[%s212 + $0x4] sm:$0xf]
    %v215 = vld [vmem:[%s212 + $0x8] sm:$0xf]
    %v216 = vld [vmem:[%s212 + $0xc] sm:$0xf]
    %v217 = vld [vmem:[%s212 + $0x10] sm:$0xf]
    %v218 = vld [vmem:[%s212 + $0x14] sm:$0xf]
    %v219 = vld [vmem:[%s212 + $0x18] sm:$0xf]
    %v220 = vld [vmem:[%s212 + $0x1c] sm:$0xf]
    %v221 = vld [vmem:[%s212 + $0x20] sm:$0xf]
    %v222 = vld [vmem:[%s212 + $0x24] sm:$0xf]
    %v223 = vld [vmem:[%s212 + $0x28] sm:$0xf]
    %v224 = vld [vmem:[%s212 + $0x2c] sm:$0xf]
    %v225 = vld [vmem:[%s212 + $0x30] sm:$0xf]
    %v226 = vld [vmem:[%s212 + $0x34] sm:$0xf]
    %v227 = vld [vmem:[%s212 + $0x38] sm:$0xf]
    %v228 = vld [vmem:[%s212 + $0x3c] sm:$0xf]
    %v245 = vunpack.c.l.b16 %v213
    %v246 = vunpack.c.l.b16 %v214
    %v247 = vunpack.c.l.b16 %v215
    %v248 = vunpack.c.l.b16 %v216
    %v249 = vunpack.c.l.b16 %v217
    %v250 = vunpack.c.l.b16 %v218
    %v251 = vunpack.c.l.b16 %v219
    %v252 = vunpack.c.l.b16 %v220
    %v253 = vunpack.c.l.b16 %v221
    %v254 = vunpack.c.l.b16 %v222
    %v255 = vunpack.c.l.b16 %v223
    %v256 = vunpack.c.l.b16 %v224
    %v257 = vunpack.c.l.b16 %v225
    %v258 = vunpack.c.l.b16 %v226
    %v259 = vunpack.c.l.b16 %v227
    %v260 = vunpack.c.l.b16 %v228
    %v261 = vpack.c.b16 %v246, %v245
    %v262 = vpack.c.b16 %v248, %v247
    %v263 = vpack.c.b16 %v250, %v249
    %v264 = vpack.c.b16 %v252, %v251
    %v265 = vpack.c.b16 %v254, %v253
    %v266 = vpack.c.b16 %v256, %v255
    %v267 = vpack.c.b16 %v258, %v257
    %v268 = vpack.c.b16 %v260, %v259
    %277 = vmatprep.subr.bf16.mxu0 0
    %278 = vmatpush1.bf16.msra.mxu0 %v261
    %279 = vmatprep.subr.bf16.mxu0 0
    %280 = vmatpush1.bf16.msra.mxu0 %v262
    %281 = vmatprep.subr.bf16.mxu0 0
    %282 = vmatpush1.bf16.msra.mxu0 %v263
    %283 = vmatprep.subr.bf16.mxu0 0
    %284 = vmatpush1.bf16.msra.mxu0 %v264
    %285 = vmatprep.subr.bf16.mxu0 0
    %286 = vmatpush1.bf16.msra.mxu0 %v265
    %287 = vmatprep.subr.bf16.mxu0 0
    %288 = vmatpush1.bf16.msra.mxu0 %v266
    %289 = vmatprep.subr.bf16.mxu0 0
    %290 = vmatpush1.bf16.msra.mxu0 %v267
    %291 = vmatprep.subr.bf16.mxu0 0
    %292 = vmatpush1.bf16.msra.mxu0 %v268
    %293 = vmatprep.subr.bf16.mxu0 0
    %294 = vmatpush1.bf16.msra.mxu0 0
    %295 = vmatprep.subr.bf16.mxu0 0
    %296 = vmatpush1.bf16.msra.mxu0 0
    %297 = vmatprep.subr.bf16.mxu0 0
    %298 = vmatpush1.bf16.msra.mxu0 0
    %299 = vmatprep.subr.bf16.mxu0 0
    %300 = vmatpush1.bf16.msra.mxu0 0
    %301 = vmatprep.subr.bf16.mxu0 0
    %302 = vmatpush1.bf16.msra.mxu0 0
    %303 = vmatprep.subr.bf16.mxu0 0
    %304 = vmatpush1.bf16.msra.mxu0 0
    %305 = vmatprep.subr.bf16.mxu0 0
    %306 = vmatpush1.bf16.msra.mxu0 0
    %307 = vmatprep.subr.bf16.mxu0 0
    %308 = vmatpush1.bf16.msra.mxu0 0
    %309 = vmatprep.mubr.bf16.mxu0 0
    %310 = vmatmul.mubr.bf16.gmra.mrb[0].mxu0 %v211
    %v311 = vpop.f32.mrb[0].mxu0
    %v312 = vadd.f32 0.0, %v311
    %v313 = vpop.f32.mrb[0].mxu0
    %v314 = vpop.f32.mrb[0].mxu0
    %v315 = vpop.f32.mrb[0].mxu0
    %316 = vdwg.mxu0
    %s317 = scalar_lea.vmem %s5, 1
    %v318 = vld [vmem:[%s317] sm:$0x1]
    %v320 = vlaneseq
    %v321 = vshrl.u32 %v320, 7
    %v322 = vsub.s32 0, %v321
    %v323 = vrot.slane %v318, %v322
    %v325 = vmul.f32 %v312, %v323
    %s326 = scalar_lea.vmem %s6, 1
    %v327 = vld [vmem:[%s326] sm:$0x1]
    %v329 = vlaneseq
    %v330 = vshrl.u32 %v329, 7
    %v331 = vsub.s32 0, %v330
    %v332 = vrot.slane %v327, %v331
    %v334 = vadd.f32 %v325, %v332
    %v335 = vmax.f32 %v334, 0.0
    %s336 = scalar_lea.vmem %s1, 2
    %v337 = vld [vmem:[%s336] sm:$0x1]
    %v339 = vlaneseq
    %v340 = vshrl.u32 %v339, 7
    %v341 = vsub.s32 0, %v340
    %v342 = vrot.slane %v337, %v341
    %v344 = vmul.f32 %v335, %v342
    %s345 = scalar_lea.vmem %s2, 2
    %v346 = vld [vmem:[%s345] sm:$0x1]
    %v348 = vlaneseq
    %v349 = vshrl.u32 %v348, 7
    %v350 = vsub.s32 0, %v349
    %v351 = vrot.slane %v346, %v350
    %v353 = vmul.f32 %v344, %v351
    %s354 = scalar_lea.vmem %s3, 2
    %v355 = vld [vmem:[%s354] sm:$0x1]
    %v357 = vlaneseq
    %v358 = vshrl.u32 %v357, 7
    %v359 = vsub.s32 0, %v358
    %v360 = vrot.slane %v355, %v359
    %v362 = vadd.f32 %v353, %v360
    %v363 = vmax.f32 %v362, 0.0
    %v364 = vpack.c.bf16 %v363, %v363
    %s365 = scalar_lea.vmem %s4, 128
    %v366 = vld [vmem:[%s365] sm:$0xf]
    %v367 = vld [vmem:[%s365 + $0x4] sm:$0xf]
    %v368 = vld [vmem:[%s365 + $0x8] sm:$0xf]
    %v369 = vld [vmem:[%s365 + $0xc] sm:$0xf]
    %v370 = vld [vmem:[%s365 + $0x10] sm:$0xf]
    %v371 = vld [vmem:[%s365 + $0x14] sm:$0xf]
    %v372 = vld [vmem:[%s365 + $0x18] sm:$0xf]
    %v373 = vld [vmem:[%s365 + $0x1c] sm:$0xf]
    %v374 = vld [vmem:[%s365 + $0x20] sm:$0xf]
    %v375 = vld [vmem:[%s365 + $0x24] sm:$0xf]
    %v376 = vld [vmem:[%s365 + $0x28] sm:$0xf]
    %v377 = vld [vmem:[%s365 + $0x2c] sm:$0xf]
    %v378 = vld [vmem:[%s365 + $0x30] sm:$0xf]
    %v379 = vld [vmem:[%s365 + $0x34] sm:$0xf]
    %v380 = vld [vmem:[%s365 + $0x38] sm:$0xf]
    %v381 = vld [vmem:[%s365 + $0x3c] sm:$0xf]
    %v398 = vunpack.c.l.b16 %v366
    %v399 = vunpack.c.l.b16 %v367
    %v400 = vunpack.c.l.b16 %v368
    %v401 = vunpack.c.l.b16 %v369
    %v402 = vunpack.c.l.b16 %v370
    %v403 = vunpack.c.l.b16 %v371
    %v404 = vunpack.c.l.b16 %v372
    %v405 = vunpack.c.l.b16 %v373
    %v406 = vunpack.c.l.b16 %v374
    %v407 = vunpack.c.l.b16 %v375
    %v408 = vunpack.c.l.b16 %v376
    %v409 = vunpack.c.l.b16 %v377
    %v410 = vunpack.c.l.b16 %v378
    %v411 = vunpack.c.l.b16 %v379
    %v412 = vunpack.c.l.b16 %v380
    %v413 = vunpack.c.l.b16 %v381
    %v414 = vpack.c.b16 %v399, %v398
    %v415 = vpack.c.b16 %v401, %v400
    %v416 = vpack.c.b16 %v403, %v402
    %v417 = vpack.c.b16 %v405, %v404
    %v418 = vpack.c.b16 %v407, %v406
    %v419 = vpack.c.b16 %v409, %v408
    %v420 = vpack.c.b16 %v411, %v410
    %v421 = vpack.c.b16 %v413, %v412
    %430 = vmatprep.subr.bf16.mxu0 0
    %431 = vmatpush1.bf16.msra.mxu0 %v414
    %432 = vmatprep.subr.bf16.mxu0 0
    %433 = vmatpush1.bf16.msra.mxu0 %v415
    %434 = vmatprep.subr.bf16.mxu0 0
    %435 = vmatpush1.bf16.msra.mxu0 %v416
    %436 = vmatprep.subr.bf16.mxu0 0
    %437 = vmatpush1.bf16.msra.mxu0 %v417
    %438 = vmatprep.subr.bf16.mxu0 0
    %439 = vmatpush1.bf16.msra.mxu0 %v418
    %440 = vmatprep.subr.bf16.mxu0 0
    %441 = vmatpush1.bf16.msra.mxu0 %v419
    %442 = vmatprep.subr.bf16.mxu0 0
    %443 = vmatpush1.bf16.msra.mxu0 %v420
    %444 = vmatprep.subr.bf16.mxu0 0
    %445 = vmatpush1.bf16.msra.mxu0 %v421
    %446 = vmatprep.subr.bf16.mxu0 0
    %447 = vmatpush1.bf16.msra.mxu0 0
    %448 = vmatprep.subr.bf16.mxu0 0
    %449 = vmatpush1.bf16.msra.mxu0 0
    %450 = vmatprep.subr.bf16.mxu0 0
    %451 = vmatpush1.bf16.msra.mxu0 0
    %452 = vmatprep.subr.bf16.mxu0 0
    %453 = vmatpush1.bf16.msra.mxu0 0
    %454 = vmatprep.subr.bf16.mxu0 0
    %455 = vmatpush1.bf16.msra.mxu0 0
    %456 = vmatprep.subr.bf16.mxu0 0
    %457 = vmatpush1.bf16.msra.mxu0 0
    %458 = vmatprep.subr.bf16.mxu0 0
    %459 = vmatpush1.bf16.msra.mxu0 0
    %460 = vmatprep.subr.bf16.mxu0 0
    %461 = vmatpush1.bf16.msra.mxu0 0
    %462 = vmatprep.mubr.bf16.mxu0 0
    %463 = vmatmul.mubr.bf16.gmra.mrb[0].mxu0 %v364
    %v464 = vpop.f32.mrb[0].mxu0
    %v465 = vadd.f32 0.0, %v464
    %v466 = vpop.f32.mrb[0].mxu0
    %v467 = vpop.f32.mrb[0].mxu0
    %v468 = vpop.f32.mrb[0].mxu0
    %469 = vdwg.mxu0
    %s470 = scalar_lea.vmem %s5, 2
    %v471 = vld [vmem:[%s470] sm:$0x1]
    %v473 = vlaneseq
    %v474 = vshrl.u32 %v473, 7
    %v475 = vsub.s32 0, %v474
    %v476 = vrot.slane %v471, %v475
    %v478 = vmul.f32 %v465, %v476
    %s479 = scalar_lea.vmem %s6, 2
    %v480 = vld [vmem:[%s479] sm:$0x1]
    %v482 = vlaneseq
    %v483 = vshrl.u32 %v482, 7
    %v484 = vsub.s32 0, %v483
    %v485 = vrot.slane %v480, %v484
    %v487 = vadd.f32 %v478, %v485
    %v488 = vmax.f32 %v487, 0.0
    %s489 = scalar_lea.vmem %s1, 3
    %v490 = vld [vmem:[%s489] sm:$0x1]
    %v492 = vlaneseq
    %v493 = vshrl.u32 %v492, 7
    %v494 = vsub.s32 0, %v493
    %v495 = vrot.slane %v490, %v494
    %v497 = vmul.f32 %v488, %v495
    %s498 = scalar_lea.vmem %s2, 3
    %v499 = vld [vmem:[%s498] sm:$0x1]
    %v501 = vlaneseq
    %v502 = vshrl.u32 %v501, 7
    %v503 = vsub.s32 0, %v502
    %v504 = vrot.slane %v499, %v503
    %v506 = vmul.f32 %v497, %v504
    %s507 = scalar_lea.vmem %s3, 3
    %v508 = vld [vmem:[%s507] sm:$0x1]
    %v510 = vlaneseq
    %v511 = vshrl.u32 %v510, 7
    %v512 = vsub.s32 0, %v511
    %v513 = vrot.slane %v508, %v512
    %v515 = vadd.f32 %v506, %v513
    %v516 = vmax.f32 %v515, 0.0
    %v517 = vpack.c.bf16 %v516, %v516
    %s518 = scalar_lea.vmem %s4, 192
    %v519 = vld [vmem:[%s518] sm:$0xf]
    %v520 = vld [vmem:[%s518 + $0x4] sm:$0xf]
    %v521 = vld [vmem:[%s518 + $0x8] sm:$0xf]
    %v522 = vld [vmem:[%s518 + $0xc] sm:$0xf]
    %v523 = vld [vmem:[%s518 + $0x10] sm:$0xf]
    %v524 = vld [vmem:[%s518 + $0x14] sm:$0xf]
    %v525 = vld [vmem:[%s518 + $0x18] sm:$0xf]
    %v526 = vld [vmem:[%s518 + $0x1c] sm:$0xf]
    %v527 = vld [vmem:[%s518 + $0x20] sm:$0xf]
    %v528 = vld [vmem:[%s518 + $0x24] sm:$0xf]
    %v529 = vld [vmem:[%s518 + $0x28] sm:$0xf]
    %v530 = vld [vmem:[%s518 + $0x2c] sm:$0xf]
    %v531 = vld [vmem:[%s518 + $0x30] sm:$0xf]
    %v532 = vld [vmem:[%s518 + $0x34] sm:$0xf]
    %v533 = vld [vmem:[%s518 + $0x38] sm:$0xf]
    %v534 = vld [vmem:[%s518 + $0x3c] sm:$0xf]
    %v551 = vunpack.c.l.b16 %v519
    %v552 = vunpack.c.l.b16 %v520
    %v553 = vunpack.c.l.b16 %v521
    %v554 = vunpack.c.l.b16 %v522
    %v555 = vunpack.c.l.b16 %v523
    %v556 = vunpack.c.l.b16 %v524
    %v557 = vunpack.c.l.b16 %v525
    %v558 = vunpack.c.l.b16 %v526
    %v559 = vunpack.c.l.b16 %v527
    %v560 = vunpack.c.l.b16 %v528
    %v561 = vunpack.c.l.b16 %v529
    %v562 = vunpack.c.l.b16 %v530
    %v563 = vunpack.c.l.b16 %v531
    %v564 = vunpack.c.l.b16 %v532
    %v565 = vunpack.c.l.b16 %v533
    %v566 = vunpack.c.l.b16 %v534
    %v567 = vpack.c.b16 %v552, %v551
    %v568 = vpack.c.b16 %v554, %v553
    %v569 = vpack.c.b16 %v556, %v555
    %v570 = vpack.c.b16 %v558, %v557
    %v571 = vpack.c.b16 %v560, %v559
    %v572 = vpack.c.b16 %v562, %v561
    %v573 = vpack.c.b16 %v564, %v563
    %v574 = vpack.c.b16 %v566, %v565
    %583 = vmatprep.subr.bf16.mxu0 0
    %584 = vmatpush1.bf16.msra.mxu0 %v567
    %585 = vmatprep.subr.bf16.mxu0 0
    %586 = vmatpush1.bf16.msra.mxu0 %v568
    %587 = vmatprep.subr.bf16.mxu0 0
    %588 = vmatpush1.bf16.msra.mxu0 %v569
    %589 = vmatprep.subr.bf16.mxu0 0
    %590 = vmatpush1.bf16.msra.mxu0 %v570
    %591 = vmatprep.subr.bf16.mxu0 0
    %592 = vmatpush1.bf16.msra.mxu0 %v571
    %593 = vmatprep.subr.bf16.mxu0 0
    %594 = vmatpush1.bf16.msra.mxu0 %v572
    %595 = vmatprep.subr.bf16.mxu0 0
    %596 = vmatpush1.bf16.msra.mxu0 %v573
    %597 = vmatprep.subr.bf16.mxu0 0
    %598 = vmatpush1.bf16.msra.mxu0 %v574
    %599 = vmatprep.subr.bf16.mxu0 0
    %600 = vmatpush1.bf16.msra.mxu0 0
    %601 = vmatprep.subr.bf16.mxu0 0
    %602 = vmatpush1.bf16.msra.mxu0 0
    %603 = vmatprep.subr.bf16.mxu0 0
    %604 = vmatpush1.bf16.msra.mxu0 0
    %605 = vmatprep.subr.bf16.mxu0 0
    %606 = vmatpush1.bf16.msra.mxu0 0
    %607 = vmatprep.subr.bf16.mxu0 0
    %608 = vmatpush1.bf16.msra.mxu0 0
    %609 = vmatprep.subr.bf16.mxu0 0
    %610 = vmatpush1.bf16.msra.mxu0 0
    %611 = vmatprep.subr.bf16.mxu0 0
    %612 = vmatpush1.bf16.msra.mxu0 0
    %613 = vmatprep.subr.bf16.mxu0 0
    %614 = vmatpush1.bf16.msra.mxu0 0
    %615 = vmatprep.mubr.bf16.mxu0 0
    %616 = vmatmul.mubr.bf16.gmra.mrb[0].mxu0 %v517
    %v617 = vpop.f32.mrb[0].mxu0
    %v618 = vadd.f32 0.0, %v617
    %v619 = vpop.f32.mrb[0].mxu0
    %v620 = vpop.f32.mrb[0].mxu0
    %v621 = vpop.f32.mrb[0].mxu0
    %622 = vdwg.mxu0
    %s623 = scalar_lea.vmem %s5, 3
    %v624 = vld [vmem:[%s623] sm:$0x1]
    %v626 = vlaneseq
    %v627 = vshrl.u32 %v626, 7
    %v628 = vsub.s32 0, %v627
    %v629 = vrot.slane %v624, %v628
    %v631 = vmul.f32 %v618, %v629
    %s632 = scalar_lea.vmem %s6, 3
    %v633 = vld [vmem:[%s632] sm:$0x1]
    %v635 = vlaneseq
    %v636 = vshrl.u32 %v635, 7
    %v637 = vsub.s32 0, %v636
    %v638 = vrot.slane %v633, %v637
    %v640 = vadd.f32 %v631, %v638
    %v641 = vmax.f32 %v640, 0.0
    %s642 = scalar_lea.vmem %s1, 4
    %v643 = vld [vmem:[%s642] sm:$0x1]
    %v645 = vlaneseq
    %v646 = vshrl.u32 %v645, 7
    %v647 = vsub.s32 0, %v646
    %v648 = vrot.slane %v643, %v647
    %v650 = vmul.f32 %v641, %v648
    %s651 = scalar_lea.vmem %s2, 4
    %v652 = vld [vmem:[%s651] sm:$0x1]
    %v654 = vlaneseq
    %v655 = vshrl.u32 %v654, 7
    %v656 = vsub.s32 0, %v655
    %v657 = vrot.slane %v652, %v656
    %v659 = vmul.f32 %v650, %v657
    %s660 = scalar_lea.vmem %s3, 4
    %v661 = vld [vmem:[%s660] sm:$0x1]
    %v663 = vlaneseq
    %v664 = vshrl.u32 %v663, 7
    %v665 = vsub.s32 0, %v664
    %v666 = vrot.slane %v661, %v665
    %v668 = vadd.f32 %v659, %v666
    %v669 = vmax.f32 %v668, 0.0
    %v670 = vpack.c.bf16 %v669, %v669
    %s671 = scalar_lea.vmem %s4, 256
    %v672 = vld [vmem:[%s671] sm:$0xf]
    %v673 = vld [vmem:[%s671 + $0x4] sm:$0xf]
    %v674 = vld [vmem:[%s671 + $0x8] sm:$0xf]
    %v675 = vld [vmem:[%s671 + $0xc] sm:$0xf]
    %v676 = vld [vmem:[%s671 + $0x10] sm:$0xf]
    %v677 = vld [vmem:[%s671 + $0x14] sm:$0xf]
    %v678 = vld [vmem:[%s671 + $0x18] sm:$0xf]
    %v679 = vld [vmem:[%s671 + $0x1c] sm:$0xf]
    %v680 = vld [vmem:[%s671 + $0x20] sm:$0xf]
    %v681 = vld [vmem:[%s671 + $0x24] sm:$0xf]
    %v682 = vld [vmem:[%s671 + $0x28] sm:$0xf]
    %v683 = vld [vmem:[%s671 + $0x2c] sm:$0xf]
    %v684 = vld [vmem:[%s671 + $0x30] sm:$0xf]
    %v685 = vld [vmem:[%s671 + $0x34] sm:$0xf]
    %v686 = vld [vmem:[%s671 + $0x38] sm:$0xf]
    %v687 = vld [vmem:[%s671 + $0x3c] sm:$0xf]
    %v704 = vunpack.c.l.b16 %v672
    %v705 = vunpack.c.l.b16 %v673
    %v706 = vunpack.c.l.b16 %v674
    %v707 = vunpack.c.l.b16 %v675
    %v708 = vunpack.c.l.b16 %v676
    %v709 = vunpack.c.l.b16 %v677
    %v710 = vunpack.c.l.b16 %v678
    %v711 = vunpack.c.l.b16 %v679
    %v712 = vunpack.c.l.b16 %v680
    %v713 = vunpack.c.l.b16 %v681
    %v714 = vunpack.c.l.b16 %v682
    %v715 = vunpack.c.l.b16 %v683
    %v716 = vunpack.c.l.b16 %v684
    %v717 = vunpack.c.l.b16 %v685
    %v718 = vunpack.c.l.b16 %v686
    %v719 = vunpack.c.l.b16 %v687
    %v720 = vpack.c.b16 %v705, %v704
    %v721 = vpack.c.b16 %v707, %v706
    %v722 = vpack.c.b16 %v709, %v708
    %v723 = vpack.c.b16 %v711, %v710
    %v724 = vpack.c.b16 %v713, %v712
    %v725 = vpack.c.b16 %v715, %v714
    %v726 = vpack.c.b16 %v717, %v716
    %v727 = vpack.c.b16 %v719, %v718
    %736 = vmatprep.subr.bf16.mxu0 0
    %737 = vmatpush1.bf16.msra.mxu0 %v720
    %738 = vmatprep.subr.bf16.mxu0 0
    %739 = vmatpush1.bf16.msra.mxu0 %v721
    %740 = vmatprep.subr.bf16.mxu0 0
    %741 = vmatpush1.bf16.msra.mxu0 %v722
    %742 = vmatprep.subr.bf16.mxu0 0
    %743 = vmatpush1.bf16.msra.mxu0 %v723
    %744 = vmatprep.subr.bf16.mxu0 0
    %745 = vmatpush1.bf16.msra.mxu0 %v724
    %746 = vmatprep.subr.bf16.mxu0 0
    %747 = vmatpush1.bf16.msra.mxu0 %v725
    %748 = vmatprep.subr.bf16.mxu0 0
    %749 = vmatpush1.bf16.msra.mxu0 %v726
    %750 = vmatprep.subr.bf16.mxu0 0
    %751 = vmatpush1.bf16.msra.mxu0 %v727
    %752 = vmatprep.subr.bf16.mxu0 0
    %753 = vmatpush1.bf16.msra.mxu0 0
    %754 = vmatprep.subr.bf16.mxu0 0
    %755 = vmatpush1.bf16.msra.mxu0 0
    %756 = vmatprep.subr.bf16.mxu0 0
    %757 = vmatpush1.bf16.msra.mxu0 0
    %758 = vmatprep.subr.bf16.mxu0 0
    %759 = vmatpush1.bf16.msra.mxu0 0
    %760 = vmatprep.subr.bf16.mxu0 0
    %761 = vmatpush1.bf16.msra.mxu0 0
    %762 = vmatprep.subr.bf16.mxu0 0
    %763 = vmatpush1.bf16.msra.mxu0 0
    %764 = vmatprep.subr.bf16.mxu0 0
    %765 = vmatpush1.bf16.msra.mxu0 0
    %766 = vmatprep.subr.bf16.mxu0 0
    %767 = vmatpush1.bf16.msra.mxu0 0
    %768 = vmatprep.mubr.bf16.mxu0 0
    %769 = vmatmul.mubr.bf16.gmra.mrb[0].mxu0 %v670
    %v770 = vpop.f32.mrb[0].mxu0
    %v771 = vadd.f32 0.0, %v770
    %v772 = vpop.f32.mrb[0].mxu0
    %v773 = vpop.f32.mrb[0].mxu0
    %v774 = vpop.f32.mrb[0].mxu0
    %775 = vdwg.mxu0
    %s776 = scalar_lea.vmem %s5, 4
    %v777 = vld [vmem:[%s776] sm:$0x1]
    %v779 = vlaneseq
    %v780 = vshrl.u32 %v779, 7
    %v781 = vsub.s32 0, %v780
    %v782 = vrot.slane %v777, %v781
    %v784 = vmul.f32 %v771, %v782
    %s785 = scalar_lea.vmem %s6, 4
    %v786 = vld [vmem:[%s785] sm:$0x1]
    %v788 = vlaneseq
    %v789 = vshrl.u32 %v788, 7
    %v790 = vsub.s32 0, %v789
    %v791 = vrot.slane %v786, %v790
    %v793 = vadd.f32 %v784, %v791
    %v794 = vmax.f32 %v793, 0.0
    %s795 = scalar_lea.vmem %s1, 5
    %v796 = vld [vmem:[%s795] sm:$0x1]
    %v798 = vlaneseq
    %v799 = vshrl.u32 %v798, 7
    %v800 = vsub.s32 0, %v799
    %v801 = vrot.slane %v796, %v800
    %v803 = vmul.f32 %v794, %v801
    %s804 = scalar_lea.vmem %s2, 5
    %v805 = vld [vmem:[%s804] sm:$0x1]
    %v807 = vlaneseq
    %v808 = vshrl.u32 %v807, 7
    %v809 = vsub.s32 0, %v808
    %v810 = vrot.slane %v805, %v809
    %v812 = vmul.f32 %v803, %v810
    %s813 = scalar_lea.vmem %s3, 5
    %v814 = vld [vmem:[%s813] sm:$0x1]
    %v816 = vlaneseq
    %v817 = vshrl.u32 %v816, 7
    %v818 = vsub.s32 0, %v817
    %v819 = vrot.slane %v814, %v818
    %v821 = vadd.f32 %v812, %v819
    %v822 = vmax.f32 %v821, 0.0
    %v823 = vpack.c.bf16 %v822, %v822
    %s824 = scalar_lea.vmem %s4, 320
    %v825 = vld [vmem:[%s824] sm:$0xf]
    %v826 = vld [vmem:[%s824 + $0x4] sm:$0xf]
    %v827 = vld [vmem:[%s824 + $0x8] sm:$0xf]
    %v828 = vld [vmem:[%s824 + $0xc] sm:$0xf]
    %v829 = vld [vmem:[%s824 + $0x10] sm:$0xf]
    %v830 = vld [vmem:[%s824 + $0x14] sm:$0xf]
    %v831 = vld [vmem:[%s824 + $0x18] sm:$0xf]
    %v832 = vld [vmem:[%s824 + $0x1c] sm:$0xf]
    %v833 = vld [vmem:[%s824 + $0x20] sm:$0xf]
    %v834 = vld [vmem:[%s824 + $0x24] sm:$0xf]
    %v835 = vld [vmem:[%s824 + $0x28] sm:$0xf]
    %v836 = vld [vmem:[%s824 + $0x2c] sm:$0xf]
    %v837 = vld [vmem:[%s824 + $0x30] sm:$0xf]
    %v838 = vld [vmem:[%s824 + $0x34] sm:$0xf]
    %v839 = vld [vmem:[%s824 + $0x38] sm:$0xf]
    %v840 = vld [vmem:[%s824 + $0x3c] sm:$0xf]
    %v857 = vunpack.c.l.b16 %v825
    %v858 = vunpack.c.l.b16 %v826
    %v859 = vunpack.c.l.b16 %v827
    %v860 = vunpack.c.l.b16 %v828
    %v861 = vunpack.c.l.b16 %v829
    %v862 = vunpack.c.l.b16 %v830
    %v863 = vunpack.c.l.b16 %v831
    %v864 = vunpack.c.l.b16 %v832
    %v865 = vunpack.c.l.b16 %v833
    %v866 = vunpack.c.l.b16 %v834
    %v867 = vunpack.c.l.b16 %v835
    %v868 = vunpack.c.l.b16 %v836
    %v869 = vunpack.c.l.b16 %v837
    %v870 = vunpack.c.l.b16 %v838
    %v871 = vunpack.c.l.b16 %v839
    %v872 = vunpack.c.l.b16 %v840
    %v873 = vpack.c.b16 %v858, %v857
    %v874 = vpack.c.b16 %v860, %v859
    %v875 = vpack.c.b16 %v862, %v861
    %v876 = vpack.c.b16 %v864, %v863
    %v877 = vpack.c.b16 %v866, %v865
    %v878 = vpack.c.b16 %v868, %v867
    %v879 = vpack.c.b16 %v870, %v869
    %v880 = vpack.c.b16 %v872, %v871
    %889 = vmatprep.subr.bf16.mxu0 0
    %890 = vmatpush1.bf16.msra.mxu0 %v873
    %891 = vmatprep.subr.bf16.mxu0 0
    %892 = vmatpush1.bf16.msra.mxu0 %v874
    %893 = vmatprep.subr.bf16.mxu0 0
    %894 = vmatpush1.bf16.msra.mxu0 %v875
    %895 = vmatprep.subr.bf16.mxu0 0
    %896 = vmatpush1.bf16.msra.mxu0 %v876
    %897 = vmatprep.subr.bf16.mxu0 0
    %898 = vmatpush1.bf16.msra.mxu0 %v877
    %899 = vmatprep.subr.bf16.mxu0 0
    %900 = vmatpush1.bf16.msra.mxu0 %v878
    %901 = vmatprep.subr.bf16.mxu0 0
    %902 = vmatpush1.bf16.msra.mxu0 %v879
    %903 = vmatprep.subr.bf16.mxu0 0
    %904 = vmatpush1.bf16.msra.mxu0 %v880
    %905 = vmatprep.subr.bf16.mxu0 0
    %906 = vmatpush1.bf16.msra.mxu0 0
    %907 = vmatprep.subr.bf16.mxu0 0
    %908 = vmatpush1.bf16.msra.mxu0 0
    %909 = vmatprep.subr.bf16.mxu0 0
    %910 = vmatpush1.bf16.msra.mxu0 0
    %911 = vmatprep.subr.bf16.mxu0 0
    %912 = vmatpush1.bf16.msra.mxu0 0
    %913 = vmatprep.subr.bf16.mxu0 0
    %914 = vmatpush1.bf16.msra.mxu0 0
    %915 = vmatprep.subr.bf16.mxu0 0
    %916 = vmatpush1.bf16.msra.mxu0 0
    %917 = vmatprep.subr.bf16.mxu0 0
    %918 = vmatpush1.bf16.msra.mxu0 0
    %919 = vmatprep.subr.bf16.mxu0 0
    %920 = vmatpush1.bf16.msra.mxu0 0
    %921 = vmatprep.mubr.bf16.mxu0 0
    %922 = vmatmul.mubr.bf16.gmra.mrb[0].mxu0 %v823
    %v923 = vpop.f32.mrb[0].mxu0
    %v924 = vadd.f32 0.0, %v923
    %v925 = vpop.f32.mrb[0].mxu0
    %v926 = vpop.f32.mrb[0].mxu0
    %v927 = vpop.f32.mrb[0].mxu0
    %928 = vdwg.mxu0
    %s929 = scalar_lea.vmem %s5, 5
    %v930 = vld [vmem:[%s929] sm:$0x1]
    %v932 = vlaneseq
    %v933 = vshrl.u32 %v932, 7
    %v934 = vsub.s32 0, %v933
    %v935 = vrot.slane %v930, %v934
    %v937 = vmul.f32 %v924, %v935
    %s938 = scalar_lea.vmem %s6, 5
    %v939 = vld [vmem:[%s938] sm:$0x1]
    %v941 = vlaneseq
    %v942 = vshrl.u32 %v941, 7
    %v943 = vsub.s32 0, %v942
    %v944 = vrot.slane %v939, %v943
    %v946 = vadd.f32 %v937, %v944
    %v947 = vmax.f32 %v946, 0.0
    %s948 = scalar_lea.vmem %s1, 6
    %v949 = vld [vmem:[%s948] sm:$0x1]
    %v951 = vlaneseq
    %v952 = vshrl.u32 %v951, 7
    %v953 = vsub.s32 0, %v952
    %v954 = vrot.slane %v949, %v953
    %v956 = vmul.f32 %v947, %v954
    %s957 = scalar_lea.vmem %s2, 6
    %v958 = vld [vmem:[%s957] sm:$0x1]
    %v960 = vlaneseq
    %v961 = vshrl.u32 %v960, 7
    %v962 = vsub.s32 0, %v961
    %v963 = vrot.slane %v958, %v962
    %v965 = vmul.f32 %v956, %v963
    %s966 = scalar_lea.vmem %s3, 6
    %v967 = vld [vmem:[%s966] sm:$0x1]
    %v969 = vlaneseq
    %v970 = vshrl.u32 %v969, 7
    %v971 = vsub.s32 0, %v970
    %v972 = vrot.slane %v967, %v971
    %v974 = vadd.f32 %v965, %v972
    %v975 = vmax.f32 %v974, 0.0
    %v976 = vpack.c.bf16 %v975, %v975
    %s977 = scalar_lea.vmem %s4, 384
    %v978 = vld [vmem:[%s977] sm:$0xf]
    %v979 = vld [vmem:[%s977 + $0x4] sm:$0xf]
    %v980 = vld [vmem:[%s977 + $0x8] sm:$0xf]
    %v981 = vld [vmem:[%s977 + $0xc] sm:$0xf]
    %v982 = vld [vmem:[%s977 + $0x10] sm:$0xf]
    %v983 = vld [vmem:[%s977 + $0x14] sm:$0xf]
    %v984 = vld [vmem:[%s977 + $0x18] sm:$0xf]
    %v985 = vld [vmem:[%s977 + $0x1c] sm:$0xf]
    %v986 = vld [vmem:[%s977 + $0x20] sm:$0xf]
    %v987 = vld [vmem:[%s977 + $0x24] sm:$0xf]
    %v988 = vld [vmem:[%s977 + $0x28] sm:$0xf]
    %v989 = vld [vmem:[%s977 + $0x2c] sm:$0xf]
    %v990 = vld [vmem:[%s977 + $0x30] sm:$0xf]
    %v991 = vld [vmem:[%s977 + $0x34] sm:$0xf]
    %v992 = vld [vmem:[%s977 + $0x38] sm:$0xf]
    %v993 = vld [vmem:[%s977 + $0x3c] sm:$0xf]
    %v1010 = vunpack.c.l.b16 %v978
    %v1011 = vunpack.c.l.b16 %v979
    %v1012 = vunpack.c.l.b16 %v980
    %v1013 = vunpack.c.l.b16 %v981
    %v1014 = vunpack.c.l.b16 %v982
    %v1015 = vunpack.c.l.b16 %v983
    %v1016 = vunpack.c.l.b16 %v984
    %v1017 = vunpack.c.l.b16 %v985
    %v1018 = vunpack.c.l.b16 %v986
    %v1019 = vunpack.c.l.b16 %v987
    %v1020 = vunpack.c.l.b16 %v988
    %v1021 = vunpack.c.l.b16 %v989
    %v1022 = vunpack.c.l.b16 %v990
    %v1023 = vunpack.c.l.b16 %v991
    %v1024 = vunpack.c.l.b16 %v992
    %v1025 = vunpack.c.l.b16 %v993
    %v1026 = vpack.c.b16 %v1011, %v1010
    %v1027 = vpack.c.b16 %v1013, %v1012
    %v1028 = vpack.c.b16 %v1015, %v1014
    %v1029 = vpack.c.b16 %v1017, %v1016
    %v1030 = vpack.c.b16 %v1019, %v1018
    %v1031 = vpack.c.b16 %v1021, %v1020
    %v1032 = vpack.c.b16 %v1023, %v1022
    %v1033 = vpack.c.b16 %v1025, %v1024
    %1042 = vmatprep.subr.bf16.mxu0 0
    %1043 = vmatpush1.bf16.msra.mxu0 %v1026
    %1044 = vmatprep.subr.bf16.mxu0 0
    %1045 = vmatpush1.bf16.msra.mxu0 %v1027
    %1046 = vmatprep.subr.bf16.mxu0 0
    %1047 = vmatpush1.bf16.msra.mxu0 %v1028
    %1048 = vmatprep.subr.bf16.mxu0 0
    %1049 = vmatpush1.bf16.msra.mxu0 %v1029
    %1050 = vmatprep.subr.bf16.mxu0 0
    %1051 = vmatpush1.bf16.msra.mxu0 %v1030
    %1052 = vmatprep.subr.bf16.mxu0 0
    %1053 = vmatpush1.bf16.msra.mxu0 %v1031
    %1054 = vmatprep.subr.bf16.mxu0 0
    %1055 = vmatpush1.bf16.msra.mxu0 %v1032
    %1056 = vmatprep.subr.bf16.mxu0 0
    %1057 = vmatpush1.bf16.msra.mxu0 %v1033
    %1058 = vmatprep.subr.bf16.mxu0 0
    %1059 = vmatpush1.bf16.msra.mxu0 0
    %1060 = vmatprep.subr.bf16.mxu0 0
    %1061 = vmatpush1.bf16.msra.mxu0 0
    %1062 = vmatprep.subr.bf16.mxu0 0
    %1063 = vmatpush1.bf16.msra.mxu0 0
    %1064 = vmatprep.subr.bf16.mxu0 0
    %1065 = vmatpush1.bf16.msra.mxu0 0
    %1066 = vmatprep.subr.bf16.mxu0 0
    %1067 = vmatpush1.bf16.msra.mxu0 0
    %1068 = vmatprep.subr.bf16.mxu0 0
    %1069 = vmatpush1.bf16.msra.mxu0 0
    %1070 = vmatprep.subr.bf16.mxu0 0
    %1071 = vmatpush1.bf16.msra.mxu0 0
    %1072 = vmatprep.subr.bf16.mxu0 0
    %1073 = vmatpush1.bf16.msra.mxu0 0
    %1074 = vmatprep.mubr.bf16.mxu0 0
    %1075 = vmatmul.mubr.bf16.gmra.mrb[0].mxu0 %v976
    %v1076 = vpop.f32.mrb[0].mxu0
    %v1077 = vadd.f32 0.0, %v1076
    %v1078 = vpop.f32.mrb[0].mxu0
    %v1079 = vpop.f32.mrb[0].mxu0
    %v1080 = vpop.f32.mrb[0].mxu0
    %1081 = vdwg.mxu0
    %s1082 = scalar_lea.vmem %s5, 6
    %v1083 = vld [vmem:[%s1082] sm:$0x1]
    %v1085 = vlaneseq
    %v1086 = vshrl.u32 %v1085, 7
    %v1087 = vsub.s32 0, %v1086
    %v1088 = vrot.slane %v1083, %v1087
    %v1090 = vmul.f32 %v1077, %v1088
    %s1091 = scalar_lea.vmem %s6, 6
    %v1092 = vld [vmem:[%s1091] sm:$0x1]
    %v1094 = vlaneseq
    %v1095 = vshrl.u32 %v1094, 7
    %v1096 = vsub.s32 0, %v1095
    %v1097 = vrot.slane %v1092, %v1096
    %v1099 = vadd.f32 %v1090, %v1097
    %v1100 = vmax.f32 %v1099, 0.0
    %s1101 = scalar_lea.vmem %s1, 7
    %v1102 = vld [vmem:[%s1101] sm:$0x1]
    %v1104 = vlaneseq
    %v1105 = vshrl.u32 %v1104, 7
    %v1106 = vsub.s32 0, %v1105
    %v1107 = vrot.slane %v1102, %v1106
    %v1109 = vmul.f32 %v1100, %v1107
    %s1110 = scalar_lea.vmem %s2, 7
    %v1111 = vld [vmem:[%s1110] sm:$0x1]
    %v1113 = vlaneseq
    %v1114 = vshrl.u32 %v1113, 7
    %v1115 = vsub.s32 0, %v1114
    %v1116 = vrot.slane %v1111, %v1115
    %v1118 = vmul.f32 %v1109, %v1116
    %s1119 = scalar_lea.vmem %s3, 7
    %v1120 = vld [vmem:[%s1119] sm:$0x1]
    %v1122 = vlaneseq
    %v1123 = vshrl.u32 %v1122, 7
    %v1124 = vsub.s32 0, %v1123
    %v1125 = vrot.slane %v1120, %v1124
    %v1127 = vadd.f32 %v1118, %v1125
    %v1128 = vmax.f32 %v1127, 0.0
    %v1129 = vpack.c.bf16 %v1128, %v1128
    %s1130 = scalar_lea.vmem %s4, 448
    %v1131 = vld [vmem:[%s1130] sm:$0xf]
    %v1132 = vld [vmem:[%s1130 + $0x4] sm:$0xf]
    %v1133 = vld [vmem:[%s1130 + $0x8] sm:$0xf]
    %v1134 = vld [vmem:[%s1130 + $0xc] sm:$0xf]
    %v1135 = vld [vmem:[%s1130 + $0x10] sm:$0xf]
    %v1136 = vld [vmem:[%s1130 + $0x14] sm:$0xf]
    %v1137 = vld [vmem:[%s1130 + $0x18] sm:$0xf]
    %v1138 = vld [vmem:[%s1130 + $0x1c] sm:$0xf]
    %v1139 = vld [vmem:[%s1130 + $0x20] sm:$0xf]
    %v1140 = vld [vmem:[%s1130 + $0x24] sm:$0xf]
    %v1141 = vld [vmem:[%s1130 + $0x28] sm:$0xf]
    %v1142 = vld [vmem:[%s1130 + $0x2c] sm:$0xf]
    %v1143 = vld [vmem:[%s1130 + $0x30] sm:$0xf]
    %v1144 = vld [vmem:[%s1130 + $0x34] sm:$0xf]
    %v1145 = vld [vmem:[%s1130 + $0x38] sm:$0xf]
    %v1146 = vld [vmem:[%s1130 + $0x3c] sm:$0xf]
    %v1163 = vunpack.c.l.b16 %v1131
    %v1164 = vunpack.c.l.b16 %v1132
    %v1165 = vunpack.c.l.b16 %v1133
    %v1166 = vunpack.c.l.b16 %v1134
    %v1167 = vunpack.c.l.b16 %v1135
    %v1168 = vunpack.c.l.b16 %v1136
    %v1169 = vunpack.c.l.b16 %v1137
    %v1170 = vunpack.c.l.b16 %v1138
    %v1171 = vunpack.c.l.b16 %v1139
    %v1172 = vunpack.c.l.b16 %v1140
    %v1173 = vunpack.c.l.b16 %v1141
    %v1174 = vunpack.c.l.b16 %v1142
    %v1175 = vunpack.c.l.b16 %v1143
    %v1176 = vunpack.c.l.b16 %v1144
    %v1177 = vunpack.c.l.b16 %v1145
    %v1178 = vunpack.c.l.b16 %v1146
    %v1179 = vpack.c.b16 %v1164, %v1163
    %v1180 = vpack.c.b16 %v1166, %v1165
    %v1181 = vpack.c.b16 %v1168, %v1167
    %v1182 = vpack.c.b16 %v1170, %v1169
    %v1183 = vpack.c.b16 %v1172, %v1171
    %v1184 = vpack.c.b16 %v1174, %v1173
    %v1185 = vpack.c.b16 %v1176, %v1175
    %v1186 = vpack.c.b16 %v1178, %v1177
    %1195 = vmatprep.subr.bf16.mxu0 0
    %1196 = vmatpush1.bf16.msra.mxu0 %v1179
    %1197 = vmatprep.subr.bf16.mxu0 0
    %1198 = vmatpush1.bf16.msra.mxu0 %v1180
    %1199 = vmatprep.subr.bf16.mxu0 0
    %1200 = vmatpush1.bf16.msra.mxu0 %v1181
    %1201 = vmatprep.subr.bf16.mxu0 0
    %1202 = vmatpush1.bf16.msra.mxu0 %v1182
    %1203 = vmatprep.subr.bf16.mxu0 0
    %1204 = vmatpush1.bf16.msra.mxu0 %v1183
    %1205 = vmatprep.subr.bf16.mxu0 0
    %1206 = vmatpush1.bf16.msra.mxu0 %v1184
    %1207 = vmatprep.subr.bf16.mxu0 0
    %1208 = vmatpush1.bf16.msra.mxu0 %v1185
    %1209 = vmatprep.subr.bf16.mxu0 0
    %1210 = vmatpush1.bf16.msra.mxu0 %v1186
    %1211 = vmatprep.subr.bf16.mxu0 0
    %1212 = vmatpush1.bf16.msra.mxu0 0
    %1213 = vmatprep.subr.bf16.mxu0 0
    %1214 = vmatpush1.bf16.msra.mxu0 0
    %1215 = vmatprep.subr.bf16.mxu0 0
    %1216 = vmatpush1.bf16.msra.mxu0 0
    %1217 = vmatprep.subr.bf16.mxu0 0
    %1218 = vmatpush1.bf16.msra.mxu0 0
    %1219 = vmatprep.subr.bf16.mxu0 0
    %1220 = vmatpush1.bf16.msra.mxu0 0
    %1221 = vmatprep.subr.bf16.mxu0 0
    %1222 = vmatpush1.bf16.msra.mxu0 0
    %1223 = vmatprep.subr.bf16.mxu0 0
    %1224 = vmatpush1.bf16.msra.mxu0 0
    %1225 = vmatprep.subr.bf16.mxu0 0
    %1226 = vmatpush1.bf16.msra.mxu0 0
    %1227 = vmatprep.mubr.bf16.mxu0 0
    %1228 = vmatmul.mubr.bf16.gmra.mrb[0].mxu0 %v1129
    %v1229 = vpop.f32.mrb[0].mxu0
    %v1230 = vadd.f32 0.0, %v1229
    %v1231 = vpop.f32.mrb[0].mxu0
    %v1232 = vpop.f32.mrb[0].mxu0
    %v1233 = vpop.f32.mrb[0].mxu0
    %1234 = vdwg.mxu0
    %s1235 = scalar_lea.vmem %s5, 7
    %v1236 = vld [vmem:[%s1235] sm:$0x1]
    %v1238 = vlaneseq
    %v1239 = vshrl.u32 %v1238, 7
    %v1240 = vsub.s32 0, %v1239
    %v1241 = vrot.slane %v1236, %v1240
    %v1243 = vmul.f32 %v1230, %v1241
    %s1244 = scalar_lea.vmem %s6, 7
    %v1245 = vld [vmem:[%s1244] sm:$0x1]
    %v1247 = vlaneseq
    %v1248 = vshrl.u32 %v1247, 7
    %v1249 = vsub.s32 0, %v1248
    %v1250 = vrot.slane %v1245, %v1249
    %v1252 = vadd.f32 %v1243, %v1250
    %v1253 = vmax.f32 %v1252, 0.0
    %s1254 = scalar_lea.vmem %s1, 8
    %v1255 = vld [vmem:[%s1254] sm:$0x1]
    %v1257 = vlaneseq
    %v1258 = vshrl.u32 %v1257, 7
    %v1259 = vsub.s32 0, %v1258
    %v1260 = vrot.slane %v1255, %v1259
    %v1262 = vmul.f32 %v1253, %v1260
    %s1263 = scalar_lea.vmem %s2, 8
    %v1264 = vld [vmem:[%s1263] sm:$0x1]
    %v1266 = vlaneseq
    %v1267 = vshrl.u32 %v1266, 7
    %v1268 = vsub.s32 0, %v1267
    %v1269 = vrot.slane %v1264, %v1268
    %v1271 = vmul.f32 %v1262, %v1269
    %s1272 = scalar_lea.vmem %s3, 8
    %v1273 = vld [vmem:[%s1272] sm:$0x1]
    %v1275 = vlaneseq
    %v1276 = vshrl.u32 %v1275, 7
    %v1277 = vsub.s32 0, %v1276
    %v1278 = vrot.slane %v1273, %v1277
    %v1280 = vadd.f32 %v1271, %v1278
    %v1281 = vmax.f32 %v1280, 0.0
    %v1282 = vpack.c.bf16 %v1281, %v1281
    %s1283 = scalar_lea.vmem %s4, 512
    %v1284 = vld [vmem:[%s1283] sm:$0xf]
    %v1285 = vld [vmem:[%s1283 + $0x4] sm:$0xf]
    %v1286 = vld [vmem:[%s1283 + $0x8] sm:$0xf]
    %v1287 = vld [vmem:[%s1283 + $0xc] sm:$0xf]
    %v1288 = vld [vmem:[%s1283 + $0x10] sm:$0xf]
    %v1289 = vld [vmem:[%s1283 + $0x14] sm:$0xf]
    %v1290 = vld [vmem:[%s1283 + $0x18] sm:$0xf]
    %v1291 = vld [vmem:[%s1283 + $0x1c] sm:$0xf]
    %v1292 = vld [vmem:[%s1283 + $0x20] sm:$0xf]
    %v1293 = vld [vmem:[%s1283 + $0x24] sm:$0xf]
    %v1294 = vld [vmem:[%s1283 + $0x28] sm:$0xf]
    %v1295 = vld [vmem:[%s1283 + $0x2c] sm:$0xf]
    %v1296 = vld [vmem:[%s1283 + $0x30] sm:$0xf]
    %v1297 = vld [vmem:[%s1283 + $0x34] sm:$0xf]
    %v1298 = vld [vmem:[%s1283 + $0x38] sm:$0xf]
    %v1299 = vld [vmem:[%s1283 + $0x3c] sm:$0xf]
    %v1316 = vunpack.c.l.b16 %v1284
    %v1317 = vunpack.c.l.b16 %v1285
    %v1318 = vunpack.c.l.b16 %v1286
    %v1319 = vunpack.c.l.b16 %v1287
    %v1320 = vunpack.c.l.b16 %v1288
    %v1321 = vunpack.c.l.b16 %v1289
    %v1322 = vunpack.c.l.b16 %v1290
    %v1323 = vunpack.c.l.b16 %v1291
    %v1324 = vunpack.c.l.b16 %v1292
    %v1325 = vunpack.c.l.b16 %v1293
    %v1326 = vunpack.c.l.b16 %v1294
    %v1327 = vunpack.c.l.b16 %v1295
    %v1328 = vunpack.c.l.b16 %v1296
    %v1329 = vunpack.c.l.b16 %v1297
    %v1330 = vunpack.c.l.b16 %v1298
    %v1331 = vunpack.c.l.b16 %v1299
    %v1332 = vpack.c.b16 %v1317, %v1316
    %v1333 = vpack.c.b16 %v1319, %v1318
    %v1334 = vpack.c.b16 %v1321, %v1320
    %v1335 = vpack.c.b16 %v1323, %v1322
    %v1336 = vpack.c.b16 %v1325, %v1324
    %v1337 = vpack.c.b16 %v1327, %v1326
    %v1338 = vpack.c.b16 %v1329, %v1328
    %v1339 = vpack.c.b16 %v1331, %v1330
    %1348 = vmatprep.subr.bf16.mxu0 0
    %1349 = vmatpush1.bf16.msra.mxu0 %v1332
    %1350 = vmatprep.subr.bf16.mxu0 0
    %1351 = vmatpush1.bf16.msra.mxu0 %v1333
    %1352 = vmatprep.subr.bf16.mxu0 0
    %1353 = vmatpush1.bf16.msra.mxu0 %v1334
    %1354 = vmatprep.subr.bf16.mxu0 0
    %1355 = vmatpush1.bf16.msra.mxu0 %v1335
    %1356 = vmatprep.subr.bf16.mxu0 0
    %1357 = vmatpush1.bf16.msra.mxu0 %v1336
    %1358 = vmatprep.subr.bf16.mxu0 0
    %1359 = vmatpush1.bf16.msra.mxu0 %v1337
    %1360 = vmatprep.subr.bf16.mxu0 0
    %1361 = vmatpush1.bf16.msra.mxu0 %v1338
    %1362 = vmatprep.subr.bf16.mxu0 0
    %1363 = vmatpush1.bf16.msra.mxu0 %v1339
    %1364 = vmatprep.subr.bf16.mxu0 0
    %1365 = vmatpush1.bf16.msra.mxu0 0
    %1366 = vmatprep.subr.bf16.mxu0 0
    %1367 = vmatpush1.bf16.msra.mxu0 0
    %1368 = vmatprep.subr.bf16.mxu0 0
    %1369 = vmatpush1.bf16.msra.mxu0 0
    %1370 = vmatprep.subr.bf16.mxu0 0
    %1371 = vmatpush1.bf16.msra.mxu0 0
    %1372 = vmatprep.subr.bf16.mxu0 0
    %1373 = vmatpush1.bf16.msra.mxu0 0
    %1374 = vmatprep.subr.bf16.mxu0 0
    %1375 = vmatpush1.bf16.msra.mxu0 0
    %1376 = vmatprep.subr.bf16.mxu0 0
    %1377 = vmatpush1.bf16.msra.mxu0 0
    %1378 = vmatprep.subr.bf16.mxu0 0
    %1379 = vmatpush1.bf16.msra.mxu0 0
    %1380 = vmatprep.mubr.bf16.mxu0 0
    %1381 = vmatmul.mubr.bf16.gmra.mrb[0].mxu0 %v1282
    %v1382 = vpop.f32.mrb[0].mxu0
    %v1383 = vadd.f32 0.0, %v1382
    %v1384 = vpop.f32.mrb[0].mxu0
    %v1385 = vpop.f32.mrb[0].mxu0
    %v1386 = vpop.f32.mrb[0].mxu0
    %1387 = vdwg.mxu0
    %s1388 = scalar_lea.vmem %s5, 8
    %v1389 = vld [vmem:[%s1388] sm:$0x1]
    %v1391 = vlaneseq
    %v1392 = vshrl.u32 %v1391, 7
    %v1393 = vsub.s32 0, %v1392
    %v1394 = vrot.slane %v1389, %v1393
    %v1396 = vmul.f32 %v1383, %v1394
    %s1397 = scalar_lea.vmem %s6, 8
    %v1398 = vld [vmem:[%s1397] sm:$0x1]
    %v1400 = vlaneseq
    %v1401 = vshrl.u32 %v1400, 7
    %v1402 = vsub.s32 0, %v1401
    %v1403 = vrot.slane %v1398, %v1402
    %v1405 = vadd.f32 %v1396, %v1403
    %v1406 = vmax.f32 %v1405, 0.0
    %v1407 = vpack.c.bf16 %v1406, %v1406
    %v1408 = vld [vmem:[%s7] sm:$0xf]
    %v1409 = vld [vmem:[%s7 + $0x4] sm:$0xf]
    %v1410 = vld [vmem:[%s7 + $0x8] sm:$0xf]
    %v1411 = vld [vmem:[%s7 + $0xc] sm:$0xf]
    %v1412 = vld [vmem:[%s7 + $0x10] sm:$0xf]
    %v1413 = vld [vmem:[%s7 + $0x14] sm:$0xf]
    %v1414 = vld [vmem:[%s7 + $0x18] sm:$0xf]
    %v1415 = vld [vmem:[%s7 + $0x1c] sm:$0xf]
    %v1416 = vld [vmem:[%s7 + $0x20] sm:$0xf]
    %v1417 = vld [vmem:[%s7 + $0x24] sm:$0xf]
    %v1418 = vld [vmem:[%s7 + $0x28] sm:$0xf]
    %v1419 = vld [vmem:[%s7 + $0x2c] sm:$0xf]
    %v1420 = vld [vmem:[%s7 + $0x30] sm:$0xf]
    %v1421 = vld [vmem:[%s7 + $0x34] sm:$0xf]
    %v1422 = vld [vmem:[%s7 + $0x38] sm:$0xf]
    %v1423 = vld [vmem:[%s7 + $0x3c] sm:$0xf]
    %v1424 = vld [vmem:[%s8] sm:$0x1]
    %v1426 = vlaneseq
    %v1427 = vshrl.u32 %v1426, 7
    %v1428 = vsub.s32 0, %v1427
    %v1429 = vrot.slane %v1424, %v1428
    %v1447 = vunpack.c.l.b16 %v1408
    %v1448 = vunpack.c.l.b16 %v1409
    %v1449 = vunpack.c.l.b16 %v1410
    %v1450 = vunpack.c.l.b16 %v1411
    %v1451 = vunpack.c.l.b16 %v1412
    %v1452 = vunpack.c.l.b16 %v1413
    %v1453 = vunpack.c.l.b16 %v1414
    %v1454 = vunpack.c.l.b16 %v1415
    %v1455 = vunpack.c.l.b16 %v1416
    %v1456 = vunpack.c.l.b16 %v1417
    %v1457 = vunpack.c.l.b16 %v1418
    %v1458 = vunpack.c.l.b16 %v1419
    %v1459 = vunpack.c.l.b16 %v1420
    %v1460 = vunpack.c.l.b16 %v1421
    %v1461 = vunpack.c.l.b16 %v1422
    %v1462 = vunpack.c.l.b16 %v1423
    %v1463 = vpack.c.b16 %v1448, %v1447
    %v1464 = vpack.c.b16 %v1450, %v1449
    %v1465 = vpack.c.b16 %v1452, %v1451
    %v1466 = vpack.c.b16 %v1454, %v1453
    %v1467 = vpack.c.b16 %v1456, %v1455
    %v1468 = vpack.c.b16 %v1458, %v1457
    %v1469 = vpack.c.b16 %v1460, %v1459
    %v1470 = vpack.c.b16 %v1462, %v1461
    %1479 = vmatprep.subr.bf16.mxu0 0
    %1480 = vmatpush1.bf16.msra.mxu0 %v1463
    %1481 = vmatprep.subr.bf16.mxu0 0
    %1482 = vmatpush1.bf16.msra.mxu0 %v1464
    %1483 = vmatprep.subr.bf16.mxu0 0
    %1484 = vmatpush1.bf16.msra.mxu0 %v1465
    %1485 = vmatprep.subr.bf16.mxu0 0
    %1486 = vmatpush1.bf16.msra.mxu0 %v1466
    %1487 = vmatprep.subr.bf16.mxu0 0
    %1488 = vmatpush1.bf16.msra.mxu0 %v1467
    %1489 = vmatprep.subr.bf16.mxu0 0
    %1490 = vmatpush1.bf16.msra.mxu0 %v1468
    %1491 = vmatprep.subr.bf16.mxu0 0
    %1492 = vmatpush1.bf16.msra.mxu0 %v1469
    %1493 = vmatprep.subr.bf16.mxu0 0
    %1494 = vmatpush1.bf16.msra.mxu0 %v1470
    %1495 = vmatprep.subr.bf16.mxu0 0
    %1496 = vmatpush1.bf16.msra.mxu0 0
    %1497 = vmatprep.subr.bf16.mxu0 0
    %1498 = vmatpush1.bf16.msra.mxu0 0
    %1499 = vmatprep.subr.bf16.mxu0 0
    %1500 = vmatpush1.bf16.msra.mxu0 0
    %1501 = vmatprep.subr.bf16.mxu0 0
    %1502 = vmatpush1.bf16.msra.mxu0 0
    %1503 = vmatprep.subr.bf16.mxu0 0
    %1504 = vmatpush1.bf16.msra.mxu0 0
    %1505 = vmatprep.subr.bf16.mxu0 0
    %1506 = vmatpush1.bf16.msra.mxu0 0
    %1507 = vmatprep.subr.bf16.mxu0 0
    %1508 = vmatpush1.bf16.msra.mxu0 0
    %1509 = vmatprep.subr.bf16.mxu0 0
    %1510 = vmatpush1.bf16.msra.mxu0 0
    %1511 = vmatprep.mubr.bf16.mxu0 0
    %1512 = vmatmul.mubr.bf16.gmra.mrb[0].mxu0 %v1407
    %v1513 = vpop.f32.mrb[0].mxu0
    %v1514 = vadd.f32 %v1429, %v1513
    %v1515 = vpop.f32.mrb[0].mxu0
    %v1516 = vpop.f32.mrb[0].mxu0
    %v1517 = vpop.f32.mrb[0].mxu0
    %1518 = vdwg.mxu0
    %vm1519 = vcmask 1041408
    %v1520 = vsel %vm1519, %v1514, -inf
    %1521 = vmax.xlane.f32.xlu0 %v1520
    %v1522 = vpop.xlane.xlu0 %1521
    %v1523 = vsub.f32 %v1514, %v1522
    %v1524 = vmul.f32 %v1523, 1.442695
    %v1525 = vpow.pop %v1524
    %v1526 = vsel %vm1519, %v1525, 0.0
    %1527 = vadd.xlane.f32.xlu0 %v1526
    %v1528 = vpop.xlane.xlu0 %1527
    %v1529 = vrcp.pop %v1528
    %v1530 = vmul.f32 %v1528, %v1529
    %v1531 = vsub.f32 2.0, %v1530
    %v1532 = vmul.f32 %v1529, %v1531
    %v1533 = vmul.f32 %v1528, %v1532
    %v1534 = vsub.f32 2.0, %v1533
    %v1535 = vmul.f32 %v1532, %v1534
    %v1536 = vmul.f32 %v1525, %v1535
    %1537 = vst [vmem:[#allocation2] sm:$0x3] %v1536
    // Predicated region
    $region38: #{mobilenet_forward.11} parent=1 // pred_check
      _
    $region39: #{mobilenet_forward.11} parent=1 // pred_check_branch
      %1539 = sbr.rel (0) target = $region41
    $region40: #{mobilenet_forward.11} parent=1 // pred_region
      %s1541 = ssub.s32 32, 32
      %1542 = vsyncadd [#allocation3], %s1541
      %s1544 = sshll.u32 [#allocation2], 4
      %s1545 = int_to_ptr.vmem [resolvable:$true] %s1544
      %1547 = dma.vmem_to_hbm [thread:$0]  %s1545, 32, %s9, [#allocation3]
    $region41: #{mobilenet_forward.11} parent=1 // pred_fallthru
      _
    // Predicated region
    $region42: #{mobilenet_forward.11} parent=1 // pred_check
      _
    $region43: #{mobilenet_forward.11} parent=1 // pred_check_branch
      %1549 = sbr.rel (0) target = $region45
    $region44: #{mobilenet_forward.11} parent=1 // pred_region
      %1550 = dma.done [#allocation3], 32
    $region45: #{mobilenet_forward.11} parent=1 // pred_fallthru
      _
    %1551 = vsyncpa [#allocation3], 1

</llo_original>
